<compile_context>
chip_gen: v6e
topology: v6e:2x2x1
jax: 0.10.0
libtpu: 0.0.40
codegen_flags: <defaults>
</compile_context>

<pallas_src>
import functools

import jax
import jax.numpy as jnp
from jax import lax
from jax.experimental import pallas as pl
from jax.experimental.pallas import tpu as pltpu

IN_CH = 3
STEM = 16
NUM_CLASSES = 20  # classifier: Conv2d(C_final, 20, 1, bias=False)


def _round_up(a, m):
    return ((a + m - 1) // m) * m


def _tpu_budget():
    """Generation-aware tiling / VMEM budget (v5e/v6e: 128 MiB VMEM, v7x: 64 MiB)."""
    vmem = 64 * 1024 * 1024  # conservative default (v7x-sized)
    try:
        info = pltpu.get_tpu_info()
        v = int(getattr(info, "vmem_capacity_bytes", 0) or 0)
        if v > 0:
            vmem = v
    except Exception:
        pass
    big = vmem >= 100 * 1024 * 1024  # v5e / v6e class parts
    return dict(
        tm=512 if big else 256,      # M tile (review: 512 on 128MiB parts)
        tk=1024 if big else 512,     # K tile; K grid axis engages past this
        tn_cap=512,                  # keep W resident: single N tile when N_pad <= 512
        vmem_limit=min(int(vmem * 3 // 4), 112 * 1024 * 1024),
    )


_BUDGET = _tpu_budget()


def _pick_tile(total, cap):
    """Largest multiple of 128 <= cap that divides `total` (total is a mult of 128)."""
    if total <= cap:
        return total
    for t in range(cap - cap % 128, 0, -128):
        if total % t == 0:
            return t
    return 128


# ----------------------------------------------------------------------------
# Pallas kernels
# ----------------------------------------------------------------------------
def _mm_kernel(x_ref, w_ref, b_ref, o_ref, acc_ref, *, relu):
    # grid = (N tiles, M tiles, K tiles); K is the reduction axis (last).
    @pl.when(pl.program_id(2) == 0)
    def _init():
        acc_ref[...] = jnp.zeros_like(acc_ref)

    acc_ref[...] += jnp.dot(x_ref[...], w_ref[...],
                            preferred_element_type=jnp.float32)

    @pl.when(pl.program_id(2) == pl.num_programs(2) - 1)
    def _fin():
        y = acc_ref[...] + b_ref[...]
        if relu:
            y = jnp.maximum(y, 0.0)
        o_ref[...] = y.astype(o_ref.dtype)


def _mm_res_kernel(x_ref, w_ref, b_ref, r_ref, o_ref, acc_ref):
    # bottleneck tail: conv3 + bn3 + residual add + ReLU, fused.
    @pl.when(pl.program_id(2) == 0)
    def _init():
        acc_ref[...] = jnp.zeros_like(acc_ref)

    acc_ref[...] += jnp.dot(x_ref[...], w_ref[...],
                            preferred_element_type=jnp.float32)

    @pl.when(pl.program_id(2) == pl.num_programs(2) - 1)
    def _fin():
        y = acc_ref[...] + b_ref[...] + r_ref[...].astype(jnp.float32)
        o_ref[...] = jnp.maximum(y, 0.0).astype(o_ref.dtype)


def _conv_kernel(x_ref, w_ref, b_ref, o_ref, *, kh, kw, relu):
    # Direct (im2col-free) stride-1 conv.
    #   x_ref: (Hp, Wp, Cin)  padded input plane (bf16)
    #   w_ref: (kh*kw, Cin, tn) BN-scale-folded weights (bf16)
    #   b_ref: (1, tn) f32 bias ; o_ref: (Ho, Wo, tn)
    ho, wo, _ = o_ref.shape

    def row(r, carry):
        acc = jnp.zeros(o_ref.shape[1:], jnp.float32)            # (wo, tn)
        for di in range(kh):
            for dj in range(kw):
                xw = x_ref[r + di, pl.ds(dj, wo), :]              # (wo, cin)
                acc = acc + jnp.dot(xw, w_ref[di * kw + dj],
                                    preferred_element_type=jnp.float32)
        acc = acc + b_ref[...]
        if relu:
            acc = jnp.maximum(acc, 0.0)
        o_ref[r] = acc.astype(o_ref.dtype)
        return carry

    lax.fori_loop(0, ho, row, 0)


def _maxpool_kernel(x_ref, o_ref):
    # x_ref: (4, Hq, Wq, C) phase-split, -inf padded input ; o_ref: (Ho, Wo, C)
    ho, wo, _ = o_ref.shape
    acc = None
    for di in range(3):
        ai, p = di // 2, di % 2
        for dj in range(3):
            aj, q = dj // 2, dj % 2
            v = x_ref[2 * p + q, pl.ds(ai, ho), pl.ds(aj, wo), :]
            acc = v if acc is None else jnp.maximum(acc, v)
    o_ref[...] = acc


def _gap_kernel(x_ref, o_ref, acc_ref, *, inv_hw):
    # grid = (C tiles "parallel", HW tiles "arbitrary")
    @pl.when(pl.program_id(1) == 0)
    def _init():
        acc_ref[...] = jnp.zeros_like(acc_ref)

    acc_ref[...] += jnp.sum(x_ref[...].astype(jnp.float32), axis=1)

    @pl.when(pl.program_id(1) == pl.num_programs(1) - 1)
    def _fin():
        o_ref[...] = acc_ref[...] * inv_hw


# ----------------------------------------------------------------------------
# Wrappers around pallas_call
# ----------------------------------------------------------------------------
def matmul_bias(x2d, w2d, bias, *, relu=True, residual=None,
                out_dtype=jnp.bfloat16):
    """y = x2d @ w2d + bias (+ residual) (+ relu); weight-resident, K-tiled."""
    M, K = x2d.shape
    _, N = w2d.shape

    K_pad = _round_up(K, 128)                 # lane-dense X loads / full MXU feeds
    N_pad = _round_up(N, 128)                 # lane-dense output stores
    tn = _pick_tile(N_pad, _BUDGET["tn_cap"])
    tk = _pick_tile(K_pad, _BUDGET["tk"])
    tm = min(_BUDGET["tm"], _round_up(M, 8))
    M_pad = _round_up(M, tm)

    x_p = jnp.pad(x2d.astype(jnp.bfloat16), ((0, M_pad - M), (0, K_pad - K)))
    w_p = jnp.pad(w2d.astype(jnp.bfloat16), ((0, K_pad - K), (0, N_pad - N)))
    b_p = jnp.pad(bias.astype(jnp.float32).reshape(1, N),
                  ((0, 0), (0, N_pad - N)))

    nj, ni, nk = N_pad // tn, M_pad // tm, K_pad // tk

    in_specs = [
        pl.BlockSpec((tm, tk), lambda j, i, k: (i, k)),
        # Constant over the M axis when nk == 1 -> weight block stays resident.
        pl.BlockSpec((tk, tn), lambda j, i, k: (k, j)),
        pl.BlockSpec((1, tn), lambda j, i, k: (0, j)),
    ]
    args = [x_p, w_p, b_p]
    if residual is None:
        kernel = functools.partial(_mm_kernel, relu=relu)
    else:
        r_p = jnp.pad(residual.astype(jnp.bfloat16),
                      ((0, M_pad - M), (0, N_pad - N)))
        in_specs.append(pl.BlockSpec((tm, tn), lambda j, i, k: (i, j)))
        args.append(r_p)
        kernel = _mm_res_kernel

    w_reads = 1 if nk == 1 else ni            # W only re-streamed when K is tiled
    cost = pl.CostEstimate(
        flops=2 * M_pad * N_pad * K_pad,
        transcendentals=0,
        bytes_accessed=int(M_pad * K_pad * 2 * nj
                           + K_pad * N_pad * 2 * w_reads
                           + M_pad * N_pad * jnp.dtype(out_dtype).itemsize
                           + (M_pad * N_pad * 2 if residual is not None else 0)),
    )

    out = pl.pallas_call(
        kernel,
        grid=(nj, ni, nk),
        in_specs=in_specs,
        out_specs=pl.BlockSpec((tm, tn), lambda j, i, k: (i, j)),
        out_shape=jax.ShapeDtypeStruct((M_pad, N_pad), out_dtype),
        scratch_shapes=[pltpu.VMEM((tm, tn), jnp.float32)],
        compiler_params=pltpu.CompilerParams(
            dimension_semantics=("parallel", "parallel", "arbitrary"),
            vmem_limit_bytes=_BUDGET["vmem_limit"]),
        cost_estimate=cost,
    )(*args)

    if M_pad != M or N_pad != N:
        out = out[:M, :N]
    return out


def _conv_direct(xpad, w, scale, bias, *, relu=True):
    """Direct stride-1 conv on an already spatially padded NHWC input.

    Tap-accumulating: the (Hp, Wp, Cin) plane is read once per cout tile and the
    kernel runs kh*kw small MXU matmuls per output row (f32 accumulation); no
    im2col patch tensor is materialized.
    TODO(synk): at large resolutions the per-image plane should be row-tiled with
                a +/- (kh-1) halo instead of being whole-plane resident in VMEM.
    """
    n, hp, wp, cin = xpad.shape
    kh, kw, _, cout = w.shape
    ho, wo = hp - kh + 1, wp - kw + 1

    cin_p = _round_up(cin, 8)          # sublane-aligned tap slices
    cout_p = _round_up(cout, 128)      # lane-dense output stores
    tn = _pick_tile(cout_p, _BUDGET["tn_cap"])

    x_p = jnp.pad(xpad.astype(jnp.bfloat16),
                  ((0, 0), (0, 0), (0, 0), (0, cin_p - cin)))
    w_f = (w * scale).astype(jnp.float32)              # fold BN scale into weights
    w_f = jnp.pad(w_f, ((0, 0), (0, 0), (0, cin_p - cin), (0, cout_p - cout)))
    w_p = w_f.reshape(kh * kw, cin_p, cout_p).astype(jnp.bfloat16)
    b_p = jnp.pad(bias.astype(jnp.float32).reshape(1, cout),
                  ((0, 0), (0, cout_p - cout)))

    nj = cout_p // tn
    cost = pl.CostEstimate(
        flops=2 * n * ho * wo * kh * kw * cin_p * cout_p,
        transcendentals=0,
        bytes_accessed=int(n * hp * wp * cin_p * 2
                           + kh * kw * cin_p * cout_p * 2 * (n if nj > 1 else 1)
                           + n * ho * wo * cout_p * 2),
    )
    out = pl.pallas_call(
        functools.partial(_conv_kernel, kh=kh, kw=kw, relu=relu),
        grid=(n, nj),
        in_specs=[
            pl.BlockSpec((None, hp, wp, cin_p), lambda b, j: (b, 0, 0, 0)),
            pl.BlockSpec((kh * kw, cin_p, tn), lambda b, j: (0, 0, j)),
            pl.BlockSpec((1, tn), lambda b, j: (0, j)),
        ],
        out_specs=pl.BlockSpec((None, ho, wo, tn), lambda b, j: (b, 0, 0, j)),
        out_shape=jax.ShapeDtypeStruct((n, ho, wo, cout_p), jnp.bfloat16),
        compiler_params=pltpu.CompilerParams(
            dimension_semantics=("parallel", "parallel"),
            vmem_limit_bytes=_BUDGET["vmem_limit"]),
        cost_estimate=cost,
    )(x_p, w_p, b_p)
    return out[..., :cout] if cout_p != cout else out


def _space_to_depth_conv(x, w_hwio):
    """3x3 stride-2 pad-1 conv -> equivalent 2x2 stride-1 conv on phase channels."""
    n, h, wd, c = x.shape
    _, _, cin, cout = w_hwio.shape
    xp = jnp.pad(x, ((0, 0), (1, 1), (1, 1), (0, 0)))            # conv zero pad
    hp, wp = h + 2, wd + 2
    hpe, wpe = _round_up(hp, 2), _round_up(wp, 2)
    xp = jnp.pad(xp, ((0, 0), (0, hpe - hp), (0, wpe - wp), (0, 0)))
    hq, wq = hpe // 2, wpe // 2
    xq = xp.reshape(n, hq, 2, wq, 2, c).transpose(0, 1, 3, 2, 4, 5)
    xq = xq.reshape(n, hq, wq, 4 * c)
    # W2[ai, aj, (p, q, c), :] = W[2*ai+p, 2*aj+q, c, :]; zero where the original
    # tap index would be 3 (outside the 3x3 window).
    w2 = jnp.zeros((2, 2, 2, 2, cin, cout), w_hwio.dtype)
    for ai in range(2):
        for aj in range(2):
            for p in range(2):
                for q in range(2):
                    di, dj = 2 * ai + p, 2 * aj + q
                    if di <= 2 and dj <= 2:
                        w2 = w2.at[ai, aj, p, q].set(w_hwio[di, dj])
    return xq, w2.reshape(2, 2, 4 * cin, cout)


def conv3x3_bn(x, w_hwio, bn, *, stride=1, relu=True):
    """3x3 conv + folded BN (+ReLU), im2col-free (stride 2 via space-to-depth)."""
    scale, bias = bn
    if stride == 1:
        xp = jnp.pad(x, ((0, 0), (1, 1), (1, 1), (0, 0)))
        w = w_hwio
    else:
        xp, w = _space_to_depth_conv(x, w_hwio)
    return _conv_direct(xp, w, scale, bias, relu=relu)


def conv1x1_bn(x, w_hwio, bn, *, stride=1, relu=True, residual=None,
               out_dtype=jnp.bfloat16):
    """1x1 conv + folded BN (+ residual) (+ ReLU) as a weight-resident matmul."""
    if stride != 1:
        x = x[:, ::stride, ::stride, :]      # 1x1 stride-s conv == subsample + matmul
    n, h, wd, cin = x.shape
    cout = w_hwio.shape[-1]
    scale, bias = bn
    w2d = w_hwio.reshape(cin, cout) * scale[None, :]
    r2d = None if residual is None else residual.reshape(n * h * wd, cout)
    y = matmul_bias(x.reshape(n * h * wd, cin), w2d, bias,
                    relu=relu, residual=r2d, out_dtype=out_dtype)
    return y.reshape(n, h, wd, cout)


def maxpool_3x3_s2(x):
    """MaxPool2d(3, stride=2, padding=1) via a phase-split shifted-max kernel."""
    n, h, wd, c = x.shape
    ho, wo = -(-h // 2), -(-wd // 2)
    xp = jnp.pad(x, ((0, 0), (1, 1), (1, 1), (0, 0)), constant_values=-jnp.inf)
    hp, wp = h + 2, wd + 2
    hpe, wpe = _round_up(hp, 2), _round_up(wp, 2)
    xp = jnp.pad(xp, ((0, 0), (0, hpe - hp), (0, wpe - wp), (0, 0)),
                 constant_values=-jnp.inf)
    hq, wq = hpe // 2, wpe // 2
    xq = xp.reshape(n, hq, 2, wq, 2, c).transpose(0, 2, 4, 1, 3, 5)
    xq = xq.reshape(n, 4, hq, wq, c)
    # TODO(synk): pad C up to 128 (or fuse the pool into the stem conv epilogue)
    #             for lane-dense stores once the stem width warrants it.
    return pl.pallas_call(
        _maxpool_kernel,
        grid=(n,),
        in_specs=[pl.BlockSpec((None, 4, hq, wq, c),
                               lambda b: (b, 0, 0, 0, 0))],
        out_specs=pl.BlockSpec((None, ho, wo, c), lambda b: (b, 0, 0, 0)),
        out_shape=jax.ShapeDtypeStruct((n, ho, wo, c), x.dtype),
        compiler_params=pltpu.CompilerParams(
            dimension_semantics=("parallel",),
            vmem_limit_bytes=_BUDGET["vmem_limit"]),
    )(xq)


def global_avg_pool(x):
    # torchutils.gap2d(keepdims=True): mean over H*W -> (N, C) f32
    n, h, wd, c = x.shape
    hw = h * wd
    t_hw = min(512, _round_up(hw, 8))
    hw_pad = _round_up(hw, t_hw)
    c_pad = _round_up(c, 128)
    tc = 128 if c_pad > 128 else c_pad
    xr = jnp.pad(x.reshape(n, hw, c),
                 ((0, 0), (0, hw_pad - hw), (0, c_pad - c)))  # zeros: sum-safe
    out = pl.pallas_call(
        functools.partial(_gap_kernel, inv_hw=1.0 / hw),
        grid=(c_pad // tc, hw_pad // t_hw),
        in_specs=[pl.BlockSpec((n, t_hw, tc), lambda ci, hi: (0, hi, ci))],
        out_specs=pl.BlockSpec((n, tc), lambda ci, hi: (0, ci)),
        out_shape=jax.ShapeDtypeStruct((n, c_pad), jnp.float32),
        scratch_shapes=[pltpu.VMEM((n, tc), jnp.float32)],
        compiler_params=pltpu.CompilerParams(
            dimension_semantics=("parallel", "arbitrary"),
            vmem_limit_bytes=_BUDGET["vmem_limit"]),
    )(xr)
    return out[:, :c]


# ----------------------------------------------------------------------------
# Parameters (deterministic synthetic init) and forward pass
# ----------------------------------------------------------------------------
def _fold_bn(key, c, eps=1e-5):
    k1, k2, k3, k4 = jax.random.split(key, 4)
    gamma = 1.0 + 0.1 * jax.random.normal(k1, (c,), jnp.float32)
    beta = 0.1 * jax.random.normal(k2, (c,), jnp.float32)
    mean = 0.1 * jax.random.normal(k3, (c,), jnp.float32)
    var = 1.0 + 0.1 * jax.random.uniform(k4, (c,), jnp.float32)
    scale = gamma / jnp.sqrt(var + eps)  # FixedBatchNorm (inference) folded
    bias = beta - mean * scale
    return scale, bias


def _conv_w(key, kh, kw, cin, cout):
    std = (2.0 / (kh * kw * cin)) ** 0.5
    return std * jax.random.normal(key, (kh, kw, cin, cout), jnp.float32)  # HWIO


def init_params(key):
    keys = iter(jax.random.split(key, 64))
    p = {}
    p["stem_w"] = _conv_w(next(keys), 3, 3, IN_CH, STEM)
    p["stem_bn"] = _fold_bn(next(keys), STEM)

    def block(cin, width, cout):
        return dict(
            conv1_w=_conv_w(next(keys), 1, 1, cin, width), bn1=_fold_bn(next(keys), width),
            conv2_w=_conv_w(next(keys), 3, 3, width, width), bn2=_fold_bn(next(keys), width),
            conv3_w=_conv_w(next(keys), 1, 1, width, cout), bn3=_fold_bn(next(keys), cout),
            down_w=_conv_w(next(keys), 1, 1, cin, cout), bn_down=_fold_bn(next(keys), cout),
        )

    p["layer1"] = block(STEM, 16, 64)     # stage1 tail
    p["layer2"] = block(64, 32, 128)      # stage2
    p["layer3"] = block(128, 64, 256)     # stage3
    p["layer4"] = block(256, 128, 512)    # stage4 (2048 in the full-size net)
    p["cls_w"] = 0.01 * jax.random.normal(next(keys), (512, NUM_CLASSES), jnp.float32)
    return p


def bottleneck(x, bp, stride):
    out = conv1x1_bn(x, bp["conv1_w"], bp["bn1"], relu=True)
    # TODO(synk): SplAtConv2d (radix split-attention) replaced by a plain 3x3 conv.
    out = conv3x3_bn(out, bp["conv2_w"], bp["bn2"], stride=stride, relu=True)
    shortcut = conv1x1_bn(x, bp["down_w"], bp["bn_down"], stride=stride, relu=False)
    # conv3 + bn3 + residual add + ReLU fused in one Pallas kernel
    out = conv1x1_bn(out, bp["conv3_w"], bp["bn3"], relu=True, residual=shortcut)
    return out


def net_forward(params, x_nchw):
    # NCHW -> NHWC, bf16 activations through the backbone
    x = jnp.transpose(x_nchw, (0, 2, 3, 1)).astype(jnp.bfloat16)
    # stage1 = conv1 + bn1 + relu + maxpool + layer1
    x = conv3x3_bn(x, params["stem_w"], params["stem_bn"], stride=2, relu=True)
    x = maxpool_3x3_s2(x)
    x = bottleneck(x, params["layer1"], stride=1)
    # stage2 (the reference calls .detach() on its output)
    x = lax.stop_gradient(bottleneck(x, params["layer2"], stride=2))
    # stage3, stage4
    x = bottleneck(x, params["layer3"], stride=2)
    x = bottleneck(x, params["layer4"], stride=2)
    # gap2d + classifier (Conv2d(C, 20, 1, bias=False)) + view(-1, 20)
    pooled = global_avg_pool(x)                                    # (N, C) f32
    logits = matmul_bias(pooled, params["cls_w"],
                         jnp.zeros((NUM_CLASSES,), jnp.float32),
                         relu=False, out_dtype=jnp.float32)
    return logits.reshape(-1, NUM_CLASSES)


if __name__ == "__main__":
    key = jax.random.PRNGKey(0)
    pkey, xkey = jax.random.split(key)
    params = init_params(pkey)
    x = jax.random.normal(xkey, (2, 3, 16, 16), jnp.float32)  # NCHW like PyTorch
    out = jax.jit(net_forward)(params, x)
    out = jax.block_until_ready(out)
    assert out.shape == (2, NUM_CLASSES)
    assert bool(jnp.all(jnp.isfinite(out)))
    print("KERNEL_OK")
</pallas_src>

<mosaic_0001>
module attributes {stable_mosaic.version = 11 : i64} {
  func.func @_conv_kernel(%arg0: i32, %arg1: i32, %arg2: memref<1x9x9x16xbf16, #tpu.memory_space<vmem>>, %arg3: memref<4x16x128xbf16, #tpu.memory_space<vmem>>, %arg4: memref<1x128xf32, #tpu.memory_space<vmem>>, %arg5: memref<1x8x8x128xbf16, #tpu.memory_space<vmem>>) attributes {dimension_semantics = [#tpu.dimension_semantics<parallel>, #tpu.dimension_semantics<parallel>], iteration_bounds = array<i64: 2, 1>, scalar_prefetch = 0 : i64, scratch_operands = 0 : i64, tpu.core_type = #tpu.core_type<tc>, window_params = [{transform_indices = @transform_0, window_bounds = array<i64: 1, 9, 9, 16>}, {transform_indices = @transform_1, window_bounds = array<i64: 4, 16, 128>}, {transform_indices = @transform_2, window_bounds = array<i64: 1, 128>}, {transform_indices = @transform_3, window_bounds = array<i64: 1, 8, 8, 128>}]} {
    %c0_i32 = arith.constant 0 : i32
    %c8_i32 = arith.constant 8 : i32
    %0 = arith.addi %c0_i32, %c8_i32 : i32
    %c1_i32 = arith.constant 1 : i32
    scf.for %arg6 = %c0_i32 to %0 step %c1_i32  : i32 {
      %cst = arith.constant 0.000000e+00 : f32
      %1 = vector.broadcast %cst : f32 to vector<8x128xf32>
      %c0_i32_1 = arith.constant 0 : i32
      %2 = arith.addi %arg6, %c0_i32_1 : i32
      %c0 = arith.constant 0 : index
      %3 = arith.index_cast %2 : i32 to index
      %c0_2 = arith.constant 0 : index
      %c0_3 = arith.constant 0 : index
      %4 = vector.load %arg2[%c0, %3, %c0_2, %c0_3] : memref<1x9x9x16xbf16, #tpu.memory_space<vmem>>, vector<1x1x8x16xbf16>
      %5 = vector.shape_cast %4 : vector<1x1x8x16xbf16> to vector<8x16xbf16>
      %c0_4 = arith.constant 0 : index
      %c0_5 = arith.constant 0 : index
      %c0_6 = arith.constant 0 : index
      %6 = vector.load %arg3[%c0_4, %c0_5, %c0_6] : memref<4x16x128xbf16, #tpu.memory_space<vmem>>, vector<1x16x128xbf16>
      %7 = vector.shape_cast %6 : vector<1x16x128xbf16> to vector<16x128xbf16>
      %cst_7 = arith.constant dense<0.000000e+00> : vector<8x128xf32>
      %8 = tpu.matmul %5, %7, %cst_7 {dimension_numbers = #tpu.dot_dimension_numbers<[1], [0], [0], [1], [0, 0, 1, 1], [], []>} : vector<8x16xbf16>, vector<16x128xbf16>, vector<8x128xf32> -> vector<8x128xf32>
      %9 = arith.addf %1, %8 : vector<8x128xf32>
      %c0_i32_8 = arith.constant 0 : i32
      %10 = arith.addi %arg6, %c0_i32_8 : i32
      %c0_9 = arith.constant 0 : index
      %11 = arith.index_cast %10 : i32 to index
      %c1 = arith.constant 1 : index
      %c0_10 = arith.constant 0 : index
      %12 = vector.load %arg2[%c0_9, %11, %c1, %c0_10] : memref<1x9x9x16xbf16, #tpu.memory_space<vmem>>, vector<1x1x8x16xbf16>
      %13 = vector.shape_cast %12 : vector<1x1x8x16xbf16> to vector<8x16xbf16>
      %c1_11 = arith.constant 1 : index
      %c0_12 = arith.constant 0 : index
      %c0_13 = arith.constant 0 : index
      %14 = vector.load %arg3[%c1_11, %c0_12, %c0_13] : memref<4x16x128xbf16, #tpu.memory_space<vmem>>, vector<1x16x128xbf16>
      %15 = vector.shape_cast %14 : vector<1x16x128xbf16> to vector<16x128xbf16>
      %cst_14 = arith.constant dense<0.000000e+00> : vector<8x128xf32>
      %16 = tpu.matmul %13, %15, %cst_14 {dimension_numbers = #tpu.dot_dimension_numbers<[1], [0], [0], [1], [0, 0, 1, 1], [], []>} : vector<8x16xbf16>, vector<16x128xbf16>, vector<8x128xf32> -> vector<8x128xf32>
      %17 = arith.addf %9, %16 : vector<8x128xf32>
      %c1_i32_15 = arith.constant 1 : i32
      %18 = arith.addi %arg6, %c1_i32_15 : i32
      %c0_16 = arith.constant 0 : index
      %19 = arith.index_cast %18 : i32 to index
      %c0_17 = arith.constant 0 : index
      %c0_18 = arith.constant 0 : index
      %20 = vector.load %arg2[%c0_16, %19, %c0_17, %c0_18] : memref<1x9x9x16xbf16, #tpu.memory_space<vmem>>, vector<1x1x8x16xbf16>
      %21 = vector.shape_cast %20 : vector<1x1x8x16xbf16> to vector<8x16xbf16>
      %c2 = arith.constant 2 : index
      %c0_19 = arith.constant 0 : index
      %c0_20 = arith.constant 0 : index
      %22 = vector.load %arg3[%c2, %c0_19, %c0_20] : memref<4x16x128xbf16, #tpu.memory_space<vmem>>, vector<1x16x128xbf16>
      %23 = vector.shape_cast %22 : vector<1x16x128xbf16> to vector<16x128xbf16>
      %cst_21 = arith.constant dense<0.000000e+00> : vector<8x128xf32>
      %24 = tpu.matmul %21, %23, %cst_21 {dimension_numbers = #tpu.dot_dimension_numbers<[1], [0], [0], [1], [0, 0, 1, 1], [], []>} : vector<8x16xbf16>, vector<16x128xbf16>, vector<8x128xf32> -> vector<8x128xf32>
      %25 = arith.addf %17, %24 : vector<8x128xf32>
      %c1_i32_22 = arith.constant 1 : i32
      %26 = arith.addi %arg6, %c1_i32_22 : i32
      %c0_23 = arith.constant 0 : index
      %27 = arith.index_cast %26 : i32 to index
      %c1_24 = arith.constant 1 : index
      %c0_25 = arith.constant 0 : index
      %28 = vector.load %arg2[%c0_23, %27, %c1_24, %c0_25] : memref<1x9x9x16xbf16, #tpu.memory_space<vmem>>, vector<1x1x8x16xbf16>
      %29 = vector.shape_cast %28 : vector<1x1x8x16xbf16> to vector<8x16xbf16>
      %c3 = arith.constant 3 : index
      %c0_26 = arith.constant 0 : index
      %c0_27 = arith.constant 0 : index
      %30 = vector.load %arg3[%c3, %c0_26, %c0_27] : memref<4x16x128xbf16, #tpu.memory_space<vmem>>, vector<1x16x128xbf16>
      %31 = vector.shape_cast %30 : vector<1x16x128xbf16> to vector<16x128xbf16>
      %cst_28 = arith.constant dense<0.000000e+00> : vector<8x128xf32>
      %32 = tpu.matmul %29, %31, %cst_28 {dimension_numbers = #tpu.dot_dimension_numbers<[1], [0], [0], [1], [0, 0, 1, 1], [], []>} : vector<8x16xbf16>, vector<16x128xbf16>, vector<8x128xf32> -> vector<8x128xf32>
      %33 = arith.addf %25, %32 : vector<8x128xf32>
      %c0_29 = arith.constant 0 : index
      %c0_30 = arith.constant 0 : index
      %34 = vector.load %arg4[%c0_29, %c0_30] : memref<1x128xf32, #tpu.memory_space<vmem>>, vector<1x128xf32>
      %35 = vector.broadcast %34 : vector<1x128xf32> to vector<8x128xf32>
      %36 = arith.addf %33, %35 : vector<8x128xf32>
      %cst_31 = arith.constant 0.000000e+00 : f32
      %37 = vector.broadcast %cst_31 : f32 to vector<8x128xf32>
      %38 = arith.maximumf %36, %37 : vector<8x128xf32>
      %39 = arith.truncf %38 : vector<8x128xf32> to vector<8x128xbf16>
      %c0_32 = arith.constant 0 : index
      %40 = arith.index_cast %arg6 : i32 to index
      %c0_33 = arith.constant 0 : index
      %c0_34 = arith.constant 0 : index
      %41 = vector.load %arg5[%c0_32, %40, %c0_33, %c0_34] : memref<1x8x8x128xbf16, #tpu.memory_space<vmem>>, vector<1x1x8x128xbf16>
      %42 = vector.shape_cast %41 : vector<1x1x8x128xbf16> to vector<8x128xbf16>
      %43 = vector.shape_cast %39 : vector<8x128xbf16> to vector<1x1x8x128xbf16>
      tpu.vector_store %arg5[%c0_32, %40, %c0_33, %c0_34], %43 {strides = array<i32>} : memref<1x8x8x128xbf16, #tpu.memory_space<vmem>>, vector<1x1x8x128xbf16>,
    }
    %c8_i32_0 = arith.constant 8 : i32
    return
  }
  func.func @transform_0(%arg0: i32, %arg1: i32) -> (i32, i32, i32, i32) {
    %c0_i32 = arith.constant 0 : i32
    %c0_i32_0 = arith.constant 0 : i32
    %c0_i32_1 = arith.constant 0 : i32
    %c0_i32_2 = arith.constant 0 : i32
    return %arg0, %c0_i32, %c0_i32_0, %c0_i32_1 : i32, i32, i32, i32
  }
  func.func @transform_1(%arg0: i32, %arg1: i32) -> (i32, i32, i32) {
    %c0_i32 = arith.constant 0 : i32
    %c0_i32_0 = arith.constant 0 : i32
    %c0_i32_1 = arith.constant 0 : i32
    return %c0_i32, %c0_i32_0, %arg1 : i32, i32, i32
  }
  func.func @transform_2(%arg0: i32, %arg1: i32) -> (i32, i32) {
    %c0_i32 = arith.constant 0 : i32
    %c0_i32_0 = arith.constant 0 : i32
    return %c0_i32, %arg1 : i32, i32
  }
  func.func @transform_3(%arg0: i32, %arg1: i32) -> (i32, i32, i32, i32) {
    %c0_i32 = arith.constant 0 : i32
    %c0_i32_0 = arith.constant 0 : i32
    %c0_i32_1 = arith.constant 0 : i32
    return %arg0, %c0_i32, %c0_i32_0, %arg1 : i32, i32, i32, i32
  }
}

module attributes {stable_mosaic.version = 11 : i64} {
  func.func @_mm_kernel(%arg0: i32, %arg1: i32, %arg2: i32, %arg3: memref<32x128xbf16, #tpu.memory_space<vmem>>, %arg4: memref<128x128xbf16, #tpu.memory_space<vmem>>, %arg5: memref<1x128xf32, #tpu.memory_space<vmem>>, %arg6: memref<32x128xbf16, #tpu.memory_space<vmem>>, %arg7: memref<32x128xf32, #tpu.memory_space<vmem>>) attributes {dimension_semantics = [#tpu.dimension_semantics<parallel>, #tpu.dimension_semantics<parallel>, #tpu.dimension_semantics<arbitrary>], iteration_bounds = array<i64: 1, 1, 1>, scalar_prefetch = 0 : i64, scratch_operands = 1 : i64, tpu.core_type = #tpu.core_type<tc>, window_params = [{transform_indices = @transform_0, window_bounds = array<i64: 32, 128>}, {transform_indices = @transform_1, window_bounds = array<i64: 128, 128>}, {transform_indices = @transform_2, window_bounds = array<i64: 1, 128>}, {transform_indices = @transform_3, window_bounds = array<i64: 32, 128>}]} {
    %c0_i32 = arith.constant 0 : i32
    %0 = arith.cmpi eq, %arg2, %c0_i32 : i32
    %1 = arith.extui %0 : i1 to i32
    %c0_i32_0 = arith.constant 0 : i32
    %2 = arith.cmpi ne, %1, %c0_i32_0 : i32
    scf.if %2 {
      %cst_10 = arith.constant 0.000000e+00 : f32
      %12 = vector.broadcast %cst_10 : f32 to vector<32x128xf32>
      %c0_11 = arith.constant 0 : index
      %c0_12 = arith.constant 0 : index
      %13 = vector.load %arg7[%c0_11, %c0_12] : memref<32x128xf32, #tpu.memory_space<vmem>>, vector<32x128xf32>
      tpu.vector_store %arg7[%c0_11, %c0_12], %12 {strides = array<i32>} : memref<32x128xf32, #tpu.memory_space<vmem>>, vector<32x128xf32>,
    } else {
    }
    %c0 = arith.constant 0 : index
    %c0_1 = arith.constant 0 : index
    %3 = vector.load %arg7[%c0, %c0_1] : memref<32x128xf32, #tpu.memory_space<vmem>>, vector<32x128xf32>
    %c0_2 = arith.constant 0 : index
    %c0_3 = arith.constant 0 : index
    %4 = vector.load %arg3[%c0_2, %c0_3] : memref<32x128xbf16, #tpu.memory_space<vmem>>, vector<32x128xbf16>
    %c0_4 = arith.constant 0 : index
    %c0_5 = arith.constant 0 : index
    %5 = vector.load %arg4[%c0_4, %c0_5] : memref<128x128xbf16, #tpu.memory_space<vmem>>, vector<128x128xbf16>
    %cst = arith.constant dense<0.000000e+00> : vector<32x128xf32>
    %6 = tpu.matmul %4, %5, %cst {dimension_numbers = #tpu.dot_dimension_numbers<[1], [0], [0], [1], [0, 0, 1, 1], [], []>} : vector<32x128xbf16>, vector<128x128xbf16>, vector<32x128xf32> -> vector<32x128xf32>
    %7 = arith.addf %3, %6 : vector<32x128xf32>
    %c0_6 = arith.constant 0 : index
    %c0_7 = arith.constant 0 : index
    %8 = vector.load %arg7[%c0_6, %c0_7] : memref<32x128xf32, #tpu.memory_space<vmem>>, vector<32x128xf32>
    tpu.vector_store %arg7[%c0_6, %c0_7], %7 {strides = array<i32>} : memref<32x128xf32, #tpu.memory_space<vmem>>, vector<32x128xf32>,
    %c0_i32_8 = arith.constant 0 : i32
    %9 = arith.cmpi eq, %arg2, %c0_i32_8 : i32
    %10 = arith.extui %9 : i1 to i32
    %c0_i32_9 = arith.constant 0 : i32
    %11 = arith.cmpi ne, %10, %c0_i32_9 : i32
    scf.if %11 {
      %c0_10 = arith.constant 0 : index
      %c0_11 = arith.constant 0 : index
      %12 = vector.load %arg7[%c0_10, %c0_11] : memref<32x128xf32, #tpu.memory_space<vmem>>, vector<32x128xf32>
      %c0_12 = arith.constant 0 : index
      %c0_13 = arith.constant 0 : index
      %13 = vector.load %arg5[%c0_12, %c0_13] : memref<1x128xf32, #tpu.memory_space<vmem>>, vector<1x128xf32>
      %14 = vector.broadcast %13 : vector<1x128xf32> to vector<32x128xf32>
      %15 = arith.addf %12, %14 : vector<32x128xf32>
      %cst_14 = arith.constant 0.000000e+00 : f32
      %16 = vector.broadcast %cst_14 : f32 to vector<32x128xf32>
      %17 = arith.maximumf %15, %16 : vector<32x128xf32>
      %18 = arith.truncf %17 : vector<32x128xf32> to vector<32x128xbf16>
      %c0_15 = arith.constant 0 : index
      %c0_16 = arith.constant 0 : index
      %19 = vector.load %arg6[%c0_15, %c0_16] : memref<32x128xbf16, #tpu.memory_space<vmem>>, vector<32x128xbf16>
      tpu.vector_store %arg6[%c0_15, %c0_16], %18 {strides = array<i32>} : memref<32x128xbf16, #tpu.memory_space<vmem>>, vector<32x128xbf16>,
    } else {
    }
    return
  }
  func.func @transform_0(%arg0: i32, %arg1: i32, %arg2: i32) -> (i32, i32) {
    %c0_i32 = arith.constant 0 : i32
    return %arg1, %arg2 : i32, i32
  }
  func.func @transform_1(%arg0: i32, %arg1: i32, %arg2: i32) -> (i32, i32) {
    %c0_i32 = arith.constant 0 : i32
    return %arg2, %arg0 : i32, i32
  }
  func.func @transform_2(%arg0: i32, %arg1: i32, %arg2: i32) -> (i32, i32) {
    %c0_i32 = arith.constant 0 : i32
    %c0_i32_0 = arith.constant 0 : i32
    return %c0_i32, %arg0 : i32, i32
  }
  func.func @transform_3(%arg0: i32, %arg1: i32, %arg2: i32) -> (i32, i32) {
    %c0_i32 = arith.constant 0 : i32
    return %arg1, %arg0 : i32, i32
  }
}

module attributes {stable_mosaic.version = 11 : i64} {
  func.func @_maxpool_kernel(%arg0: i32, %arg1: memref<1x4x5x5x16xbf16, #tpu.memory_space<vmem>>, %arg2: memref<1x4x4x16xbf16, #tpu.memory_space<vmem>>) attributes {dimension_semantics = [#tpu.dimension_semantics<parallel>], iteration_bounds = array<i64: 2>, scalar_prefetch = 0 : i64, scratch_operands = 0 : i64, tpu.core_type = #tpu.core_type<tc>, window_params = [{transform_indices = @transform_0, window_bounds = array<i64: 1, 4, 5, 5, 16>}, {transform_indices = @transform_1, window_bounds = array<i64: 1, 4, 4, 16>}]} {
    %c0 = arith.constant 0 : index
    %c0_0 = arith.constant 0 : index
    %c0_1 = arith.constant 0 : index
    %c0_2 = arith.constant 0 : index
    %c0_3 = arith.constant 0 : index
    %0 = vector.load %arg1[%c0, %c0_0, %c0_1, %c0_2, %c0_3] : memref<1x4x5x5x16xbf16, #tpu.memory_space<vmem>>, vector<1x1x4x4x16xbf16>
    %1 = vector.shape_cast %0 : vector<1x1x4x4x16xbf16> to vector<4x4x16xbf16>
    %c0_4 = arith.constant 0 : index
    %c1 = arith.constant 1 : index
    %c0_5 = arith.constant 0 : index
    %c0_6 = arith.constant 0 : index
    %c0_7 = arith.constant 0 : index
    %2 = vector.load %arg1[%c0_4, %c1, %c0_5, %c0_6, %c0_7] : memref<1x4x5x5x16xbf16, #tpu.memory_space<vmem>>, vector<1x1x4x4x16xbf16>
    %3 = vector.shape_cast %2 : vector<1x1x4x4x16xbf16> to vector<4x4x16xbf16>
    %4 = arith.maximumf %1, %3 : vector<4x4x16xbf16>
    %c0_8 = arith.constant 0 : index
    %c0_9 = arith.constant 0 : index
    %c0_10 = arith.constant 0 : index
    %c1_11 = arith.constant 1 : index
    %c0_12 = arith.constant 0 : index
    %5 = vector.load %arg1[%c0_8, %c0_9, %c0_10, %c1_11, %c0_12] : memref<1x4x5x5x16xbf16, #tpu.memory_space<vmem>>, vector<1x1x4x4x16xbf16>
    %6 = vector.shape_cast %5 : vector<1x1x4x4x16xbf16> to vector<4x4x16xbf16>
    %7 = arith.maximumf %4, %6 : vector<4x4x16xbf16>
    %c0_13 = arith.constant 0 : index
    %c2 = arith.constant 2 : index
    %c0_14 = arith.constant 0 : index
    %c0_15 = arith.constant 0 : index
    %c0_16 = arith.constant 0 : index
    %8 = vector.load %arg1[%c0_13, %c2, %c0_14, %c0_15, %c0_16] : memref<1x4x5x5x16xbf16, #tpu.memory_space<vmem>>, vector<1x1x4x4x16xbf16>
    %9 = vector.shape_cast %8 : vector<1x1x4x4x16xbf16> to vector<4x4x16xbf16>
    %10 = arith.maximumf %7, %9 : vector<4x4x16xbf16>
    %c0_17 = arith.constant 0 : index
    %c3 = arith.constant 3 : index
    %c0_18 = arith.constant 0 : index
    %c0_19 = arith.constant 0 : index
    %c0_20 = arith.constant 0 : index
    %11 = vector.load %arg1[%c0_17, %c3, %c0_18, %c0_19, %c0_20] : memref<1x4x5x5x16xbf16, #tpu.memory_space<vmem>>, vector<1x1x4x4x16xbf16>
    %12 = vector.shape_cast %11 : vector<1x1x4x4x16xbf16> to vector<4x4x16xbf16>
    %13 = arith.maximumf %10, %12 : vector<4x4x16xbf16>
    %c0_21 = arith.constant 0 : index
    %c2_22 = arith.constant 2 : index
    %c0_23 = arith.constant 0 : index
    %c1_24 = arith.constant 1 : index
    %c0_25 = arith.constant 0 : index
    %14 = vector.load %arg1[%c0_21, %c2_22, %c0_23, %c1_24, %c0_25] : memref<1x4x5x5x16xbf16, #tpu.memory_space<vmem>>, vector<1x1x4x4x16xbf16>
    %15 = vector.shape_cast %14 : vector<1x1x4x4x16xbf16> to vector<4x4x16xbf16>
    %16 = arith.maximumf %13, %15 : vector<4x4x16xbf16>
    %c0_26 = arith.constant 0 : index
    %c0_27 = arith.constant 0 : index
    %c1_28 = arith.constant 1 : index
    %c0_29 = arith.constant 0 : index
    %c0_30 = arith.constant 0 : index
    %17 = vector.load %arg1[%c0_26, %c0_27, %c1_28, %c0_29, %c0_30] : memref<1x4x5x5x16xbf16, #tpu.memory_space<vmem>>, vector<1x1x4x4x16xbf16>
    %18 = vector.shape_cast %17 : vector<1x1x4x4x16xbf16> to vector<4x4x16xbf16>
    %19 = arith.maximumf %16, %18 : vector<4x4x16xbf16>
    %c0_31 = arith.constant 0 : index
    %c1_32 = arith.constant 1 : index
    %c1_33 = arith.constant 1 : index
    %c0_34 = arith.constant 0 : index
    %c0_35 = arith.constant 0 : index
    %20 = vector.load %arg1[%c0_31, %c1_32, %c1_33, %c0_34, %c0_35] : memref<1x4x5x5x16xbf16, #tpu.memory_space<vmem>>, vector<1x1x4x4x16xbf16>
    %21 = vector.shape_cast %20 : vector<1x1x4x4x16xbf16> to vector<4x4x16xbf16>
    %22 = arith.maximumf %19, %21 : vector<4x4x16xbf16>
    %c0_36 = arith.constant 0 : index
    %c0_37 = arith.constant 0 : index
    %c1_38 = arith.constant 1 : index
    %c1_39 = arith.constant 1 : index
    %c0_40 = arith.constant 0 : index
    %23 = vector.load %arg1[%c0_36, %c0_37, %c1_38, %c1_39, %c0_40] : memref<1x4x5x5x16xbf16, #tpu.memory_space<vmem>>, vector<1x1x4x4x16xbf16>
    %24 = vector.shape_cast %23 : vector<1x1x4x4x16xbf16> to vector<4x4x16xbf16>
    %25 = arith.maximumf %22, %24 : vector<4x4x16xbf16>
    %c0_41 = arith.constant 0 : index
    %c0_42 = arith.constant 0 : index
    %c0_43 = arith.constant 0 : index
    %c0_44 = arith.constant 0 : index
    %26 = vector.load %arg2[%c0_41, %c0_42, %c0_43, %c0_44] : memref<1x4x4x16xbf16, #tpu.memory_space<vmem>>, vector<1x4x4x16xbf16>
    %27 = vector.shape_cast %26 : vector<1x4x4x16xbf16> to vector<4x4x16xbf16>
    %28 = vector.shape_cast %25 : vector<4x4x16xbf16> to vector<1x4x4x16xbf16>
    tpu.vector_store %arg2[%c0_41, %c0_42, %c0_43, %c0_44], %28 {strides = array<i32>} : memref<1x4x4x16xbf16, #tpu.memory_space<vmem>>, vector<1x4x4x16xbf16>,
    return
  }
  func.func @transform_0(%arg0: i32) -> (i32, i32, i32, i32, i32) {
    %c0_i32 = arith.constant 0 : i32
    %c0_i32_0 = arith.constant 0 : i32
    %c0_i32_1 = arith.constant 0 : i32
    %c0_i32_2 = arith.constant 0 : i32
    %c0_i32_3 = arith.constant 0 : i32
    return %arg0, %c0_i32, %c0_i32_0, %c0_i32_1, %c0_i32_2 : i32, i32, i32, i32, i32
  }
  func.func @transform_1(%arg0: i32) -> (i32, i32, i32, i32) {
    %c0_i32 = arith.constant 0 : i32
    %c0_i32_0 = arith.constant 0 : i32
    %c0_i32_1 = arith.constant 0 : i32
    %c0_i32_2 = arith.constant 0 : i32
    return %arg0, %c0_i32, %c0_i32_0, %c0_i32_1 : i32, i32, i32, i32
  }
}

module attributes {stable_mosaic.version = 11 : i64} {
  func.func @_conv_kernel(%arg0: i32, %arg1: i32, %arg2: memref<1x6x6x16xbf16, #tpu.memory_space<vmem>>, %arg3: memref<9x16x128xbf16, #tpu.memory_space<vmem>>, %arg4: memref<1x128xf32, #tpu.memory_space<vmem>>, %arg5: memref<1x4x4x128xbf16, #tpu.memory_space<vmem>>) attributes {dimension_semantics = [#tpu.dimension_semantics<parallel>, #tpu.dimension_semantics<parallel>], iteration_bounds = array<i64: 2, 1>, scalar_prefetch = 0 : i64, scratch_operands = 0 : i64, tpu.core_type = #tpu.core_type<tc>, window_params = [{transform_indices = @transform_0, window_bounds = array<i64: 1, 6, 6, 16>}, {transform_indices = @transform_1, window_bounds = array<i64: 9, 16, 128>}, {transform_indices = @transform_2, window_bounds = array<i64: 1, 128>}, {transform_indices = @transform_3, window_bounds = array<i64: 1, 4, 4, 128>}]} {
    %c0_i32 = arith.constant 0 : i32
    %c4_i32 = arith.constant 4 : i32
    %0 = arith.addi %c0_i32, %c4_i32 : i32
    %c1_i32 = arith.constant 1 : i32
    scf.for %arg6 = %c0_i32 to %0 step %c1_i32  : i32 {
      %cst = arith.constant 0.000000e+00 : f32
      %1 = vector.broadcast %cst : f32 to vector<4x128xf32>
      %c0_i32_1 = arith.constant 0 : i32
      %2 = arith.addi %arg6, %c0_i32_1 : i32
      %c0 = arith.constant 0 : index
      %3 = arith.index_cast %2 : i32 to index
      %c0_2 = arith.constant 0 : index
      %c0_3 = arith.constant 0 : index
      %4 = vector.load %arg2[%c0, %3, %c0_2, %c0_3] : memref<1x6x6x16xbf16, #tpu.memory_space<vmem>>, vector<1x1x4x16xbf16>
      %5 = vector.shape_cast %4 : vector<1x1x4x16xbf16> to vector<4x16xbf16>
      %c0_4 = arith.constant 0 : index
      %c0_5 = arith.constant 0 : index
      %c0_6 = arith.constant 0 : index
      %6 = vector.load %arg3[%c0_4, %c0_5, %c0_6] : memref<9x16x128xbf16, #tpu.memory_space<vmem>>, vector<1x16x128xbf16>
      %7 = vector.shape_cast %6 : vector<1x16x128xbf16> to vector<16x128xbf16>
      %cst_7 = arith.constant dense<0.000000e+00> : vector<4x128xf32>
      %8 = tpu.matmul %5, %7, %cst_7 {dimension_numbers = #tpu.dot_dimension_numbers<[1], [0], [0], [1], [0, 0, 1, 1], [], []>} : vector<4x16xbf16>, vector<16x128xbf16>, vector<4x128xf32> -> vector<4x128xf32>
      %9 = arith.addf %1, %8 : vector<4x128xf32>
      %c0_i32_8 = arith.constant 0 : i32
      %10 = arith.addi %arg6, %c0_i32_8 : i32
      %c0_9 = arith.constant 0 : index
      %11 = arith.index_cast %10 : i32 to index
      %c1 = arith.constant 1 : index
      %c0_10 = arith.constant 0 : index
      %12 = vector.load %arg2[%c0_9, %11, %c1, %c0_10] : memref<1x6x6x16xbf16, #tpu.memory_space<vmem>>, vector<1x1x4x16xbf16>
      %13 = vector.shape_cast %12 : vector<1x1x4x16xbf16> to vector<4x16xbf16>
      %c1_11 = arith.constant 1 : index
      %c0_12 = arith.constant 0 : index
      %c0_13 = arith.constant 0 : index
      %14 = vector.load %arg3[%c1_11, %c0_12, %c0_13] : memref<9x16x128xbf16, #tpu.memory_space<vmem>>, vector<1x16x128xbf16>
      %15 = vector.shape_cast %14 : vector<1x16x128xbf16> to vector<16x128xbf16>
      %cst_14 = arith.constant dense<0.000000e+00> : vector<4x128xf32>
      %16 = tpu.matmul %13, %15, %cst_14 {dimension_numbers = #tpu.dot_dimension_numbers<[1], [0], [0], [1], [0, 0, 1, 1], [], []>} : vector<4x16xbf16>, vector<16x128xbf16>, vector<4x128xf32> -> vector<4x128xf32>
      %17 = arith.addf %9, %16 : vector<4x128xf32>
      %c0_i32_15 = arith.constant 0 : i32
      %18 = arith.addi %arg6, %c0_i32_15 : i32
      %c0_16 = arith.constant 0 : index
      %19 = arith.index_cast %18 : i32 to index
      %c2 = arith.constant 2 : index
      %c0_17 = arith.constant 0 : index
      %20 = vector.load %arg2[%c0_16, %19, %c2, %c0_17] : memref<1x6x6x16xbf16, #tpu.memory_space<vmem>>, vector<1x1x4x16xbf16>
      %21 = vector.shape_cast %20 : vector<1x1x4x16xbf16> to vector<4x16xbf16>
      %c2_18 = arith.constant 2 : index
      %c0_19 = arith.constant 0 : index
      %c0_20 = arith.constant 0 : index
      %22 = vector.load %arg3[%c2_18, %c0_19, %c0_20] : memref<9x16x128xbf16, #tpu.memory_space<vmem>>, vector<1x16x128xbf16>
      %23 = vector.shape_cast %22 : vector<1x16x128xbf16> to vector<16x128xbf16>
      %cst_21 = arith.constant dense<0.000000e+00> : vector<4x128xf32>
      %24 = tpu.matmul %21, %23, %cst_21 {dimension_numbers = #tpu.dot_dimension_numbers<[1], [0], [0], [1], [0, 0, 1, 1], [], []>} : vector<4x16xbf16>, vector<16x128xbf16>, vector<4x128xf32> -> vector<4x128xf32>
      %25 = arith.addf %17, %24 : vector<4x128xf32>
      %c1_i32_22 = arith.constant 1 : i32
      %26 = arith.addi %arg6, %c1_i32_22 : i32
      %c0_23 = arith.constant 0 : index
      %27 = arith.index_cast %26 : i32 to index
      %c0_24 = arith.constant 0 : index
      %c0_25 = arith.constant 0 : index
      %28 = vector.load %arg2[%c0_23, %27, %c0_24, %c0_25] : memref<1x6x6x16xbf16, #tpu.memory_space<vmem>>, vector<1x1x4x16xbf16>
      %29 = vector.shape_cast %28 : vector<1x1x4x16xbf16> to vector<4x16xbf16>
      %c3 = arith.constant 3 : index
      %c0_26 = arith.constant 0 : index
      %c0_27 = arith.constant 0 : index
      %30 = vector.load %arg3[%c3, %c0_26, %c0_27] : memref<9x16x128xbf16, #tpu.memory_space<vmem>>, vector<1x16x128xbf16>
      %31 = vector.shape_cast %30 : vector<1x16x128xbf16> to vector<16x128xbf16>
      %cst_28 = arith.constant dense<0.000000e+00> : vector<4x128xf32>
      %32 = tpu.matmul %29, %31, %cst_28 {dimension_numbers = #tpu.dot_dimension_numbers<[1], [0], [0], [1], [0, 0, 1, 1], [], []>} : vector<4x16xbf16>, vector<16x128xbf16>, vector<4x128xf32> -> vector<4x128xf32>
      %33 = arith.addf %25, %32 : vector<4x128xf32>
      %c1_i32_29 = arith.constant 1 : i32
      %34 = arith.addi %arg6, %c1_i32_29 : i32
      %c0_30 = arith.constant 0 : index
      %35 = arith.index_cast %34 : i32 to index
      %c1_31 = arith.constant 1 : index
      %c0_32 = arith.constant 0 : index
      %36 = vector.load %arg2[%c0_30, %35, %c1_31, %c0_32] : memref<1x6x6x16xbf16, #tpu.memory_space<vmem>>, vector<1x1x4x16xbf16>
      %37 = vector.shape_cast %36 : vector<1x1x4x16xbf16> to vector<4x16xbf16>
      %c4 = arith.constant 4 : index
      %c0_33 = arith.constant 0 : index
      %c0_34 = arith.constant 0 : index
      %38 = vector.load %arg3[%c4, %c0_33, %c0_34] : memref<9x16x128xbf16, #tpu.memory_space<vmem>>, vector<1x16x128xbf16>
      %39 = vector.shape_cast %38 : vector<1x16x128xbf16> to vector<16x128xbf16>
      %cst_35 = arith.constant dense<0.000000e+00> : vector<4x128xf32>
      %40 = tpu.matmul %37, %39, %cst_35 {dimension_numbers = #tpu.dot_dimension_numbers<[1], [0], [0], [1], [0, 0, 1, 1], [], []>} : vector<4x16xbf16>, vector<16x128xbf16>, vector<4x128xf32> -> vector<4x128xf32>
      %41 = arith.addf %33, %40 : vector<4x128xf32>
      %c1_i32_36 = arith.constant 1 : i32
      %42 = arith.addi %arg6, %c1_i32_36 : i32
      %c0_37 = arith.constant 0 : index
      %43 = arith.index_cast %42 : i32 to index
      %c2_38 = arith.constant 2 : index
      %c0_39 = arith.constant 0 : index
      %44 = vector.load %arg2[%c0_37, %43, %c2_38, %c0_39] : memref<1x6x6x16xbf16, #tpu.memory_space<vmem>>, vector<1x1x4x16xbf16>
      %45 = vector.shape_cast %44 : vector<1x1x4x16xbf16> to vector<4x16xbf16>
      %c5 = arith.constant 5 : index
      %c0_40 = arith.constant 0 : index
      %c0_41 = arith.constant 0 : index
      %46 = vector.load %arg3[%c5, %c0_40, %c0_41] : memref<9x16x128xbf16, #tpu.memory_space<vmem>>, vector<1x16x128xbf16>
      %47 = vector.shape_cast %46 : vector<1x16x128xbf16> to vector<16x128xbf16>
      %cst_42 = arith.constant dense<0.000000e+00> : vector<4x128xf32>
      %48 = tpu.matmul %45, %47, %cst_42 {dimension_numbers = #tpu.dot_dimension_numbers<[1], [0], [0], [1], [0, 0, 1, 1], [], []>} : vector<4x16xbf16>, vector<16x128xbf16>, vector<4x128xf32> -> vector<4x128xf32>
      %49 = arith.addf %41, %48 : vector<4x128xf32>
      %c2_i32 = arith.constant 2 : i32
      %50 = arith.addi %arg6, %c2_i32 : i32
      %c0_43 = arith.constant 0 : index
      %51 = arith.index_cast %50 : i32 to index
      %c0_44 = arith.constant 0 : index
      %c0_45 = arith.constant 0 : index
      %52 = vector.load %arg2[%c0_43, %51, %c0_44, %c0_45] : memref<1x6x6x16xbf16, #tpu.memory_space<vmem>>, vector<1x1x4x16xbf16>
      %53 = vector.shape_cast %52 : vector<1x1x4x16xbf16> to vector<4x16xbf16>
      %c6 = arith.constant 6 : index
      %c0_46 = arith.constant 0 : index
      %c0_47 = arith.constant 0 : index
      %54 = vector.load %arg3[%c6, %c0_46, %c0_47] : memref<9x16x128xbf16, #tpu.memory_space<vmem>>, vector<1x16x128xbf16>
      %55 = vector.shape_cast %54 : vector<1x16x128xbf16> to vector<16x128xbf16>
      %cst_48 = arith.constant dense<0.000000e+00> : vector<4x128xf32>
      %56 = tpu.matmul %53, %55, %cst_48 {dimension_numbers = #tpu.dot_dimension_numbers<[1], [0], [0], [1], [0, 0, 1, 1], [], []>} : vector<4x16xbf16>, vector<16x128xbf16>, vector<4x128xf32> -> vector<4x128xf32>
      %57 = arith.addf %49, %56 : vector<4x128xf32>
      %c2_i32_49 = arith.constant 2 : i32
      %58 = arith.addi %arg6, %c2_i32_49 : i32
      %c0_50 = arith.constant 0 : index
      %59 = arith.index_cast %58 : i32 to index
      %c1_51 = arith.constant 1 : index
      %c0_52 = arith.constant 0 : index
      %60 = vector.load %arg2[%c0_50, %59, %c1_51, %c0_52] : memref<1x6x6x16xbf16, #tpu.memory_space<vmem>>, vector<1x1x4x16xbf16>
      %61 = vector.shape_cast %60 : vector<1x1x4x16xbf16> to vector<4x16xbf16>
      %c7 = arith.constant 7 : index
      %c0_53 = arith.constant 0 : index
      %c0_54 = arith.constant 0 : index
      %62 = vector.load %arg3[%c7, %c0_53, %c0_54] : memref<9x16x128xbf16, #tpu.memory_space<vmem>>, vector<1x16x128xbf16>
      %63 = vector.shape_cast %62 : vector<1x16x128xbf16> to vector<16x128xbf16>
      %cst_55 = arith.constant dense<0.000000e+00> : vector<4x128xf32>
      %64 = tpu.matmul %61, %63, %cst_55 {dimension_numbers = #tpu.dot_dimension_numbers<[1], [0], [0], [1], [0, 0, 1, 1], [], []>} : vector<4x16xbf16>, vector<16x128xbf16>, vector<4x128xf32> -> vector<4x128xf32>
      %65 = arith.addf %57, %64 : vector<4x128xf32>
      %c2_i32_56 = arith.constant 2 : i32
      %66 = arith.addi %arg6, %c2_i32_56 : i32
      %c0_57 = arith.constant 0 : index
      %67 = arith.index_cast %66 : i32 to index
      %c2_58 = arith.constant 2 : index
      %c0_59 = arith.constant 0 : index
      %68 = vector.load %arg2[%c0_57, %67, %c2_58, %c0_59] : memref<1x6x6x16xbf16, #tpu.memory_space<vmem>>, vector<1x1x4x16xbf16>
      %69 = vector.shape_cast %68 : vector<1x1x4x16xbf16> to vector<4x16xbf16>
      %c8 = arith.constant 8 : index
      %c0_60 = arith.constant 0 : index
      %c0_61 = arith.constant 0 : index
      %70 = vector.load %arg3[%c8, %c0_60, %c0_61] : memref<9x16x128xbf16, #tpu.memory_space<vmem>>, vector<1x16x128xbf16>
      %71 = vector.shape_cast %70 : vector<1x16x128xbf16> to vector<16x128xbf16>
      %cst_62 = arith.constant dense<0.000000e+00> : vector<4x128xf32>
      %72 = tpu.matmul %69, %71, %cst_62 {dimension_numbers = #tpu.dot_dimension_numbers<[1], [0], [0], [1], [0, 0, 1, 1], [], []>} : vector<4x16xbf16>, vector<16x128xbf16>, vector<4x128xf32> -> vector<4x128xf32>
      %73 = arith.addf %65, %72 : vector<4x128xf32>
      %c0_63 = arith.constant 0 : index
      %c0_64 = arith.constant 0 : index
      %74 = vector.load %arg4[%c0_63, %c0_64] : memref<1x128xf32, #tpu.memory_space<vmem>>, vector<1x128xf32>
      %75 = vector.broadcast %74 : vector<1x128xf32> to vector<4x128xf32>
      %76 = arith.addf %73, %75 : vector<4x128xf32>
      %cst_65 = arith.constant 0.000000e+00 : f32
      %77 = vector.broadcast %cst_65 : f32 to vector<4x128xf32>
      %78 = arith.maximumf %76, %77 : vector<4x128xf32>
      %79 = arith.truncf %78 : vector<4x128xf32> to vector<4x128xbf16>
      %c0_66 = arith.constant 0 : index
      %80 = arith.index_cast %arg6 : i32 to index
      %c0_67 = arith.constant 0 : index
      %c0_68 = arith.constant 0 : index
      %81 = vector.load %arg5[%c0_66, %80, %c0_67, %c0_68] : memref<1x4x4x128xbf16, #tpu.memory_space<vmem>>, vector<1x1x4x128xbf16>
      %82 = vector.shape_cast %81 : vector<1x1x4x128xbf16> to vector<4x128xbf16>
      %83 = vector.shape_cast %79 : vector<4x128xbf16> to vector<1x1x4x128xbf16>
      tpu.vector_store %arg5[%c0_66, %80, %c0_67, %c0_68], %83 {strides = array<i32>} : memref<1x4x4x128xbf16, #tpu.memory_space<vmem>>, vector<1x1x4x128xbf16>,
    }
    %c4_i32_0 = arith.constant 4 : i32
    return
  }
  func.func @transform_0(%arg0: i32, %arg1: i32) -> (i32, i32, i32, i32) {
    %c0_i32 = arith.constant 0 : i32
    %c0_i32_0 = arith.constant 0 : i32
    %c0_i32_1 = arith.constant 0 : i32
    %c0_i32_2 = arith.constant 0 : i32
    return %arg0, %c0_i32, %c0_i32_0, %c0_i32_1 : i32, i32, i32, i32
  }
  func.func @transform_1(%arg0: i32, %arg1: i32) -> (i32, i32, i32) {
    %c0_i32 = arith.constant 0 : i32
    %c0_i32_0 = arith.constant 0 : i32
    %c0_i32_1 = arith.constant 0 : i32
    return %c0_i32, %c0_i32_0, %arg1 : i32, i32, i32
  }
  func.func @transform_2(%arg0: i32, %arg1: i32) -> (i32, i32) {
    %c0_i32 = arith.constant 0 : i32
    %c0_i32_0 = arith.constant 0 : i32
    return %c0_i32, %arg1 : i32, i32
  }
  func.func @transform_3(%arg0: i32, %arg1: i32) -> (i32, i32, i32, i32) {
    %c0_i32 = arith.constant 0 : i32
    %c0_i32_0 = arith.constant 0 : i32
    %c0_i32_1 = arith.constant 0 : i32
    return %arg0, %c0_i32, %c0_i32_0, %arg1 : i32, i32, i32, i32
  }
}

module attributes {stable_mosaic.version = 11 : i64} {
  func.func @_mm_kernel(%arg0: i32, %arg1: i32, %arg2: i32, %arg3: memref<32x128xbf16, #tpu.memory_space<vmem>>, %arg4: memref<128x128xbf16, #tpu.memory_space<vmem>>, %arg5: memref<1x128xf32, #tpu.memory_space<vmem>>, %arg6: memref<32x128xbf16, #tpu.memory_space<vmem>>, %arg7: memref<32x128xf32, #tpu.memory_space<vmem>>) attributes {dimension_semantics = [#tpu.dimension_semantics<parallel>, #tpu.dimension_semantics<parallel>, #tpu.dimension_semantics<arbitrary>], iteration_bounds = array<i64: 1, 1, 1>, scalar_prefetch = 0 : i64, scratch_operands = 1 : i64, tpu.core_type = #tpu.core_type<tc>, window_params = [{transform_indices = @transform_0, window_bounds = array<i64: 32, 128>}, {transform_indices = @transform_1, window_bounds = array<i64: 128, 128>}, {transform_indices = @transform_2, window_bounds = array<i64: 1, 128>}, {transform_indices = @transform_3, window_bounds = array<i64: 32, 128>}]} {
    %c0_i32 = arith.constant 0 : i32
    %0 = arith.cmpi eq, %arg2, %c0_i32 : i32
    %1 = arith.extui %0 : i1 to i32
    %c0_i32_0 = arith.constant 0 : i32
    %2 = arith.cmpi ne, %1, %c0_i32_0 : i32
    scf.if %2 {
      %cst_10 = arith.constant 0.000000e+00 : f32
      %12 = vector.broadcast %cst_10 : f32 to vector<32x128xf32>
      %c0_11 = arith.constant 0 : index
      %c0_12 = arith.constant 0 : index
      %13 = vector.load %arg7[%c0_11, %c0_12] : memref<32x128xf32, #tpu.memory_space<vmem>>, vector<32x128xf32>
      tpu.vector_store %arg7[%c0_11, %c0_12], %12 {strides = array<i32>} : memref<32x128xf32, #tpu.memory_space<vmem>>, vector<32x128xf32>,
    } else {
    }
    %c0 = arith.constant 0 : index
    %c0_1 = arith.constant 0 : index
    %3 = vector.load %arg7[%c0, %c0_1] : memref<32x128xf32, #tpu.memory_space<vmem>>, vector<32x128xf32>
    %c0_2 = arith.constant 0 : index
    %c0_3 = arith.constant 0 : index
    %4 = vector.load %arg3[%c0_2, %c0_3] : memref<32x128xbf16, #tpu.memory_space<vmem>>, vector<32x128xbf16>
    %c0_4 = arith.constant 0 : index
    %c0_5 = arith.constant 0 : index
    %5 = vector.load %arg4[%c0_4, %c0_5] : memref<128x128xbf16, #tpu.memory_space<vmem>>, vector<128x128xbf16>
    %cst = arith.constant dense<0.000000e+00> : vector<32x128xf32>
    %6 = tpu.matmul %4, %5, %cst {dimension_numbers = #tpu.dot_dimension_numbers<[1], [0], [0], [1], [0, 0, 1, 1], [], []>} : vector<32x128xbf16>, vector<128x128xbf16>, vector<32x128xf32> -> vector<32x128xf32>
    %7 = arith.addf %3, %6 : vector<32x128xf32>
    %c0_6 = arith.constant 0 : index
    %c0_7 = arith.constant 0 : index
    %8 = vector.load %arg7[%c0_6, %c0_7] : memref<32x128xf32, #tpu.memory_space<vmem>>, vector<32x128xf32>
    tpu.vector_store %arg7[%c0_6, %c0_7], %7 {strides = array<i32>} : memref<32x128xf32, #tpu.memory_space<vmem>>, vector<32x128xf32>,
    %c0_i32_8 = arith.constant 0 : i32
    %9 = arith.cmpi eq, %arg2, %c0_i32_8 : i32
    %10 = arith.extui %9 : i1 to i32
    %c0_i32_9 = arith.constant 0 : i32
    %11 = arith.cmpi ne, %10, %c0_i32_9 : i32
    scf.if %11 {
      %c0_10 = arith.constant 0 : index
      %c0_11 = arith.constant 0 : index
      %12 = vector.load %arg7[%c0_10, %c0_11] : memref<32x128xf32, #tpu.memory_space<vmem>>, vector<32x128xf32>
      %c0_12 = arith.constant 0 : index
      %c0_13 = arith.constant 0 : index
      %13 = vector.load %arg5[%c0_12, %c0_13] : memref<1x128xf32, #tpu.memory_space<vmem>>, vector<1x128xf32>
      %14 = vector.broadcast %13 : vector<1x128xf32> to vector<32x128xf32>
      %15 = arith.addf %12, %14 : vector<32x128xf32>
      %16 = arith.truncf %15 : vector<32x128xf32> to vector<32x128xbf16>
      %c0_14 = arith.constant 0 : index
      %c0_15 = arith.constant 0 : index
      %17 = vector.load %arg6[%c0_14, %c0_15] : memref<32x128xbf16, #tpu.memory_space<vmem>>, vector<32x128xbf16>
      tpu.vector_store %arg6[%c0_14, %c0_15], %16 {strides = array<i32>} : memref<32x128xbf16, #tpu.memory_space<vmem>>, vector<32x128xbf16>,
    } else {
    }
    return
  }
  func.func @transform_0(%arg0: i32, %arg1: i32, %arg2: i32) -> (i32, i32) {
    %c0_i32 = arith.constant 0 : i32
    return %arg1, %arg2 : i32, i32
  }
  func.func @transform_1(%arg0: i32, %arg1: i32, %arg2: i32) -> (i32, i32) {
    %c0_i32 = arith.constant 0 : i32
    return %arg2, %arg0 : i32, i32
  }
  func.func @transform_2(%arg0: i32, %arg1: i32, %arg2: i32) -> (i32, i32) {
    %c0_i32 = arith.constant 0 : i32
    %c0_i32_0 = arith.constant 0 : i32
    return %c0_i32, %arg0 : i32, i32
  }
  func.func @transform_3(%arg0: i32, %arg1: i32, %arg2: i32) -> (i32, i32) {
    %c0_i32 = arith.constant 0 : i32
    return %arg1, %arg0 : i32, i32
  }
}

module attributes {stable_mosaic.version = 11 : i64} {
  func.func @_mm_res_kernel(%arg0: i32, %arg1: i32, %arg2: i32, %arg3: memref<32x128xbf16, #tpu.memory_space<vmem>>, %arg4: memref<128x128xbf16, #tpu.memory_space<vmem>>, %arg5: memref<1x128xf32, #tpu.memory_space<vmem>>, %arg6: memref<32x128xbf16, #tpu.memory_space<vmem>>, %arg7: memref<32x128xbf16, #tpu.memory_space<vmem>>, %arg8: memref<32x128xf32, #tpu.memory_space<vmem>>) attributes {dimension_semantics = [#tpu.dimension_semantics<parallel>, #tpu.dimension_semantics<parallel>, #tpu.dimension_semantics<arbitrary>], iteration_bounds = array<i64: 1, 1, 1>, scalar_prefetch = 0 : i64, scratch_operands = 1 : i64, tpu.core_type = #tpu.core_type<tc>, window_params = [{transform_indices = @transform_0, window_bounds = array<i64: 32, 128>}, {transform_indices = @transform_1, window_bounds = array<i64: 128, 128>}, {transform_indices = @transform_2, window_bounds = array<i64: 1, 128>}, {transform_indices = @transform_3, window_bounds = array<i64: 32, 128>}, {transform_indices = @transform_4, window_bounds = array<i64: 32, 128>}]} {
    %c0_i32 = arith.constant 0 : i32
    %0 = arith.cmpi eq, %arg2, %c0_i32 : i32
    %1 = arith.extui %0 : i1 to i32
    %c0_i32_0 = arith.constant 0 : i32
    %2 = arith.cmpi ne, %1, %c0_i32_0 : i32
    scf.if %2 {
      %cst_10 = arith.constant 0.000000e+00 : f32
      %12 = vector.broadcast %cst_10 : f32 to vector<32x128xf32>
      %c0_11 = arith.constant 0 : index
      %c0_12 = arith.constant 0 : index
      %13 = vector.load %arg8[%c0_11, %c0_12] : memref<32x128xf32, #tpu.memory_space<vmem>>, vector<32x128xf32>
      tpu.vector_store %arg8[%c0_11, %c0_12], %12 {strides = array<i32>} : memref<32x128xf32, #tpu.memory_space<vmem>>, vector<32x128xf32>,
    } else {
    }
    %c0 = arith.constant 0 : index
    %c0_1 = arith.constant 0 : index
    %3 = vector.load %arg8[%c0, %c0_1] : memref<32x128xf32, #tpu.memory_space<vmem>>, vector<32x128xf32>
    %c0_2 = arith.constant 0 : index
    %c0_3 = arith.constant 0 : index
    %4 = vector.load %arg3[%c0_2, %c0_3] : memref<32x128xbf16, #tpu.memory_space<vmem>>, vector<32x128xbf16>
    %c0_4 = arith.constant 0 : index
    %c0_5 = arith.constant 0 : index
    %5 = vector.load %arg4[%c0_4, %c0_5] : memref<128x128xbf16, #tpu.memory_space<vmem>>, vector<128x128xbf16>
    %cst = arith.constant dense<0.000000e+00> : vector<32x128xf32>
    %6 = tpu.matmul %4, %5, %cst {dimension_numbers = #tpu.dot_dimension_numbers<[1], [0], [0], [1], [0, 0, 1, 1], [], []>} : vector<32x128xbf16>, vector<128x128xbf16>, vector<32x128xf32> -> vector<32x128xf32>
    %7 = arith.addf %3, %6 : vector<32x128xf32>
    %c0_6 = arith.constant 0 : index
    %c0_7 = arith.constant 0 : index
    %8 = vector.load %arg8[%c0_6, %c0_7] : memref<32x128xf32, #tpu.memory_space<vmem>>, vector<32x128xf32>
    tpu.vector_store %arg8[%c0_6, %c0_7], %7 {strides = array<i32>} : memref<32x128xf32, #tpu.memory_space<vmem>>, vector<32x128xf32>,
    %c0_i32_8 = arith.constant 0 : i32
    %9 = arith.cmpi eq, %arg2, %c0_i32_8 : i32
    %10 = arith.extui %9 : i1 to i32
    %c0_i32_9 = arith.constant 0 : i32
    %11 = arith.cmpi ne, %10, %c0_i32_9 : i32
    scf.if %11 {
      %c0_10 = arith.constant 0 : index
      %c0_11 = arith.constant 0 : index
      %12 = vector.load %arg8[%c0_10, %c0_11] : memref<32x128xf32, #tpu.memory_space<vmem>>, vector<32x128xf32>
      %c0_12 = arith.constant 0 : index
      %c0_13 = arith.constant 0 : index
      %13 = vector.load %arg5[%c0_12, %c0_13] : memref<1x128xf32, #tpu.memory_space<vmem>>, vector<1x128xf32>
      %14 = vector.broadcast %13 : vector<1x128xf32> to vector<32x128xf32>
      %15 = arith.addf %12, %14 : vector<32x128xf32>
      %c0_14 = arith.constant 0 : index
      %c0_15 = arith.constant 0 : index
      %16 = vector.load %arg6[%c0_14, %c0_15] : memref<32x128xbf16, #tpu.memory_space<vmem>>, vector<32x128xbf16>
      %17 = arith.extf %16 : vector<32x128xbf16> to vector<32x128xf32>
      %18 = arith.addf %15, %17 : vector<32x128xf32>
      %cst_16 = arith.constant 0.000000e+00 : f32
      %19 = vector.broadcast %cst_16 : f32 to vector<32x128xf32>
      %20 = arith.maximumf %18, %19 : vector<32x128xf32>
      %21 = arith.truncf %20 : vector<32x128xf32> to vector<32x128xbf16>
      %c0_17 = arith.constant 0 : index
      %c0_18 = arith.constant 0 : index
      %22 = vector.load %arg7[%c0_17, %c0_18] : memref<32x128xbf16, #tpu.memory_space<vmem>>, vector<32x128xbf16>
      tpu.vector_store %arg7[%c0_17, %c0_18], %21 {strides = array<i32>} : memref<32x128xbf16, #tpu.memory_space<vmem>>, vector<32x128xbf16>,
    } else {
    }
    return
  }
  func.func @transform_0(%arg0: i32, %arg1: i32, %arg2: i32) -> (i32, i32) {
    %c0_i32 = arith.constant 0 : i32
    return %arg1, %arg2 : i32, i32
  }
  func.func @transform_1(%arg0: i32, %arg1: i32, %arg2: i32) -> (i32, i32) {
    %c0_i32 = arith.constant 0 : i32
    return %arg2, %arg0 : i32, i32
  }
  func.func @transform_2(%arg0: i32, %arg1: i32, %arg2: i32) -> (i32, i32) {
    %c0_i32 = arith.constant 0 : i32
    %c0_i32_0 = arith.constant 0 : i32
    return %c0_i32, %arg0 : i32, i32
  }
  func.func @transform_3(%arg0: i32, %arg1: i32, %arg2: i32) -> (i32, i32) {
    %c0_i32 = arith.constant 0 : i32
    return %arg1, %arg0 : i32, i32
  }
  func.func @transform_4(%arg0: i32, %arg1: i32, %arg2: i32) -> (i32, i32) {
    %c0_i32 = arith.constant 0 : i32
    return %arg1, %arg0 : i32, i32
  }
}

module attributes {stable_mosaic.version = 11 : i64} {
  func.func @_conv_kernel(%arg0: i32, %arg1: i32, %arg2: memref<1x3x3x128xbf16, #tpu.memory_space<vmem>>, %arg3: memref<4x128x128xbf16, #tpu.memory_space<vmem>>, %arg4: memref<1x128xf32, #tpu.memory_space<vmem>>, %arg5: memref<1x2x2x128xbf16, #tpu.memory_space<vmem>>) attributes {dimension_semantics = [#tpu.dimension_semantics<parallel>, #tpu.dimension_semantics<parallel>], iteration_bounds = array<i64: 2, 1>, scalar_prefetch = 0 : i64, scratch_operands = 0 : i64, tpu.core_type = #tpu.core_type<tc>, window_params = [{transform_indices = @transform_0, window_bounds = array<i64: 1, 3, 3, 128>}, {transform_indices = @transform_1, window_bounds = array<i64: 4, 128, 128>}, {transform_indices = @transform_2, window_bounds = array<i64: 1, 128>}, {transform_indices = @transform_3, window_bounds = array<i64: 1, 2, 2, 128>}]} {
    %c0_i32 = arith.constant 0 : i32
    %c2_i32 = arith.constant 2 : i32
    %0 = arith.addi %c0_i32, %c2_i32 : i32
    %c1_i32 = arith.constant 1 : i32
    scf.for %arg6 = %c0_i32 to %0 step %c1_i32  : i32 {
      %cst = arith.constant 0.000000e+00 : f32
      %1 = vector.broadcast %cst : f32 to vector<2x128xf32>
      %c0_i32_1 = arith.constant 0 : i32
      %2 = arith.addi %arg6, %c0_i32_1 : i32
      %c0 = arith.constant 0 : index
      %3 = arith.index_cast %2 : i32 to index
      %c0_2 = arith.constant 0 : index
      %c0_3 = arith.constant 0 : index
      %4 = vector.load %arg2[%c0, %3, %c0_2, %c0_3] : memref<1x3x3x128xbf16, #tpu.memory_space<vmem>>, vector<1x1x2x128xbf16>
      %5 = vector.shape_cast %4 : vector<1x1x2x128xbf16> to vector<2x128xbf16>
      %c0_4 = arith.constant 0 : index
      %c0_5 = arith.constant 0 : index
      %c0_6 = arith.constant 0 : index
      %6 = vector.load %arg3[%c0_4, %c0_5, %c0_6] : memref<4x128x128xbf16, #tpu.memory_space<vmem>>, vector<1x128x128xbf16>
      %7 = vector.shape_cast %6 : vector<1x128x128xbf16> to vector<128x128xbf16>
      %cst_7 = arith.constant dense<0.000000e+00> : vector<2x128xf32>
      %8 = tpu.matmul %5, %7, %cst_7 {dimension_numbers = #tpu.dot_dimension_numbers<[1], [0], [0], [1], [0, 0, 1, 1], [], []>} : vector<2x128xbf16>, vector<128x128xbf16>, vector<2x128xf32> -> vector<2x128xf32>
      %9 = arith.addf %1, %8 : vector<2x128xf32>
      %c0_i32_8 = arith.constant 0 : i32
      %10 = arith.addi %arg6, %c0_i32_8 : i32
      %c0_9 = arith.constant 0 : index
      %11 = arith.index_cast %10 : i32 to index
      %c1 = arith.constant 1 : index
      %c0_10 = arith.constant 0 : index
      %12 = vector.load %arg2[%c0_9, %11, %c1, %c0_10] : memref<1x3x3x128xbf16, #tpu.memory_space<vmem>>, vector<1x1x2x128xbf16>
      %13 = vector.shape_cast %12 : vector<1x1x2x128xbf16> to vector<2x128xbf16>
      %c1_11 = arith.constant 1 : index
      %c0_12 = arith.constant 0 : index
      %c0_13 = arith.constant 0 : index
      %14 = vector.load %arg3[%c1_11, %c0_12, %c0_13] : memref<4x128x128xbf16, #tpu.memory_space<vmem>>, vector<1x128x128xbf16>
      %15 = vector.shape_cast %14 : vector<1x128x128xbf16> to vector<128x128xbf16>
      %cst_14 = arith.constant dense<0.000000e+00> : vector<2x128xf32>
      %16 = tpu.matmul %13, %15, %cst_14 {dimension_numbers = #tpu.dot_dimension_numbers<[1], [0], [0], [1], [0, 0, 1, 1], [], []>} : vector<2x128xbf16>, vector<128x128xbf16>, vector<2x128xf32> -> vector<2x128xf32>
      %17 = arith.addf %9, %16 : vector<2x128xf32>
      %c1_i32_15 = arith.constant 1 : i32
      %18 = arith.addi %arg6, %c1_i32_15 : i32
      %c0_16 = arith.constant 0 : index
      %19 = arith.index_cast %18 : i32 to index
      %c0_17 = arith.constant 0 : index
      %c0_18 = arith.constant 0 : index
      %20 = vector.load %arg2[%c0_16, %19, %c0_17, %c0_18] : memref<1x3x3x128xbf16, #tpu.memory_space<vmem>>, vector<1x1x2x128xbf16>
      %21 = vector.shape_cast %20 : vector<1x1x2x128xbf16> to vector<2x128xbf16>
      %c2 = arith.constant 2 : index
      %c0_19 = arith.constant 0 : index
      %c0_20 = arith.constant 0 : index
      %22 = vector.load %arg3[%c2, %c0_19, %c0_20] : memref<4x128x128xbf16, #tpu.memory_space<vmem>>, vector<1x128x128xbf16>
      %23 = vector.shape_cast %22 : vector<1x128x128xbf16> to vector<128x128xbf16>
      %cst_21 = arith.constant dense<0.000000e+00> : vector<2x128xf32>
      %24 = tpu.matmul %21, %23, %cst_21 {dimension_numbers = #tpu.dot_dimension_numbers<[1], [0], [0], [1], [0, 0, 1, 1], [], []>} : vector<2x128xbf16>, vector<128x128xbf16>, vector<2x128xf32> -> vector<2x128xf32>
      %25 = arith.addf %17, %24 : vector<2x128xf32>
      %c1_i32_22 = arith.constant 1 : i32
      %26 = arith.addi %arg6, %c1_i32_22 : i32
      %c0_23 = arith.constant 0 : index
      %27 = arith.index_cast %26 : i32 to index
      %c1_24 = arith.constant 1 : index
      %c0_25 = arith.constant 0 : index
      %28 = vector.load %arg2[%c0_23, %27, %c1_24, %c0_25] : memref<1x3x3x128xbf16, #tpu.memory_space<vmem>>, vector<1x1x2x128xbf16>
      %29 = vector.shape_cast %28 : vector<1x1x2x128xbf16> to vector<2x128xbf16>
      %c3 = arith.constant 3 : index
      %c0_26 = arith.constant 0 : index
      %c0_27 = arith.constant 0 : index
      %30 = vector.load %arg3[%c3, %c0_26, %c0_27] : memref<4x128x128xbf16, #tpu.memory_space<vmem>>, vector<1x128x128xbf16>
      %31 = vector.shape_cast %30 : vector<1x128x128xbf16> to vector<128x128xbf16>
      %cst_28 = arith.constant dense<0.000000e+00> : vector<2x128xf32>
      %32 = tpu.matmul %29, %31, %cst_28 {dimension_numbers = #tpu.dot_dimension_numbers<[1], [0], [0], [1], [0, 0, 1, 1], [], []>} : vector<2x128xbf16>, vector<128x128xbf16>, vector<2x128xf32> -> vector<2x128xf32>
      %33 = arith.addf %25, %32 : vector<2x128xf32>
      %c0_29 = arith.constant 0 : index
      %c0_30 = arith.constant 0 : index
      %34 = vector.load %arg4[%c0_29, %c0_30] : memref<1x128xf32, #tpu.memory_space<vmem>>, vector<1x128xf32>
      %35 = vector.broadcast %34 : vector<1x128xf32> to vector<2x128xf32>
      %36 = arith.addf %33, %35 : vector<2x128xf32>
      %cst_31 = arith.constant 0.000000e+00 : f32
      %37 = vector.broadcast %cst_31 : f32 to vector<2x128xf32>
      %38 = arith.maximumf %36, %37 : vector<2x128xf32>
      %39 = arith.truncf %38 : vector<2x128xf32> to vector<2x128xbf16>
      %c0_32 = arith.constant 0 : index
      %40 = arith.index_cast %arg6 : i32 to index
      %c0_33 = arith.constant 0 : index
      %c0_34 = arith.constant 0 : index
      %41 = vector.load %arg5[%c0_32, %40, %c0_33, %c0_34] : memref<1x2x2x128xbf16, #tpu.memory_space<vmem>>, vector<1x1x2x128xbf16>
      %42 = vector.shape_cast %41 : vector<1x1x2x128xbf16> to vector<2x128xbf16>
      %43 = vector.shape_cast %39 : vector<2x128xbf16> to vector<1x1x2x128xbf16>
      tpu.vector_store %arg5[%c0_32, %40, %c0_33, %c0_34], %43 {strides = array<i32>} : memref<1x2x2x128xbf16, #tpu.memory_space<vmem>>, vector<1x1x2x128xbf16>,
    }
    %c2_i32_0 = arith.constant 2 : i32
    return
  }
  func.func @transform_0(%arg0: i32, %arg1: i32) -> (i32, i32, i32, i32) {
    %c0_i32 = arith.constant 0 : i32
    %c0_i32_0 = arith.constant 0 : i32
    %c0_i32_1 = arith.constant 0 : i32
    %c0_i32_2 = arith.constant 0 : i32
    return %arg0, %c0_i32, %c0_i32_0, %c0_i32_1 : i32, i32, i32, i32
  }
  func.func @transform_1(%arg0: i32, %arg1: i32) -> (i32, i32, i32) {
    %c0_i32 = arith.constant 0 : i32
    %c0_i32_0 = arith.constant 0 : i32
    %c0_i32_1 = arith.constant 0 : i32
    return %c0_i32, %c0_i32_0, %arg1 : i32, i32, i32
  }
  func.func @transform_2(%arg0: i32, %arg1: i32) -> (i32, i32) {
    %c0_i32 = arith.constant 0 : i32
    %c0_i32_0 = arith.constant 0 : i32
    return %c0_i32, %arg1 : i32, i32
  }
  func.func @transform_3(%arg0: i32, %arg1: i32) -> (i32, i32, i32, i32) {
    %c0_i32 = arith.constant 0 : i32
    %c0_i32_0 = arith.constant 0 : i32
    %c0_i32_1 = arith.constant 0 : i32
    return %arg0, %c0_i32, %c0_i32_0, %arg1 : i32, i32, i32, i32
  }
}

module attributes {stable_mosaic.version = 11 : i64} {
  func.func @_mm_kernel(%arg0: i32, %arg1: i32, %arg2: i32, %arg3: memref<8x128xbf16, #tpu.memory_space<vmem>>, %arg4: memref<128x128xbf16, #tpu.memory_space<vmem>>, %arg5: memref<1x128xf32, #tpu.memory_space<vmem>>, %arg6: memref<8x128xbf16, #tpu.memory_space<vmem>>, %arg7: memref<8x128xf32, #tpu.memory_space<vmem>>) attributes {dimension_semantics = [#tpu.dimension_semantics<parallel>, #tpu.dimension_semantics<parallel>, #tpu.dimension_semantics<arbitrary>], iteration_bounds = array<i64: 1, 1, 1>, scalar_prefetch = 0 : i64, scratch_operands = 1 : i64, tpu.core_type = #tpu.core_type<tc>, window_params = [{transform_indices = @transform_0, window_bounds = array<i64: 8, 128>}, {transform_indices = @transform_1, window_bounds = array<i64: 128, 128>}, {transform_indices = @transform_2, window_bounds = array<i64: 1, 128>}, {transform_indices = @transform_3, window_bounds = array<i64: 8, 128>}]} {
    %c0_i32 = arith.constant 0 : i32
    %0 = arith.cmpi eq, %arg2, %c0_i32 : i32
    %1 = arith.extui %0 : i1 to i32
    %c0_i32_0 = arith.constant 0 : i32
    %2 = arith.cmpi ne, %1, %c0_i32_0 : i32
    scf.if %2 {
      %cst_10 = arith.constant 0.000000e+00 : f32
      %12 = vector.broadcast %cst_10 : f32 to vector<8x128xf32>
      %c0_11 = arith.constant 0 : index
      %c0_12 = arith.constant 0 : index
      %13 = vector.load %arg7[%c0_11, %c0_12] : memref<8x128xf32, #tpu.memory_space<vmem>>, vector<8x128xf32>
      tpu.vector_store %arg7[%c0_11, %c0_12], %12 {strides = array<i32>} : memref<8x128xf32, #tpu.memory_space<vmem>>, vector<8x128xf32>,
    } else {
    }
    %c0 = arith.constant 0 : index
    %c0_1 = arith.constant 0 : index
    %3 = vector.load %arg7[%c0, %c0_1] : memref<8x128xf32, #tpu.memory_space<vmem>>, vector<8x128xf32>
    %c0_2 = arith.constant 0 : index
    %c0_3 = arith.constant 0 : index
    %4 = vector.load %arg3[%c0_2, %c0_3] : memref<8x128xbf16, #tpu.memory_space<vmem>>, vector<8x128xbf16>
    %c0_4 = arith.constant 0 : index
    %c0_5 = arith.constant 0 : index
    %5 = vector.load %arg4[%c0_4, %c0_5] : memref<128x128xbf16, #tpu.memory_space<vmem>>, vector<128x128xbf16>
    %cst = arith.constant dense<0.000000e+00> : vector<8x128xf32>
    %6 = tpu.matmul %4, %5, %cst {dimension_numbers = #tpu.dot_dimension_numbers<[1], [0], [0], [1], [0, 0, 1, 1], [], []>} : vector<8x128xbf16>, vector<128x128xbf16>, vector<8x128xf32> -> vector<8x128xf32>
    %7 = arith.addf %3, %6 : vector<8x128xf32>
    %c0_6 = arith.constant 0 : index
    %c0_7 = arith.constant 0 : index
    %8 = vector.load %arg7[%c0_6, %c0_7] : memref<8x128xf32, #tpu.memory_space<vmem>>, vector<8x128xf32>
    tpu.vector_store %arg7[%c0_6, %c0_7], %7 {strides = array<i32>} : memref<8x128xf32, #tpu.memory_space<vmem>>, vector<8x128xf32>,
    %c0_i32_8 = arith.constant 0 : i32
    %9 = arith.cmpi eq, %arg2, %c0_i32_8 : i32
    %10 = arith.extui %9 : i1 to i32
    %c0_i32_9 = arith.constant 0 : i32
    %11 = arith.cmpi ne, %10, %c0_i32_9 : i32
    scf.if %11 {
      %c0_10 = arith.constant 0 : index
      %c0_11 = arith.constant 0 : index
      %12 = vector.load %arg7[%c0_10, %c0_11] : memref<8x128xf32, #tpu.memory_space<vmem>>, vector<8x128xf32>
      %c0_12 = arith.constant 0 : index
      %c0_13 = arith.constant 0 : index
      %13 = vector.load %arg5[%c0_12, %c0_13] : memref<1x128xf32, #tpu.memory_space<vmem>>, vector<1x128xf32>
      %14 = vector.broadcast %13 : vector<1x128xf32> to vector<8x128xf32>
      %15 = arith.addf %12, %14 : vector<8x128xf32>
      %16 = arith.truncf %15 : vector<8x128xf32> to vector<8x128xbf16>
      %c0_14 = arith.constant 0 : index
      %c0_15 = arith.constant 0 : index
      %17 = vector.load %arg6[%c0_14, %c0_15] : memref<8x128xbf16, #tpu.memory_space<vmem>>, vector<8x128xbf16>
      tpu.vector_store %arg6[%c0_14, %c0_15], %16 {strides = array<i32>} : memref<8x128xbf16, #tpu.memory_space<vmem>>, vector<8x128xbf16>,
    } else {
    }
    return
  }
  func.func @transform_0(%arg0: i32, %arg1: i32, %arg2: i32) -> (i32, i32) {
    %c0_i32 = arith.constant 0 : i32
    return %arg1, %arg2 : i32, i32
  }
  func.func @transform_1(%arg0: i32, %arg1: i32, %arg2: i32) -> (i32, i32) {
    %c0_i32 = arith.constant 0 : i32
    return %arg2, %arg0 : i32, i32
  }
  func.func @transform_2(%arg0: i32, %arg1: i32, %arg2: i32) -> (i32, i32) {
    %c0_i32 = arith.constant 0 : i32
    %c0_i32_0 = arith.constant 0 : i32
    return %c0_i32, %arg0 : i32, i32
  }
  func.func @transform_3(%arg0: i32, %arg1: i32, %arg2: i32) -> (i32, i32) {
    %c0_i32 = arith.constant 0 : i32
    return %arg1, %arg0 : i32, i32
  }
}

module attributes {stable_mosaic.version = 11 : i64} {
  func.func @_mm_res_kernel(%arg0: i32, %arg1: i32, %arg2: i32, %arg3: memref<8x128xbf16, #tpu.memory_space<vmem>>, %arg4: memref<128x128xbf16, #tpu.memory_space<vmem>>, %arg5: memref<1x128xf32, #tpu.memory_space<vmem>>, %arg6: memref<8x128xbf16, #tpu.memory_space<vmem>>, %arg7: memref<8x128xbf16, #tpu.memory_space<vmem>>, %arg8: memref<8x128xf32, #tpu.memory_space<vmem>>) attributes {dimension_semantics = [#tpu.dimension_semantics<parallel>, #tpu.dimension_semantics<parallel>, #tpu.dimension_semantics<arbitrary>], iteration_bounds = array<i64: 1, 1, 1>, scalar_prefetch = 0 : i64, scratch_operands = 1 : i64, tpu.core_type = #tpu.core_type<tc>, window_params = [{transform_indices = @transform_0, window_bounds = array<i64: 8, 128>}, {transform_indices = @transform_1, window_bounds = array<i64: 128, 128>}, {transform_indices = @transform_2, window_bounds = array<i64: 1, 128>}, {transform_indices = @transform_3, window_bounds = array<i64: 8, 128>}, {transform_indices = @transform_4, window_bounds = array<i64: 8, 128>}]} {
    %c0_i32 = arith.constant 0 : i32
    %0 = arith.cmpi eq, %arg2, %c0_i32 : i32
    %1 = arith.extui %0 : i1 to i32
    %c0_i32_0 = arith.constant 0 : i32
    %2 = arith.cmpi ne, %1, %c0_i32_0 : i32
    scf.if %2 {
      %cst_10 = arith.constant 0.000000e+00 : f32
      %12 = vector.broadcast %cst_10 : f32 to vector<8x128xf32>
      %c0_11 = arith.constant 0 : index
      %c0_12 = arith.constant 0 : index
      %13 = vector.load %arg8[%c0_11, %c0_12] : memref<8x128xf32, #tpu.memory_space<vmem>>, vector<8x128xf32>
      tpu.vector_store %arg8[%c0_11, %c0_12], %12 {strides = array<i32>} : memref<8x128xf32, #tpu.memory_space<vmem>>, vector<8x128xf32>,
    } else {
    }
    %c0 = arith.constant 0 : index
    %c0_1 = arith.constant 0 : index
    %3 = vector.load %arg8[%c0, %c0_1] : memref<8x128xf32, #tpu.memory_space<vmem>>, vector<8x128xf32>
    %c0_2 = arith.constant 0 : index
    %c0_3 = arith.constant 0 : index
    %4 = vector.load %arg3[%c0_2, %c0_3] : memref<8x128xbf16, #tpu.memory_space<vmem>>, vector<8x128xbf16>
    %c0_4 = arith.constant 0 : index
    %c0_5 = arith.constant 0 : index
    %5 = vector.load %arg4[%c0_4, %c0_5] : memref<128x128xbf16, #tpu.memory_space<vmem>>, vector<128x128xbf16>
    %cst = arith.constant dense<0.000000e+00> : vector<8x128xf32>
    %6 = tpu.matmul %4, %5, %cst {dimension_numbers = #tpu.dot_dimension_numbers<[1], [0], [0], [1], [0, 0, 1, 1], [], []>} : vector<8x128xbf16>, vector<128x128xbf16>, vector<8x128xf32> -> vector<8x128xf32>
    %7 = arith.addf %3, %6 : vector<8x128xf32>
    %c0_6 = arith.constant 0 : index
    %c0_7 = arith.constant 0 : index
    %8 = vector.load %arg8[%c0_6, %c0_7] : memref<8x128xf32, #tpu.memory_space<vmem>>, vector<8x128xf32>
    tpu.vector_store %arg8[%c0_6, %c0_7], %7 {strides = array<i32>} : memref<8x128xf32, #tpu.memory_space<vmem>>, vector<8x128xf32>,
    %c0_i32_8 = arith.constant 0 : i32
    %9 = arith.cmpi eq, %arg2, %c0_i32_8 : i32
    %10 = arith.extui %9 : i1 to i32
    %c0_i32_9 = arith.constant 0 : i32
    %11 = arith.cmpi ne, %10, %c0_i32_9 : i32
    scf.if %11 {
      %c0_10 = arith.constant 0 : index
      %c0_11 = arith.constant 0 : index
      %12 = vector.load %arg8[%c0_10, %c0_11] : memref<8x128xf32, #tpu.memory_space<vmem>>, vector<8x128xf32>
      %c0_12 = arith.constant 0 : index
      %c0_13 = arith.constant 0 : index
      %13 = vector.load %arg5[%c0_12, %c0_13] : memref<1x128xf32, #tpu.memory_space<vmem>>, vector<1x128xf32>
      %14 = vector.broadcast %13 : vector<1x128xf32> to vector<8x128xf32>
      %15 = arith.addf %12, %14 : vector<8x128xf32>
      %c0_14 = arith.constant 0 : index
      %c0_15 = arith.constant 0 : index
      %16 = vector.load %arg6[%c0_14, %c0_15] : memref<8x128xbf16, #tpu.memory_space<vmem>>, vector<8x128xbf16>
      %17 = arith.extf %16 : vector<8x128xbf16> to vector<8x128xf32>
      %18 = arith.addf %15, %17 : vector<8x128xf32>
      %cst_16 = arith.constant 0.000000e+00 : f32
      %19 = vector.broadcast %cst_16 : f32 to vector<8x128xf32>
      %20 = arith.maximumf %18, %19 : vector<8x128xf32>
      %21 = arith.truncf %20 : vector<8x128xf32> to vector<8x128xbf16>
      %c0_17 = arith.constant 0 : index
      %c0_18 = arith.constant 0 : index
      %22 = vector.load %arg7[%c0_17, %c0_18] : memref<8x128xbf16, #tpu.memory_space<vmem>>, vector<8x128xbf16>
      tpu.vector_store %arg7[%c0_17, %c0_18], %21 {strides = array<i32>} : memref<8x128xbf16, #tpu.memory_space<vmem>>, vector<8x128xbf16>,
    } else {
    }
    return
  }
  func.func @transform_0(%arg0: i32, %arg1: i32, %arg2: i32) -> (i32, i32) {
    %c0_i32 = arith.constant 0 : i32
    return %arg1, %arg2 : i32, i32
  }
  func.func @transform_1(%arg0: i32, %arg1: i32, %arg2: i32) -> (i32, i32) {
    %c0_i32 = arith.constant 0 : i32
    return %arg2, %arg0 : i32, i32
  }
  func.func @transform_2(%arg0: i32, %arg1: i32, %arg2: i32) -> (i32, i32) {
    %c0_i32 = arith.constant 0 : i32
    %c0_i32_0 = arith.constant 0 : i32
    return %c0_i32, %arg0 : i32, i32
  }
  func.func @transform_3(%arg0: i32, %arg1: i32, %arg2: i32) -> (i32, i32) {
    %c0_i32 = arith.constant 0 : i32
    return %arg1, %arg0 : i32, i32
  }
  func.func @transform_4(%arg0: i32, %arg1: i32, %arg2: i32) -> (i32, i32) {
    %c0_i32 = arith.constant 0 : i32
    return %arg1, %arg0 : i32, i32
  }
}

module attributes {stable_mosaic.version = 11 : i64} {
  func.func @_mm_kernel(%arg0: i32, %arg1: i32, %arg2: i32, %arg3: memref<8x128xbf16, #tpu.memory_space<vmem>>, %arg4: memref<128x128xbf16, #tpu.memory_space<vmem>>, %arg5: memref<1x128xf32, #tpu.memory_space<vmem>>, %arg6: memref<8x128xbf16, #tpu.memory_space<vmem>>, %arg7: memref<8x128xf32, #tpu.memory_space<vmem>>) attributes {dimension_semantics = [#tpu.dimension_semantics<parallel>, #tpu.dimension_semantics<parallel>, #tpu.dimension_semantics<arbitrary>], iteration_bounds = array<i64: 1, 1, 1>, scalar_prefetch = 0 : i64, scratch_operands = 1 : i64, tpu.core_type = #tpu.core_type<tc>, window_params = [{transform_indices = @transform_0, window_bounds = array<i64: 8, 128>}, {transform_indices = @transform_1, window_bounds = array<i64: 128, 128>}, {transform_indices = @transform_2, window_bounds = array<i64: 1, 128>}, {transform_indices = @transform_3, window_bounds = array<i64: 8, 128>}]} {
    %c0_i32 = arith.constant 0 : i32
    %0 = arith.cmpi eq, %arg2, %c0_i32 : i32
    %1 = arith.extui %0 : i1 to i32
    %c0_i32_0 = arith.constant 0 : i32
    %2 = arith.cmpi ne, %1, %c0_i32_0 : i32
    scf.if %2 {
      %cst_10 = arith.constant 0.000000e+00 : f32
      %12 = vector.broadcast %cst_10 : f32 to vector<8x128xf32>
      %c0_11 = arith.constant 0 : index
      %c0_12 = arith.constant 0 : index
      %13 = vector.load %arg7[%c0_11, %c0_12] : memref<8x128xf32, #tpu.memory_space<vmem>>, vector<8x128xf32>
      tpu.vector_store %arg7[%c0_11, %c0_12], %12 {strides = array<i32>} : memref<8x128xf32, #tpu.memory_space<vmem>>, vector<8x128xf32>,
    } else {
    }
    %c0 = arith.constant 0 : index
    %c0_1 = arith.constant 0 : index
    %3 = vector.load %arg7[%c0, %c0_1] : memref<8x128xf32, #tpu.memory_space<vmem>>, vector<8x128xf32>
    %c0_2 = arith.constant 0 : index
    %c0_3 = arith.constant 0 : index
    %4 = vector.load %arg3[%c0_2, %c0_3] : memref<8x128xbf16, #tpu.memory_space<vmem>>, vector<8x128xbf16>
    %c0_4 = arith.constant 0 : index
    %c0_5 = arith.constant 0 : index
    %5 = vector.load %arg4[%c0_4, %c0_5] : memref<128x128xbf16, #tpu.memory_space<vmem>>, vector<128x128xbf16>
    %cst = arith.constant dense<0.000000e+00> : vector<8x128xf32>
    %6 = tpu.matmul %4, %5, %cst {dimension_numbers = #tpu.dot_dimension_numbers<[1], [0], [0], [1], [0, 0, 1, 1], [], []>} : vector<8x128xbf16>, vector<128x128xbf16>, vector<8x128xf32> -> vector<8x128xf32>
    %7 = arith.addf %3, %6 : vector<8x128xf32>
    %c0_6 = arith.constant 0 : index
    %c0_7 = arith.constant 0 : index
    %8 = vector.load %arg7[%c0_6, %c0_7] : memref<8x128xf32, #tpu.memory_space<vmem>>, vector<8x128xf32>
    tpu.vector_store %arg7[%c0_6, %c0_7], %7 {strides = array<i32>} : memref<8x128xf32, #tpu.memory_space<vmem>>, vector<8x128xf32>,
    %c0_i32_8 = arith.constant 0 : i32
    %9 = arith.cmpi eq, %arg2, %c0_i32_8 : i32
    %10 = arith.extui %9 : i1 to i32
    %c0_i32_9 = arith.constant 0 : i32
    %11 = arith.cmpi ne, %10, %c0_i32_9 : i32
    scf.if %11 {
      %c0_10 = arith.constant 0 : index
      %c0_11 = arith.constant 0 : index
      %12 = vector.load %arg7[%c0_10, %c0_11] : memref<8x128xf32, #tpu.memory_space<vmem>>, vector<8x128xf32>
      %c0_12 = arith.constant 0 : index
      %c0_13 = arith.constant 0 : index
      %13 = vector.load %arg5[%c0_12, %c0_13] : memref<1x128xf32, #tpu.memory_space<vmem>>, vector<1x128xf32>
      %14 = vector.broadcast %13 : vector<1x128xf32> to vector<8x128xf32>
      %15 = arith.addf %12, %14 : vector<8x128xf32>
      %cst_14 = arith.constant 0.000000e+00 : f32
      %16 = vector.broadcast %cst_14 : f32 to vector<8x128xf32>
      %17 = arith.maximumf %15, %16 : vector<8x128xf32>
      %18 = arith.truncf %17 : vector<8x128xf32> to vector<8x128xbf16>
      %c0_15 = arith.constant 0 : index
      %c0_16 = arith.constant 0 : index
      %19 = vector.load %arg6[%c0_15, %c0_16] : memref<8x128xbf16, #tpu.memory_space<vmem>>, vector<8x128xbf16>
      tpu.vector_store %arg6[%c0_15, %c0_16], %18 {strides = array<i32>} : memref<8x128xbf16, #tpu.memory_space<vmem>>, vector<8x128xbf16>,
    } else {
    }
    return
  }
  func.func @transform_0(%arg0: i32, %arg1: i32, %arg2: i32) -> (i32, i32) {
    %c0_i32 = arith.constant 0 : i32
    return %arg1, %arg2 : i32, i32
  }
  func.func @transform_1(%arg0: i32, %arg1: i32, %arg2: i32) -> (i32, i32) {
    %c0_i32 = arith.constant 0 : i32
    return %arg2, %arg0 : i32, i32
  }
  func.func @transform_2(%arg0: i32, %arg1: i32, %arg2: i32) -> (i32, i32) {
    %c0_i32 = arith.constant 0 : i32
    %c0_i32_0 = arith.constant 0 : i32
    return %c0_i32, %arg0 : i32, i32
  }
  func.func @transform_3(%arg0: i32, %arg1: i32, %arg2: i32) -> (i32, i32) {
    %c0_i32 = arith.constant 0 : i32
    return %arg1, %arg0 : i32, i32
  }
}

module attributes {stable_mosaic.version = 11 : i64} {
  func.func @_conv_kernel(%arg0: i32, %arg1: i32, %arg2: memref<1x2x2x256xbf16, #tpu.memory_space<vmem>>, %arg3: memref<4x256x128xbf16, #tpu.memory_space<vmem>>, %arg4: memref<1x128xf32, #tpu.memory_space<vmem>>, %arg5: memref<1x1x1x128xbf16, #tpu.memory_space<vmem>>) attributes {dimension_semantics = [#tpu.dimension_semantics<parallel>, #tpu.dimension_semantics<parallel>], iteration_bounds = array<i64: 2, 1>, scalar_prefetch = 0 : i64, scratch_operands = 0 : i64, tpu.core_type = #tpu.core_type<tc>, window_params = [{transform_indices = @transform_0, window_bounds = array<i64: 1, 2, 2, 256>}, {transform_indices = @transform_1, window_bounds = array<i64: 4, 256, 128>}, {transform_indices = @transform_2, window_bounds = array<i64: 1, 128>}, {transform_indices = @transform_3, window_bounds = array<i64: 1, 1, 1, 128>}]} {
    %c0_i32 = arith.constant 0 : i32
    %cst = arith.constant 0.000000e+00 : f32
    %0 = vector.broadcast %cst : f32 to vector<1x128xf32>
    %c0_i32_0 = arith.constant 0 : i32
    %1 = arith.addi %c0_i32, %c0_i32_0 : i32
    %c0 = arith.constant 0 : index
    %2 = arith.index_cast %1 : i32 to index
    %c0_1 = arith.constant 0 : index
    %c0_2 = arith.constant 0 : index
    %3 = vector.load %arg2[%c0, %2, %c0_1, %c0_2] : memref<1x2x2x256xbf16, #tpu.memory_space<vmem>>, vector<1x1x1x256xbf16>
    %4 = vector.shape_cast %3 : vector<1x1x1x256xbf16> to vector<1x256xbf16>
    %c0_3 = arith.constant 0 : index
    %c0_4 = arith.constant 0 : index
    %c0_5 = arith.constant 0 : index
    %5 = vector.load %arg3[%c0_3, %c0_4, %c0_5] : memref<4x256x128xbf16, #tpu.memory_space<vmem>>, vector<1x256x128xbf16>
    %6 = vector.shape_cast %5 : vector<1x256x128xbf16> to vector<256x128xbf16>
    %cst_6 = arith.constant dense<0.000000e+00> : vector<1x128xf32>
    %7 = tpu.matmul %4, %6, %cst_6 {dimension_numbers = #tpu.dot_dimension_numbers<[1], [0], [0], [1], [0, 0, 1, 1], [], []>} : vector<1x256xbf16>, vector<256x128xbf16>, vector<1x128xf32> -> vector<1x128xf32>
    %8 = arith.addf %0, %7 : vector<1x128xf32>
    %c0_i32_7 = arith.constant 0 : i32
    %9 = arith.addi %c0_i32, %c0_i32_7 : i32
    %c0_8 = arith.constant 0 : index
    %10 = arith.index_cast %9 : i32 to index
    %c1 = arith.constant 1 : index
    %c0_9 = arith.constant 0 : index
    %11 = vector.load %arg2[%c0_8, %10, %c1, %c0_9] : memref<1x2x2x256xbf16, #tpu.memory_space<vmem>>, vector<1x1x1x256xbf16>
    %12 = vector.shape_cast %11 : vector<1x1x1x256xbf16> to vector<1x256xbf16>
    %c1_10 = arith.constant 1 : index
    %c0_11 = arith.constant 0 : index
    %c0_12 = arith.constant 0 : index
    %13 = vector.load %arg3[%c1_10, %c0_11, %c0_12] : memref<4x256x128xbf16, #tpu.memory_space<vmem>>, vector<1x256x128xbf16>
    %14 = vector.shape_cast %13 : vector<1x256x128xbf16> to vector<256x128xbf16>
    %cst_13 = arith.constant dense<0.000000e+00> : vector<1x128xf32>
    %15 = tpu.matmul %12, %14, %cst_13 {dimension_numbers = #tpu.dot_dimension_numbers<[1], [0], [0], [1], [0, 0, 1, 1], [], []>} : vector<1x256xbf16>, vector<256x128xbf16>, vector<1x128xf32> -> vector<1x128xf32>
    %16 = arith.addf %8, %15 : vector<1x128xf32>
    %c1_i32 = arith.constant 1 : i32
    %17 = arith.addi %c0_i32, %c1_i32 : i32
    %c0_14 = arith.constant 0 : index
    %18 = arith.index_cast %17 : i32 to index
    %c0_15 = arith.constant 0 : index
    %c0_16 = arith.constant 0 : index
    %19 = vector.load %arg2[%c0_14, %18, %c0_15, %c0_16] : memref<1x2x2x256xbf16, #tpu.memory_space<vmem>>, vector<1x1x1x256xbf16>
    %20 = vector.shape_cast %19 : vector<1x1x1x256xbf16> to vector<1x256xbf16>
    %c2 = arith.constant 2 : index
    %c0_17 = arith.constant 0 : index
    %c0_18 = arith.constant 0 : index
    %21 = vector.load %arg3[%c2, %c0_17, %c0_18] : memref<4x256x128xbf16, #tpu.memory_space<vmem>>, vector<1x256x128xbf16>
    %22 = vector.shape_cast %21 : vector<1x256x128xbf16> to vector<256x128xbf16>
    %cst_19 = arith.constant dense<0.000000e+00> : vector<1x128xf32>
    %23 = tpu.matmul %20, %22, %cst_19 {dimension_numbers = #tpu.dot_dimension_numbers<[1], [0], [0], [1], [0, 0, 1, 1], [], []>} : vector<1x256xbf16>, vector<256x128xbf16>, vector<1x128xf32> -> vector<1x128xf32>
    %24 = arith.addf %16, %23 : vector<1x128xf32>
    %c1_i32_20 = arith.constant 1 : i32
    %25 = arith.addi %c0_i32, %c1_i32_20 : i32
    %c0_21 = arith.constant 0 : index
    %26 = arith.index_cast %25 : i32 to index
    %c1_22 = arith.constant 1 : index
    %c0_23 = arith.constant 0 : index
    %27 = vector.load %arg2[%c0_21, %26, %c1_22, %c0_23] : memref<1x2x2x256xbf16, #tpu.memory_space<vmem>>, vector<1x1x1x256xbf16>
    %28 = vector.shape_cast %27 : vector<1x1x1x256xbf16> to vector<1x256xbf16>
    %c3 = arith.constant 3 : index
    %c0_24 = arith.constant 0 : index
    %c0_25 = arith.constant 0 : index
    %29 = vector.load %arg3[%c3, %c0_24, %c0_25] : memref<4x256x128xbf16, #tpu.memory_space<vmem>>, vector<1x256x128xbf16>
    %30 = vector.shape_cast %29 : vector<1x256x128xbf16> to vector<256x128xbf16>
    %cst_26 = arith.constant dense<0.000000e+00> : vector<1x128xf32>
    %31 = tpu.matmul %28, %30, %cst_26 {dimension_numbers = #tpu.dot_dimension_numbers<[1], [0], [0], [1], [0, 0, 1, 1], [], []>} : vector<1x256xbf16>, vector<256x128xbf16>, vector<1x128xf32> -> vector<1x128xf32>
    %32 = arith.addf %24, %31 : vector<1x128xf32>
    %c0_27 = arith.constant 0 : index
    %c0_28 = arith.constant 0 : index
    %33 = vector.load %arg4[%c0_27, %c0_28] : memref<1x128xf32, #tpu.memory_space<vmem>>, vector<1x128xf32>
    %34 = arith.addf %32, %33 : vector<1x128xf32>
    %cst_29 = arith.constant 0.000000e+00 : f32
    %35 = vector.broadcast %cst_29 : f32 to vector<1x128xf32>
    %36 = arith.maximumf %34, %35 : vector<1x128xf32>
    %37 = arith.truncf %36 : vector<1x128xf32> to vector<1x128xbf16>
    %c0_30 = arith.constant 0 : index
    %38 = arith.index_cast %c0_i32 : i32 to index
    %c0_31 = arith.constant 0 : index
    %c0_32 = arith.constant 0 : index
    %39 = vector.load %arg5[%c0_30, %38, %c0_31, %c0_32] : memref<1x1x1x128xbf16, #tpu.memory_space<vmem>>, vector<1x1x1x128xbf16>
    %40 = vector.shape_cast %39 : vector<1x1x1x128xbf16> to vector<1x128xbf16>
    %41 = vector.shape_cast %37 : vector<1x128xbf16> to vector<1x1x1x128xbf16>
    tpu.vector_store %arg5[%c0_30, %38, %c0_31, %c0_32], %41 {strides = array<i32>} : memref<1x1x1x128xbf16, #tpu.memory_space<vmem>>, vector<1x1x1x128xbf16>,
    %c1_i32_33 = arith.constant 1 : i32
    return
  }
  func.func @transform_0(%arg0: i32, %arg1: i32) -> (i32, i32, i32, i32) {
    %c0_i32 = arith.constant 0 : i32
    %c0_i32_0 = arith.constant 0 : i32
    %c0_i32_1 = arith.constant 0 : i32
    %c0_i32_2 = arith.constant 0 : i32
    return %arg0, %c0_i32, %c0_i32_0, %c0_i32_1 : i32, i32, i32, i32
  }
  func.func @transform_1(%arg0: i32, %arg1: i32) -> (i32, i32, i32) {
    %c0_i32 = arith.constant 0 : i32
    %c0_i32_0 = arith.constant 0 : i32
    %c0_i32_1 = arith.constant 0 : i32
    return %c0_i32, %c0_i32_0, %arg1 : i32, i32, i32
  }
  func.func @transform_2(%arg0: i32, %arg1: i32) -> (i32, i32) {
    %c0_i32 = arith.constant 0 : i32
    %c0_i32_0 = arith.constant 0 : i32
    return %c0_i32, %arg1 : i32, i32
  }
  func.func @transform_3(%arg0: i32, %arg1: i32) -> (i32, i32, i32, i32) {
    %c0_i32 = arith.constant 0 : i32
    %c0_i32_0 = arith.constant 0 : i32
    %c0_i32_1 = arith.constant 0 : i32
    return %arg0, %c0_i32, %c0_i32_0, %arg1 : i32, i32, i32, i32
  }
}

module attributes {stable_mosaic.version = 11 : i64} {
  func.func @_mm_kernel(%arg0: i32, %arg1: i32, %arg2: i32, %arg3: memref<8x128xbf16, #tpu.memory_space<vmem>>, %arg4: memref<128x256xbf16, #tpu.memory_space<vmem>>, %arg5: memref<1x256xf32, #tpu.memory_space<vmem>>, %arg6: memref<8x256xbf16, #tpu.memory_space<vmem>>, %arg7: memref<8x256xf32, #tpu.memory_space<vmem>>) attributes {dimension_semantics = [#tpu.dimension_semantics<parallel>, #tpu.dimension_semantics<parallel>, #tpu.dimension_semantics<arbitrary>], iteration_bounds = array<i64: 1, 1, 1>, scalar_prefetch = 0 : i64, scratch_operands = 1 : i64, tpu.core_type = #tpu.core_type<tc>, window_params = [{transform_indices = @transform_0, window_bounds = array<i64: 8, 128>}, {transform_indices = @transform_1, window_bounds = array<i64: 128, 256>}, {transform_indices = @transform_2, window_bounds = array<i64: 1, 256>}, {transform_indices = @transform_3, window_bounds = array<i64: 8, 256>}]} {
    %c0_i32 = arith.constant 0 : i32
    %0 = arith.cmpi eq, %arg2, %c0_i32 : i32
    %1 = arith.extui %0 : i1 to i32
    %c0_i32_0 = arith.constant 0 : i32
    %2 = arith.cmpi ne, %1, %c0_i32_0 : i32
    scf.if %2 {
      %cst_10 = arith.constant 0.000000e+00 : f32
      %12 = vector.broadcast %cst_10 : f32 to vector<8x256xf32>
      %c0_11 = arith.constant 0 : index
      %c0_12 = arith.constant 0 : index
      %13 = vector.load %arg7[%c0_11, %c0_12] : memref<8x256xf32, #tpu.memory_space<vmem>>, vector<8x256xf32>
      tpu.vector_store %arg7[%c0_11, %c0_12], %12 {strides = array<i32>} : memref<8x256xf32, #tpu.memory_space<vmem>>, vector<8x256xf32>,
    } else {
    }
    %c0 = arith.constant 0 : index
    %c0_1 = arith.constant 0 : index
    %3 = vector.load %arg7[%c0, %c0_1] : memref<8x256xf32, #tpu.memory_space<vmem>>, vector<8x256xf32>
    %c0_2 = arith.constant 0 : index
    %c0_3 = arith.constant 0 : index
    %4 = vector.load %arg3[%c0_2, %c0_3] : memref<8x128xbf16, #tpu.memory_space<vmem>>, vector<8x128xbf16>
    %c0_4 = arith.constant 0 : index
    %c0_5 = arith.constant 0 : index
    %5 = vector.load %arg4[%c0_4, %c0_5] : memref<128x256xbf16, #tpu.memory_space<vmem>>, vector<128x256xbf16>
    %cst = arith.constant dense<0.000000e+00> : vector<8x256xf32>
    %6 = tpu.matmul %4, %5, %cst {dimension_numbers = #tpu.dot_dimension_numbers<[1], [0], [0], [1], [0, 0, 1, 1], [], []>} : vector<8x128xbf16>, vector<128x256xbf16>, vector<8x256xf32> -> vector<8x256xf32>
    %7 = arith.addf %3, %6 : vector<8x256xf32>
    %c0_6 = arith.constant 0 : index
    %c0_7 = arith.constant 0 : index
    %8 = vector.load %arg7[%c0_6, %c0_7] : memref<8x256xf32, #tpu.memory_space<vmem>>, vector<8x256xf32>
    tpu.vector_store %arg7[%c0_6, %c0_7], %7 {strides = array<i32>} : memref<8x256xf32, #tpu.memory_space<vmem>>, vector<8x256xf32>,
    %c0_i32_8 = arith.constant 0 : i32
    %9 = arith.cmpi eq, %arg2, %c0_i32_8 : i32
    %10 = arith.extui %9 : i1 to i32
    %c0_i32_9 = arith.constant 0 : i32
    %11 = arith.cmpi ne, %10, %c0_i32_9 : i32
    scf.if %11 {
      %c0_10 = arith.constant 0 : index
      %c0_11 = arith.constant 0 : index
      %12 = vector.load %arg7[%c0_10, %c0_11] : memref<8x256xf32, #tpu.memory_space<vmem>>, vector<8x256xf32>
      %c0_12 = arith.constant 0 : index
      %c0_13 = arith.constant 0 : index
      %13 = vector.load %arg5[%c0_12, %c0_13] : memref<1x256xf32, #tpu.memory_space<vmem>>, vector<1x256xf32>
      %14 = vector.broadcast %13 : vector<1x256xf32> to vector<8x256xf32>
      %15 = arith.addf %12, %14 : vector<8x256xf32>
      %16 = arith.truncf %15 : vector<8x256xf32> to vector<8x256xbf16>
      %c0_14 = arith.constant 0 : index
      %c0_15 = arith.constant 0 : index
      %17 = vector.load %arg6[%c0_14, %c0_15] : memref<8x256xbf16, #tpu.memory_space<vmem>>, vector<8x256xbf16>
      tpu.vector_store %arg6[%c0_14, %c0_15], %16 {strides = array<i32>} : memref<8x256xbf16, #tpu.memory_space<vmem>>, vector<8x256xbf16>,
    } else {
    }
    return
  }
  func.func @transform_0(%arg0: i32, %arg1: i32, %arg2: i32) -> (i32, i32) {
    %c0_i32 = arith.constant 0 : i32
    return %arg1, %arg2 : i32, i32
  }
  func.func @transform_1(%arg0: i32, %arg1: i32, %arg2: i32) -> (i32, i32) {
    %c0_i32 = arith.constant 0 : i32
    return %arg2, %arg0 : i32, i32
  }
  func.func @transform_2(%arg0: i32, %arg1: i32, %arg2: i32) -> (i32, i32) {
    %c0_i32 = arith.constant 0 : i32
    %c0_i32_0 = arith.constant 0 : i32
    return %c0_i32, %arg0 : i32, i32
  }
  func.func @transform_3(%arg0: i32, %arg1: i32, %arg2: i32) -> (i32, i32) {
    %c0_i32 = arith.constant 0 : i32
    return %arg1, %arg0 : i32, i32
  }
}

module attributes {stable_mosaic.version = 11 : i64} {
  func.func @_mm_res_kernel(%arg0: i32, %arg1: i32, %arg2: i32, %arg3: memref<8x128xbf16, #tpu.memory_space<vmem>>, %arg4: memref<128x256xbf16, #tpu.memory_space<vmem>>, %arg5: memref<1x256xf32, #tpu.memory_space<vmem>>, %arg6: memref<8x256xbf16, #tpu.memory_space<vmem>>, %arg7: memref<8x256xbf16, #tpu.memory_space<vmem>>, %arg8: memref<8x256xf32, #tpu.memory_space<vmem>>) attributes {dimension_semantics = [#tpu.dimension_semantics<parallel>, #tpu.dimension_semantics<parallel>, #tpu.dimension_semantics<arbitrary>], iteration_bounds = array<i64: 1, 1, 1>, scalar_prefetch = 0 : i64, scratch_operands = 1 : i64, tpu.core_type = #tpu.core_type<tc>, window_params = [{transform_indices = @transform_0, window_bounds = array<i64: 8, 128>}, {transform_indices = @transform_1, window_bounds = array<i64: 128, 256>}, {transform_indices = @transform_2, window_bounds = array<i64: 1, 256>}, {transform_indices = @transform_3, window_bounds = array<i64: 8, 256>}, {transform_indices = @transform_4, window_bounds = array<i64: 8, 256>}]} {
    %c0_i32 = arith.constant 0 : i32
    %0 = arith.cmpi eq, %arg2, %c0_i32 : i32
    %1 = arith.extui %0 : i1 to i32
    %c0_i32_0 = arith.constant 0 : i32
    %2 = arith.cmpi ne, %1, %c0_i32_0 : i32
    scf.if %2 {
      %cst_10 = arith.constant 0.000000e+00 : f32
      %12 = vector.broadcast %cst_10 : f32 to vector<8x256xf32>
      %c0_11 = arith.constant 0 : index
      %c0_12 = arith.constant 0 : index
      %13 = vector.load %arg8[%c0_11, %c0_12] : memref<8x256xf32, #tpu.memory_space<vmem>>, vector<8x256xf32>
      tpu.vector_store %arg8[%c0_11, %c0_12], %12 {strides = array<i32>} : memref<8x256xf32, #tpu.memory_space<vmem>>, vector<8x256xf32>,
    } else {
    }
    %c0 = arith.constant 0 : index
    %c0_1 = arith.constant 0 : index
    %3 = vector.load %arg8[%c0, %c0_1] : memref<8x256xf32, #tpu.memory_space<vmem>>, vector<8x256xf32>
    %c0_2 = arith.constant 0 : index
    %c0_3 = arith.constant 0 : index
    %4 = vector.load %arg3[%c0_2, %c0_3] : memref<8x128xbf16, #tpu.memory_space<vmem>>, vector<8x128xbf16>
    %c0_4 = arith.constant 0 : index
    %c0_5 = arith.constant 0 : index
    %5 = vector.load %arg4[%c0_4, %c0_5] : memref<128x256xbf16, #tpu.memory_space<vmem>>, vector<128x256xbf16>
    %cst = arith.constant dense<0.000000e+00> : vector<8x256xf32>
    %6 = tpu.matmul %4, %5, %cst {dimension_numbers = #tpu.dot_dimension_numbers<[1], [0], [0], [1], [0, 0, 1, 1], [], []>} : vector<8x128xbf16>, vector<128x256xbf16>, vector<8x256xf32> -> vector<8x256xf32>
    %7 = arith.addf %3, %6 : vector<8x256xf32>
    %c0_6 = arith.constant 0 : index
    %c0_7 = arith.constant 0 : index
    %8 = vector.load %arg8[%c0_6, %c0_7] : memref<8x256xf32, #tpu.memory_space<vmem>>, vector<8x256xf32>
    tpu.vector_store %arg8[%c0_6, %c0_7], %7 {strides = array<i32>} : memref<8x256xf32, #tpu.memory_space<vmem>>, vector<8x256xf32>,
    %c0_i32_8 = arith.constant 0 : i32
    %9 = arith.cmpi eq, %arg2, %c0_i32_8 : i32
    %10 = arith.extui %9 : i1 to i32
    %c0_i32_9 = arith.constant 0 : i32
    %11 = arith.cmpi ne, %10, %c0_i32_9 : i32
    scf.if %11 {
      %c0_10 = arith.constant 0 : index
      %c0_11 = arith.constant 0 : index
      %12 = vector.load %arg8[%c0_10, %c0_11] : memref<8x256xf32, #tpu.memory_space<vmem>>, vector<8x256xf32>
      %c0_12 = arith.constant 0 : index
      %c0_13 = arith.constant 0 : index
      %13 = vector.load %arg5[%c0_12, %c0_13] : memref<1x256xf32, #tpu.memory_space<vmem>>, vector<1x256xf32>
      %14 = vector.broadcast %13 : vector<1x256xf32> to vector<8x256xf32>
      %15 = arith.addf %12, %14 : vector<8x256xf32>
      %c0_14 = arith.constant 0 : index
      %c0_15 = arith.constant 0 : index
      %16 = vector.load %arg6[%c0_14, %c0_15] : memref<8x256xbf16, #tpu.memory_space<vmem>>, vector<8x256xbf16>
      %17 = arith.extf %16 : vector<8x256xbf16> to vector<8x256xf32>
      %18 = arith.addf %15, %17 : vector<8x256xf32>
      %cst_16 = arith.constant 0.000000e+00 : f32
      %19 = vector.broadcast %cst_16 : f32 to vector<8x256xf32>
      %20 = arith.maximumf %18, %19 : vector<8x256xf32>
      %21 = arith.truncf %20 : vector<8x256xf32> to vector<8x256xbf16>
      %c0_17 = arith.constant 0 : index
      %c0_18 = arith.constant 0 : index
      %22 = vector.load %arg7[%c0_17, %c0_18] : memref<8x256xbf16, #tpu.memory_space<vmem>>, vector<8x256xbf16>
      tpu.vector_store %arg7[%c0_17, %c0_18], %21 {strides = array<i32>} : memref<8x256xbf16, #tpu.memory_space<vmem>>, vector<8x256xbf16>,
    } else {
    }
    return
  }
  func.func @transform_0(%arg0: i32, %arg1: i32, %arg2: i32) -> (i32, i32) {
    %c0_i32 = arith.constant 0 : i32
    return %arg1, %arg2 : i32, i32
  }
  func.func @transform_1(%arg0: i32, %arg1: i32, %arg2: i32) -> (i32, i32) {
    %c0_i32 = arith.constant 0 : i32
    return %arg2, %arg0 : i32, i32
  }
  func.func @transform_2(%arg0: i32, %arg1: i32, %arg2: i32) -> (i32, i32) {
    %c0_i32 = arith.constant 0 : i32
    %c0_i32_0 = arith.constant 0 : i32
    return %c0_i32, %arg0 : i32, i32
  }
  func.func @transform_3(%arg0: i32, %arg1: i32, %arg2: i32) -> (i32, i32) {
    %c0_i32 = arith.constant 0 : i32
    return %arg1, %arg0 : i32, i32
  }
  func.func @transform_4(%arg0: i32, %arg1: i32, %arg2: i32) -> (i32, i32) {
    %c0_i32 = arith.constant 0 : i32
    return %arg1, %arg0 : i32, i32
  }
}

module attributes {stable_mosaic.version = 11 : i64} {
  func.func @_mm_kernel(%arg0: i32, %arg1: i32, %arg2: i32, %arg3: memref<8x256xbf16, #tpu.memory_space<vmem>>, %arg4: memref<256x128xbf16, #tpu.memory_space<vmem>>, %arg5: memref<1x128xf32, #tpu.memory_space<vmem>>, %arg6: memref<8x128xbf16, #tpu.memory_space<vmem>>, %arg7: memref<8x128xf32, #tpu.memory_space<vmem>>) attributes {dimension_semantics = [#tpu.dimension_semantics<parallel>, #tpu.dimension_semantics<parallel>, #tpu.dimension_semantics<arbitrary>], iteration_bounds = array<i64: 1, 1, 1>, scalar_prefetch = 0 : i64, scratch_operands = 1 : i64, tpu.core_type = #tpu.core_type<tc>, window_params = [{transform_indices = @transform_0, window_bounds = array<i64: 8, 256>}, {transform_indices = @transform_1, window_bounds = array<i64: 256, 128>}, {transform_indices = @transform_2, window_bounds = array<i64: 1, 128>}, {transform_indices = @transform_3, window_bounds = array<i64: 8, 128>}]} {
    %c0_i32 = arith.constant 0 : i32
    %0 = arith.cmpi eq, %arg2, %c0_i32 : i32
    %1 = arith.extui %0 : i1 to i32
    %c0_i32_0 = arith.constant 0 : i32
    %2 = arith.cmpi ne, %1, %c0_i32_0 : i32
    scf.if %2 {
      %cst_10 = arith.constant 0.000000e+00 : f32
      %12 = vector.broadcast %cst_10 : f32 to vector<8x128xf32>
      %c0_11 = arith.constant 0 : index
      %c0_12 = arith.constant 0 : index
      %13 = vector.load %arg7[%c0_11, %c0_12] : memref<8x128xf32, #tpu.memory_space<vmem>>, vector<8x128xf32>
      tpu.vector_store %arg7[%c0_11, %c0_12], %12 {strides = array<i32>} : memref<8x128xf32, #tpu.memory_space<vmem>>, vector<8x128xf32>,
    } else {
    }
    %c0 = arith.constant 0 : index
    %c0_1 = arith.constant 0 : index
    %3 = vector.load %arg7[%c0, %c0_1] : memref<8x128xf32, #tpu.memory_space<vmem>>, vector<8x128xf32>
    %c0_2 = arith.constant 0 : index
    %c0_3 = arith.constant 0 : index
    %4 = vector.load %arg3[%c0_2, %c0_3] : memref<8x256xbf16, #tpu.memory_space<vmem>>, vector<8x256xbf16>
    %c0_4 = arith.constant 0 : index
    %c0_5 = arith.constant 0 : index
    %5 = vector.load %arg4[%c0_4, %c0_5] : memref<256x128xbf16, #tpu.memory_space<vmem>>, vector<256x128xbf16>
    %cst = arith.constant dense<0.000000e+00> : vector<8x128xf32>
    %6 = tpu.matmul %4, %5, %cst {dimension_numbers = #tpu.dot_dimension_numbers<[1], [0], [0], [1], [0, 0, 1, 1], [], []>} : vector<8x256xbf16>, vector<256x128xbf16>, vector<8x128xf32> -> vector<8x128xf32>
    %7 = arith.addf %3, %6 : vector<8x128xf32>
    %c0_6 = arith.constant 0 : index
    %c0_7 = arith.constant 0 : index
    %8 = vector.load %arg7[%c0_6, %c0_7] : memref<8x128xf32, #tpu.memory_space<vmem>>, vector<8x128xf32>
    tpu.vector_store %arg7[%c0_6, %c0_7], %7 {strides = array<i32>} : memref<8x128xf32, #tpu.memory_space<vmem>>, vector<8x128xf32>,
    %c0_i32_8 = arith.constant 0 : i32
    %9 = arith.cmpi eq, %arg2, %c0_i32_8 : i32
    %10 = arith.extui %9 : i1 to i32
    %c0_i32_9 = arith.constant 0 : i32
    %11 = arith.cmpi ne, %10, %c0_i32_9 : i32
    scf.if %11 {
      %c0_10 = arith.constant 0 : index
      %c0_11 = arith.constant 0 : index
      %12 = vector.load %arg7[%c0_10, %c0_11] : memref<8x128xf32, #tpu.memory_space<vmem>>, vector<8x128xf32>
      %c0_12 = arith.constant 0 : index
      %c0_13 = arith.constant 0 : index
      %13 = vector.load %arg5[%c0_12, %c0_13] : memref<1x128xf32, #tpu.memory_space<vmem>>, vector<1x128xf32>
      %14 = vector.broadcast %13 : vector<1x128xf32> to vector<8x128xf32>
      %15 = arith.addf %12, %14 : vector<8x128xf32>
      %cst_14 = arith.constant 0.000000e+00 : f32
      %16 = vector.broadcast %cst_14 : f32 to vector<8x128xf32>
      %17 = arith.maximumf %15, %16 : vector<8x128xf32>
      %18 = arith.truncf %17 : vector<8x128xf32> to vector<8x128xbf16>
      %c0_15 = arith.constant 0 : index
      %c0_16 = arith.constant 0 : index
      %19 = vector.load %arg6[%c0_15, %c0_16] : memref<8x128xbf16, #tpu.memory_space<vmem>>, vector<8x128xbf16>
      tpu.vector_store %arg6[%c0_15, %c0_16], %18 {strides = array<i32>} : memref<8x128xbf16, #tpu.memory_space<vmem>>, vector<8x128xbf16>,
    } else {
    }
    return
  }
  func.func @transform_0(%arg0: i32, %arg1: i32, %arg2: i32) -> (i32, i32) {
    %c0_i32 = arith.constant 0 : i32
    return %arg1, %arg2 : i32, i32
  }
  func.func @transform_1(%arg0: i32, %arg1: i32, %arg2: i32) -> (i32, i32) {
    %c0_i32 = arith.constant 0 : i32
    return %arg2, %arg0 : i32, i32
  }
  func.func @transform_2(%arg0: i32, %arg1: i32, %arg2: i32) -> (i32, i32) {
    %c0_i32 = arith.constant 0 : i32
    %c0_i32_0 = arith.constant 0 : i32
    return %c0_i32, %arg0 : i32, i32
  }
  func.func @transform_3(%arg0: i32, %arg1: i32, %arg2: i32) -> (i32, i32) {
    %c0_i32 = arith.constant 0 : i32
    return %arg1, %arg0 : i32, i32
  }
}

module attributes {stable_mosaic.version = 11 : i64} {
  func.func @_mm_kernel(%arg0: i32, %arg1: i32, %arg2: i32, %arg3: memref<8x256xbf16, #tpu.memory_space<vmem>>, %arg4: memref<256x512xbf16, #tpu.memory_space<vmem>>, %arg5: memref<1x512xf32, #tpu.memory_space<vmem>>, %arg6: memref<8x512xbf16, #tpu.memory_space<vmem>>, %arg7: memref<8x512xf32, #tpu.memory_space<vmem>>) attributes {dimension_semantics = [#tpu.dimension_semantics<parallel>, #tpu.dimension_semantics<parallel>, #tpu.dimension_semantics<arbitrary>], iteration_bounds = array<i64: 1, 1, 1>, scalar_prefetch = 0 : i64, scratch_operands = 1 : i64, tpu.core_type = #tpu.core_type<tc>, window_params = [{transform_indices = @transform_0, window_bounds = array<i64: 8, 256>}, {transform_indices = @transform_1, window_bounds = array<i64: 256, 512>}, {transform_indices = @transform_2, window_bounds = array<i64: 1, 512>}, {transform_indices = @transform_3, window_bounds = array<i64: 8, 512>}]} {
    %c0_i32 = arith.constant 0 : i32
    %0 = arith.cmpi eq, %arg2, %c0_i32 : i32
    %1 = arith.extui %0 : i1 to i32
    %c0_i32_0 = arith.constant 0 : i32
    %2 = arith.cmpi ne, %1, %c0_i32_0 : i32
    scf.if %2 {
      %cst_10 = arith.constant 0.000000e+00 : f32
      %12 = vector.broadcast %cst_10 : f32 to vector<8x512xf32>
      %c0_11 = arith.constant 0 : index
      %c0_12 = arith.constant 0 : index
      %13 = vector.load %arg7[%c0_11, %c0_12] : memref<8x512xf32, #tpu.memory_space<vmem>>, vector<8x512xf32>
      tpu.vector_store %arg7[%c0_11, %c0_12], %12 {strides = array<i32>} : memref<8x512xf32, #tpu.memory_space<vmem>>, vector<8x512xf32>,
    } else {
    }
    %c0 = arith.constant 0 : index
    %c0_1 = arith.constant 0 : index
    %3 = vector.load %arg7[%c0, %c0_1] : memref<8x512xf32, #tpu.memory_space<vmem>>, vector<8x512xf32>
    %c0_2 = arith.constant 0 : index
    %c0_3 = arith.constant 0 : index
    %4 = vector.load %arg3[%c0_2, %c0_3] : memref<8x256xbf16, #tpu.memory_space<vmem>>, vector<8x256xbf16>
    %c0_4 = arith.constant 0 : index
    %c0_5 = arith.constant 0 : index
    %5 = vector.load %arg4[%c0_4, %c0_5] : memref<256x512xbf16, #tpu.memory_space<vmem>>, vector<256x512xbf16>
    %cst = arith.constant dense<0.000000e+00> : vector<8x512xf32>
    %6 = tpu.matmul %4, %5, %cst {dimension_numbers = #tpu.dot_dimension_numbers<[1], [0], [0], [1], [0, 0, 1, 1], [], []>} : vector<8x256xbf16>, vector<256x512xbf16>, vector<8x512xf32> -> vector<8x512xf32>
    %7 = arith.addf %3, %6 : vector<8x512xf32>
    %c0_6 = arith.constant 0 : index
    %c0_7 = arith.constant 0 : index
    %8 = vector.load %arg7[%c0_6, %c0_7] : memref<8x512xf32, #tpu.memory_space<vmem>>, vector<8x512xf32>
    tpu.vector_store %arg7[%c0_6, %c0_7], %7 {strides = array<i32>} : memref<8x512xf32, #tpu.memory_space<vmem>>, vector<8x512xf32>,
    %c0_i32_8 = arith.constant 0 : i32
    %9 = arith.cmpi eq, %arg2, %c0_i32_8 : i32
    %10 = arith.extui %9 : i1 to i32
    %c0_i32_9 = arith.constant 0 : i32
    %11 = arith.cmpi ne, %10, %c0_i32_9 : i32
    scf.if %11 {
      %c0_10 = arith.constant 0 : index
      %c0_11 = arith.constant 0 : index
      %12 = vector.load %arg7[%c0_10, %c0_11] : memref<8x512xf32, #tpu.memory_space<vmem>>, vector<8x512xf32>
      %c0_12 = arith.constant 0 : index
      %c0_13 = arith.constant 0 : index
      %13 = vector.load %arg5[%c0_12, %c0_13] : memref<1x512xf32, #tpu.memory_space<vmem>>, vector<1x512xf32>
      %14 = vector.broadcast %13 : vector<1x512xf32> to vector<8x512xf32>
      %15 = arith.addf %12, %14 : vector<8x512xf32>
      %16 = arith.truncf %15 : vector<8x512xf32> to vector<8x512xbf16>
      %c0_14 = arith.constant 0 : index
      %c0_15 = arith.constant 0 : index
      %17 = vector.load %arg6[%c0_14, %c0_15] : memref<8x512xbf16, #tpu.memory_space<vmem>>, vector<8x512xbf16>
      tpu.vector_store %arg6[%c0_14, %c0_15], %16 {strides = array<i32>} : memref<8x512xbf16, #tpu.memory_space<vmem>>, vector<8x512xbf16>,
    } else {
    }
    return
  }
  func.func @transform_0(%arg0: i32, %arg1: i32, %arg2: i32) -> (i32, i32) {
    %c0_i32 = arith.constant 0 : i32
    return %arg1, %arg2 : i32, i32
  }
  func.func @transform_1(%arg0: i32, %arg1: i32, %arg2: i32) -> (i32, i32) {
    %c0_i32 = arith.constant 0 : i32
    return %arg2, %arg0 : i32, i32
  }
  func.func @transform_2(%arg0: i32, %arg1: i32, %arg2: i32) -> (i32, i32) {
    %c0_i32 = arith.constant 0 : i32
    %c0_i32_0 = arith.constant 0 : i32
    return %c0_i32, %arg0 : i32, i32
  }
  func.func @transform_3(%arg0: i32, %arg1: i32, %arg2: i32) -> (i32, i32) {
    %c0_i32 = arith.constant 0 : i32
    return %arg1, %arg0 : i32, i32
  }
}

module attributes {stable_mosaic.version = 11 : i64} {
  func.func @_conv_kernel(%arg0: i32, %arg1: i32, %arg2: memref<1x2x2x512xbf16, #tpu.memory_space<vmem>>, %arg3: memref<4x512x128xbf16, #tpu.memory_space<vmem>>, %arg4: memref<1x128xf32, #tpu.memory_space<vmem>>, %arg5: memref<1x1x1x128xbf16, #tpu.memory_space<vmem>>) attributes {dimension_semantics = [#tpu.dimension_semantics<parallel>, #tpu.dimension_semantics<parallel>], iteration_bounds = array<i64: 2, 1>, scalar_prefetch = 0 : i64, scratch_operands = 0 : i64, tpu.core_type = #tpu.core_type<tc>, window_params = [{transform_indices = @transform_0, window_bounds = array<i64: 1, 2, 2, 512>}, {transform_indices = @transform_1, window_bounds = array<i64: 4, 512, 128>}, {transform_indices = @transform_2, window_bounds = array<i64: 1, 128>}, {transform_indices = @transform_3, window_bounds = array<i64: 1, 1, 1, 128>}]} {
    %c0_i32 = arith.constant 0 : i32
    %cst = arith.constant 0.000000e+00 : f32
    %0 = vector.broadcast %cst : f32 to vector<1x128xf32>
    %c0_i32_0 = arith.constant 0 : i32
    %1 = arith.addi %c0_i32, %c0_i32_0 : i32
    %c0 = arith.constant 0 : index
    %2 = arith.index_cast %1 : i32 to index
    %c0_1 = arith.constant 0 : index
    %c0_2 = arith.constant 0 : index
    %3 = vector.load %arg2[%c0, %2, %c0_1, %c0_2] : memref<1x2x2x512xbf16, #tpu.memory_space<vmem>>, vector<1x1x1x512xbf16>
    %4 = vector.shape_cast %3 : vector<1x1x1x512xbf16> to vector<1x512xbf16>
    %c0_3 = arith.constant 0 : index
    %c0_4 = arith.constant 0 : index
    %c0_5 = arith.constant 0 : index
    %5 = vector.load %arg3[%c0_3, %c0_4, %c0_5] : memref<4x512x128xbf16, #tpu.memory_space<vmem>>, vector<1x512x128xbf16>
    %6 = vector.shape_cast %5 : vector<1x512x128xbf16> to vector<512x128xbf16>
    %cst_6 = arith.constant dense<0.000000e+00> : vector<1x128xf32>
    %7 = tpu.matmul %4, %6, %cst_6 {dimension_numbers = #tpu.dot_dimension_numbers<[1], [0], [0], [1], [0, 0, 1, 1], [], []>} : vector<1x512xbf16>, vector<512x128xbf16>, vector<1x128xf32> -> vector<1x128xf32>
    %8 = arith.addf %0, %7 : vector<1x128xf32>
    %c0_i32_7 = arith.constant 0 : i32
    %9 = arith.addi %c0_i32, %c0_i32_7 : i32
    %c0_8 = arith.constant 0 : index
    %10 = arith.index_cast %9 : i32 to index
    %c1 = arith.constant 1 : index
    %c0_9 = arith.constant 0 : index
    %11 = vector.load %arg2[%c0_8, %10, %c1, %c0_9] : memref<1x2x2x512xbf16, #tpu.memory_space<vmem>>, vector<1x1x1x512xbf16>
    %12 = vector.shape_cast %11 : vector<1x1x1x512xbf16> to vector<1x512xbf16>
    %c1_10 = arith.constant 1 : index
    %c0_11 = arith.constant 0 : index
    %c0_12 = arith.constant 0 : index
    %13 = vector.load %arg3[%c1_10, %c0_11, %c0_12] : memref<4x512x128xbf16, #tpu.memory_space<vmem>>, vector<1x512x128xbf16>
    %14 = vector.shape_cast %13 : vector<1x512x128xbf16> to vector<512x128xbf16>
    %cst_13 = arith.constant dense<0.000000e+00> : vector<1x128xf32>
    %15 = tpu.matmul %12, %14, %cst_13 {dimension_numbers = #tpu.dot_dimension_numbers<[1], [0], [0], [1], [0, 0, 1, 1], [], []>} : vector<1x512xbf16>, vector<512x128xbf16>, vector<1x128xf32> -> vector<1x128xf32>
    %16 = arith.addf %8, %15 : vector<1x128xf32>
    %c1_i32 = arith.constant 1 : i32
    %17 = arith.addi %c0_i32, %c1_i32 : i32
    %c0_14 = arith.constant 0 : index
    %18 = arith.index_cast %17 : i32 to index
    %c0_15 = arith.constant 0 : index
    %c0_16 = arith.constant 0 : index
    %19 = vector.load %arg2[%c0_14, %18, %c0_15, %c0_16] : memref<1x2x2x512xbf16, #tpu.memory_space<vmem>>, vector<1x1x1x512xbf16>
    %20 = vector.shape_cast %19 : vector<1x1x1x512xbf16> to vector<1x512xbf16>
    %c2 = arith.constant 2 : index
    %c0_17 = arith.constant 0 : index
    %c0_18 = arith.constant 0 : index
    %21 = vector.load %arg3[%c2, %c0_17, %c0_18] : memref<4x512x128xbf16, #tpu.memory_space<vmem>>, vector<1x512x128xbf16>
    %22 = vector.shape_cast %21 : vector<1x512x128xbf16> to vector<512x128xbf16>
    %cst_19 = arith.constant dense<0.000000e+00> : vector<1x128xf32>
    %23 = tpu.matmul %20, %22, %cst_19 {dimension_numbers = #tpu.dot_dimension_numbers<[1], [0], [0], [1], [0, 0, 1, 1], [], []>} : vector<1x512xbf16>, vector<512x128xbf16>, vector<1x128xf32> -> vector<1x128xf32>
    %24 = arith.addf %16, %23 : vector<1x128xf32>
    %c1_i32_20 = arith.constant 1 : i32
    %25 = arith.addi %c0_i32, %c1_i32_20 : i32
    %c0_21 = arith.constant 0 : index
    %26 = arith.index_cast %25 : i32 to index
    %c1_22 = arith.constant 1 : index
    %c0_23 = arith.constant 0 : index
    %27 = vector.load %arg2[%c0_21, %26, %c1_22, %c0_23] : memref<1x2x2x512xbf16, #tpu.memory_space<vmem>>, vector<1x1x1x512xbf16>
    %28 = vector.shape_cast %27 : vector<1x1x1x512xbf16> to vector<1x512xbf16>
    %c3 = arith.constant 3 : index
    %c0_24 = arith.constant 0 : index
    %c0_25 = arith.constant 0 : index
    %29 = vector.load %arg3[%c3, %c0_24, %c0_25] : memref<4x512x128xbf16, #tpu.memory_space<vmem>>, vector<1x512x128xbf16>
    %30 = vector.shape_cast %29 : vector<1x512x128xbf16> to vector<512x128xbf16>
    %cst_26 = arith.constant dense<0.000000e+00> : vector<1x128xf32>
    %31 = tpu.matmul %28, %30, %cst_26 {dimension_numbers = #tpu.dot_dimension_numbers<[1], [0], [0], [1], [0, 0, 1, 1], [], []>} : vector<1x512xbf16>, vector<512x128xbf16>, vector<1x128xf32> -> vector<1x128xf32>
    %32 = arith.addf %24, %31 : vector<1x128xf32>
    %c0_27 = arith.constant 0 : index
    %c0_28 = arith.constant 0 : index
    %33 = vector.load %arg4[%c0_27, %c0_28] : memref<1x128xf32, #tpu.memory_space<vmem>>, vector<1x128xf32>
    %34 = arith.addf %32, %33 : vector<1x128xf32>
    %cst_29 = arith.constant 0.000000e+00 : f32
    %35 = vector.broadcast %cst_29 : f32 to vector<1x128xf32>
    %36 = arith.maximumf %34, %35 : vector<1x128xf32>
    %37 = arith.truncf %36 : vector<1x128xf32> to vector<1x128xbf16>
    %c0_30 = arith.constant 0 : index
    %38 = arith.index_cast %c0_i32 : i32 to index
    %c0_31 = arith.constant 0 : index
    %c0_32 = arith.constant 0 : index
    %39 = vector.load %arg5[%c0_30, %38, %c0_31, %c0_32] : memref<1x1x1x128xbf16, #tpu.memory_space<vmem>>, vector<1x1x1x128xbf16>
    %40 = vector.shape_cast %39 : vector<1x1x1x128xbf16> to vector<1x128xbf16>
    %41 = vector.shape_cast %37 : vector<1x128xbf16> to vector<1x1x1x128xbf16>
    tpu.vector_store %arg5[%c0_30, %38, %c0_31, %c0_32], %41 {strides = array<i32>} : memref<1x1x1x128xbf16, #tpu.memory_space<vmem>>, vector<1x1x1x128xbf16>,
    %c1_i32_33 = arith.constant 1 : i32
    return
  }
  func.func @transform_0(%arg0: i32, %arg1: i32) -> (i32, i32, i32, i32) {
    %c0_i32 = arith.constant 0 : i32
    %c0_i32_0 = arith.constant 0 : i32
    %c0_i32_1 = arith.constant 0 : i32
    %c0_i32_2 = arith.constant 0 : i32
    return %arg0, %c0_i32, %c0_i32_0, %c0_i32_1 : i32, i32, i32, i32
  }
  func.func @transform_1(%arg0: i32, %arg1: i32) -> (i32, i32, i32) {
    %c0_i32 = arith.constant 0 : i32
    %c0_i32_0 = arith.constant 0 : i32
    %c0_i32_1 = arith.constant 0 : i32
    return %c0_i32, %c0_i32_0, %arg1 : i32, i32, i32
  }
  func.func @transform_2(%arg0: i32, %arg1: i32) -> (i32, i32) {
    %c0_i32 = arith.constant 0 : i32
    %c0_i32_0 = arith.constant 0 : i32
    return %c0_i32, %arg1 : i32, i32
  }
  func.func @transform_3(%arg0: i32, %arg1: i32) -> (i32, i32, i32, i32) {
    %c0_i32 = arith.constant 0 : i32
    %c0_i32_0 = arith.constant 0 : i32
    %c0_i32_1 = arith.constant 0 : i32
    return %arg0, %c0_i32, %c0_i32_0, %arg1 : i32, i32, i32, i32
  }
}

module attributes {stable_mosaic.version = 11 : i64} {
  func.func @_mm_res_kernel(%arg0: i32, %arg1: i32, %arg2: i32, %arg3: memref<8x128xbf16, #tpu.memory_space<vmem>>, %arg4: memref<128x512xbf16, #tpu.memory_space<vmem>>, %arg5: memref<1x512xf32, #tpu.memory_space<vmem>>, %arg6: memref<8x512xbf16, #tpu.memory_space<vmem>>, %arg7: memref<8x512xbf16, #tpu.memory_space<vmem>>, %arg8: memref<8x512xf32, #tpu.memory_space<vmem>>) attributes {dimension_semantics = [#tpu.dimension_semantics<parallel>, #tpu.dimension_semantics<parallel>, #tpu.dimension_semantics<arbitrary>], iteration_bounds = array<i64: 1, 1, 1>, scalar_prefetch = 0 : i64, scratch_operands = 1 : i64, tpu.core_type = #tpu.core_type<tc>, window_params = [{transform_indices = @transform_0, window_bounds = array<i64: 8, 128>}, {transform_indices = @transform_1, window_bounds = array<i64: 128, 512>}, {transform_indices = @transform_2, window_bounds = array<i64: 1, 512>}, {transform_indices = @transform_3, window_bounds = array<i64: 8, 512>}, {transform_indices = @transform_4, window_bounds = array<i64: 8, 512>}]} {
    %c0_i32 = arith.constant 0 : i32
    %0 = arith.cmpi eq, %arg2, %c0_i32 : i32
    %1 = arith.extui %0 : i1 to i32
    %c0_i32_0 = arith.constant 0 : i32
    %2 = arith.cmpi ne, %1, %c0_i32_0 : i32
    scf.if %2 {
      %cst_10 = arith.constant 0.000000e+00 : f32
      %12 = vector.broadcast %cst_10 : f32 to vector<8x512xf32>
      %c0_11 = arith.constant 0 : index
      %c0_12 = arith.constant 0 : index
      %13 = vector.load %arg8[%c0_11, %c0_12] : memref<8x512xf32, #tpu.memory_space<vmem>>, vector<8x512xf32>
      tpu.vector_store %arg8[%c0_11, %c0_12], %12 {strides = array<i32>} : memref<8x512xf32, #tpu.memory_space<vmem>>, vector<8x512xf32>,
    } else {
    }
    %c0 = arith.constant 0 : index
    %c0_1 = arith.constant 0 : index
    %3 = vector.load %arg8[%c0, %c0_1] : memref<8x512xf32, #tpu.memory_space<vmem>>, vector<8x512xf32>
    %c0_2 = arith.constant 0 : index
    %c0_3 = arith.constant 0 : index
    %4 = vector.load %arg3[%c0_2, %c0_3] : memref<8x128xbf16, #tpu.memory_space<vmem>>, vector<8x128xbf16>
    %c0_4 = arith.constant 0 : index
    %c0_5 = arith.constant 0 : index
    %5 = vector.load %arg4[%c0_4, %c0_5] : memref<128x512xbf16, #tpu.memory_space<vmem>>, vector<128x512xbf16>
    %cst = arith.constant dense<0.000000e+00> : vector<8x512xf32>
    %6 = tpu.matmul %4, %5, %cst {dimension_numbers = #tpu.dot_dimension_numbers<[1], [0], [0], [1], [0, 0, 1, 1], [], []>} : vector<8x128xbf16>, vector<128x512xbf16>, vector<8x512xf32> -> vector<8x512xf32>
    %7 = arith.addf %3, %6 : vector<8x512xf32>
    %c0_6 = arith.constant 0 : index
    %c0_7 = arith.constant 0 : index
    %8 = vector.load %arg8[%c0_6, %c0_7] : memref<8x512xf32, #tpu.memory_space<vmem>>, vector<8x512xf32>
    tpu.vector_store %arg8[%c0_6, %c0_7], %7 {strides = array<i32>} : memref<8x512xf32, #tpu.memory_space<vmem>>, vector<8x512xf32>,
    %c0_i32_8 = arith.constant 0 : i32
    %9 = arith.cmpi eq, %arg2, %c0_i32_8 : i32
    %10 = arith.extui %9 : i1 to i32
    %c0_i32_9 = arith.constant 0 : i32
    %11 = arith.cmpi ne, %10, %c0_i32_9 : i32
    scf.if %11 {
      %c0_10 = arith.constant 0 : index
      %c0_11 = arith.constant 0 : index
      %12 = vector.load %arg8[%c0_10, %c0_11] : memref<8x512xf32, #tpu.memory_space<vmem>>, vector<8x512xf32>
      %c0_12 = arith.constant 0 : index
      %c0_13 = arith.constant 0 : index
      %13 = vector.load %arg5[%c0_12, %c0_13] : memref<1x512xf32, #tpu.memory_space<vmem>>, vector<1x512xf32>
      %14 = vector.broadcast %13 : vector<1x512xf32> to vector<8x512xf32>
      %15 = arith.addf %12, %14 : vector<8x512xf32>
      %c0_14 = arith.constant 0 : index
      %c0_15 = arith.constant 0 : index
      %16 = vector.load %arg6[%c0_14, %c0_15] : memref<8x512xbf16, #tpu.memory_space<vmem>>, vector<8x512xbf16>
      %17 = arith.extf %16 : vector<8x512xbf16> to vector<8x512xf32>
      %18 = arith.addf %15, %17 : vector<8x512xf32>
      %cst_16 = arith.constant 0.000000e+00 : f32
      %19 = vector.broadcast %cst_16 : f32 to vector<8x512xf32>
      %20 = arith.maximumf %18, %19 : vector<8x512xf32>
      %21 = arith.truncf %20 : vector<8x512xf32> to vector<8x512xbf16>
      %c0_17 = arith.constant 0 : index
      %c0_18 = arith.constant 0 : index
      %22 = vector.load %arg7[%c0_17, %c0_18] : memref<8x512xbf16, #tpu.memory_space<vmem>>, vector<8x512xbf16>
      tpu.vector_store %arg7[%c0_17, %c0_18], %21 {strides = array<i32>} : memref<8x512xbf16, #tpu.memory_space<vmem>>, vector<8x512xbf16>,
    } else {
    }
    return
  }
  func.func @transform_0(%arg0: i32, %arg1: i32, %arg2: i32) -> (i32, i32) {
    %c0_i32 = arith.constant 0 : i32
    return %arg1, %arg2 : i32, i32
  }
  func.func @transform_1(%arg0: i32, %arg1: i32, %arg2: i32) -> (i32, i32) {
    %c0_i32 = arith.constant 0 : i32
    return %arg2, %arg0 : i32, i32
  }
  func.func @transform_2(%arg0: i32, %arg1: i32, %arg2: i32) -> (i32, i32) {
    %c0_i32 = arith.constant 0 : i32
    %c0_i32_0 = arith.constant 0 : i32
    return %c0_i32, %arg0 : i32, i32
  }
  func.func @transform_3(%arg0: i32, %arg1: i32, %arg2: i32) -> (i32, i32) {
    %c0_i32 = arith.constant 0 : i32
    return %arg1, %arg0 : i32, i32
  }
  func.func @transform_4(%arg0: i32, %arg1: i32, %arg2: i32) -> (i32, i32) {
    %c0_i32 = arith.constant 0 : i32
    return %arg1, %arg0 : i32, i32
  }
}

module attributes {stable_mosaic.version = 11 : i64} {
  func.func @_gap_kernel(%arg0: i32, %arg1: i32, %arg2: memref<2x8x128xbf16, #tpu.memory_space<vmem>>, %arg3: memref<2x128xf32, #tpu.memory_space<vmem>>, %arg4: memref<2x128xf32, #tpu.memory_space<vmem>>) attributes {dimension_semantics = [#tpu.dimension_semantics<parallel>, #tpu.dimension_semantics<arbitrary>], iteration_bounds = array<i64: 4, 1>, scalar_prefetch = 0 : i64, scratch_operands = 1 : i64, tpu.core_type = #tpu.core_type<tc>, window_params = [{transform_indices = @transform_0, window_bounds = array<i64: 2, 8, 128>}, {transform_indices = @transform_1, window_bounds = array<i64: 2, 128>}]} {
    %c0_i32 = arith.constant 0 : i32
    %0 = arith.cmpi eq, %arg1, %c0_i32 : i32
    %1 = arith.extui %0 : i1 to i32
    %c0_i32_0 = arith.constant 0 : i32
    %2 = arith.cmpi ne, %1, %c0_i32_0 : i32
    scf.if %2 {
      %cst_9 = arith.constant 0.000000e+00 : f32
      %12 = vector.broadcast %cst_9 : f32 to vector<2x128xf32>
      %c0_10 = arith.constant 0 : index
      %c0_11 = arith.constant 0 : index
      %13 = vector.load %arg4[%c0_10, %c0_11] : memref<2x128xf32, #tpu.memory_space<vmem>>, vector<2x128xf32>
      tpu.vector_store %arg4[%c0_10, %c0_11], %12 {strides = array<i32>} : memref<2x128xf32, #tpu.memory_space<vmem>>, vector<2x128xf32>,
    } else {
    }
    %c0 = arith.constant 0 : index
    %c0_1 = arith.constant 0 : index
    %3 = vector.load %arg4[%c0, %c0_1] : memref<2x128xf32, #tpu.memory_space<vmem>>, vector<2x128xf32>
    %c0_2 = arith.constant 0 : index
    %c0_3 = arith.constant 0 : index
    %c0_4 = arith.constant 0 : index
    %4 = vector.load %arg2[%c0_2, %c0_3, %c0_4] : memref<2x8x128xbf16, #tpu.memory_space<vmem>>, vector<2x8x128xbf16>
    %5 = arith.extf %4 : vector<2x8x128xbf16> to vector<2x8x128xf32>
    %cst = arith.constant dense<0.000000e+00> : vector<2x128xf32>
    %6 = vector.multi_reduction <add>, %5, %cst [1] : vector<2x8x128xf32> to vector<2x128xf32>
    %7 = arith.addf %3, %6 : vector<2x128xf32>
    %c0_5 = arith.constant 0 : index
    %c0_6 = arith.constant 0 : index
    %8 = vector.load %arg4[%c0_5, %c0_6] : memref<2x128xf32, #tpu.memory_space<vmem>>, vector<2x128xf32>
    tpu.vector_store %arg4[%c0_5, %c0_6], %7 {strides = array<i32>} : memref<2x128xf32, #tpu.memory_space<vmem>>, vector<2x128xf32>,
    %c0_i32_7 = arith.constant 0 : i32
    %9 = arith.cmpi eq, %arg1, %c0_i32_7 : i32
    %10 = arith.extui %9 : i1 to i32
    %c0_i32_8 = arith.constant 0 : i32
    %11 = arith.cmpi ne, %10, %c0_i32_8 : i32
    scf.if %11 {
      %c0_9 = arith.constant 0 : index
      %c0_10 = arith.constant 0 : index
      %12 = vector.load %arg4[%c0_9, %c0_10] : memref<2x128xf32, #tpu.memory_space<vmem>>, vector<2x128xf32>
      %cst_11 = arith.constant 1.000000e+00 : f32
      %13 = vector.broadcast %cst_11 : f32 to vector<2x128xf32>
      %14 = arith.mulf %12, %13 : vector<2x128xf32>
      %c0_12 = arith.constant 0 : index
      %c0_13 = arith.constant 0 : index
      %15 = vector.load %arg3[%c0_12, %c0_13] : memref<2x128xf32, #tpu.memory_space<vmem>>, vector<2x128xf32>
      tpu.vector_store %arg3[%c0_12, %c0_13], %14 {strides = array<i32>} : memref<2x128xf32, #tpu.memory_space<vmem>>, vector<2x128xf32>,
    } else {
    }
    return
  }
  func.func @transform_0(%arg0: i32, %arg1: i32) -> (i32, i32, i32) {
    %c0_i32 = arith.constant 0 : i32
    %c0_i32_0 = arith.constant 0 : i32
    return %c0_i32, %arg1, %arg0 : i32, i32, i32
  }
  func.func @transform_1(%arg0: i32, %arg1: i32) -> (i32, i32) {
    %c0_i32 = arith.constant 0 : i32
    %c0_i32_0 = arith.constant 0 : i32
    return %c0_i32, %arg0 : i32, i32
  }
}

module attributes {stable_mosaic.version = 11 : i64} {
  func.func @_mm_kernel(%arg0: i32, %arg1: i32, %arg2: i32, %arg3: memref<8x512xbf16, #tpu.memory_space<vmem>>, %arg4: memref<512x128xbf16, #tpu.memory_space<vmem>>, %arg5: memref<1x128xf32, #tpu.memory_space<vmem>>, %arg6: memref<8x128xf32, #tpu.memory_space<vmem>>, %arg7: memref<8x128xf32, #tpu.memory_space<vmem>>) attributes {dimension_semantics = [#tpu.dimension_semantics<parallel>, #tpu.dimension_semantics<parallel>, #tpu.dimension_semantics<arbitrary>], iteration_bounds = array<i64: 1, 1, 1>, scalar_prefetch = 0 : i64, scratch_operands = 1 : i64, tpu.core_type = #tpu.core_type<tc>, window_params = [{transform_indices = @transform_0, window_bounds = array<i64: 8, 512>}, {transform_indices = @transform_1, window_bounds = array<i64: 512, 128>}, {transform_indices = @transform_2, window_bounds = array<i64: 1, 128>}, {transform_indices = @transform_3, window_bounds = array<i64: 8, 128>}]} {
    %c0_i32 = arith.constant 0 : i32
    %0 = arith.cmpi eq, %arg2, %c0_i32 : i32
    %1 = arith.extui %0 : i1 to i32
    %c0_i32_0 = arith.constant 0 : i32
    %2 = arith.cmpi ne, %1, %c0_i32_0 : i32
    scf.if %2 {
      %cst_10 = arith.constant 0.000000e+00 : f32
      %12 = vector.broadcast %cst_10 : f32 to vector<8x128xf32>
      %c0_11 = arith.constant 0 : index
      %c0_12 = arith.constant 0 : index
      %13 = vector.load %arg7[%c0_11, %c0_12] : memref<8x128xf32, #tpu.memory_space<vmem>>, vector<8x128xf32>
      tpu.vector_store %arg7[%c0_11, %c0_12], %12 {strides = array<i32>} : memref<8x128xf32, #tpu.memory_space<vmem>>, vector<8x128xf32>,
    } else {
    }
    %c0 = arith.constant 0 : index
    %c0_1 = arith.constant 0 : index
    %3 = vector.load %arg7[%c0, %c0_1] : memref<8x128xf32, #tpu.memory_space<vmem>>, vector<8x128xf32>
    %c0_2 = arith.constant 0 : index
    %c0_3 = arith.constant 0 : index
    %4 = vector.load %arg3[%c0_2, %c0_3] : memref<8x512xbf16, #tpu.memory_space<vmem>>, vector<8x512xbf16>
    %c0_4 = arith.constant 0 : index
    %c0_5 = arith.constant 0 : index
    %5 = vector.load %arg4[%c0_4, %c0_5] : memref<512x128xbf16, #tpu.memory_space<vmem>>, vector<512x128xbf16>
    %cst = arith.constant dense<0.000000e+00> : vector<8x128xf32>
    %6 = tpu.matmul %4, %5, %cst {dimension_numbers = #tpu.dot_dimension_numbers<[1], [0], [0], [1], [0, 0, 1, 1], [], []>} : vector<8x512xbf16>, vector<512x128xbf16>, vector<8x128xf32> -> vector<8x128xf32>
    %7 = arith.addf %3, %6 : vector<8x128xf32>
    %c0_6 = arith.constant 0 : index
    %c0_7 = arith.constant 0 : index
    %8 = vector.load %arg7[%c0_6, %c0_7] : memref<8x128xf32, #tpu.memory_space<vmem>>, vector<8x128xf32>
    tpu.vector_store %arg7[%c0_6, %c0_7], %7 {strides = array<i32>} : memref<8x128xf32, #tpu.memory_space<vmem>>, vector<8x128xf32>,
    %c0_i32_8 = arith.constant 0 : i32
    %9 = arith.cmpi eq, %arg2, %c0_i32_8 : i32
    %10 = arith.extui %9 : i1 to i32
    %c0_i32_9 = arith.constant 0 : i32
    %11 = arith.cmpi ne, %10, %c0_i32_9 : i32
    scf.if %11 {
      %c0_10 = arith.constant 0 : index
      %c0_11 = arith.constant 0 : index
      %12 = vector.load %arg7[%c0_10, %c0_11] : memref<8x128xf32, #tpu.memory_space<vmem>>, vector<8x128xf32>
      %c0_12 = arith.constant 0 : index
      %c0_13 = arith.constant 0 : index
      %13 = vector.load %arg5[%c0_12, %c0_13] : memref<1x128xf32, #tpu.memory_space<vmem>>, vector<1x128xf32>
      %14 = vector.broadcast %13 : vector<1x128xf32> to vector<8x128xf32>
      %15 = arith.addf %12, %14 : vector<8x128xf32>
      %c0_14 = arith.constant 0 : index
      %c0_15 = arith.constant 0 : index
      %16 = vector.load %arg6[%c0_14, %c0_15] : memref<8x128xf32, #tpu.memory_space<vmem>>, vector<8x128xf32>
      tpu.vector_store %arg6[%c0_14, %c0_15], %15 {strides = array<i32>} : memref<8x128xf32, #tpu.memory_space<vmem>>, vector<8x128xf32>,
    } else {
    }
    return
  }
  func.func @transform_0(%arg0: i32, %arg1: i32, %arg2: i32) -> (i32, i32) {
    %c0_i32 = arith.constant 0 : i32
    return %arg1, %arg2 : i32, i32
  }
  func.func @transform_1(%arg0: i32, %arg1: i32, %arg2: i32) -> (i32, i32) {
    %c0_i32 = arith.constant 0 : i32
    return %arg2, %arg0 : i32, i32
  }
  func.func @transform_2(%arg0: i32, %arg1: i32, %arg2: i32) -> (i32, i32) {
    %c0_i32 = arith.constant 0 : i32
    %c0_i32_0 = arith.constant 0 : i32
    return %c0_i32, %arg0 : i32, i32
  }
  func.func @transform_3(%arg0: i32, %arg1: i32, %arg2: i32) -> (i32, i32) {
    %c0_i32 = arith.constant 0 : i32
    return %arg1, %arg0 : i32, i32
  }
}

</mosaic_0001>

<llo_original>
// kernel: net_forward.21
$region0: #{net_forward.21}
  #allocation0 [shape = 'u32[]', space=smem, size = 0x4, offset = 0x4, fixed_abs, tag = 'smem constant byte address 0x4 - core index']
  #allocation1 [shape = 'u32[144,128]{1,0:T(1,128)}', space=vmem, size = 0x12000, scoped, tag = 'internal scratch']
  %s0 = inlined_call_operand.vmem [shape: bf16[2,4,5,5,16], index: 0, kind: input, shape index: {}]
  %s1 = inlined_call_operand.vmem [shape: bf16[2,4,4,16], index: 1, kind: output, shape index: {}]
  %s2 = sld [smem:[#allocation0]]
  $region37: #{net_forward.21} parent=0
    _
  %s4 = ssub.s32 1, %s2
  %s5 = scalar_select 0, %s4, %s2
  loop: start=0, step=1, limit=4
  $region2: #{net_forward.21} parent=0 // loop_pre_header
    _
  $region3: #{net_forward.21} parent=0 // loop_header
    %s7 = sphi 0, %s11
    %p8 = scmp.ge.s32.totalorder %s7, 4
    %s17 = sphi 0, %s19
    %s20 = sphi 0, %s17
    %s21 = sphi 0, %s20
    %s37 = sphi 0, %s21
    %s43 = sphi 0, %s45
    %s46 = sphi 0, %s43
    %s47 = sphi 0, %s46
    %s63 = sphi 0, %s47
  $region4: #{net_forward.21} parent=0 // loop_header_branch
    %10 = sbr.rel (%p8) target = $region8
  $region5: #{net_forward.21} parent=0 // loop_body
    %s12 = ssub.s32 %s7, 1
    %s13 = ssub.s32 %s7, 2
    %s14 = sadd.s32 %s7, 1
    %s15 = ssub.s32 %s7, %s14
    %p16 = scmp.eq.s32.totalorder %s15, 0
    %s18 = sadd.s32 %s17, 1
    %s19 = scalar_select %p16, %s17, %s18
    %p22 = pneg %p16
    %p23 = scmp.eq.s32.totalorder %s7, 1
    %p24 = por %p22, %p23
    %p25 = scmp.ne.s32.totalorder %s17, %s20
    %p26 = scmp.eq.s32.totalorder %s7, 0
    %p27 = por %p25, %p26
    %p28 = scmp.ne.s32.totalorder %s17, %s20
    %p29 = scmp.eq.s32.totalorder %s12, 1
    %p30 = por %p28, %p29
    %p31 = scmp.ne.s32.totalorder %s20, %s21
    %p32 = scmp.eq.s32.totalorder %s12, 0
    %p33 = por %p31, %p32
    %p34 = scmp.ne.s32.totalorder %s20, %s21
    %p35 = scmp.eq.s32.totalorder %s13, 1
    %p36 = por %p34, %p35
    %p38 = scmp.ne.s32.totalorder %s21, %s37
    %p39 = scmp.eq.s32.totalorder %s13, 0
    %p40 = por %p38, %p39
    %s41 = ssub.s32 %s7, %s14
    %p42 = scmp.eq.s32.totalorder %s41, 0
    %s44 = sadd.s32 %s43, 1
    %s45 = scalar_select %p42, %s43, %s44
    %p48 = pneg %p42
    %p49 = scmp.eq.s32.totalorder %s7, 1
    %p50 = por %p48, %p49
    %p51 = scmp.ne.s32.totalorder %s43, %s46
    %p52 = scmp.eq.s32.totalorder %s7, 0
    %p53 = por %p51, %p52
    %p54 = scmp.ne.s32.totalorder %s43, %s46
    %p55 = scmp.eq.s32.totalorder %s12, 1
    %p56 = por %p54, %p55
    %p57 = scmp.ne.s32.totalorder %s46, %s47
    %p58 = scmp.eq.s32.totalorder %s12, 0
    %p59 = por %p57, %p58
    %p60 = scmp.ne.s32.totalorder %s46, %s47
    %p61 = scmp.eq.s32.totalorder %s13, 1
    %p62 = por %p60, %p61
    %p64 = scmp.ne.s32.totalorder %s47, %s63
    %p65 = scmp.eq.s32.totalorder %s13, 0
    %p66 = por %p64, %p65
    %p67 = scmp.le.s32.totalorder 1, %s7
    %p68 = scmp.lt.s32.totalorder %s7, 3
    %p69 = pnand %p67, %p68
    %p70 = pneg %p69
    // Predicated region
    $region9: #{net_forward.21} parent=5 // pred_check
      _
    $region10: #{net_forward.21} parent=5 // pred_check_branch
      %72 = sbr.rel (%p69) target = $region12
    $region11: #{net_forward.21} parent=5 // pred_region
      %s73 = ssub.s32 %s7, 1
    $region12: #{net_forward.21} parent=5 // pred_fallthru
      _
    %p74 = scmp.lt.s32.totalorder %s7, 2
    // Predicated region
    $region13: #{net_forward.21} parent=5 // pred_check
      %p75 = pneg %p74
    $region14: #{net_forward.21} parent=5 // pred_check_branch
      %77 = sbr.rel (%p75) target = $region16
    $region15: #{net_forward.21} parent=5 // pred_region
      // Predicated region
      $region17: #{net_forward.21} parent=15 // pred_check
        %p78 = pneg %p27
      $region18: #{net_forward.21} parent=15 // pred_check_branch
        %80 = sbr.rel (%p78) target = $region20
      $region19: #{net_forward.21} parent=15 // pred_region
        %p81 = scmp.lt.s32.totalorder %s7, 1
        %s82 = scalar_select %p81, %s7, 1
        %s83 = smul.addr %s82, 20
        %s84 = smul.addr %s83, 4
        %s85 = scalar_lea.vmem %s0, %s84
      $region20: #{net_forward.21} parent=15 // pred_fallthru
        _
    $region16: #{net_forward.21} parent=5 // pred_fallthru
      _
    %p86 = scmp.le.s32.totalorder 1, %s7
    %p87 = scmp.lt.s32.totalorder %s7, 3
    %p88 = pnand %p86, %p87
    %p89 = pneg %p88
    // Predicated region
    $region21: #{net_forward.21} parent=5 // pred_check
      _
    $region22: #{net_forward.21} parent=5 // pred_check_branch
      %91 = sbr.rel (%p88) target = $region24
    $region23: #{net_forward.21} parent=5 // pred_region
      %s92 = ssub.s32 %s7, 1
      %p93 = scmp.lt.s32.totalorder %s12, 1
      %s94 = scalar_select %p93, %s12, 1
      %s95 = smul.addr %s94, 20
      %s96 = smul.addr %s95, 4
      %s97 = scalar_lea.vmem %s0, %s96
      %p98 = pneg %p33
      %p99 = pneg %p30
      %p100 = pneg %p59
      %p101 = pneg %p56
      %p102 = scmp.lt.s32.totalorder %s12, 1
      %s103 = scalar_select %p102, %s12, 1
      %s104 = smul.addr %s103, 4
      %s105 = smul.addr %s104, 2
      %s106 = scalar_lea.vmem %s1, %s105
      %p107 = scmp.lt.s32.totalorder %s12, 1
      %s108 = scalar_select %p107, %s12, 1
      %s109 = smul.addr %s108, 20
      %s110 = smul.addr %s109, 4
      %s111 = scalar_lea.vmem %s0, %s110
      %p112 = scmp.lt.s32.totalorder %s12, 1
      %s113 = scalar_select %p112, %s12, 1
      %s114 = smul.addr %s113, 4
      %s115 = smul.addr %s114, 2
      %s116 = scalar_lea.vmem %s1, %s115
      %v117 = vld [vmem:[%s111] sm:$0x3]
      %v118 = vld [vmem:[%s111 + $0x4] sm:$0x3]
      %v119 = vld [vmem:[%s111 + $0x8] sm:$0x3]
      %v120 = vld [vmem:[%s111 + $0xc] sm:$0x3]
      %s121 = scalar_lea.vmem %s111, 20
      %v122 = vld [vmem:[%s121] sm:$0x3]
      %v123 = vld [vmem:[%s121 + $0x4] sm:$0x3]
      %v124 = vld [vmem:[%s121 + $0x8] sm:$0x3]
      %v125 = vld [vmem:[%s121 + $0xc] sm:$0x3]
      %v126 = vmax.bf16 %v117, %v122
      %v127 = vmax.bf16 %v118, %v123
      %v128 = vmax.bf16 %v119, %v124
      %v129 = vmax.bf16 %v120, %v125
      %v130 = vld [vmem:[%s111] sm:$0x7]
      %v131 = vld [vmem:[%s111 + $0x4] sm:$0x7]
      %v132 = vld [vmem:[%s111 + $0x8] sm:$0x7]
      %v133 = vld [vmem:[%s111 + $0xc] sm:$0x7]
      %v135 = vshrl.u32 %v130, 16
      %v137 = vrot.slane %v135, 4
      %v138 = vshll.u32 %v130, 16
      %v140 = vrot.slane %v138, 5
      %v141 = vor.u32 %v137, %v140
      %v142 = vrot.slane %v141, 4
      %v144 = vshrl.u32 %v131, 16
      %v146 = vrot.slane %v144, 4
      %v147 = vshll.u32 %v131, 16
      %v149 = vrot.slane %v147, 5
      %v150 = vor.u32 %v146, %v149
      %v151 = vrot.slane %v150, 4
      %v153 = vshrl.u32 %v132, 16
      %v155 = vrot.slane %v153, 4
      %v156 = vshll.u32 %v132, 16
      %v158 = vrot.slane %v156, 5
      %v159 = vor.u32 %v155, %v158
      %v160 = vrot.slane %v159, 4
      %v162 = vshrl.u32 %v133, 16
      %v164 = vrot.slane %v162, 4
      %v165 = vshll.u32 %v133, 16
      %v167 = vrot.slane %v165, 5
      %v168 = vor.u32 %v164, %v167
      %v169 = vrot.slane %v168, 4
      %v174 = vmax.bf16 %v126, %v142
      %v175 = vmax.bf16 %v127, %v151
      %v176 = vmax.bf16 %v128, %v160
      %v177 = vmax.bf16 %v129, %v169
      %s178 = scalar_lea.vmem %s111, 40
      %v179 = vld [vmem:[%s178] sm:$0x3]
      %v180 = vld [vmem:[%s178 + $0x4] sm:$0x3]
      %v181 = vld [vmem:[%s178 + $0x8] sm:$0x3]
      %v182 = vld [vmem:[%s178 + $0xc] sm:$0x3]
      %v183 = vmax.bf16 %v174, %v179
      %v184 = vmax.bf16 %v175, %v180
      %v185 = vmax.bf16 %v176, %v181
      %v186 = vmax.bf16 %v177, %v182
      %s187 = scalar_lea.vmem %s111, 60
      %v188 = vld [vmem:[%s187] sm:$0x3]
      %v189 = vld [vmem:[%s187 + $0x4] sm:$0x3]
      %v190 = vld [vmem:[%s187 + $0x8] sm:$0x3]
      %v191 = vld [vmem:[%s187 + $0xc] sm:$0x3]
      %v192 = vmax.bf16 %v183, %v188
      %v193 = vmax.bf16 %v184, %v189
      %v194 = vmax.bf16 %v185, %v190
      %v195 = vmax.bf16 %v186, %v191
      %v196 = vld [vmem:[%s178] sm:$0x7]
      %v197 = vld [vmem:[%s178 + $0x4] sm:$0x7]
      %v198 = vld [vmem:[%s178 + $0x8] sm:$0x7]
      %v199 = vld [vmem:[%s178 + $0xc] sm:$0x7]
      %v201 = vshrl.u32 %v196, 16
      %v203 = vrot.slane %v201, 4
      %v204 = vshll.u32 %v196, 16
      %v206 = vrot.slane %v204, 5
      %v207 = vor.u32 %v203, %v206
      %v208 = vrot.slane %v207, 4
      %v210 = vshrl.u32 %v197, 16
      %v212 = vrot.slane %v210, 4
      %v213 = vshll.u32 %v197, 16
      %v215 = vrot.slane %v213, 5
      %v216 = vor.u32 %v212, %v215
      %v217 = vrot.slane %v216, 4
      %v219 = vshrl.u32 %v198, 16
      %v221 = vrot.slane %v219, 4
      %v222 = vshll.u32 %v198, 16
      %v224 = vrot.slane %v222, 5
      %v225 = vor.u32 %v221, %v224
      %v226 = vrot.slane %v225, 4
      %v228 = vshrl.u32 %v199, 16
      %v230 = vrot.slane %v228, 4
      %v231 = vshll.u32 %v199, 16
      %v233 = vrot.slane %v231, 5
      %v234 = vor.u32 %v230, %v233
      %v235 = vrot.slane %v234, 4
      %v240 = vmax.bf16 %v192, %v208
      %v241 = vmax.bf16 %v193, %v217
      %v242 = vmax.bf16 %v194, %v226
      %v243 = vmax.bf16 %v195, %v235
      %s244 = scalar_lea.vmem %s111, 4
      %v245 = vld [vmem:[%s244] sm:$0x3]
      %v246 = vld [vmem:[%s244 + $0x4] sm:$0x3]
      %v247 = vld [vmem:[%s244 + $0x8] sm:$0x3]
      %v248 = vld [vmem:[%s244 + $0xc] sm:$0x3]
      %v249 = vmax.bf16 %v240, %v245
      %v250 = vmax.bf16 %v241, %v246
      %v251 = vmax.bf16 %v242, %v247
      %v252 = vmax.bf16 %v243, %v248
      %s253 = scalar_lea.vmem %s111, 24
      %v254 = vld [vmem:[%s253] sm:$0x3]
      %v255 = vld [vmem:[%s253 + $0x4] sm:$0x3]
      %v256 = vld [vmem:[%s253 + $0x8] sm:$0x3]
      %v257 = vld [vmem:[%s253 + $0xc] sm:$0x3]
      %v258 = vmax.bf16 %v249, %v254
      %v259 = vmax.bf16 %v250, %v255
      %v260 = vmax.bf16 %v251, %v256
      %v261 = vmax.bf16 %v252, %v257
      %v262 = vld [vmem:[%s244] sm:$0x7]
      %v263 = vld [vmem:[%s244 + $0x4] sm:$0x7]
      %v264 = vld [vmem:[%s244 + $0x8] sm:$0x7]
      %v265 = vld [vmem:[%s244 + $0xc] sm:$0x7]
      %v267 = vshrl.u32 %v262, 16
      %v269 = vrot.slane %v267, 4
      %v270 = vshll.u32 %v262, 16
      %v272 = vrot.slane %v270, 5
      %v273 = vor.u32 %v269, %v272
      %v274 = vrot.slane %v273, 4
      %v276 = vshrl.u32 %v263, 16
      %v278 = vrot.slane %v276, 4
      %v279 = vshll.u32 %v263, 16
      %v281 = vrot.slane %v279, 5
      %v282 = vor.u32 %v278, %v281
      %v283 = vrot.slane %v282, 4
      %v285 = vshrl.u32 %v264, 16
      %v287 = vrot.slane %v285, 4
      %v288 = vshll.u32 %v264, 16
      %v290 = vrot.slane %v288, 5
      %v291 = vor.u32 %v287, %v290
      %v292 = vrot.slane %v291, 4
      %v294 = vshrl.u32 %v265, 16
      %v296 = vrot.slane %v294, 4
      %v297 = vshll.u32 %v265, 16
      %v299 = vrot.slane %v297, 5
      %v300 = vor.u32 %v296, %v299
      %v301 = vrot.slane %v300, 4
      %v306 = vmax.bf16 %v258, %v274
      %v307 = vmax.bf16 %v259, %v283
      %v308 = vmax.bf16 %v260, %v292
      %v309 = vmax.bf16 %v261, %v301
      %vm310 = vcmask 123904
      %311 = vst.msk [vmem:[%s116] sm:$0x3] %vm310, %v306
      %312 = vst.msk [vmem:[%s116 + $0x2] sm:$0x3] %vm310, %v307
      %313 = vst.msk [vmem:[%s116 + $0x4] sm:$0x3] %vm310, %v308
      %314 = vst.msk [vmem:[%s116 + $0x6] sm:$0x3] %vm310, %v309
      %p315 = scmp.lt.s32.totalorder %s12, 1
      %s316 = scalar_select %p315, %s12, 1
      %s317 = smul.addr %s316, 4
      %s318 = smul.addr %s317, 2
      %s319 = scalar_lea.vmem %s1, %s318
      // Predicated region
      $region25: #{net_forward.21} parent=23 // pred_check
        %p320 = pneg %p56
      $region26: #{net_forward.21} parent=23 // pred_check_branch
        %322 = sbr.rel (%p320) target = $region28
      $region27: #{net_forward.21} parent=23 // pred_region
        _
      $region28: #{net_forward.21} parent=23 // pred_fallthru
        _
    $region24: #{net_forward.21} parent=5 // pred_fallthru
      _
    %p323 = scmp.le.s32.totalorder 2, %s7
    // Predicated region
    $region29: #{net_forward.21} parent=5 // pred_check
      %p324 = pneg %p323
    $region30: #{net_forward.21} parent=5 // pred_check_branch
      %326 = sbr.rel (%p324) target = $region32
    $region31: #{net_forward.21} parent=5 // pred_region
      %s327 = ssub.s32 %s7, 2
      // Predicated region
      $region33: #{net_forward.21} parent=31 // pred_check
        %p328 = pneg %p62
      $region34: #{net_forward.21} parent=31 // pred_check_branch
        %330 = sbr.rel (%p328) target = $region36
      $region35: #{net_forward.21} parent=31 // pred_region
        %p331 = scmp.lt.s32.totalorder %s13, 1
        %s332 = scalar_select %p331, %s13, 1
        %s333 = smul.addr %s332, 4
        %s334 = smul.addr %s333, 2
        %s335 = scalar_lea.vmem %s1, %s334
      $region36: #{net_forward.21} parent=31 // pred_fallthru
        _
    $region32: #{net_forward.21} parent=5 // pred_fallthru
      _
  $region6: #{net_forward.21} parent=0 // loop_footer
    %s11 = sadd.s32 1, %s7
  $region7: #{net_forward.21} parent=0 // loop_footer_branch
    %6 = sbr.rel target = $region3
  $region8: #{net_forward.21} parent=0 // loop_exit
    _

// kernel: net_forward.20
$region0: #{net_forward.20}
  #allocation0 [shape = 'u32[]', space=smem, size = 0x4, offset = 0x4, fixed_abs, tag = 'smem constant byte address 0x4 - core index']
  #allocation1 [shape = 'u32[144,128]{1,0:T(1,128)}', space=vmem, size = 0x12000, scoped, tag = 'internal scratch']
  %s0 = inlined_call_operand.vmem [shape: bf16[2,9,9,16], index: 0, kind: input, shape index: {}]
  %s1 = inlined_call_operand.vmem [shape: bf16[4,16,128], index: 1, kind: input, shape index: {}]
  %s2 = inlined_call_operand.vmem [shape: f32[1,128], index: 2, kind: input, shape index: {}]
  %s3 = inlined_call_operand.vmem [shape: bf16[2,8,8,128], index: 3, kind: output, shape index: {}]
  %s4 = sld [smem:[#allocation0]]
  $region52: #{net_forward.20} parent=0
    _
  %s6 = ssub.s32 1, %s4
  %s7 = scalar_select 0, %s6, %s4
  loop: start=0, step=1, limit=4
  $region2: #{net_forward.20} parent=0 // loop_pre_header
    _
  $region3: #{net_forward.20} parent=0 // loop_header
    %s9 = sphi 0, %s13
    %p10 = scmp.ge.s32.totalorder %s9, 4
    %s16 = sphi 0, %s28
    %s17 = sphi 0, %s24
    %s18 = sphi 0, %s16
    %s19 = sphi 0, %s17
    %s20 = sphi 0, %s18
    %s21 = sphi 0, %s19
    %s31 = sphi 0, %s33
    %s34 = sphi 0, %s31
    %s35 = sphi 0, %s34
    %s51 = sphi 0, %s35
    %s57 = sphi 0, %s59
    %s60 = sphi 0, %s57
    %s61 = sphi 0, %s60
    %s77 = sphi 0, %s61
    %s83 = sphi 0, %s85
    %s86 = sphi 0, %s83
    %s87 = sphi 0, %s86
    %s103 = sphi 0, %s87
    %s111 = sphi 0, %s113
    %s114 = sphi 0, %s111
    %s115 = sphi 0, %s114
    %s131 = sphi 0, %s115
  $region4: #{net_forward.20} parent=0 // loop_header_branch
    %12 = sbr.rel (%p10) target = $region8
  $region5: #{net_forward.20} parent=0 // loop_body
    %s14 = ssub.s32 %s9, 1
    %s15 = ssub.s32 %s9, 2
    %s22 = sadd.s32 1, %s17
    %p23 = scmp.ge.s32.totalorder %s22, 1
    %s24 = scalar_select %p23, 0, %s22
    %s25 = sadd.s32 1, %s16
    %s26 = scalar_select %p23, %s25, %s16
    %p27 = scmp.ge.s32.totalorder %s26, 2
    %s28 = scalar_select %p27, 0, %s26
    %s29 = ssub.s32 %s16, %s28
    %p30 = scmp.eq.s32.totalorder %s29, 0
    %s32 = sadd.s32 %s31, 1
    %s33 = scalar_select %p30, %s31, %s32
    %p36 = pneg %p30
    %p37 = scmp.eq.s32.totalorder %s9, 1
    %p38 = por %p36, %p37
    %p39 = scmp.ne.s32.totalorder %s31, %s34
    %p40 = scmp.eq.s32.totalorder %s9, 0
    %p41 = por %p39, %p40
    %p42 = scmp.ne.s32.totalorder %s31, %s34
    %p43 = scmp.eq.s32.totalorder %s14, 1
    %p44 = por %p42, %p43
    %p45 = scmp.ne.s32.totalorder %s34, %s35
    %p46 = scmp.eq.s32.totalorder %s14, 0
    %p47 = por %p45, %p46
    %p48 = scmp.ne.s32.totalorder %s34, %s35
    %p49 = scmp.eq.s32.totalorder %s15, 1
    %p50 = por %p48, %p49
    %p52 = scmp.ne.s32.totalorder %s35, %s51
    %p53 = scmp.eq.s32.totalorder %s15, 0
    %p54 = por %p52, %p53
    %s55 = ssub.s32 %s17, %s24
    %p56 = scmp.eq.s32.totalorder %s55, 0
    %s58 = sadd.s32 %s57, 1
    %s59 = scalar_select %p56, %s57, %s58
    %p62 = pneg %p56
    %p63 = scmp.eq.s32.totalorder %s9, 1
    %p64 = por %p62, %p63
    %p65 = scmp.ne.s32.totalorder %s57, %s60
    %p66 = scmp.eq.s32.totalorder %s9, 0
    %p67 = por %p65, %p66
    %p68 = scmp.ne.s32.totalorder %s57, %s60
    %p69 = scmp.eq.s32.totalorder %s14, 1
    %p70 = por %p68, %p69
    %p71 = scmp.ne.s32.totalorder %s60, %s61
    %p72 = scmp.eq.s32.totalorder %s14, 0
    %p73 = por %p71, %p72
    %p74 = scmp.ne.s32.totalorder %s60, %s61
    %p75 = scmp.eq.s32.totalorder %s15, 1
    %p76 = por %p74, %p75
    %p78 = scmp.ne.s32.totalorder %s61, %s77
    %p79 = scmp.eq.s32.totalorder %s15, 0
    %p80 = por %p78, %p79
    %s81 = ssub.s32 %s17, %s24
    %p82 = scmp.eq.s32.totalorder %s81, 0
    %s84 = sadd.s32 %s83, 1
    %s85 = scalar_select %p82, %s83, %s84
    %p88 = pneg %p82
    %p89 = scmp.eq.s32.totalorder %s9, 1
    %p90 = por %p88, %p89
    %p91 = scmp.ne.s32.totalorder %s83, %s86
    %p92 = scmp.eq.s32.totalorder %s9, 0
    %p93 = por %p91, %p92
    %p94 = scmp.ne.s32.totalorder %s83, %s86
    %p95 = scmp.eq.s32.totalorder %s14, 1
    %p96 = por %p94, %p95
    %p97 = scmp.ne.s32.totalorder %s86, %s87
    %p98 = scmp.eq.s32.totalorder %s14, 0
    %p99 = por %p97, %p98
    %p100 = scmp.ne.s32.totalorder %s86, %s87
    %p101 = scmp.eq.s32.totalorder %s15, 1
    %p102 = por %p100, %p101
    %p104 = scmp.ne.s32.totalorder %s87, %s103
    %p105 = scmp.eq.s32.totalorder %s15, 0
    %p106 = por %p104, %p105
    %s107 = ssub.s32 %s16, %s28
    %s108 = ssub.s32 %s17, %s24
    %s109 = sor.u32 %s107, %s108
    %p110 = scmp.eq.s32.totalorder %s109, 0
    %s112 = sadd.s32 %s111, 1
    %s113 = scalar_select %p110, %s111, %s112
    %p116 = pneg %p110
    %p117 = scmp.eq.s32.totalorder %s9, 1
    %p118 = por %p116, %p117
    %p119 = scmp.ne.s32.totalorder %s111, %s114
    %p120 = scmp.eq.s32.totalorder %s9, 0
    %p121 = por %p119, %p120
    %p122 = scmp.ne.s32.totalorder %s111, %s114
    %p123 = scmp.eq.s32.totalorder %s14, 1
    %p124 = por %p122, %p123
    %p125 = scmp.ne.s32.totalorder %s114, %s115
    %p126 = scmp.eq.s32.totalorder %s14, 0
    %p127 = por %p125, %p126
    %p128 = scmp.ne.s32.totalorder %s114, %s115
    %p129 = scmp.eq.s32.totalorder %s15, 1
    %p130 = por %p128, %p129
    %p132 = scmp.ne.s32.totalorder %s115, %s131
    %p133 = scmp.eq.s32.totalorder %s15, 0
    %p134 = por %p132, %p133
    %p135 = scmp.le.s32.totalorder 1, %s9
    %p136 = scmp.lt.s32.totalorder %s9, 3
    %p137 = pnand %p135, %p136
    %p138 = pneg %p137
    // Predicated region
    $region9: #{net_forward.20} parent=5 // pred_check
      _
    $region10: #{net_forward.20} parent=5 // pred_check_branch
      %140 = sbr.rel (%p137) target = $region12
    $region11: #{net_forward.20} parent=5 // pred_region
      %s141 = ssub.s32 %s9, 1
      // Predicated region
      $region13: #{net_forward.20} parent=11 // pred_check
        %p142 = pneg %p73
      $region14: #{net_forward.20} parent=11 // pred_check_branch
        %144 = sbr.rel (%p142) target = $region16
      $region15: #{net_forward.20} parent=11 // pred_region
        %p145 = scmp.lt.s32.totalorder %s19, 0
        %s146 = scalar_select %p145, %s19, 0
        %s147 = smul.addr %s146, 4
        %s148 = scalar_lea.vmem %s1, %s147
      $region16: #{net_forward.20} parent=11 // pred_fallthru
        _
      // Predicated region
      $region17: #{net_forward.20} parent=11 // pred_check
        %p149 = pneg %p99
      $region18: #{net_forward.20} parent=11 // pred_check_branch
        %151 = sbr.rel (%p149) target = $region20
      $region19: #{net_forward.20} parent=11 // pred_region
        %p152 = scmp.lt.s32.totalorder %s19, 0
        %s153 = scalar_select %p152, %s19, 0
        %s154 = scalar_lea.vmem %s2, %s153
      $region20: #{net_forward.20} parent=11 // pred_fallthru
        _
    $region12: #{net_forward.20} parent=5 // pred_fallthru
      _
    %p155 = scmp.lt.s32.totalorder %s9, 2
    // Predicated region
    $region21: #{net_forward.20} parent=5 // pred_check
      %p156 = pneg %p155
    $region22: #{net_forward.20} parent=5 // pred_check_branch
      %158 = sbr.rel (%p156) target = $region24
    $region23: #{net_forward.20} parent=5 // pred_region
      // Predicated region
      $region25: #{net_forward.20} parent=23 // pred_check
        %p159 = pneg %p41
      $region26: #{net_forward.20} parent=23 // pred_check_branch
        %161 = sbr.rel (%p159) target = $region28
      $region27: #{net_forward.20} parent=23 // pred_region
        %p162 = scmp.lt.s32.totalorder %s16, 1
        %s163 = scalar_select %p162, %s16, 1
        %s164 = smul.addr %s163, 18
        %s165 = smul.addr %s164, 4
        %s166 = scalar_lea.vmem %s0, %s165
      $region28: #{net_forward.20} parent=23 // pred_fallthru
        _
    $region24: #{net_forward.20} parent=5 // pred_fallthru
      _
    %p167 = scmp.le.s32.totalorder 1, %s9
    %p168 = scmp.lt.s32.totalorder %s9, 3
    %p169 = pnand %p167, %p168
    %p170 = pneg %p169
    // Predicated region
    $region29: #{net_forward.20} parent=5 // pred_check
      _
    $region30: #{net_forward.20} parent=5 // pred_check_branch
      %172 = sbr.rel (%p169) target = $region32
    $region31: #{net_forward.20} parent=5 // pred_region
      %s173 = ssub.s32 %s9, 1
      %p174 = scmp.lt.s32.totalorder %s18, 1
      %s175 = scalar_select %p174, %s18, 1
      %s176 = smul.addr %s175, 18
      %s177 = smul.addr %s176, 4
      %s178 = scalar_lea.vmem %s0, %s177
      %p179 = pneg %p47
      %p180 = pneg %p44
      %p181 = scmp.lt.s32.totalorder %s19, 0
      %s182 = scalar_select %p181, %s19, 0
      %s183 = smul.addr %s182, 4
      %s184 = scalar_lea.vmem %s1, %s183
      %p185 = pneg %p73
      %p186 = pneg %p70
      %p187 = scmp.lt.s32.totalorder %s19, 0
      %s188 = scalar_select %p187, %s19, 0
      %s189 = scalar_lea.vmem %s2, %s188
      %p190 = pneg %p99
      %p191 = pneg %p96
      %p192 = pneg %p127
      %p193 = pneg %p124
      %p194 = scmp.lt.s32.totalorder %s18, 1
      %s195 = scalar_select %p194, %s18, 1
      %p196 = scmp.lt.s32.totalorder %s19, 0
      %s197 = scalar_select %p196, %s19, 0
      %s198 = smul.addr %s195, 8
      %s199 = sadd.s32 %s197, %s198
      %s200 = smul.addr %s199, 4
      %s201 = scalar_lea.vmem %s3, %s200
      %p202 = scmp.lt.s32.totalorder %s18, 1
      %s203 = scalar_select %p202, %s18, 1
      %s204 = smul.addr %s203, 18
      %s205 = smul.addr %s204, 4
      %s206 = scalar_lea.vmem %s0, %s205
      %p207 = scmp.lt.s32.totalorder %s19, 0
      %s208 = scalar_select %p207, %s19, 0
      %s209 = smul.addr %s208, 4
      %s210 = scalar_lea.vmem %s1, %s209
      %p211 = scmp.lt.s32.totalorder %s19, 0
      %s212 = scalar_select %p211, %s19, 0
      %s213 = scalar_lea.vmem %s2, %s212
      %p214 = scmp.lt.s32.totalorder %s18, 1
      %s215 = scalar_select %p214, %s18, 1
      %p216 = scmp.lt.s32.totalorder %s19, 0
      %s217 = scalar_select %p216, %s19, 0
      %s218 = smul.addr %s215, 8
      %s219 = sadd.s32 %s217, %s218
      %s220 = smul.addr %s219, 4
      %s221 = scalar_lea.vmem %s3, %s220
      loop: start=0, step=1, limit=8
      $region33: #{net_forward.20} parent=31 // loop_pre_header
        _
      $region34: #{net_forward.20} parent=31 // loop_header
        %s224 = sphi 0, %s228
        %p225 = scmp.ge.s32.totalorder %s224, 8
      $region35: #{net_forward.20} parent=31 // loop_header_branch
        %227 = sbr.rel (%p225) target = $region39
      $region36: #{net_forward.20} parent=31 // loop_body
        %s229 = smul.u32 %s224, 2
        %s230 = smul.addr %s229, 4
        %s231 = scalar_lea.vmem %s206, %s230
        %v232 = vld [vmem:[%s231] sm:$0xf]
        %v233 = vld [vmem:[%s210] sm:$0xf]
        %v234 = vld [vmem:[%s210 + $0x4] sm:$0xf]
        %v235 = vld [vmem:[%s231 + $0x4] sm:$0x1]
        %s236 = scalar_lea.vmem %s210, 8
        %v237 = vld [vmem:[%s236] sm:$0xf]
        %v238 = vld [vmem:[%s236 + $0x4] sm:$0xf]
        %v241 = vunpack.c.l.b16 %v232
        %v242 = vunpack.c.l.b16 %v235
        %v243 = vpack.c.b16 %v242, %v241
        %v245 = vshrl.u32 %v243, 16
        %v247 = vshll.u32 %v243, 16
        %v249 = vrot.slane %v247, 1
        %v250 = vor.u32 %v245, %v249
        %v253 = vunpack.c.l.b16 %v237
        %v254 = vunpack.c.l.b16 %v238
        %v255 = vpack.c.b16 %v254, %v253
        %vm257 = vcmask 130048
        %v259 = vsel %vm257, %v250, 0
        %261 = vmatprep.subr.bf16.mxu0 0
        %262 = vmatpush1.bf16.msra.mxu0 0
        %263 = vmatprep.subr.bf16.mxu0 0
        %264 = vmatpush1.bf16.msra.mxu0 0
        %265 = vmatprep.subr.bf16.mxu0 0
        %266 = vmatpush1.bf16.msra.mxu0 0
        %267 = vmatprep.subr.bf16.mxu0 0
        %268 = vmatpush1.bf16.msra.mxu0 0
        %269 = vmatprep.subr.bf16.mxu0 0
        %270 = vmatpush1.bf16.msra.mxu0 0
        %271 = vmatprep.subr.bf16.mxu0 0
        %272 = vmatpush1.bf16.msra.mxu0 0
        %273 = vmatprep.subr.bf16.mxu0 0
        %274 = vmatpush1.bf16.msra.mxu0 0
        %275 = vmatprep.subr.bf16.mxu0 0
        %276 = vmatpush1.bf16.msra.mxu0 %v255
        %277 = vmatprep.subr.bf16.mxu0 0
        %278 = vmatpush2.bf16.msra.mxu0 0
        %279 = vmatprep.subr.bf16.mxu0 0
        %280 = vmatpush2.bf16.msra.mxu0 0
        %281 = vmatprep.subr.bf16.mxu0 0
        %282 = vmatpush2.bf16.msra.mxu0 0
        %283 = vmatprep.subr.bf16.mxu0 0
        %284 = vmatpush2.bf16.msra.mxu0 0
        %285 = vmatprep.subr.bf16.mxu0 0
        %286 = vmatpush2.bf16.msra.mxu0 0
        %287 = vmatprep.subr.bf16.mxu0 0
        %288 = vmatpush2.bf16.msra.mxu0 0
        %289 = vmatprep.subr.bf16.mxu0 0
        %290 = vmatpush2.bf16.msra.mxu0 0
        %291 = vmatprep.subr.bf16.mxu0 0
        %292 = vmatpush2.bf16.msra.mxu0 0
        %293 = vmatprep.mubr.bf16.mxu0 0
        %294 = vmatmul.mubr.bf16.gmra.mxu0 %v259
        %v295 = vpop.f32.mrf.mxu0
        %v296 = vadd.f32 0.0, %v295
        %v297 = vpop.f32.mrf.mxu0
        %v298 = vpop.f32.mrf.mxu0
        %v299 = vpop.f32.mrf.mxu0
        %300 = vdwg.mxu0
        %v303 = vunpack.c.l.b16 %v233
        %v304 = vunpack.c.l.b16 %v234
        %v305 = vpack.c.b16 %v304, %v303
        %v308 = vsel %vm257, %v232, 0
        %310 = vmatprep.subr.bf16.mxu0 0
        %311 = vmatpush1.bf16.msra.mxu0 0
        %312 = vmatprep.subr.bf16.mxu0 0
        %313 = vmatpush1.bf16.msra.mxu0 0
        %314 = vmatprep.subr.bf16.mxu0 0
        %315 = vmatpush1.bf16.msra.mxu0 0
        %316 = vmatprep.subr.bf16.mxu0 0
        %317 = vmatpush1.bf16.msra.mxu0 0
        %318 = vmatprep.subr.bf16.mxu0 0
        %319 = vmatpush1.bf16.msra.mxu0 0
        %320 = vmatprep.subr.bf16.mxu0 0
        %321 = vmatpush1.bf16.msra.mxu0 0
        %322 = vmatprep.subr.bf16.mxu0 0
        %323 = vmatpush1.bf16.msra.mxu0 0
        %324 = vmatprep.subr.bf16.mxu0 0
        %325 = vmatpush1.bf16.msra.mxu0 %v305
        %326 = vmatprep.subr.bf16.mxu0 0
        %327 = vmatpush2.bf16.msra.mxu0 0
        %328 = vmatprep.subr.bf16.mxu0 0
        %329 = vmatpush2.bf16.msra.mxu0 0
        %330 = vmatprep.subr.bf16.mxu0 0
        %331 = vmatpush2.bf16.msra.mxu0 0
        %332 = vmatprep.subr.bf16.mxu0 0
        %333 = vmatpush2.bf16.msra.mxu0 0
        %334 = vmatprep.subr.bf16.mxu0 0
        %335 = vmatpush2.bf16.msra.mxu0 0
        %336 = vmatprep.subr.bf16.mxu0 0
        %337 = vmatpush2.bf16.msra.mxu0 0
        %338 = vmatprep.subr.bf16.mxu0 0
        %339 = vmatpush2.bf16.msra.mxu0 0
        %340 = vmatprep.subr.bf16.mxu0 0
        %341 = vmatpush2.bf16.msra.mxu0 0
        %342 = vmatprep.mubr.bf16.mxu0 0
        %343 = vmatmul.mubr.bf16.gmra.mxu0 %v308
        %v344 = vpop.f32.mrf.mxu0
        %v345 = vadd.f32 %v296, %v344
        %v346 = vpop.f32.mrf.mxu0
        %v347 = vpop.f32.mrf.mxu0
        %v348 = vpop.f32.mrf.mxu0
        %349 = vdwg.mxu0
        %s350 = sadd.s32 %s224, 1
        %s351 = smul.u32 %s350, 2
        %s352 = smul.addr %s351, 4
        %s353 = scalar_lea.vmem %s206, %s352
        %v354 = vld [vmem:[%s353] sm:$0xf]
        %s355 = scalar_lea.vmem %s210, 16
        %v356 = vld [vmem:[%s355] sm:$0xf]
        %v357 = vld [vmem:[%s355 + $0x4] sm:$0xf]
        %v360 = vunpack.c.l.b16 %v356
        %v361 = vunpack.c.l.b16 %v357
        %v362 = vpack.c.b16 %v361, %v360
        %v365 = vsel %vm257, %v354, 0
        %367 = vmatprep.subr.bf16.mxu0 0
        %368 = vmatpush1.bf16.msra.mxu0 0
        %369 = vmatprep.subr.bf16.mxu0 0
        %370 = vmatpush1.bf16.msra.mxu0 0
        %371 = vmatprep.subr.bf16.mxu0 0
        %372 = vmatpush1.bf16.msra.mxu0 0
        %373 = vmatprep.subr.bf16.mxu0 0
        %374 = vmatpush1.bf16.msra.mxu0 0
        %375 = vmatprep.subr.bf16.mxu0 0
        %376 = vmatpush1.bf16.msra.mxu0 0
        %377 = vmatprep.subr.bf16.mxu0 0
        %378 = vmatpush1.bf16.msra.mxu0 0
        %379 = vmatprep.subr.bf16.mxu0 0
        %380 = vmatpush1.bf16.msra.mxu0 0
        %381 = vmatprep.subr.bf16.mxu0 0
        %382 = vmatpush1.bf16.msra.mxu0 %v362
        %383 = vmatprep.subr.bf16.mxu0 0
        %384 = vmatpush2.bf16.msra.mxu0 0
        %385 = vmatprep.subr.bf16.mxu0 0
        %386 = vmatpush2.bf16.msra.mxu0 0
        %387 = vmatprep.subr.bf16.mxu0 0
        %388 = vmatpush2.bf16.msra.mxu0 0
        %389 = vmatprep.subr.bf16.mxu0 0
        %390 = vmatpush2.bf16.msra.mxu0 0
        %391 = vmatprep.subr.bf16.mxu0 0
        %392 = vmatpush2.bf16.msra.mxu0 0
        %393 = vmatprep.subr.bf16.mxu0 0
        %394 = vmatpush2.bf16.msra.mxu0 0
        %395 = vmatprep.subr.bf16.mxu0 0
        %396 = vmatpush2.bf16.msra.mxu0 0
        %397 = vmatprep.subr.bf16.mxu0 0
        %398 = vmatpush2.bf16.msra.mxu0 0
        %399 = vmatprep.mubr.bf16.mxu0 0
        %400 = vmatmul.mubr.bf16.gmra.mxu0 %v365
        %v401 = vpop.f32.mrf.mxu0
        %v402 = vadd.f32 0.0, %v401
        %v403 = vpop.f32.mrf.mxu0
        %v404 = vpop.f32.mrf.mxu0
        %v405 = vpop.f32.mrf.mxu0
        %406 = vdwg.mxu0
        %v407 = vadd.f32 %v345, %v402
        %v408 = vld [vmem:[%s353] sm:$0xf]
        %v409 = vld [vmem:[%s353 + $0x4] sm:$0x1]
        %s410 = scalar_lea.vmem %s210, 24
        %v411 = vld [vmem:[%s410] sm:$0xf]
        %v412 = vld [vmem:[%s410 + $0x4] sm:$0xf]
        %v415 = vunpack.c.l.b16 %v408
        %v416 = vunpack.c.l.b16 %v409
        %v417 = vpack.c.b16 %v416, %v415
        %v419 = vshrl.u32 %v417, 16
        %v421 = vshll.u32 %v417, 16
        %v423 = vrot.slane %v421, 1
        %v424 = vor.u32 %v419, %v423
        %v427 = vunpack.c.l.b16 %v411
        %v428 = vunpack.c.l.b16 %v412
        %v429 = vpack.c.b16 %v428, %v427
        %v432 = vsel %vm257, %v424, 0
        %434 = vmatprep.subr.bf16.mxu0 0
        %435 = vmatpush1.bf16.msra.mxu0 0
        %436 = vmatprep.subr.bf16.mxu0 0
        %437 = vmatpush1.bf16.msra.mxu0 0
        %438 = vmatprep.subr.bf16.mxu0 0
        %439 = vmatpush1.bf16.msra.mxu0 0
        %440 = vmatprep.subr.bf16.mxu0 0
        %441 = vmatpush1.bf16.msra.mxu0 0
        %442 = vmatprep.subr.bf16.mxu0 0
        %443 = vmatpush1.bf16.msra.mxu0 0
        %444 = vmatprep.subr.bf16.mxu0 0
        %445 = vmatpush1.bf16.msra.mxu0 0
        %446 = vmatprep.subr.bf16.mxu0 0
        %447 = vmatpush1.bf16.msra.mxu0 0
        %448 = vmatprep.subr.bf16.mxu0 0
        %449 = vmatpush1.bf16.msra.mxu0 %v429
        %450 = vmatprep.subr.bf16.mxu0 0
        %451 = vmatpush2.bf16.msra.mxu0 0
        %452 = vmatprep.subr.bf16.mxu0 0
        %453 = vmatpush2.bf16.msra.mxu0 0
        %454 = vmatprep.subr.bf16.mxu0 0
        %455 = vmatpush2.bf16.msra.mxu0 0
        %456 = vmatprep.subr.bf16.mxu0 0
        %457 = vmatpush2.bf16.msra.mxu0 0
        %458 = vmatprep.subr.bf16.mxu0 0
        %459 = vmatpush2.bf16.msra.mxu0 0
        %460 = vmatprep.subr.bf16.mxu0 0
        %461 = vmatpush2.bf16.msra.mxu0 0
        %462 = vmatprep.subr.bf16.mxu0 0
        %463 = vmatpush2.bf16.msra.mxu0 0
        %464 = vmatprep.subr.bf16.mxu0 0
        %465 = vmatpush2.bf16.msra.mxu0 0
        %466 = vmatprep.mubr.bf16.mxu0 0
        %467 = vmatmul.mubr.bf16.gmra.mxu0 %v432
        %v468 = vpop.f32.mrf.mxu0
        %v469 = vadd.f32 0.0, %v468
        %v470 = vpop.f32.mrf.mxu0
        %v471 = vpop.f32.mrf.mxu0
        %v472 = vpop.f32.mrf.mxu0
        %473 = vdwg.mxu0
        %v474 = vadd.f32 %v407, %v469
        %v475 = vld [vmem:[%s213] sm:$0x1]
        %v477 = vlaneseq
        %v478 = vshrl.u32 %v477, 7
        %v479 = vsub.s32 0, %v478
        %v480 = vrot.slane %v475, %v479
        %v482 = vadd.f32 %v474, %v480
        %v483 = vmax.f32 %v482, 0.0
        %v484 = vpack.c.bf16 %v483, %v483
        %s485 = smul.addr %s224, 4
        %s486 = scalar_lea.vmem %s221, %s485
        %487 = vst [vmem:[%s486] sm:$0xf] %v484
      $region37: #{net_forward.20} parent=31 // loop_footer
        %s228 = sadd.s32 1, %s224
      $region38: #{net_forward.20} parent=31 // loop_footer_branch
        %223 = sbr.rel target = $region34
      $region39: #{net_forward.20} parent=31 // loop_exit
        _
      %p488 = scmp.lt.s32.totalorder %s18, 1
      %s489 = scalar_select %p488, %s18, 1
      %p490 = scmp.lt.s32.totalorder %s19, 0
      %s491 = scalar_select %p490, %s19, 0
      %s492 = smul.addr %s489, 8
      %s493 = sadd.s32 %s491, %s492
      %s494 = smul.addr %s493, 4
      %s495 = scalar_lea.vmem %s3, %s494
      // Predicated region
      $region40: #{net_forward.20} parent=31 // pred_check
        %p496 = pneg %p124
      $region41: #{net_forward.20} parent=31 // pred_check_branch
        %498 = sbr.rel (%p496) target = $region43
      $region42: #{net_forward.20} parent=31 // pred_region
        _
      $region43: #{net_forward.20} parent=31 // pred_fallthru
        _
    $region32: #{net_forward.20} parent=5 // pred_fallthru
      _
    %p499 = scmp.le.s32.totalorder 2, %s9
    // Predicated region
    $region44: #{net_forward.20} parent=5 // pred_check
      %p500 = pneg %p499
    $region45: #{net_forward.20} parent=5 // pred_check_branch
      %502 = sbr.rel (%p500) target = $region47
    $region46: #{net_forward.20} parent=5 // pred_region
      %s503 = ssub.s32 %s9, 2
      // Predicated region
      $region48: #{net_forward.20} parent=46 // pred_check
        %p504 = pneg %p130
      $region49: #{net_forward.20} parent=46 // pred_check_branch
        %506 = sbr.rel (%p504) target = $region51
      $region50: #{net_forward.20} parent=46 // pred_region
        %p507 = scmp.lt.s32.totalorder %s20, 1
        %s508 = scalar_select %p507, %s20, 1
        %p509 = scmp.lt.s32.totalorder %s21, 0
        %s510 = scalar_select %p509, %s21, 0
        %s511 = smul.addr %s508, 8
        %s512 = sadd.s32 %s510, %s511
        %s513 = smul.addr %s512, 4
        %s514 = scalar_lea.vmem %s3, %s513
      $region51: #{net_forward.20} parent=46 // pred_fallthru
        _
    $region47: #{net_forward.20} parent=5 // pred_fallthru
      _
  $region6: #{net_forward.20} parent=0 // loop_footer
    %s13 = sadd.s32 1, %s9
  $region7: #{net_forward.20} parent=0 // loop_footer_branch
    %8 = sbr.rel target = $region3
  $region8: #{net_forward.20} parent=0 // loop_exit
    _

// kernel: net_forward.22
$region0: #{net_forward.22}
  #allocation0 [shape = 'u32[]', space=smem, size = 0x4, offset = 0x4, fixed_abs, tag = 'smem constant byte address 0x4 - core index']
  #allocation1 [shape = 'u32[144,128]{1,0:T(1,128)}', space=vmem, size = 0x12000, scoped, tag = 'internal scratch']
  #allocation2 [shape = 'f32[32,128]{1,0:T(8,128)}', space=vmem, size = 0x4000, scoped, tag = 'scratch operand']
  %s0 = inlined_call_operand.vmem [shape: bf16[32,128], index: 0, kind: input, shape index: {}]
  %s1 = inlined_call_operand.vmem [shape: bf16[128,128], index: 1, kind: input, shape index: {}]
  %s2 = inlined_call_operand.vmem [shape: f32[1,128], index: 2, kind: input, shape index: {}]
  %s3 = inlined_call_operand.vmem [shape: bf16[32,128], index: 3, kind: output, shape index: {}]
  %s4 = sld [smem:[#allocation0]]
  $region30: #{net_forward.22} parent=0
    _
  %s6 = ssub.s32 1, %s4
  %s7 = scalar_select 0, %s6, %s4
  // Predicated region
  $region2: #{net_forward.22} parent=0 // pred_check
    _
  $region3: #{net_forward.22} parent=0 // pred_check_branch
    %9 = sbr.rel (0) target = $region5
  $region4: #{net_forward.22} parent=0 // pred_region
    _
  $region5: #{net_forward.22} parent=0 // pred_fallthru
    _
  // Predicated region
  $region6: #{net_forward.22} parent=0 // pred_check
    _
  $region7: #{net_forward.22} parent=0 // pred_check_branch
    %11 = sbr.rel (0) target = $region9
  $region8: #{net_forward.22} parent=0 // pred_region
    _
  $region9: #{net_forward.22} parent=0 // pred_fallthru
    _
  // Predicated region
  $region10: #{net_forward.22} parent=0 // pred_check
    _
  $region11: #{net_forward.22} parent=0 // pred_check_branch
    %13 = sbr.rel (0) target = $region13
  $region12: #{net_forward.22} parent=0 // pred_region
    _
  $region13: #{net_forward.22} parent=0 // pred_fallthru
    _
  %p15 = scmp.eq.s32.totalorder 0, 0
  // Predicated region
  $region14: #{net_forward.22} parent=0 // pred_check
    %p16 = pneg %p15
  $region15: #{net_forward.22} parent=0 // pred_check_branch
    %18 = sbr.rel (%p16) target = $region17
  $region16: #{net_forward.22} parent=0 // pred_region
    %19 = vst [vmem:[#allocation2] sm:$0xff] 0.0
    %20 = vst [vmem:[#allocation2 + $0x8] sm:$0xff] 0.0
    %21 = vst [vmem:[#allocation2 + $0x10] sm:$0xff] 0.0
    %22 = vst [vmem:[#allocation2 + $0x18] sm:$0xff] 0.0
  $region17: #{net_forward.22} parent=0 // pred_fallthru
    _
  %v23 = vld [vmem:[#allocation2] sm:$0xff]
  %v24 = vld [vmem:[#allocation2 + $0x8] sm:$0xff]
  %v25 = vld [vmem:[#allocation2 + $0x10] sm:$0xff]
  %v26 = vld [vmem:[#allocation2 + $0x18] sm:$0xff]
  %v27 = vld [vmem:[%s0] sm:$0xf]
  %v28 = vld [vmem:[%s0 + $0x4] sm:$0xf]
  %v29 = vld [vmem:[%s0 + $0x8] sm:$0xf]
  %v30 = vld [vmem:[%s0 + $0xc] sm:$0xf]
  %v31 = vld [vmem:[%s1] sm:$0xf]
  %v32 = vld [vmem:[%s1 + $0x4] sm:$0xf]
  %v33 = vld [vmem:[%s1 + $0x8] sm:$0xf]
  %v34 = vld [vmem:[%s1 + $0xc] sm:$0xf]
  %v35 = vld [vmem:[%s1 + $0x10] sm:$0xf]
  %v36 = vld [vmem:[%s1 + $0x14] sm:$0xf]
  %v37 = vld [vmem:[%s1 + $0x18] sm:$0xf]
  %v38 = vld [vmem:[%s1 + $0x1c] sm:$0xf]
  %v39 = vld [vmem:[%s1 + $0x20] sm:$0xf]
  %v40 = vld [vmem:[%s1 + $0x24] sm:$0xf]
  %v41 = vld [vmem:[%s1 + $0x28] sm:$0xf]
  %v42 = vld [vmem:[%s1 + $0x2c] sm:$0xf]
  %v43 = vld [vmem:[%s1 + $0x30] sm:$0xf]
  %v44 = vld [vmem:[%s1 + $0x34] sm:$0xf]
  %v45 = vld [vmem:[%s1 + $0x38] sm:$0xf]
  %v46 = vld [vmem:[%s1 + $0x3c] sm:$0xf]
  %v51 = vunpack.c.l.b16 %v27
  %v52 = vunpack.c.l.b16 %v28
  %v53 = vunpack.c.l.b16 %v29
  %v54 = vunpack.c.l.b16 %v30
  %v55 = vpack.c.b16 %v52, %v51
  %v56 = vpack.c.b16 %v54, %v53
  %v75 = vunpack.c.l.b16 %v31
  %v76 = vunpack.c.l.b16 %v32
  %v77 = vunpack.c.l.b16 %v33
  %v78 = vunpack.c.l.b16 %v34
  %v79 = vunpack.c.l.b16 %v35
  %v80 = vunpack.c.l.b16 %v36
  %v81 = vunpack.c.l.b16 %v37
  %v82 = vunpack.c.l.b16 %v38
  %v83 = vunpack.c.l.b16 %v39
  %v84 = vunpack.c.l.b16 %v40
  %v85 = vunpack.c.l.b16 %v41
  %v86 = vunpack.c.l.b16 %v42
  %v87 = vunpack.c.l.b16 %v43
  %v88 = vunpack.c.l.b16 %v44
  %v89 = vunpack.c.l.b16 %v45
  %v90 = vunpack.c.l.b16 %v46
  %v91 = vpack.c.b16 %v76, %v75
  %v92 = vpack.c.b16 %v78, %v77
  %v93 = vpack.c.b16 %v80, %v79
  %v94 = vpack.c.b16 %v82, %v81
  %v95 = vpack.c.b16 %v84, %v83
  %v96 = vpack.c.b16 %v86, %v85
  %v97 = vpack.c.b16 %v88, %v87
  %v98 = vpack.c.b16 %v90, %v89
  %107 = vmatprep.subr.bf16.mxu0 0
  %108 = vmatpush1.bf16.msra.mxu0 %v98
  %109 = vmatprep.subr.bf16.mxu0 0
  %110 = vmatpush1.bf16.msra.mxu0 %v97
  %111 = vmatprep.subr.bf16.mxu0 0
  %112 = vmatpush1.bf16.msra.mxu0 %v96
  %113 = vmatprep.subr.bf16.mxu0 0
  %114 = vmatpush1.bf16.msra.mxu0 %v95
  %115 = vmatprep.subr.bf16.mxu0 0
  %116 = vmatpush1.bf16.msra.mxu0 %v94
  %117 = vmatprep.subr.bf16.mxu0 0
  %118 = vmatpush1.bf16.msra.mxu0 %v93
  %119 = vmatprep.subr.bf16.mxu0 0
  %120 = vmatpush1.bf16.msra.mxu0 %v92
  %121 = vmatprep.subr.bf16.mxu0 0
  %122 = vmatpush1.bf16.msra.mxu0 %v91
  %123 = vmatprep.subr.bf16.mxu0 0
  %124 = vmatpush2.bf16.msra.mxu0 0
  %125 = vmatprep.subr.bf16.mxu0 0
  %126 = vmatpush2.bf16.msra.mxu0 0
  %127 = vmatprep.subr.bf16.mxu0 0
  %128 = vmatpush2.bf16.msra.mxu0 0
  %129 = vmatprep.subr.bf16.mxu0 0
  %130 = vmatpush2.bf16.msra.mxu0 0
  %131 = vmatprep.subr.bf16.mxu0 0
  %132 = vmatpush2.bf16.msra.mxu0 0
  %133 = vmatprep.subr.bf16.mxu0 0
  %134 = vmatpush2.bf16.msra.mxu0 0
  %135 = vmatprep.subr.bf16.mxu0 0
  %136 = vmatpush2.bf16.msra.mxu0 0
  %137 = vmatprep.subr.bf16.mxu0 0
  %138 = vmatpush2.bf16.msra.mxu0 0
  %139 = vmatprep.mubr.bf16.mxu0 0
  %140 = vmatmul.mubr.bf16.gmra.mxu0 %v55
  %v141 = vpop.f32.mrf.mxu0
  %v142 = vadd.f32 0.0, %v141
  %v143 = vpop.f32.mrf.mxu0
  %v144 = vpop.f32.mrf.mxu0
  %v145 = vadd.f32 0.0, %v144
  %v146 = vpop.f32.mrf.mxu0
  %147 = vmatprep.mubr.bf16.mxu0 0
  %148 = vmatmul.mubr.bf16.gmra.mxu0 %v56
  %v149 = vpop.f32.mrf.mxu0
  %v150 = vadd.f32 0.0, %v149
  %v151 = vpop.f32.mrf.mxu0
  %v152 = vpop.f32.mrf.mxu0
  %v153 = vadd.f32 0.0, %v152
  %v154 = vpop.f32.mrf.mxu0
  %155 = vdwg.mxu0
  %v156 = vadd.f32 %v23, %v142
  %v157 = vadd.f32 %v24, %v145
  %v158 = vadd.f32 %v25, %v150
  %v159 = vadd.f32 %v26, %v153
  %160 = vst [vmem:[#allocation2] sm:$0xff] %v156
  %161 = vst [vmem:[#allocation2 + $0x8] sm:$0xff] %v157
  %162 = vst [vmem:[#allocation2 + $0x10] sm:$0xff] %v158
  %163 = vst [vmem:[#allocation2 + $0x18] sm:$0xff] %v159
  // Predicated region
  $region18: #{net_forward.22} parent=0 // pred_check
    %p164 = pneg %p15
  $region19: #{net_forward.22} parent=0 // pred_check_branch
    %166 = sbr.rel (%p164) target = $region21
  $region20: #{net_forward.22} parent=0 // pred_region
    %v167 = vld [vmem:[#allocation2] sm:$0xff]
    %v168 = vld [vmem:[#allocation2 + $0x8] sm:$0xff]
    %v169 = vld [vmem:[#allocation2 + $0x10] sm:$0xff]
    %v170 = vld [vmem:[#allocation2 + $0x18] sm:$0xff]
    %v171 = vld [vmem:[%s2] sm:$0x1]
    %v173 = vlaneseq
    %v174 = vshrl.u32 %v173, 7
    %v175 = vsub.s32 0, %v174
    %v176 = vrot.slane %v171, %v175
    %v178 = vadd.f32 %v167, %v176
    %v179 = vadd.f32 %v168, %v176
    %v180 = vadd.f32 %v169, %v176
    %v181 = vadd.f32 %v170, %v176
    %v182 = vmax.f32 %v178, 0.0
    %v183 = vmax.f32 %v179, 0.0
    %v184 = vmax.f32 %v180, 0.0
    %v185 = vmax.f32 %v181, 0.0
    %v186 = vpack.c.bf16 %v183, %v182
    %v187 = vpack.c.bf16 %v185, %v184
    %v190 = vunpack.c.l.b16 %v186
    %v191 = vunpack.c.h.b16 %v186
    %v192 = vunpack.c.l.b16 %v187
    %v193 = vunpack.c.h.b16 %v187
    %v194 = vpack.c.b16 %v190, %v190
    %v195 = vpack.c.b16 %v191, %v191
    %v196 = vpack.c.b16 %v192, %v192
    %v197 = vpack.c.b16 %v193, %v193
    %202 = vst [vmem:[%s3] sm:$0xf] %v194
    %203 = vst [vmem:[%s3 + $0x4] sm:$0xf] %v195
    %204 = vst [vmem:[%s3 + $0x8] sm:$0xf] %v196
    %205 = vst [vmem:[%s3 + $0xc] sm:$0xf] %v197
  $region21: #{net_forward.22} parent=0 // pred_fallthru
    _
  // Predicated region
  $region22: #{net_forward.22} parent=0 // pred_check
    _
  $region23: #{net_forward.22} parent=0 // pred_check_branch
    %207 = sbr.rel (0) target = $region25
  $region24: #{net_forward.22} parent=0 // pred_region
    _
  $region25: #{net_forward.22} parent=0 // pred_fallthru
    _
  // Predicated region
  $region26: #{net_forward.22} parent=0 // pred_check
    _
  $region27: #{net_forward.22} parent=0 // pred_check_branch
    %209 = sbr.rel (0) target = $region29
  $region28: #{net_forward.22} parent=0 // pred_region
    _
  $region29: #{net_forward.22} parent=0 // pred_fallthru
    _

// kernel: net_forward.24
$region0: #{net_forward.24}
  #allocation0 [shape = 'u32[]', space=smem, size = 0x4, offset = 0x4, fixed_abs, tag = 'smem constant byte address 0x4 - core index']
  #allocation1 [shape = 'u32[144,128]{1,0:T(1,128)}', space=vmem, size = 0x12000, scoped, tag = 'internal scratch']
  #allocation2 [shape = 'f32[32,128]{1,0:T(8,128)}', space=vmem, size = 0x4000, scoped, tag = 'scratch operand']
  %s0 = inlined_call_operand.vmem [shape: bf16[32,128], index: 0, kind: input, shape index: {}]
  %s1 = inlined_call_operand.vmem [shape: bf16[128,128], index: 1, kind: input, shape index: {}]
  %s2 = inlined_call_operand.vmem [shape: f32[1,128], index: 2, kind: input, shape index: {}]
  %s3 = inlined_call_operand.vmem [shape: bf16[32,128], index: 3, kind: output, shape index: {}]
  %s4 = sld [smem:[#allocation0]]
  $region30: #{net_forward.24} parent=0
    _
  %s6 = ssub.s32 1, %s4
  %s7 = scalar_select 0, %s6, %s4
  // Predicated region
  $region2: #{net_forward.24} parent=0 // pred_check
    _
  $region3: #{net_forward.24} parent=0 // pred_check_branch
    %9 = sbr.rel (0) target = $region5
  $region4: #{net_forward.24} parent=0 // pred_region
    _
  $region5: #{net_forward.24} parent=0 // pred_fallthru
    _
  // Predicated region
  $region6: #{net_forward.24} parent=0 // pred_check
    _
  $region7: #{net_forward.24} parent=0 // pred_check_branch
    %11 = sbr.rel (0) target = $region9
  $region8: #{net_forward.24} parent=0 // pred_region
    _
  $region9: #{net_forward.24} parent=0 // pred_fallthru
    _
  // Predicated region
  $region10: #{net_forward.24} parent=0 // pred_check
    _
  $region11: #{net_forward.24} parent=0 // pred_check_branch
    %13 = sbr.rel (0) target = $region13
  $region12: #{net_forward.24} parent=0 // pred_region
    _
  $region13: #{net_forward.24} parent=0 // pred_fallthru
    _
  %p15 = scmp.eq.s32.totalorder 0, 0
  // Predicated region
  $region14: #{net_forward.24} parent=0 // pred_check
    %p16 = pneg %p15
  $region15: #{net_forward.24} parent=0 // pred_check_branch
    %18 = sbr.rel (%p16) target = $region17
  $region16: #{net_forward.24} parent=0 // pred_region
    %19 = vst [vmem:[#allocation2] sm:$0xff] 0.0
    %20 = vst [vmem:[#allocation2 + $0x8] sm:$0xff] 0.0
    %21 = vst [vmem:[#allocation2 + $0x10] sm:$0xff] 0.0
    %22 = vst [vmem:[#allocation2 + $0x18] sm:$0xff] 0.0
  $region17: #{net_forward.24} parent=0 // pred_fallthru
    _
  %v23 = vld [vmem:[#allocation2] sm:$0xff]
  %v24 = vld [vmem:[#allocation2 + $0x8] sm:$0xff]
  %v25 = vld [vmem:[#allocation2 + $0x10] sm:$0xff]
  %v26 = vld [vmem:[#allocation2 + $0x18] sm:$0xff]
  %v27 = vld [vmem:[%s0] sm:$0xf]
  %v28 = vld [vmem:[%s0 + $0x4] sm:$0xf]
  %v29 = vld [vmem:[%s0 + $0x8] sm:$0xf]
  %v30 = vld [vmem:[%s0 + $0xc] sm:$0xf]
  %v31 = vld [vmem:[%s1] sm:$0xf]
  %v32 = vld [vmem:[%s1 + $0x4] sm:$0xf]
  %v33 = vld [vmem:[%s1 + $0x8] sm:$0xf]
  %v34 = vld [vmem:[%s1 + $0xc] sm:$0xf]
  %v35 = vld [vmem:[%s1 + $0x10] sm:$0xf]
  %v36 = vld [vmem:[%s1 + $0x14] sm:$0xf]
  %v37 = vld [vmem:[%s1 + $0x18] sm:$0xf]
  %v38 = vld [vmem:[%s1 + $0x1c] sm:$0xf]
  %v39 = vld [vmem:[%s1 + $0x20] sm:$0xf]
  %v40 = vld [vmem:[%s1 + $0x24] sm:$0xf]
  %v41 = vld [vmem:[%s1 + $0x28] sm:$0xf]
  %v42 = vld [vmem:[%s1 + $0x2c] sm:$0xf]
  %v43 = vld [vmem:[%s1 + $0x30] sm:$0xf]
  %v44 = vld [vmem:[%s1 + $0x34] sm:$0xf]
  %v45 = vld [vmem:[%s1 + $0x38] sm:$0xf]
  %v46 = vld [vmem:[%s1 + $0x3c] sm:$0xf]
  %v51 = vunpack.c.l.b16 %v27
  %v52 = vunpack.c.l.b16 %v28
  %v53 = vunpack.c.l.b16 %v29
  %v54 = vunpack.c.l.b16 %v30
  %v55 = vpack.c.b16 %v52, %v51
  %v56 = vpack.c.b16 %v54, %v53
  %v75 = vunpack.c.l.b16 %v31
  %v76 = vunpack.c.l.b16 %v32
  %v77 = vunpack.c.l.b16 %v33
  %v78 = vunpack.c.l.b16 %v34
  %v79 = vunpack.c.l.b16 %v35
  %v80 = vunpack.c.l.b16 %v36
  %v81 = vunpack.c.l.b16 %v37
  %v82 = vunpack.c.l.b16 %v38
  %v83 = vunpack.c.l.b16 %v39
  %v84 = vunpack.c.l.b16 %v40
  %v85 = vunpack.c.l.b16 %v41
  %v86 = vunpack.c.l.b16 %v42
  %v87 = vunpack.c.l.b16 %v43
  %v88 = vunpack.c.l.b16 %v44
  %v89 = vunpack.c.l.b16 %v45
  %v90 = vunpack.c.l.b16 %v46
  %v91 = vpack.c.b16 %v76, %v75
  %v92 = vpack.c.b16 %v78, %v77
  %v93 = vpack.c.b16 %v80, %v79
  %v94 = vpack.c.b16 %v82, %v81
  %v95 = vpack.c.b16 %v84, %v83
  %v96 = vpack.c.b16 %v86, %v85
  %v97 = vpack.c.b16 %v88, %v87
  %v98 = vpack.c.b16 %v90, %v89
  %107 = vmatprep.subr.bf16.mxu0 0
  %108 = vmatpush1.bf16.msra.mxu0 %v98
  %109 = vmatprep.subr.bf16.mxu0 0
  %110 = vmatpush1.bf16.msra.mxu0 %v97
  %111 = vmatprep.subr.bf16.mxu0 0
  %112 = vmatpush1.bf16.msra.mxu0 %v96
  %113 = vmatprep.subr.bf16.mxu0 0
  %114 = vmatpush1.bf16.msra.mxu0 %v95
  %115 = vmatprep.subr.bf16.mxu0 0
  %116 = vmatpush1.bf16.msra.mxu0 %v94
  %117 = vmatprep.subr.bf16.mxu0 0
  %118 = vmatpush1.bf16.msra.mxu0 %v93
  %119 = vmatprep.subr.bf16.mxu0 0
  %120 = vmatpush1.bf16.msra.mxu0 %v92
  %121 = vmatprep.subr.bf16.mxu0 0
  %122 = vmatpush1.bf16.msra.mxu0 %v91
  %123 = vmatprep.subr.bf16.mxu0 0
  %124 = vmatpush2.bf16.msra.mxu0 0
  %125 = vmatprep.subr.bf16.mxu0 0
  %126 = vmatpush2.bf16.msra.mxu0 0
  %127 = vmatprep.subr.bf16.mxu0 0
  %128 = vmatpush2.bf16.msra.mxu0 0
  %129 = vmatprep.subr.bf16.mxu0 0
  %130 = vmatpush2.bf16.msra.mxu0 0
  %131 = vmatprep.subr.bf16.mxu0 0
  %132 = vmatpush2.bf16.msra.mxu0 0
  %133 = vmatprep.subr.bf16.mxu0 0
  %134 = vmatpush2.bf16.msra.mxu0 0
  %135 = vmatprep.subr.bf16.mxu0 0
  %136 = vmatpush2.bf16.msra.mxu0 0
  %137 = vmatprep.subr.bf16.mxu0 0
  %138 = vmatpush2.bf16.msra.mxu0 0
  %139 = vmatprep.mubr.bf16.mxu0 0
  %140 = vmatmul.mubr.bf16.gmra.mxu0 %v55
  %v141 = vpop.f32.mrf.mxu0
  %v142 = vadd.f32 0.0, %v141
  %v143 = vpop.f32.mrf.mxu0
  %v144 = vpop.f32.mrf.mxu0
  %v145 = vadd.f32 0.0, %v144
  %v146 = vpop.f32.mrf.mxu0
  %147 = vmatprep.mubr.bf16.mxu0 0
  %148 = vmatmul.mubr.bf16.gmra.mxu0 %v56
  %v149 = vpop.f32.mrf.mxu0
  %v150 = vadd.f32 0.0, %v149
  %v151 = vpop.f32.mrf.mxu0
  %v152 = vpop.f32.mrf.mxu0
  %v153 = vadd.f32 0.0, %v152
  %v154 = vpop.f32.mrf.mxu0
  %155 = vdwg.mxu0
  %v156 = vadd.f32 %v23, %v142
  %v157 = vadd.f32 %v24, %v145
  %v158 = vadd.f32 %v25, %v150
  %v159 = vadd.f32 %v26, %v153
  %160 = vst [vmem:[#allocation2] sm:$0xff] %v156
  %161 = vst [vmem:[#allocation2 + $0x8] sm:$0xff] %v157
  %162 = vst [vmem:[#allocation2 + $0x10] sm:$0xff] %v158
  %163 = vst [vmem:[#allocation2 + $0x18] sm:$0xff] %v159
  // Predicated region
  $region18: #{net_forward.24} parent=0 // pred_check
    %p164 = pneg %p15
  $region19: #{net_forward.24} parent=0 // pred_check_branch
    %166 = sbr.rel (%p164) target = $region21
  $region20: #{net_forward.24} parent=0 // pred_region
    %v167 = vld [vmem:[#allocation2] sm:$0xff]
    %v168 = vld [vmem:[#allocation2 + $0x8] sm:$0xff]
    %v169 = vld [vmem:[#allocation2 + $0x10] sm:$0xff]
    %v170 = vld [vmem:[#allocation2 + $0x18] sm:$0xff]
    %v171 = vld [vmem:[%s2] sm:$0x1]
    %v173 = vlaneseq
    %v174 = vshrl.u32 %v173, 7
    %v175 = vsub.s32 0, %v174
    %v176 = vrot.slane %v171, %v175
    %v178 = vadd.f32 %v167, %v176
    %v179 = vadd.f32 %v168, %v176
    %v180 = vadd.f32 %v169, %v176
    %v181 = vadd.f32 %v170, %v176
    %v182 = vpack.c.bf16 %v179, %v178
    %v183 = vpack.c.bf16 %v181, %v180
    %v186 = vunpack.c.l.b16 %v182
    %v187 = vunpack.c.h.b16 %v182
    %v188 = vunpack.c.l.b16 %v183
    %v189 = vunpack.c.h.b16 %v183
    %v190 = vpack.c.b16 %v186, %v186
    %v191 = vpack.c.b16 %v187, %v187
    %v192 = vpack.c.b16 %v188, %v188
    %v193 = vpack.c.b16 %v189, %v189
    %198 = vst [vmem:[%s3] sm:$0xf] %v190
    %199 = vst [vmem:[%s3 + $0x4] sm:$0xf] %v191
    %200 = vst [vmem:[%s3 + $0x8] sm:$0xf] %v192
    %201 = vst [vmem:[%s3 + $0xc] sm:$0xf] %v193
  $region21: #{net_forward.24} parent=0 // pred_fallthru
    _
  // Predicated region
  $region22: #{net_forward.24} parent=0 // pred_check
    _
  $region23: #{net_forward.24} parent=0 // pred_check_branch
    %203 = sbr.rel (0) target = $region25
  $region24: #{net_forward.24} parent=0 // pred_region
    _
  $region25: #{net_forward.24} parent=0 // pred_fallthru
    _
  // Predicated region
  $region26: #{net_forward.24} parent=0 // pred_check
    _
  $region27: #{net_forward.24} parent=0 // pred_check_branch
    %205 = sbr.rel (0) target = $region29
  $region28: #{net_forward.24} parent=0 // pred_region
    _
  $region29: #{net_forward.24} parent=0 // pred_fallthru
    _

// kernel: net_forward.23
$region0: #{net_forward.23}
  #allocation0 [shape = 'u32[]', space=smem, size = 0x4, offset = 0x4, fixed_abs, tag = 'smem constant byte address 0x4 - core index']
  #allocation1 [shape = 'u32[144,128]{1,0:T(1,128)}', space=vmem, size = 0x12000, scoped, tag = 'internal scratch']
  %s0 = inlined_call_operand.vmem [shape: bf16[2,6,6,16], index: 0, kind: input, shape index: {}]
  %s1 = inlined_call_operand.vmem [shape: bf16[9,16,128], index: 1, kind: input, shape index: {}]
  %s2 = inlined_call_operand.vmem [shape: f32[1,128], index: 2, kind: input, shape index: {}]
  %s3 = inlined_call_operand.vmem [shape: bf16[2,4,4,128], index: 3, kind: output, shape index: {}]
  %s4 = sld [smem:[#allocation0]]
  $region52: #{net_forward.23} parent=0
    _
  %s6 = ssub.s32 1, %s4
  %s7 = scalar_select 0, %s6, %s4
  loop: start=0, step=1, limit=4
  $region2: #{net_forward.23} parent=0 // loop_pre_header
    _
  $region3: #{net_forward.23} parent=0 // loop_header
    %s9 = sphi 0, %s13
    %p10 = scmp.ge.s32.totalorder %s9, 4
    %s16 = sphi 0, %s28
    %s17 = sphi 0, %s24
    %s18 = sphi 0, %s16
    %s19 = sphi 0, %s17
    %s20 = sphi 0, %s18
    %s21 = sphi 0, %s19
    %s31 = sphi 0, %s33
    %s34 = sphi 0, %s31
    %s35 = sphi 0, %s34
    %s51 = sphi 0, %s35
    %s57 = sphi 0, %s59
    %s60 = sphi 0, %s57
    %s61 = sphi 0, %s60
    %s77 = sphi 0, %s61
    %s83 = sphi 0, %s85
    %s86 = sphi 0, %s83
    %s87 = sphi 0, %s86
    %s103 = sphi 0, %s87
    %s111 = sphi 0, %s113
    %s114 = sphi 0, %s111
    %s115 = sphi 0, %s114
    %s131 = sphi 0, %s115
  $region4: #{net_forward.23} parent=0 // loop_header_branch
    %12 = sbr.rel (%p10) target = $region8
  $region5: #{net_forward.23} parent=0 // loop_body
    %s14 = ssub.s32 %s9, 1
    %s15 = ssub.s32 %s9, 2
    %s22 = sadd.s32 1, %s17
    %p23 = scmp.ge.s32.totalorder %s22, 1
    %s24 = scalar_select %p23, 0, %s22
    %s25 = sadd.s32 1, %s16
    %s26 = scalar_select %p23, %s25, %s16
    %p27 = scmp.ge.s32.totalorder %s26, 2
    %s28 = scalar_select %p27, 0, %s26
    %s29 = ssub.s32 %s16, %s28
    %p30 = scmp.eq.s32.totalorder %s29, 0
    %s32 = sadd.s32 %s31, 1
    %s33 = scalar_select %p30, %s31, %s32
    %p36 = pneg %p30
    %p37 = scmp.eq.s32.totalorder %s9, 1
    %p38 = por %p36, %p37
    %p39 = scmp.ne.s32.totalorder %s31, %s34
    %p40 = scmp.eq.s32.totalorder %s9, 0
    %p41 = por %p39, %p40
    %p42 = scmp.ne.s32.totalorder %s31, %s34
    %p43 = scmp.eq.s32.totalorder %s14, 1
    %p44 = por %p42, %p43
    %p45 = scmp.ne.s32.totalorder %s34, %s35
    %p46 = scmp.eq.s32.totalorder %s14, 0
    %p47 = por %p45, %p46
    %p48 = scmp.ne.s32.totalorder %s34, %s35
    %p49 = scmp.eq.s32.totalorder %s15, 1
    %p50 = por %p48, %p49
    %p52 = scmp.ne.s32.totalorder %s35, %s51
    %p53 = scmp.eq.s32.totalorder %s15, 0
    %p54 = por %p52, %p53
    %s55 = ssub.s32 %s17, %s24
    %p56 = scmp.eq.s32.totalorder %s55, 0
    %s58 = sadd.s32 %s57, 1
    %s59 = scalar_select %p56, %s57, %s58
    %p62 = pneg %p56
    %p63 = scmp.eq.s32.totalorder %s9, 1
    %p64 = por %p62, %p63
    %p65 = scmp.ne.s32.totalorder %s57, %s60
    %p66 = scmp.eq.s32.totalorder %s9, 0
    %p67 = por %p65, %p66
    %p68 = scmp.ne.s32.totalorder %s57, %s60
    %p69 = scmp.eq.s32.totalorder %s14, 1
    %p70 = por %p68, %p69
    %p71 = scmp.ne.s32.totalorder %s60, %s61
    %p72 = scmp.eq.s32.totalorder %s14, 0
    %p73 = por %p71, %p72
    %p74 = scmp.ne.s32.totalorder %s60, %s61
    %p75 = scmp.eq.s32.totalorder %s15, 1
    %p76 = por %p74, %p75
    %p78 = scmp.ne.s32.totalorder %s61, %s77
    %p79 = scmp.eq.s32.totalorder %s15, 0
    %p80 = por %p78, %p79
    %s81 = ssub.s32 %s17, %s24
    %p82 = scmp.eq.s32.totalorder %s81, 0
    %s84 = sadd.s32 %s83, 1
    %s85 = scalar_select %p82, %s83, %s84
    %p88 = pneg %p82
    %p89 = scmp.eq.s32.totalorder %s9, 1
    %p90 = por %p88, %p89
    %p91 = scmp.ne.s32.totalorder %s83, %s86
    %p92 = scmp.eq.s32.totalorder %s9, 0
    %p93 = por %p91, %p92
    %p94 = scmp.ne.s32.totalorder %s83, %s86
    %p95 = scmp.eq.s32.totalorder %s14, 1
    %p96 = por %p94, %p95
    %p97 = scmp.ne.s32.totalorder %s86, %s87
    %p98 = scmp.eq.s32.totalorder %s14, 0
    %p99 = por %p97, %p98
    %p100 = scmp.ne.s32.totalorder %s86, %s87
    %p101 = scmp.eq.s32.totalorder %s15, 1
    %p102 = por %p100, %p101
    %p104 = scmp.ne.s32.totalorder %s87, %s103
    %p105 = scmp.eq.s32.totalorder %s15, 0
    %p106 = por %p104, %p105
    %s107 = ssub.s32 %s16, %s28
    %s108 = ssub.s32 %s17, %s24
    %s109 = sor.u32 %s107, %s108
    %p110 = scmp.eq.s32.totalorder %s109, 0
    %s112 = sadd.s32 %s111, 1
    %s113 = scalar_select %p110, %s111, %s112
    %p116 = pneg %p110
    %p117 = scmp.eq.s32.totalorder %s9, 1
    %p118 = por %p116, %p117
    %p119 = scmp.ne.s32.totalorder %s111, %s114
    %p120 = scmp.eq.s32.totalorder %s9, 0
    %p121 = por %p119, %p120
    %p122 = scmp.ne.s32.totalorder %s111, %s114
    %p123 = scmp.eq.s32.totalorder %s14, 1
    %p124 = por %p122, %p123
    %p125 = scmp.ne.s32.totalorder %s114, %s115
    %p126 = scmp.eq.s32.totalorder %s14, 0
    %p127 = por %p125, %p126
    %p128 = scmp.ne.s32.totalorder %s114, %s115
    %p129 = scmp.eq.s32.totalorder %s15, 1
    %p130 = por %p128, %p129
    %p132 = scmp.ne.s32.totalorder %s115, %s131
    %p133 = scmp.eq.s32.totalorder %s15, 0
    %p134 = por %p132, %p133
    %p135 = scmp.le.s32.totalorder 1, %s9
    %p136 = scmp.lt.s32.totalorder %s9, 3
    %p137 = pnand %p135, %p136
    %p138 = pneg %p137
    // Predicated region
    $region9: #{net_forward.23} parent=5 // pred_check
      _
    $region10: #{net_forward.23} parent=5 // pred_check_branch
      %140 = sbr.rel (%p137) target = $region12
    $region11: #{net_forward.23} parent=5 // pred_region
      %s141 = ssub.s32 %s9, 1
      // Predicated region
      $region13: #{net_forward.23} parent=11 // pred_check
        %p142 = pneg %p73
      $region14: #{net_forward.23} parent=11 // pred_check_branch
        %144 = sbr.rel (%p142) target = $region16
      $region15: #{net_forward.23} parent=11 // pred_region
        %p145 = scmp.lt.s32.totalorder %s19, 0
        %s146 = scalar_select %p145, %s19, 0
        %s147 = smul.addr %s146, 4
        %s148 = scalar_lea.vmem %s1, %s147
      $region16: #{net_forward.23} parent=11 // pred_fallthru
        _
      // Predicated region
      $region17: #{net_forward.23} parent=11 // pred_check
        %p149 = pneg %p99
      $region18: #{net_forward.23} parent=11 // pred_check_branch
        %151 = sbr.rel (%p149) target = $region20
      $region19: #{net_forward.23} parent=11 // pred_region
        %p152 = scmp.lt.s32.totalorder %s19, 0
        %s153 = scalar_select %p152, %s19, 0
        %s154 = scalar_lea.vmem %s2, %s153
      $region20: #{net_forward.23} parent=11 // pred_fallthru
        _
    $region12: #{net_forward.23} parent=5 // pred_fallthru
      _
    %p155 = scmp.lt.s32.totalorder %s9, 2
    // Predicated region
    $region21: #{net_forward.23} parent=5 // pred_check
      %p156 = pneg %p155
    $region22: #{net_forward.23} parent=5 // pred_check_branch
      %158 = sbr.rel (%p156) target = $region24
    $region23: #{net_forward.23} parent=5 // pred_region
      // Predicated region
      $region25: #{net_forward.23} parent=23 // pred_check
        %p159 = pneg %p41
      $region26: #{net_forward.23} parent=23 // pred_check_branch
        %161 = sbr.rel (%p159) target = $region28
      $region27: #{net_forward.23} parent=23 // pred_region
        %p162 = scmp.lt.s32.totalorder %s16, 1
        %s163 = scalar_select %p162, %s16, 1
        %s164 = smul.addr %s163, 6
        %s165 = smul.addr %s164, 4
        %s166 = scalar_lea.vmem %s0, %s165
      $region28: #{net_forward.23} parent=23 // pred_fallthru
        _
    $region24: #{net_forward.23} parent=5 // pred_fallthru
      _
    %p167 = scmp.le.s32.totalorder 1, %s9
    %p168 = scmp.lt.s32.totalorder %s9, 3
    %p169 = pnand %p167, %p168
    %p170 = pneg %p169
    // Predicated region
    $region29: #{net_forward.23} parent=5 // pred_check
      _
    $region30: #{net_forward.23} parent=5 // pred_check_branch
      %172 = sbr.rel (%p169) target = $region32
    $region31: #{net_forward.23} parent=5 // pred_region
      %s173 = ssub.s32 %s9, 1
      %p174 = scmp.lt.s32.totalorder %s18, 1
      %s175 = scalar_select %p174, %s18, 1
      %s176 = smul.addr %s175, 6
      %s177 = smul.addr %s176, 4
      %s178 = scalar_lea.vmem %s0, %s177
      %p179 = pneg %p47
      %p180 = pneg %p44
      %p181 = scmp.lt.s32.totalorder %s19, 0
      %s182 = scalar_select %p181, %s19, 0
      %s183 = smul.addr %s182, 4
      %s184 = scalar_lea.vmem %s1, %s183
      %p185 = pneg %p73
      %p186 = pneg %p70
      %p187 = scmp.lt.s32.totalorder %s19, 0
      %s188 = scalar_select %p187, %s19, 0
      %s189 = scalar_lea.vmem %s2, %s188
      %p190 = pneg %p99
      %p191 = pneg %p96
      %p192 = pneg %p127
      %p193 = pneg %p124
      %p194 = scmp.lt.s32.totalorder %s18, 1
      %s195 = scalar_select %p194, %s18, 1
      %p196 = scmp.lt.s32.totalorder %s19, 0
      %s197 = scalar_select %p196, %s19, 0
      %s198 = smul.addr %s195, 4
      %s199 = sadd.s32 %s197, %s198
      %s200 = smul.addr %s199, 2
      %s201 = scalar_lea.vmem %s3, %s200
      %p202 = scmp.lt.s32.totalorder %s18, 1
      %s203 = scalar_select %p202, %s18, 1
      %s204 = smul.addr %s203, 6
      %s205 = smul.addr %s204, 4
      %s206 = scalar_lea.vmem %s0, %s205
      %p207 = scmp.lt.s32.totalorder %s19, 0
      %s208 = scalar_select %p207, %s19, 0
      %s209 = smul.addr %s208, 4
      %s210 = scalar_lea.vmem %s1, %s209
      %p211 = scmp.lt.s32.totalorder %s19, 0
      %s212 = scalar_select %p211, %s19, 0
      %s213 = scalar_lea.vmem %s2, %s212
      %p214 = scmp.lt.s32.totalorder %s18, 1
      %s215 = scalar_select %p214, %s18, 1
      %p216 = scmp.lt.s32.totalorder %s19, 0
      %s217 = scalar_select %p216, %s19, 0
      %s218 = smul.addr %s215, 4
      %s219 = sadd.s32 %s217, %s218
      %s220 = smul.addr %s219, 2
      %s221 = scalar_lea.vmem %s3, %s220
      loop: start=0, step=1, limit=4
      $region33: #{net_forward.23} parent=31 // loop_pre_header
        _
      $region34: #{net_forward.23} parent=31 // loop_header
        %s224 = sphi 0, %s228
        %p225 = scmp.ge.s32.totalorder %s224, 4
      $region35: #{net_forward.23} parent=31 // loop_header_branch
        %227 = sbr.rel (%p225) target = $region39
      $region36: #{net_forward.23} parent=31 // loop_body
        %s229 = smul.addr %s224, 4
        %s230 = scalar_lea.vmem %s206, %s229
        %v231 = vld [vmem:[%s230] sm:$0x3]
        %v232 = vld [vmem:[%s210] sm:$0xf]
        %v233 = vld [vmem:[%s210 + $0x4] sm:$0xf]
        %v234 = vld [vmem:[%s230] sm:$0x7]
        %s235 = scalar_lea.vmem %s210, 8
        %v236 = vld [vmem:[%s235] sm:$0xf]
        %v237 = vld [vmem:[%s235 + $0x4] sm:$0xf]
        %v239 = vunpack.c.l.b16 %v234
        %v240 = vpack.c.b16 %v239, %v239
        %v242 = vshrl.u32 %v240, 16
        %v244 = vshll.u32 %v240, 16
        %v246 = vrot.slane %v244, 1
        %v247 = vor.u32 %v242, %v246
        %v250 = vunpack.c.l.b16 %v236
        %v251 = vunpack.c.l.b16 %v237
        %v252 = vpack.c.b16 %v251, %v250
        %vm254 = vcmask 130048
        %v256 = vsel %vm254, %v247, 0
        %258 = vmatprep.subr.bf16.mxu0 0
        %259 = vmatpush1.bf16.msra.mxu0 0
        %260 = vmatprep.subr.bf16.mxu0 0
        %261 = vmatpush1.bf16.msra.mxu0 0
        %262 = vmatprep.subr.bf16.mxu0 0
        %263 = vmatpush1.bf16.msra.mxu0 0
        %264 = vmatprep.subr.bf16.mxu0 0
        %265 = vmatpush1.bf16.msra.mxu0 0
        %266 = vmatprep.subr.bf16.mxu0 0
        %267 = vmatpush1.bf16.msra.mxu0 0
        %268 = vmatprep.subr.bf16.mxu0 0
        %269 = vmatpush1.bf16.msra.mxu0 0
        %270 = vmatprep.subr.bf16.mxu0 0
        %271 = vmatpush1.bf16.msra.mxu0 0
        %272 = vmatprep.subr.bf16.mxu0 0
        %273 = vmatpush1.bf16.msra.mxu0 %v252
        %274 = vmatprep.subr.bf16.mxu0 0
        %275 = vmatpush2.bf16.msra.mxu0 0
        %276 = vmatprep.subr.bf16.mxu0 0
        %277 = vmatpush2.bf16.msra.mxu0 0
        %278 = vmatprep.subr.bf16.mxu0 0
        %279 = vmatpush2.bf16.msra.mxu0 0
        %280 = vmatprep.subr.bf16.mxu0 0
        %281 = vmatpush2.bf16.msra.mxu0 0
        %282 = vmatprep.subr.bf16.mxu0 0
        %283 = vmatpush2.bf16.msra.mxu0 0
        %284 = vmatprep.subr.bf16.mxu0 0
        %285 = vmatpush2.bf16.msra.mxu0 0
        %286 = vmatprep.subr.bf16.mxu0 0
        %287 = vmatpush2.bf16.msra.mxu0 0
        %288 = vmatprep.subr.bf16.mxu0 0
        %289 = vmatpush2.bf16.msra.mxu0 0
        %290 = vmatprep.mubr.bf16.mxu0 0
        %291 = vmatmul.mubr.bf16.gmra.mxu0 %v256
        %v292 = vpop.f32.mrf.mxu0
        %v293 = vadd.f32 0.0, %v292
        %v294 = vpop.f32.mrf.mxu0
        %v295 = vpop.f32.mrf.mxu0
        %v296 = vpop.f32.mrf.mxu0
        %297 = vdwg.mxu0
        %v300 = vunpack.c.l.b16 %v232
        %v301 = vunpack.c.l.b16 %v233
        %v302 = vpack.c.b16 %v301, %v300
        %v305 = vsel %vm254, %v231, 0
        %307 = vmatprep.subr.bf16.mxu0 0
        %308 = vmatpush1.bf16.msra.mxu0 0
        %309 = vmatprep.subr.bf16.mxu0 0
        %310 = vmatpush1.bf16.msra.mxu0 0
        %311 = vmatprep.subr.bf16.mxu0 0
        %312 = vmatpush1.bf16.msra.mxu0 0
        %313 = vmatprep.subr.bf16.mxu0 0
        %314 = vmatpush1.bf16.msra.mxu0 0
        %315 = vmatprep.subr.bf16.mxu0 0
        %316 = vmatpush1.bf16.msra.mxu0 0
        %317 = vmatprep.subr.bf16.mxu0 0
        %318 = vmatpush1.bf16.msra.mxu0 0
        %319 = vmatprep.subr.bf16.mxu0 0
        %320 = vmatpush1.bf16.msra.mxu0 0
        %321 = vmatprep.subr.bf16.mxu0 0
        %322 = vmatpush1.bf16.msra.mxu0 %v302
        %323 = vmatprep.subr.bf16.mxu0 0
        %324 = vmatpush2.bf16.msra.mxu0 0
        %325 = vmatprep.subr.bf16.mxu0 0
        %326 = vmatpush2.bf16.msra.mxu0 0
        %327 = vmatprep.subr.bf16.mxu0 0
        %328 = vmatpush2.bf16.msra.mxu0 0
        %329 = vmatprep.subr.bf16.mxu0 0
        %330 = vmatpush2.bf16.msra.mxu0 0
        %331 = vmatprep.subr.bf16.mxu0 0
        %332 = vmatpush2.bf16.msra.mxu0 0
        %333 = vmatprep.subr.bf16.mxu0 0
        %334 = vmatpush2.bf16.msra.mxu0 0
        %335 = vmatprep.subr.bf16.mxu0 0
        %336 = vmatpush2.bf16.msra.mxu0 0
        %337 = vmatprep.subr.bf16.mxu0 0
        %338 = vmatpush2.bf16.msra.mxu0 0
        %339 = vmatprep.mubr.bf16.mxu0 0
        %340 = vmatmul.mubr.bf16.gmra.mxu0 %v305
        %v341 = vpop.f32.mrf.mxu0
        %v342 = vadd.f32 %v293, %v341
        %v343 = vpop.f32.mrf.mxu0
        %v344 = vpop.f32.mrf.mxu0
        %v345 = vpop.f32.mrf.mxu0
        %346 = vdwg.mxu0
        %v347 = vld [vmem:[%s230] sm:$0x6]
        %s348 = scalar_lea.vmem %s210, 16
        %v349 = vld [vmem:[%s348] sm:$0xf]
        %v350 = vld [vmem:[%s348 + $0x4] sm:$0xf]
        %v352 = vunpack.c.l.b16 %v347
        %v353 = vpack.c.b16 %v352, %v352
        %v354 = vrot.slane %v353, 1
        %v357 = vunpack.c.l.b16 %v349
        %v358 = vunpack.c.l.b16 %v350
        %v359 = vpack.c.b16 %v358, %v357
        %v362 = vsel %vm254, %v354, 0
        %364 = vmatprep.subr.bf16.mxu0 0
        %365 = vmatpush1.bf16.msra.mxu0 0
        %366 = vmatprep.subr.bf16.mxu0 0
        %367 = vmatpush1.bf16.msra.mxu0 0
        %368 = vmatprep.subr.bf16.mxu0 0
        %369 = vmatpush1.bf16.msra.mxu0 0
        %370 = vmatprep.subr.bf16.mxu0 0
        %371 = vmatpush1.bf16.msra.mxu0 0
        %372 = vmatprep.subr.bf16.mxu0 0
        %373 = vmatpush1.bf16.msra.mxu0 0
        %374 = vmatprep.subr.bf16.mxu0 0
        %375 = vmatpush1.bf16.msra.mxu0 0
        %376 = vmatprep.subr.bf16.mxu0 0
        %377 = vmatpush1.bf16.msra.mxu0 0
        %378 = vmatprep.subr.bf16.mxu0 0
        %379 = vmatpush1.bf16.msra.mxu0 %v359
        %380 = vmatprep.subr.bf16.mxu0 0
        %381 = vmatpush2.bf16.msra.mxu0 0
        %382 = vmatprep.subr.bf16.mxu0 0
        %383 = vmatpush2.bf16.msra.mxu0 0
        %384 = vmatprep.subr.bf16.mxu0 0
        %385 = vmatpush2.bf16.msra.mxu0 0
        %386 = vmatprep.subr.bf16.mxu0 0
        %387 = vmatpush2.bf16.msra.mxu0 0
        %388 = vmatprep.subr.bf16.mxu0 0
        %389 = vmatpush2.bf16.msra.mxu0 0
        %390 = vmatprep.subr.bf16.mxu0 0
        %391 = vmatpush2.bf16.msra.mxu0 0
        %392 = vmatprep.subr.bf16.mxu0 0
        %393 = vmatpush2.bf16.msra.mxu0 0
        %394 = vmatprep.subr.bf16.mxu0 0
        %395 = vmatpush2.bf16.msra.mxu0 0
        %396 = vmatprep.mubr.bf16.mxu0 0
        %397 = vmatmul.mubr.bf16.gmra.mxu0 %v362
        %v398 = vpop.f32.mrf.mxu0
        %v399 = vadd.f32 0.0, %v398
        %v400 = vpop.f32.mrf.mxu0
        %v401 = vpop.f32.mrf.mxu0
        %v402 = vpop.f32.mrf.mxu0
        %403 = vdwg.mxu0
        %v404 = vadd.f32 %v342, %v399
        %s405 = sadd.s32 %s224, 1
        %s406 = smul.addr %s405, 4
        %s407 = scalar_lea.vmem %s206, %s406
        %v408 = vld [vmem:[%s407] sm:$0x3]
        %s409 = scalar_lea.vmem %s210, 24
        %v410 = vld [vmem:[%s409] sm:$0xf]
        %v411 = vld [vmem:[%s409 + $0x4] sm:$0xf]
        %v414 = vunpack.c.l.b16 %v410
        %v415 = vunpack.c.l.b16 %v411
        %v416 = vpack.c.b16 %v415, %v414
        %v419 = vsel %vm254, %v408, 0
        %421 = vmatprep.subr.bf16.mxu0 0
        %422 = vmatpush1.bf16.msra.mxu0 0
        %423 = vmatprep.subr.bf16.mxu0 0
        %424 = vmatpush1.bf16.msra.mxu0 0
        %425 = vmatprep.subr.bf16.mxu0 0
        %426 = vmatpush1.bf16.msra.mxu0 0
        %427 = vmatprep.subr.bf16.mxu0 0
        %428 = vmatpush1.bf16.msra.mxu0 0
        %429 = vmatprep.subr.bf16.mxu0 0
        %430 = vmatpush1.bf16.msra.mxu0 0
        %431 = vmatprep.subr.bf16.mxu0 0
        %432 = vmatpush1.bf16.msra.mxu0 0
        %433 = vmatprep.subr.bf16.mxu0 0
        %434 = vmatpush1.bf16.msra.mxu0 0
        %435 = vmatprep.subr.bf16.mxu0 0
        %436 = vmatpush1.bf16.msra.mxu0 %v416
        %437 = vmatprep.subr.bf16.mxu0 0
        %438 = vmatpush2.bf16.msra.mxu0 0
        %439 = vmatprep.subr.bf16.mxu0 0
        %440 = vmatpush2.bf16.msra.mxu0 0
        %441 = vmatprep.subr.bf16.mxu0 0
        %442 = vmatpush2.bf16.msra.mxu0 0
        %443 = vmatprep.subr.bf16.mxu0 0
        %444 = vmatpush2.bf16.msra.mxu0 0
        %445 = vmatprep.subr.bf16.mxu0 0
        %446 = vmatpush2.bf16.msra.mxu0 0
        %447 = vmatprep.subr.bf16.mxu0 0
        %448 = vmatpush2.bf16.msra.mxu0 0
        %449 = vmatprep.subr.bf16.mxu0 0
        %450 = vmatpush2.bf16.msra.mxu0 0
        %451 = vmatprep.subr.bf16.mxu0 0
        %452 = vmatpush2.bf16.msra.mxu0 0
        %453 = vmatprep.mubr.bf16.mxu0 0
        %454 = vmatmul.mubr.bf16.gmra.mxu0 %v419
        %v455 = vpop.f32.mrf.mxu0
        %v456 = vadd.f32 0.0, %v455
        %v457 = vpop.f32.mrf.mxu0
        %v458 = vpop.f32.mrf.mxu0
        %v459 = vpop.f32.mrf.mxu0
        %460 = vdwg.mxu0
        %v461 = vadd.f32 %v404, %v456
        %v462 = vld [vmem:[%s407] sm:$0x7]
        %s463 = scalar_lea.vmem %s210, 32
        %v464 = vld [vmem:[%s463] sm:$0xf]
        %v465 = vld [vmem:[%s463 + $0x4] sm:$0xf]
        %v467 = vunpack.c.l.b16 %v462
        %v468 = vpack.c.b16 %v467, %v467
        %v470 = vshrl.u32 %v468, 16
        %v472 = vshll.u32 %v468, 16
        %v474 = vrot.slane %v472, 1
        %v475 = vor.u32 %v470, %v474
        %v478 = vunpack.c.l.b16 %v464
        %v479 = vunpack.c.l.b16 %v465
        %v480 = vpack.c.b16 %v479, %v478
        %v483 = vsel %vm254, %v475, 0
        %485 = vmatprep.subr.bf16.mxu0 0
        %486 = vmatpush1.bf16.msra.mxu0 0
        %487 = vmatprep.subr.bf16.mxu0 0
        %488 = vmatpush1.bf16.msra.mxu0 0
        %489 = vmatprep.subr.bf16.mxu0 0
        %490 = vmatpush1.bf16.msra.mxu0 0
        %491 = vmatprep.subr.bf16.mxu0 0
        %492 = vmatpush1.bf16.msra.mxu0 0
        %493 = vmatprep.subr.bf16.mxu0 0
        %494 = vmatpush1.bf16.msra.mxu0 0
        %495 = vmatprep.subr.bf16.mxu0 0
        %496 = vmatpush1.bf16.msra.mxu0 0
        %497 = vmatprep.subr.bf16.mxu0 0
        %498 = vmatpush1.bf16.msra.mxu0 0
        %499 = vmatprep.subr.bf16.mxu0 0
        %500 = vmatpush1.bf16.msra.mxu0 %v480
        %501 = vmatprep.subr.bf16.mxu0 0
        %502 = vmatpush2.bf16.msra.mxu0 0
        %503 = vmatprep.subr.bf16.mxu0 0
        %504 = vmatpush2.bf16.msra.mxu0 0
        %505 = vmatprep.subr.bf16.mxu0 0
        %506 = vmatpush2.bf16.msra.mxu0 0
        %507 = vmatprep.subr.bf16.mxu0 0
        %508 = vmatpush2.bf16.msra.mxu0 0
        %509 = vmatprep.subr.bf16.mxu0 0
        %510 = vmatpush2.bf16.msra.mxu0 0
        %511 = vmatprep.subr.bf16.mxu0 0
        %512 = vmatpush2.bf16.msra.mxu0 0
        %513 = vmatprep.subr.bf16.mxu0 0
        %514 = vmatpush2.bf16.msra.mxu0 0
        %515 = vmatprep.subr.bf16.mxu0 0
        %516 = vmatpush2.bf16.msra.mxu0 0
        %517 = vmatprep.mubr.bf16.mxu0 0
        %518 = vmatmul.mubr.bf16.gmra.mxu0 %v483
        %v519 = vpop.f32.mrf.mxu0
        %v520 = vadd.f32 0.0, %v519
        %v521 = vpop.f32.mrf.mxu0
        %v522 = vpop.f32.mrf.mxu0
        %v523 = vpop.f32.mrf.mxu0
        %524 = vdwg.mxu0
        %v525 = vadd.f32 %v461, %v520
        %v526 = vld [vmem:[%s407] sm:$0x6]
        %s527 = scalar_lea.vmem %s210, 40
        %v528 = vld [vmem:[%s527] sm:$0xf]
        %v529 = vld [vmem:[%s527 + $0x4] sm:$0xf]
        %v531 = vunpack.c.l.b16 %v526
        %v532 = vpack.c.b16 %v531, %v531
        %v533 = vrot.slane %v532, 1
        %v536 = vunpack.c.l.b16 %v528
        %v537 = vunpack.c.l.b16 %v529
        %v538 = vpack.c.b16 %v537, %v536
        %v541 = vsel %vm254, %v533, 0
        %543 = vmatprep.subr.bf16.mxu0 0
        %544 = vmatpush1.bf16.msra.mxu0 0
        %545 = vmatprep.subr.bf16.mxu0 0
        %546 = vmatpush1.bf16.msra.mxu0 0
        %547 = vmatprep.subr.bf16.mxu0 0
        %548 = vmatpush1.bf16.msra.mxu0 0
        %549 = vmatprep.subr.bf16.mxu0 0
        %550 = vmatpush1.bf16.msra.mxu0 0
        %551 = vmatprep.subr.bf16.mxu0 0
        %552 = vmatpush1.bf16.msra.mxu0 0
        %553 = vmatprep.subr.bf16.mxu0 0
        %554 = vmatpush1.bf16.msra.mxu0 0
        %555 = vmatprep.subr.bf16.mxu0 0
        %556 = vmatpush1.bf16.msra.mxu0 0
        %557 = vmatprep.subr.bf16.mxu0 0
        %558 = vmatpush1.bf16.msra.mxu0 %v538
        %559 = vmatprep.subr.bf16.mxu0 0
        %560 = vmatpush2.bf16.msra.mxu0 0
        %561 = vmatprep.subr.bf16.mxu0 0
        %562 = vmatpush2.bf16.msra.mxu0 0
        %563 = vmatprep.subr.bf16.mxu0 0
        %564 = vmatpush2.bf16.msra.mxu0 0
        %565 = vmatprep.subr.bf16.mxu0 0
        %566 = vmatpush2.bf16.msra.mxu0 0
        %567 = vmatprep.subr.bf16.mxu0 0
        %568 = vmatpush2.bf16.msra.mxu0 0
        %569 = vmatprep.subr.bf16.mxu0 0
        %570 = vmatpush2.bf16.msra.mxu0 0
        %571 = vmatprep.subr.bf16.mxu0 0
        %572 = vmatpush2.bf16.msra.mxu0 0
        %573 = vmatprep.subr.bf16.mxu0 0
        %574 = vmatpush2.bf16.msra.mxu0 0
        %575 = vmatprep.mubr.bf16.mxu0 0
        %576 = vmatmul.mubr.bf16.gmra.mxu0 %v541
        %v577 = vpop.f32.mrf.mxu0
        %v578 = vadd.f32 0.0, %v577
        %v579 = vpop.f32.mrf.mxu0
        %v580 = vpop.f32.mrf.mxu0
        %v581 = vpop.f32.mrf.mxu0
        %582 = vdwg.mxu0
        %v583 = vadd.f32 %v525, %v578
        %s584 = sadd.s32 %s224, 2
        %s585 = smul.addr %s584, 4
        %s586 = scalar_lea.vmem %s206, %s585
        %v587 = vld [vmem:[%s586] sm:$0x3]
        %s588 = scalar_lea.vmem %s210, 48
        %v589 = vld [vmem:[%s588] sm:$0xf]
        %v590 = vld [vmem:[%s588 + $0x4] sm:$0xf]
        %v593 = vunpack.c.l.b16 %v589
        %v594 = vunpack.c.l.b16 %v590
        %v595 = vpack.c.b16 %v594, %v593
        %v598 = vsel %vm254, %v587, 0
        %600 = vmatprep.subr.bf16.mxu0 0
        %601 = vmatpush1.bf16.msra.mxu0 0
        %602 = vmatprep.subr.bf16.mxu0 0
        %603 = vmatpush1.bf16.msra.mxu0 0
        %604 = vmatprep.subr.bf16.mxu0 0
        %605 = vmatpush1.bf16.msra.mxu0 0
        %606 = vmatprep.subr.bf16.mxu0 0
        %607 = vmatpush1.bf16.msra.mxu0 0
        %608 = vmatprep.subr.bf16.mxu0 0
        %609 = vmatpush1.bf16.msra.mxu0 0
        %610 = vmatprep.subr.bf16.mxu0 0
        %611 = vmatpush1.bf16.msra.mxu0 0
        %612 = vmatprep.subr.bf16.mxu0 0
        %613 = vmatpush1.bf16.msra.mxu0 0
        %614 = vmatprep.subr.bf16.mxu0 0
        %615 = vmatpush1.bf16.msra.mxu0 %v595
        %616 = vmatprep.subr.bf16.mxu0 0
        %617 = vmatpush2.bf16.msra.mxu0 0
        %618 = vmatprep.subr.bf16.mxu0 0
        %619 = vmatpush2.bf16.msra.mxu0 0
        %620 = vmatprep.subr.bf16.mxu0 0
        %621 = vmatpush2.bf16.msra.mxu0 0
        %622 = vmatprep.subr.bf16.mxu0 0
        %623 = vmatpush2.bf16.msra.mxu0 0
        %624 = vmatprep.subr.bf16.mxu0 0
        %625 = vmatpush2.bf16.msra.mxu0 0
        %626 = vmatprep.subr.bf16.mxu0 0
        %627 = vmatpush2.bf16.msra.mxu0 0
        %628 = vmatprep.subr.bf16.mxu0 0
        %629 = vmatpush2.bf16.msra.mxu0 0
        %630 = vmatprep.subr.bf16.mxu0 0
        %631 = vmatpush2.bf16.msra.mxu0 0
        %632 = vmatprep.mubr.bf16.mxu0 0
        %633 = vmatmul.mubr.bf16.gmra.mxu0 %v598
        %v634 = vpop.f32.mrf.mxu0
        %v635 = vadd.f32 0.0, %v634
        %v636 = vpop.f32.mrf.mxu0
        %v637 = vpop.f32.mrf.mxu0
        %v638 = vpop.f32.mrf.mxu0
        %639 = vdwg.mxu0
        %v640 = vadd.f32 %v583, %v635
        %v641 = vld [vmem:[%s586] sm:$0x7]
        %s642 = scalar_lea.vmem %s210, 56
        %v643 = vld [vmem:[%s642] sm:$0xf]
        %v644 = vld [vmem:[%s642 + $0x4] sm:$0xf]
        %v646 = vunpack.c.l.b16 %v641
        %v647 = vpack.c.b16 %v646, %v646
        %v649 = vshrl.u32 %v647, 16
        %v651 = vshll.u32 %v647, 16
        %v653 = vrot.slane %v651, 1
        %v654 = vor.u32 %v649, %v653
        %v657 = vunpack.c.l.b16 %v643
        %v658 = vunpack.c.l.b16 %v644
        %v659 = vpack.c.b16 %v658, %v657
        %v662 = vsel %vm254, %v654, 0
        %664 = vmatprep.subr.bf16.mxu0 0
        %665 = vmatpush1.bf16.msra.mxu0 0
        %666 = vmatprep.subr.bf16.mxu0 0
        %667 = vmatpush1.bf16.msra.mxu0 0
        %668 = vmatprep.subr.bf16.mxu0 0
        %669 = vmatpush1.bf16.msra.mxu0 0
        %670 = vmatprep.subr.bf16.mxu0 0
        %671 = vmatpush1.bf16.msra.mxu0 0
        %672 = vmatprep.subr.bf16.mxu0 0
        %673 = vmatpush1.bf16.msra.mxu0 0
        %674 = vmatprep.subr.bf16.mxu0 0
        %675 = vmatpush1.bf16.msra.mxu0 0
        %676 = vmatprep.subr.bf16.mxu0 0
        %677 = vmatpush1.bf16.msra.mxu0 0
        %678 = vmatprep.subr.bf16.mxu0 0
        %679 = vmatpush1.bf16.msra.mxu0 %v659
        %680 = vmatprep.subr.bf16.mxu0 0
        %681 = vmatpush2.bf16.msra.mxu0 0
        %682 = vmatprep.subr.bf16.mxu0 0
        %683 = vmatpush2.bf16.msra.mxu0 0
        %684 = vmatprep.subr.bf16.mxu0 0
        %685 = vmatpush2.bf16.msra.mxu0 0
        %686 = vmatprep.subr.bf16.mxu0 0
        %687 = vmatpush2.bf16.msra.mxu0 0
        %688 = vmatprep.subr.bf16.mxu0 0
        %689 = vmatpush2.bf16.msra.mxu0 0
        %690 = vmatprep.subr.bf16.mxu0 0
        %691 = vmatpush2.bf16.msra.mxu0 0
        %692 = vmatprep.subr.bf16.mxu0 0
        %693 = vmatpush2.bf16.msra.mxu0 0
        %694 = vmatprep.subr.bf16.mxu0 0
        %695 = vmatpush2.bf16.msra.mxu0 0
        %696 = vmatprep.mubr.bf16.mxu0 0
        %697 = vmatmul.mubr.bf16.gmra.mxu0 %v662
        %v698 = vpop.f32.mrf.mxu0
        %v699 = vadd.f32 0.0, %v698
        %v700 = vpop.f32.mrf.mxu0
        %v701 = vpop.f32.mrf.mxu0
        %v702 = vpop.f32.mrf.mxu0
        %703 = vdwg.mxu0
        %v704 = vadd.f32 %v640, %v699
        %v705 = vld [vmem:[%s586] sm:$0x6]
        %s706 = scalar_lea.vmem %s210, 64
        %v707 = vld [vmem:[%s706] sm:$0xf]
        %v708 = vld [vmem:[%s706 + $0x4] sm:$0xf]
        %v710 = vunpack.c.l.b16 %v705
        %v711 = vpack.c.b16 %v710, %v710
        %v712 = vrot.slane %v711, 1
        %v715 = vunpack.c.l.b16 %v707
        %v716 = vunpack.c.l.b16 %v708
        %v717 = vpack.c.b16 %v716, %v715
        %v720 = vsel %vm254, %v712, 0
        %722 = vmatprep.subr.bf16.mxu0 0
        %723 = vmatpush1.bf16.msra.mxu0 0
        %724 = vmatprep.subr.bf16.mxu0 0
        %725 = vmatpush1.bf16.msra.mxu0 0
        %726 = vmatprep.subr.bf16.mxu0 0
        %727 = vmatpush1.bf16.msra.mxu0 0
        %728 = vmatprep.subr.bf16.mxu0 0
        %729 = vmatpush1.bf16.msra.mxu0 0
        %730 = vmatprep.subr.bf16.mxu0 0
        %731 = vmatpush1.bf16.msra.mxu0 0
        %732 = vmatprep.subr.bf16.mxu0 0
        %733 = vmatpush1.bf16.msra.mxu0 0
        %734 = vmatprep.subr.bf16.mxu0 0
        %735 = vmatpush1.bf16.msra.mxu0 0
        %736 = vmatprep.subr.bf16.mxu0 0
        %737 = vmatpush1.bf16.msra.mxu0 %v717
        %738 = vmatprep.subr.bf16.mxu0 0
        %739 = vmatpush2.bf16.msra.mxu0 0
        %740 = vmatprep.subr.bf16.mxu0 0
        %741 = vmatpush2.bf16.msra.mxu0 0
        %742 = vmatprep.subr.bf16.mxu0 0
        %743 = vmatpush2.bf16.msra.mxu0 0
        %744 = vmatprep.subr.bf16.mxu0 0
        %745 = vmatpush2.bf16.msra.mxu0 0
        %746 = vmatprep.subr.bf16.mxu0 0
        %747 = vmatpush2.bf16.msra.mxu0 0
        %748 = vmatprep.subr.bf16.mxu0 0
        %749 = vmatpush2.bf16.msra.mxu0 0
        %750 = vmatprep.subr.bf16.mxu0 0
        %751 = vmatpush2.bf16.msra.mxu0 0
        %752 = vmatprep.subr.bf16.mxu0 0
        %753 = vmatpush2.bf16.msra.mxu0 0
        %754 = vmatprep.mubr.bf16.mxu0 0
        %755 = vmatmul.mubr.bf16.gmra.mxu0 %v720
        %v756 = vpop.f32.mrf.mxu0
        %v757 = vadd.f32 0.0, %v756
        %v758 = vpop.f32.mrf.mxu0
        %v759 = vpop.f32.mrf.mxu0
        %v760 = vpop.f32.mrf.mxu0
        %761 = vdwg.mxu0
        %v762 = vadd.f32 %v704, %v757
        %v763 = vld [vmem:[%s213] sm:$0x1]
        %v765 = vlaneseq
        %v766 = vshrl.u32 %v765, 7
        %v767 = vsub.s32 0, %v766
        %v768 = vrot.slane %v763, %v767
        %v770 = vadd.f32 %v762, %v768
        %v771 = vmax.f32 %v770, 0.0
        %v772 = vpack.c.bf16 %v771, %v771
        %s773 = smul.addr %s224, 2
        %s774 = scalar_lea.vmem %s221, %s773
        %775 = vst [vmem:[%s774] sm:$0x3] %v772
      $region37: #{net_forward.23} parent=31 // loop_footer
        %s228 = sadd.s32 1, %s224
      $region38: #{net_forward.23} parent=31 // loop_footer_branch
        %223 = sbr.rel target = $region34
      $region39: #{net_forward.23} parent=31 // loop_exit
        _
      %p776 = scmp.lt.s32.totalorder %s18, 1
      %s777 = scalar_select %p776, %s18, 1
      %p778 = scmp.lt.s32.totalorder %s19, 0
      %s779 = scalar_select %p778, %s19, 0
      %s780 = smul.addr %s777, 4
      %s781 = sadd.s32 %s779, %s780
      %s782 = smul.addr %s781, 2
      %s783 = scalar_lea.vmem %s3, %s782
      // Predicated region
      $region40: #{net_forward.23} parent=31 // pred_check
        %p784 = pneg %p124
      $region41: #{net_forward.23} parent=31 // pred_check_branch
        %786 = sbr.rel (%p784) target = $region43
      $region42: #{net_forward.23} parent=31 // pred_region
        _
      $region43: #{net_forward.23} parent=31 // pred_fallthru
        _
    $region32: #{net_forward.23} parent=5 // pred_fallthru
      _
    %p787 = scmp.le.s32.totalorder 2, %s9
    // Predicated region
    $region44: #{net_forward.23} parent=5 // pred_check
      %p788 = pneg %p787
    $region45: #{net_forward.23} parent=5 // pred_check_branch
      %790 = sbr.rel (%p788) target = $region47
    $region46: #{net_forward.23} parent=5 // pred_region
      %s791 = ssub.s32 %s9, 2
      // Predicated region
      $region48: #{net_forward.23} parent=46 // pred_check
        %p792 = pneg %p130
      $region49: #{net_forward.23} parent=46 // pred_check_branch
        %794 = sbr.rel (%p792) target = $region51
      $region50: #{net_forward.23} parent=46 // pred_region
        %p795 = scmp.lt.s32.totalorder %s20, 1
        %s796 = scalar_select %p795, %s20, 1
        %p797 = scmp.lt.s32.totalorder %s21, 0
        %s798 = scalar_select %p797, %s21, 0
        %s799 = smul.addr %s796, 4
        %s800 = sadd.s32 %s798, %s799
        %s801 = smul.addr %s800, 2
        %s802 = scalar_lea.vmem %s3, %s801
      $region51: #{net_forward.23} parent=46 // pred_fallthru
        _
    $region47: #{net_forward.23} parent=5 // pred_fallthru
      _
  $region6: #{net_forward.23} parent=0 // loop_footer
    %s13 = sadd.s32 1, %s9
  $region7: #{net_forward.23} parent=0 // loop_footer_branch
    %8 = sbr.rel target = $region3
  $region8: #{net_forward.23} parent=0 // loop_exit
    _

// kernel: net_forward.25
$region0: #{net_forward.25}
  #allocation0 [shape = 'u32[]', space=smem, size = 0x4, offset = 0x4, fixed_abs, tag = 'smem constant byte address 0x4 - core index']
  #allocation1 [shape = 'u32[144,128]{1,0:T(1,128)}', space=vmem, size = 0x12000, scoped, tag = 'internal scratch']
  #allocation2 [shape = 'f32[32,128]{1,0:T(8,128)}', space=vmem, size = 0x4000, scoped, tag = 'scratch operand']
  %s0 = inlined_call_operand.vmem [shape: bf16[32,128], index: 0, kind: input, shape index: {}]
  %s1 = inlined_call_operand.vmem [shape: bf16[128,128], index: 1, kind: input, shape index: {}]
  %s2 = inlined_call_operand.vmem [shape: f32[1,128], index: 2, kind: input, shape index: {}]
  %s3 = inlined_call_operand.vmem [shape: bf16[32,128], index: 3, kind: input, shape index: {}]
  %s4 = inlined_call_operand.vmem [shape: bf16[32,128], index: 4, kind: output, shape index: {}]
  %s5 = sld [smem:[#allocation0]]
  $region34: #{net_forward.25} parent=0
    _
  %s7 = ssub.s32 1, %s5
  %s8 = scalar_select 0, %s7, %s5
  // Predicated region
  $region2: #{net_forward.25} parent=0 // pred_check
    _
  $region3: #{net_forward.25} parent=0 // pred_check_branch
    %10 = sbr.rel (0) target = $region5
  $region4: #{net_forward.25} parent=0 // pred_region
    _
  $region5: #{net_forward.25} parent=0 // pred_fallthru
    _
  // Predicated region
  $region6: #{net_forward.25} parent=0 // pred_check
    _
  $region7: #{net_forward.25} parent=0 // pred_check_branch
    %12 = sbr.rel (0) target = $region9
  $region8: #{net_forward.25} parent=0 // pred_region
    _
  $region9: #{net_forward.25} parent=0 // pred_fallthru
    _
  // Predicated region
  $region10: #{net_forward.25} parent=0 // pred_check
    _
  $region11: #{net_forward.25} parent=0 // pred_check_branch
    %14 = sbr.rel (0) target = $region13
  $region12: #{net_forward.25} parent=0 // pred_region
    _
  $region13: #{net_forward.25} parent=0 // pred_fallthru
    _
  // Predicated region
  $region14: #{net_forward.25} parent=0 // pred_check
    _
  $region15: #{net_forward.25} parent=0 // pred_check_branch
    %16 = sbr.rel (0) target = $region17
  $region16: #{net_forward.25} parent=0 // pred_region
    _
  $region17: #{net_forward.25} parent=0 // pred_fallthru
    _
  %p18 = scmp.eq.s32.totalorder 0, 0
  // Predicated region
  $region18: #{net_forward.25} parent=0 // pred_check
    %p19 = pneg %p18
  $region19: #{net_forward.25} parent=0 // pred_check_branch
    %21 = sbr.rel (%p19) target = $region21
  $region20: #{net_forward.25} parent=0 // pred_region
    %22 = vst [vmem:[#allocation2] sm:$0xff] 0.0
    %23 = vst [vmem:[#allocation2 + $0x8] sm:$0xff] 0.0
    %24 = vst [vmem:[#allocation2 + $0x10] sm:$0xff] 0.0
    %25 = vst [vmem:[#allocation2 + $0x18] sm:$0xff] 0.0
  $region21: #{net_forward.25} parent=0 // pred_fallthru
    _
  %v26 = vld [vmem:[#allocation2] sm:$0xff]
  %v27 = vld [vmem:[#allocation2 + $0x8] sm:$0xff]
  %v28 = vld [vmem:[#allocation2 + $0x10] sm:$0xff]
  %v29 = vld [vmem:[#allocation2 + $0x18] sm:$0xff]
  %v30 = vld [vmem:[%s0] sm:$0xf]
  %v31 = vld [vmem:[%s0 + $0x4] sm:$0xf]
  %v32 = vld [vmem:[%s0 + $0x8] sm:$0xf]
  %v33 = vld [vmem:[%s0 + $0xc] sm:$0xf]
  %v34 = vld [vmem:[%s1] sm:$0xf]
  %v35 = vld [vmem:[%s1 + $0x4] sm:$0xf]
  %v36 = vld [vmem:[%s1 + $0x8] sm:$0xf]
  %v37 = vld [vmem:[%s1 + $0xc] sm:$0xf]
  %v38 = vld [vmem:[%s1 + $0x10] sm:$0xf]
  %v39 = vld [vmem:[%s1 + $0x14] sm:$0xf]
  %v40 = vld [vmem:[%s1 + $0x18] sm:$0xf]
  %v41 = vld [vmem:[%s1 + $0x1c] sm:$0xf]
  %v42 = vld [vmem:[%s1 + $0x20] sm:$0xf]
  %v43 = vld [vmem:[%s1 + $0x24] sm:$0xf]
  %v44 = vld [vmem:[%s1 + $0x28] sm:$0xf]
  %v45 = vld [vmem:[%s1 + $0x2c] sm:$0xf]
  %v46 = vld [vmem:[%s1 + $0x30] sm:$0xf]
  %v47 = vld [vmem:[%s1 + $0x34] sm:$0xf]
  %v48 = vld [vmem:[%s1 + $0x38] sm:$0xf]
  %v49 = vld [vmem:[%s1 + $0x3c] sm:$0xf]
  %v54 = vunpack.c.l.b16 %v30
  %v55 = vunpack.c.l.b16 %v31
  %v56 = vunpack.c.l.b16 %v32
  %v57 = vunpack.c.l.b16 %v33
  %v58 = vpack.c.b16 %v55, %v54
  %v59 = vpack.c.b16 %v57, %v56
  %v78 = vunpack.c.l.b16 %v34
  %v79 = vunpack.c.l.b16 %v35
  %v80 = vunpack.c.l.b16 %v36
  %v81 = vunpack.c.l.b16 %v37
  %v82 = vunpack.c.l.b16 %v38
  %v83 = vunpack.c.l.b16 %v39
  %v84 = vunpack.c.l.b16 %v40
  %v85 = vunpack.c.l.b16 %v41
  %v86 = vunpack.c.l.b16 %v42
  %v87 = vunpack.c.l.b16 %v43
  %v88 = vunpack.c.l.b16 %v44
  %v89 = vunpack.c.l.b16 %v45
  %v90 = vunpack.c.l.b16 %v46
  %v91 = vunpack.c.l.b16 %v47
  %v92 = vunpack.c.l.b16 %v48
  %v93 = vunpack.c.l.b16 %v49
  %v94 = vpack.c.b16 %v79, %v78
  %v95 = vpack.c.b16 %v81, %v80
  %v96 = vpack.c.b16 %v83, %v82
  %v97 = vpack.c.b16 %v85, %v84
  %v98 = vpack.c.b16 %v87, %v86
  %v99 = vpack.c.b16 %v89, %v88
  %v100 = vpack.c.b16 %v91, %v90
  %v101 = vpack.c.b16 %v93, %v92
  %110 = vmatprep.subr.bf16.mxu0 0
  %111 = vmatpush1.bf16.msra.mxu0 %v101
  %112 = vmatprep.subr.bf16.mxu0 0
  %113 = vmatpush1.bf16.msra.mxu0 %v100
  %114 = vmatprep.subr.bf16.mxu0 0
  %115 = vmatpush1.bf16.msra.mxu0 %v99
  %116 = vmatprep.subr.bf16.mxu0 0
  %117 = vmatpush1.bf16.msra.mxu0 %v98
  %118 = vmatprep.subr.bf16.mxu0 0
  %119 = vmatpush1.bf16.msra.mxu0 %v97
  %120 = vmatprep.subr.bf16.mxu0 0
  %121 = vmatpush1.bf16.msra.mxu0 %v96
  %122 = vmatprep.subr.bf16.mxu0 0
  %123 = vmatpush1.bf16.msra.mxu0 %v95
  %124 = vmatprep.subr.bf16.mxu0 0
  %125 = vmatpush1.bf16.msra.mxu0 %v94
  %126 = vmatprep.subr.bf16.mxu0 0
  %127 = vmatpush2.bf16.msra.mxu0 0
  %128 = vmatprep.subr.bf16.mxu0 0
  %129 = vmatpush2.bf16.msra.mxu0 0
  %130 = vmatprep.subr.bf16.mxu0 0
  %131 = vmatpush2.bf16.msra.mxu0 0
  %132 = vmatprep.subr.bf16.mxu0 0
  %133 = vmatpush2.bf16.msra.mxu0 0
  %134 = vmatprep.subr.bf16.mxu0 0
  %135 = vmatpush2.bf16.msra.mxu0 0
  %136 = vmatprep.subr.bf16.mxu0 0
  %137 = vmatpush2.bf16.msra.mxu0 0
  %138 = vmatprep.subr.bf16.mxu0 0
  %139 = vmatpush2.bf16.msra.mxu0 0
  %140 = vmatprep.subr.bf16.mxu0 0
  %141 = vmatpush2.bf16.msra.mxu0 0
  %142 = vmatprep.mubr.bf16.mxu0 0
  %143 = vmatmul.mubr.bf16.gmra.mxu0 %v58
  %v144 = vpop.f32.mrf.mxu0
  %v145 = vadd.f32 0.0, %v144
  %v146 = vpop.f32.mrf.mxu0
  %v147 = vpop.f32.mrf.mxu0
  %v148 = vadd.f32 0.0, %v147
  %v149 = vpop.f32.mrf.mxu0
  %150 = vmatprep.mubr.bf16.mxu0 0
  %151 = vmatmul.mubr.bf16.gmra.mxu0 %v59
  %v152 = vpop.f32.mrf.mxu0
  %v153 = vadd.f32 0.0, %v152
  %v154 = vpop.f32.mrf.mxu0
  %v155 = vpop.f32.mrf.mxu0
  %v156 = vadd.f32 0.0, %v155
  %v157 = vpop.f32.mrf.mxu0
  %158 = vdwg.mxu0
  %v159 = vadd.f32 %v26, %v145
  %v160 = vadd.f32 %v27, %v148
  %v161 = vadd.f32 %v28, %v153
  %v162 = vadd.f32 %v29, %v156
  %163 = vst [vmem:[#allocation2] sm:$0xff] %v159
  %164 = vst [vmem:[#allocation2 + $0x8] sm:$0xff] %v160
  %165 = vst [vmem:[#allocation2 + $0x10] sm:$0xff] %v161
  %166 = vst [vmem:[#allocation2 + $0x18] sm:$0xff] %v162
  // Predicated region
  $region22: #{net_forward.25} parent=0 // pred_check
    %p167 = pneg %p18
  $region23: #{net_forward.25} parent=0 // pred_check_branch
    %169 = sbr.rel (%p167) target = $region25
  $region24: #{net_forward.25} parent=0 // pred_region
    %v170 = vld [vmem:[#allocation2] sm:$0xff]
    %v171 = vld [vmem:[#allocation2 + $0x8] sm:$0xff]
    %v172 = vld [vmem:[#allocation2 + $0x10] sm:$0xff]
    %v173 = vld [vmem:[#allocation2 + $0x18] sm:$0xff]
    %v174 = vld [vmem:[%s2] sm:$0x1]
    %v176 = vlaneseq
    %v177 = vshrl.u32 %v176, 7
    %v178 = vsub.s32 0, %v177
    %v179 = vrot.slane %v174, %v178
    %v181 = vadd.f32 %v170, %v179
    %v182 = vadd.f32 %v171, %v179
    %v183 = vadd.f32 %v172, %v179
    %v184 = vadd.f32 %v173, %v179
    %v185 = vld [vmem:[%s3] sm:$0xf]
    %v186 = vld [vmem:[%s3 + $0x4] sm:$0xf]
    %v187 = vld [vmem:[%s3 + $0x8] sm:$0xf]
    %v188 = vld [vmem:[%s3 + $0xc] sm:$0xf]
    %v189 = vunpack.c.l.bf16 %v185
    %v190 = vunpack.c.l.bf16 %v186
    %v191 = vunpack.c.l.bf16 %v187
    %v192 = vunpack.c.l.bf16 %v188
    %v193 = vadd.f32 %v181, %v189
    %v194 = vadd.f32 %v182, %v190
    %v195 = vadd.f32 %v183, %v191
    %v196 = vadd.f32 %v184, %v192
    %v197 = vmax.f32 %v193, 0.0
    %v198 = vmax.f32 %v194, 0.0
    %v199 = vmax.f32 %v195, 0.0
    %v200 = vmax.f32 %v196, 0.0
    %v201 = vpack.c.bf16 %v198, %v197
    %v202 = vpack.c.bf16 %v200, %v199
    %v205 = vunpack.c.l.b16 %v201
    %v206 = vunpack.c.h.b16 %v201
    %v207 = vunpack.c.l.b16 %v202
    %v208 = vunpack.c.h.b16 %v202
    %v209 = vpack.c.b16 %v205, %v205
    %v210 = vpack.c.b16 %v206, %v206
    %v211 = vpack.c.b16 %v207, %v207
    %v212 = vpack.c.b16 %v208, %v208
    %217 = vst [vmem:[%s4] sm:$0xf] %v209
    %218 = vst [vmem:[%s4 + $0x4] sm:$0xf] %v210
    %219 = vst [vmem:[%s4 + $0x8] sm:$0xf] %v211
    %220 = vst [vmem:[%s4 + $0xc] sm:$0xf] %v212
  $region25: #{net_forward.25} parent=0 // pred_fallthru
    _
  // Predicated region
  $region26: #{net_forward.25} parent=0 // pred_check
    _
  $region27: #{net_forward.25} parent=0 // pred_check_branch
    %222 = sbr.rel (0) target = $region29
  $region28: #{net_forward.25} parent=0 // pred_region
    _
  $region29: #{net_forward.25} parent=0 // pred_fallthru
    _
  // Predicated region
  $region30: #{net_forward.25} parent=0 // pred_check
    _
  $region31: #{net_forward.25} parent=0 // pred_check_branch
    %224 = sbr.rel (0) target = $region33
  $region32: #{net_forward.25} parent=0 // pred_region
    _
  $region33: #{net_forward.25} parent=0 // pred_fallthru
    _

// kernel: net_forward.28
$region0: #{net_forward.28}
  #allocation0 [shape = 'u32[]', space=smem, size = 0x4, offset = 0x4, fixed_abs, tag = 'smem constant byte address 0x4 - core index']
  #allocation1 [shape = 'u32[144,128]{1,0:T(1,128)}', space=vmem, size = 0x12000, scoped, tag = 'internal scratch']
  #allocation2 [shape = 'f32[8,128]{1,0:T(8,128)}', space=vmem, size = 0x1000, scoped, tag = 'scratch operand']
  %s0 = inlined_call_operand.vmem [shape: bf16[8,128], index: 0, kind: input, shape index: {}]
  %s1 = inlined_call_operand.vmem [shape: bf16[128,128], index: 1, kind: input, shape index: {}]
  %s2 = inlined_call_operand.vmem [shape: f32[1,128], index: 2, kind: input, shape index: {}]
  %s3 = inlined_call_operand.vmem [shape: bf16[8,128], index: 3, kind: output, shape index: {}]
  %s4 = sld [smem:[#allocation0]]
  $region30: #{net_forward.28} parent=0
    _
  %s6 = ssub.s32 1, %s4
  %s7 = scalar_select 0, %s6, %s4
  // Predicated region
  $region2: #{net_forward.28} parent=0 // pred_check
    _
  $region3: #{net_forward.28} parent=0 // pred_check_branch
    %9 = sbr.rel (0) target = $region5
  $region4: #{net_forward.28} parent=0 // pred_region
    _
  $region5: #{net_forward.28} parent=0 // pred_fallthru
    _
  // Predicated region
  $region6: #{net_forward.28} parent=0 // pred_check
    _
  $region7: #{net_forward.28} parent=0 // pred_check_branch
    %11 = sbr.rel (0) target = $region9
  $region8: #{net_forward.28} parent=0 // pred_region
    _
  $region9: #{net_forward.28} parent=0 // pred_fallthru
    _
  // Predicated region
  $region10: #{net_forward.28} parent=0 // pred_check
    _
  $region11: #{net_forward.28} parent=0 // pred_check_branch
    %13 = sbr.rel (0) target = $region13
  $region12: #{net_forward.28} parent=0 // pred_region
    _
  $region13: #{net_forward.28} parent=0 // pred_fallthru
    _
  %p15 = scmp.eq.s32.totalorder 0, 0
  // Predicated region
  $region14: #{net_forward.28} parent=0 // pred_check
    %p16 = pneg %p15
  $region15: #{net_forward.28} parent=0 // pred_check_branch
    %18 = sbr.rel (%p16) target = $region17
  $region16: #{net_forward.28} parent=0 // pred_region
    %19 = vst [vmem:[#allocation2] sm:$0xff] 0.0
  $region17: #{net_forward.28} parent=0 // pred_fallthru
    _
  %v20 = vld [vmem:[#allocation2] sm:$0xff]
  %v21 = vld [vmem:[%s0] sm:$0xf]
  %v22 = vld [vmem:[%s1] sm:$0xf]
  %v23 = vld [vmem:[%s1 + $0x4] sm:$0xf]
  %v24 = vld [vmem:[%s1 + $0x8] sm:$0xf]
  %v25 = vld [vmem:[%s1 + $0xc] sm:$0xf]
  %v26 = vld [vmem:[%s1 + $0x10] sm:$0xf]
  %v27 = vld [vmem:[%s1 + $0x14] sm:$0xf]
  %v28 = vld [vmem:[%s1 + $0x18] sm:$0xf]
  %v29 = vld [vmem:[%s1 + $0x1c] sm:$0xf]
  %v30 = vld [vmem:[%s1 + $0x20] sm:$0xf]
  %v31 = vld [vmem:[%s1 + $0x24] sm:$0xf]
  %v32 = vld [vmem:[%s1 + $0x28] sm:$0xf]
  %v33 = vld [vmem:[%s1 + $0x2c] sm:$0xf]
  %v34 = vld [vmem:[%s1 + $0x30] sm:$0xf]
  %v35 = vld [vmem:[%s1 + $0x34] sm:$0xf]
  %v36 = vld [vmem:[%s1 + $0x38] sm:$0xf]
  %v37 = vld [vmem:[%s1 + $0x3c] sm:$0xf]
  %v54 = vunpack.c.l.b16 %v22
  %v55 = vunpack.c.l.b16 %v23
  %v56 = vunpack.c.l.b16 %v24
  %v57 = vunpack.c.l.b16 %v25
  %v58 = vunpack.c.l.b16 %v26
  %v59 = vunpack.c.l.b16 %v27
  %v60 = vunpack.c.l.b16 %v28
  %v61 = vunpack.c.l.b16 %v29
  %v62 = vunpack.c.l.b16 %v30
  %v63 = vunpack.c.l.b16 %v31
  %v64 = vunpack.c.l.b16 %v32
  %v65 = vunpack.c.l.b16 %v33
  %v66 = vunpack.c.l.b16 %v34
  %v67 = vunpack.c.l.b16 %v35
  %v68 = vunpack.c.l.b16 %v36
  %v69 = vunpack.c.l.b16 %v37
  %v70 = vpack.c.b16 %v55, %v54
  %v71 = vpack.c.b16 %v57, %v56
  %v72 = vpack.c.b16 %v59, %v58
  %v73 = vpack.c.b16 %v61, %v60
  %v74 = vpack.c.b16 %v63, %v62
  %v75 = vpack.c.b16 %v65, %v64
  %v76 = vpack.c.b16 %v67, %v66
  %v77 = vpack.c.b16 %v69, %v68
  %86 = vmatprep.subr.bf16.mxu0 0
  %87 = vmatpush1.bf16.msra.mxu0 %v77
  %88 = vmatprep.subr.bf16.mxu0 0
  %89 = vmatpush1.bf16.msra.mxu0 %v76
  %90 = vmatprep.subr.bf16.mxu0 0
  %91 = vmatpush1.bf16.msra.mxu0 %v75
  %92 = vmatprep.subr.bf16.mxu0 0
  %93 = vmatpush1.bf16.msra.mxu0 %v74
  %94 = vmatprep.subr.bf16.mxu0 0
  %95 = vmatpush1.bf16.msra.mxu0 %v73
  %96 = vmatprep.subr.bf16.mxu0 0
  %97 = vmatpush1.bf16.msra.mxu0 %v72
  %98 = vmatprep.subr.bf16.mxu0 0
  %99 = vmatpush1.bf16.msra.mxu0 %v71
  %100 = vmatprep.subr.bf16.mxu0 0
  %101 = vmatpush1.bf16.msra.mxu0 %v70
  %102 = vmatprep.subr.bf16.mxu0 0
  %103 = vmatpush2.bf16.msra.mxu0 0
  %104 = vmatprep.subr.bf16.mxu0 0
  %105 = vmatpush2.bf16.msra.mxu0 0
  %106 = vmatprep.subr.bf16.mxu0 0
  %107 = vmatpush2.bf16.msra.mxu0 0
  %108 = vmatprep.subr.bf16.mxu0 0
  %109 = vmatpush2.bf16.msra.mxu0 0
  %110 = vmatprep.subr.bf16.mxu0 0
  %111 = vmatpush2.bf16.msra.mxu0 0
  %112 = vmatprep.subr.bf16.mxu0 0
  %113 = vmatpush2.bf16.msra.mxu0 0
  %114 = vmatprep.subr.bf16.mxu0 0
  %115 = vmatpush2.bf16.msra.mxu0 0
  %116 = vmatprep.subr.bf16.mxu0 0
  %117 = vmatpush2.bf16.msra.mxu0 0
  %118 = vmatprep.mubr.bf16.mxu0 0
  %119 = vmatmul.mubr.bf16.gmra.mxu0 %v21
  %v120 = vpop.f32.mrf.mxu0
  %v121 = vadd.f32 0.0, %v120
  %v122 = vpop.f32.mrf.mxu0
  %v123 = vpop.f32.mrf.mxu0
  %v124 = vpop.f32.mrf.mxu0
  %125 = vdwg.mxu0
  %v126 = vadd.f32 %v20, %v121
  %127 = vst [vmem:[#allocation2] sm:$0xff] %v126
  // Predicated region
  $region18: #{net_forward.28} parent=0 // pred_check
    %p128 = pneg %p15
  $region19: #{net_forward.28} parent=0 // pred_check_branch
    %130 = sbr.rel (%p128) target = $region21
  $region20: #{net_forward.28} parent=0 // pred_region
    %v131 = vld [vmem:[#allocation2] sm:$0xff]
    %v132 = vld [vmem:[%s2] sm:$0x1]
    %v134 = vlaneseq
    %v135 = vshrl.u32 %v134, 7
    %v136 = vsub.s32 0, %v135
    %v137 = vrot.slane %v132, %v136
    %v139 = vadd.f32 %v131, %v137
    %v140 = vpack.c.bf16 %v139, %v139
    %141 = vst [vmem:[%s3] sm:$0xf] %v140
  $region21: #{net_forward.28} parent=0 // pred_fallthru
    _
  // Predicated region
  $region22: #{net_forward.28} parent=0 // pred_check
    _
  $region23: #{net_forward.28} parent=0 // pred_check_branch
    %143 = sbr.rel (0) target = $region25
  $region24: #{net_forward.28} parent=0 // pred_region
    _
  $region25: #{net_forward.28} parent=0 // pred_fallthru
    _
  // Predicated region
  $region26: #{net_forward.28} parent=0 // pred_check
    _
  $region27: #{net_forward.28} parent=0 // pred_check_branch
    %145 = sbr.rel (0) target = $region29
  $region28: #{net_forward.28} parent=0 // pred_region
    _
  $region29: #{net_forward.28} parent=0 // pred_fallthru
    _

// kernel: net_forward.29
$region0: #{net_forward.29}
  #allocation0 [shape = 'u32[]', space=smem, size = 0x4, offset = 0x4, fixed_abs, tag = 'smem constant byte address 0x4 - core index']
  #allocation1 [shape = 'u32[144,128]{1,0:T(1,128)}', space=vmem, size = 0x12000, scoped, tag = 'internal scratch']
  #allocation2 [shape = 'f32[8,128]{1,0:T(8,128)}', space=vmem, size = 0x1000, scoped, tag = 'scratch operand']
  %s0 = inlined_call_operand.vmem [shape: bf16[8,128], index: 0, kind: input, shape index: {}]
  %s1 = inlined_call_operand.vmem [shape: bf16[128,128], index: 1, kind: input, shape index: {}]
  %s2 = inlined_call_operand.vmem [shape: f32[1,128], index: 2, kind: input, shape index: {}]
  %s3 = inlined_call_operand.vmem [shape: bf16[8,128], index: 3, kind: input, shape index: {}]
  %s4 = inlined_call_operand.vmem [shape: bf16[8,128], index: 4, kind: output, shape index: {}]
  %s5 = sld [smem:[#allocation0]]
  $region34: #{net_forward.29} parent=0
    _
  %s7 = ssub.s32 1, %s5
  %s8 = scalar_select 0, %s7, %s5
  // Predicated region
  $region2: #{net_forward.29} parent=0 // pred_check
    _
  $region3: #{net_forward.29} parent=0 // pred_check_branch
    %10 = sbr.rel (0) target = $region5
  $region4: #{net_forward.29} parent=0 // pred_region
    _
  $region5: #{net_forward.29} parent=0 // pred_fallthru
    _
  // Predicated region
  $region6: #{net_forward.29} parent=0 // pred_check
    _
  $region7: #{net_forward.29} parent=0 // pred_check_branch
    %12 = sbr.rel (0) target = $region9
  $region8: #{net_forward.29} parent=0 // pred_region
    _
  $region9: #{net_forward.29} parent=0 // pred_fallthru
    _
  // Predicated region
  $region10: #{net_forward.29} parent=0 // pred_check
    _
  $region11: #{net_forward.29} parent=0 // pred_check_branch
    %14 = sbr.rel (0) target = $region13
  $region12: #{net_forward.29} parent=0 // pred_region
    _
  $region13: #{net_forward.29} parent=0 // pred_fallthru
    _
  // Predicated region
  $region14: #{net_forward.29} parent=0 // pred_check
    _
  $region15: #{net_forward.29} parent=0 // pred_check_branch
    %16 = sbr.rel (0) target = $region17
  $region16: #{net_forward.29} parent=0 // pred_region
    _
  $region17: #{net_forward.29} parent=0 // pred_fallthru
    _
  %p18 = scmp.eq.s32.totalorder 0, 0
  // Predicated region
  $region18: #{net_forward.29} parent=0 // pred_check
    %p19 = pneg %p18
  $region19: #{net_forward.29} parent=0 // pred_check_branch
    %21 = sbr.rel (%p19) target = $region21
  $region20: #{net_forward.29} parent=0 // pred_region
    %22 = vst [vmem:[#allocation2] sm:$0xff] 0.0
  $region21: #{net_forward.29} parent=0 // pred_fallthru
    _
  %v23 = vld [vmem:[#allocation2] sm:$0xff]
  %v24 = vld [vmem:[%s0] sm:$0xf]
  %v25 = vld [vmem:[%s1] sm:$0xf]
  %v26 = vld [vmem:[%s1 + $0x4] sm:$0xf]
  %v27 = vld [vmem:[%s1 + $0x8] sm:$0xf]
  %v28 = vld [vmem:[%s1 + $0xc] sm:$0xf]
  %v29 = vld [vmem:[%s1 + $0x10] sm:$0xf]
  %v30 = vld [vmem:[%s1 + $0x14] sm:$0xf]
  %v31 = vld [vmem:[%s1 + $0x18] sm:$0xf]
  %v32 = vld [vmem:[%s1 + $0x1c] sm:$0xf]
  %v33 = vld [vmem:[%s1 + $0x20] sm:$0xf]
  %v34 = vld [vmem:[%s1 + $0x24] sm:$0xf]
  %v35 = vld [vmem:[%s1 + $0x28] sm:$0xf]
  %v36 = vld [vmem:[%s1 + $0x2c] sm:$0xf]
  %v37 = vld [vmem:[%s1 + $0x30] sm:$0xf]
  %v38 = vld [vmem:[%s1 + $0x34] sm:$0xf]
  %v39 = vld [vmem:[%s1 + $0x38] sm:$0xf]
  %v40 = vld [vmem:[%s1 + $0x3c] sm:$0xf]
  %v57 = vunpack.c.l.b16 %v25
  %v58 = vunpack.c.l.b16 %v26
  %v59 = vunpack.c.l.b16 %v27
  %v60 = vunpack.c.l.b16 %v28
  %v61 = vunpack.c.l.b16 %v29
  %v62 = vunpack.c.l.b16 %v30
  %v63 = vunpack.c.l.b16 %v31
  %v64 = vunpack.c.l.b16 %v32
  %v65 = vunpack.c.l.b16 %v33
  %v66 = vunpack.c.l.b16 %v34
  %v67 = vunpack.c.l.b16 %v35
  %v68 = vunpack.c.l.b16 %v36
  %v69 = vunpack.c.l.b16 %v37
  %v70 = vunpack.c.l.b16 %v38
  %v71 = vunpack.c.l.b16 %v39
  %v72 = vunpack.c.l.b16 %v40
  %v73 = vpack.c.b16 %v58, %v57
  %v74 = vpack.c.b16 %v60, %v59
  %v75 = vpack.c.b16 %v62, %v61
  %v76 = vpack.c.b16 %v64, %v63
  %v77 = vpack.c.b16 %v66, %v65
  %v78 = vpack.c.b16 %v68, %v67
  %v79 = vpack.c.b16 %v70, %v69
  %v80 = vpack.c.b16 %v72, %v71
  %89 = vmatprep.subr.bf16.mxu0 0
  %90 = vmatpush1.bf16.msra.mxu0 %v80
  %91 = vmatprep.subr.bf16.mxu0 0
  %92 = vmatpush1.bf16.msra.mxu0 %v79
  %93 = vmatprep.subr.bf16.mxu0 0
  %94 = vmatpush1.bf16.msra.mxu0 %v78
  %95 = vmatprep.subr.bf16.mxu0 0
  %96 = vmatpush1.bf16.msra.mxu0 %v77
  %97 = vmatprep.subr.bf16.mxu0 0
  %98 = vmatpush1.bf16.msra.mxu0 %v76
  %99 = vmatprep.subr.bf16.mxu0 0
  %100 = vmatpush1.bf16.msra.mxu0 %v75
  %101 = vmatprep.subr.bf16.mxu0 0
  %102 = vmatpush1.bf16.msra.mxu0 %v74
  %103 = vmatprep.subr.bf16.mxu0 0
  %104 = vmatpush1.bf16.msra.mxu0 %v73
  %105 = vmatprep.subr.bf16.mxu0 0
  %106 = vmatpush2.bf16.msra.mxu0 0
  %107 = vmatprep.subr.bf16.mxu0 0
  %108 = vmatpush2.bf16.msra.mxu0 0
  %109 = vmatprep.subr.bf16.mxu0 0
  %110 = vmatpush2.bf16.msra.mxu0 0
  %111 = vmatprep.subr.bf16.mxu0 0
  %112 = vmatpush2.bf16.msra.mxu0 0
  %113 = vmatprep.subr.bf16.mxu0 0
  %114 = vmatpush2.bf16.msra.mxu0 0
  %115 = vmatprep.subr.bf16.mxu0 0
  %116 = vmatpush2.bf16.msra.mxu0 0
  %117 = vmatprep.subr.bf16.mxu0 0
  %118 = vmatpush2.bf16.msra.mxu0 0
  %119 = vmatprep.subr.bf16.mxu0 0
  %120 = vmatpush2.bf16.msra.mxu0 0
  %121 = vmatprep.mubr.bf16.mxu0 0
  %122 = vmatmul.mubr.bf16.gmra.mxu0 %v24
  %v123 = vpop.f32.mrf.mxu0
  %v124 = vadd.f32 0.0, %v123
  %v125 = vpop.f32.mrf.mxu0
  %v126 = vpop.f32.mrf.mxu0
  %v127 = vpop.f32.mrf.mxu0
  %128 = vdwg.mxu0
  %v129 = vadd.f32 %v23, %v124
  %130 = vst [vmem:[#allocation2] sm:$0xff] %v129
  // Predicated region
  $region22: #{net_forward.29} parent=0 // pred_check
    %p131 = pneg %p18
  $region23: #{net_forward.29} parent=0 // pred_check_branch
    %133 = sbr.rel (%p131) target = $region25
  $region24: #{net_forward.29} parent=0 // pred_region
    %v134 = vld [vmem:[#allocation2] sm:$0xff]
    %v135 = vld [vmem:[%s2] sm:$0x1]
    %v137 = vlaneseq
    %v138 = vshrl.u32 %v137, 7
    %v139 = vsub.s32 0, %v138
    %v140 = vrot.slane %v135, %v139
    %v142 = vadd.f32 %v134, %v140
    %v143 = vld [vmem:[%s3] sm:$0xf]
    %v144 = vunpack.c.l.bf16 %v143
    %v145 = vadd.f32 %v142, %v144
    %v146 = vmax.f32 %v145, 0.0
    %v147 = vpack.c.bf16 %v146, %v146
    %148 = vst [vmem:[%s4] sm:$0xf] %v147
  $region25: #{net_forward.29} parent=0 // pred_fallthru
    _
  // Predicated region
  $region26: #{net_forward.29} parent=0 // pred_check
    _
  $region27: #{net_forward.29} parent=0 // pred_check_branch
    %150 = sbr.rel (0) target = $region29
  $region28: #{net_forward.29} parent=0 // pred_region
    _
  $region29: #{net_forward.29} parent=0 // pred_fallthru
    _
  // Predicated region
  $region30: #{net_forward.29} parent=0 // pred_check
    _
  $region31: #{net_forward.29} parent=0 // pred_check_branch
    %152 = sbr.rel (0) target = $region33
  $region32: #{net_forward.29} parent=0 // pred_region
    _
  $region33: #{net_forward.29} parent=0 // pred_fallthru
    _

// kernel: net_forward.27
$region0: #{net_forward.27}
  #allocation0 [shape = 'u32[]', space=smem, size = 0x4, offset = 0x4, fixed_abs, tag = 'smem constant byte address 0x4 - core index']
  #allocation1 [shape = 'u32[144,128]{1,0:T(1,128)}', space=vmem, size = 0x12000, scoped, tag = 'internal scratch']
  %s0 = inlined_call_operand.vmem [shape: bf16[2,3,3,128], index: 0, kind: input, shape index: {}]
  %s1 = inlined_call_operand.vmem [shape: bf16[4,128,128], index: 1, kind: input, shape index: {}]
  %s2 = inlined_call_operand.vmem [shape: f32[1,128], index: 2, kind: input, shape index: {}]
  %s3 = inlined_call_operand.vmem [shape: bf16[2,2,2,128], index: 3, kind: output, shape index: {}]
  %s4 = sld [smem:[#allocation0]]
  $region52: #{net_forward.27} parent=0
    _
  %s6 = ssub.s32 1, %s4
  %s7 = scalar_select 0, %s6, %s4
  loop: start=0, step=1, limit=4
  $region2: #{net_forward.27} parent=0 // loop_pre_header
    _
  $region3: #{net_forward.27} parent=0 // loop_header
    %s9 = sphi 0, %s13
    %p10 = scmp.ge.s32.totalorder %s9, 4
    %s16 = sphi 0, %s28
    %s17 = sphi 0, %s24
    %s18 = sphi 0, %s16
    %s19 = sphi 0, %s17
    %s20 = sphi 0, %s18
    %s21 = sphi 0, %s19
    %s31 = sphi 0, %s33
    %s34 = sphi 0, %s31
    %s35 = sphi 0, %s34
    %s51 = sphi 0, %s35
    %s57 = sphi 0, %s59
    %s60 = sphi 0, %s57
    %s61 = sphi 0, %s60
    %s77 = sphi 0, %s61
    %s83 = sphi 0, %s85
    %s86 = sphi 0, %s83
    %s87 = sphi 0, %s86
    %s103 = sphi 0, %s87
    %s111 = sphi 0, %s113
    %s114 = sphi 0, %s111
    %s115 = sphi 0, %s114
    %s131 = sphi 0, %s115
  $region4: #{net_forward.27} parent=0 // loop_header_branch
    %12 = sbr.rel (%p10) target = $region8
  $region5: #{net_forward.27} parent=0 // loop_body
    %s14 = ssub.s32 %s9, 1
    %s15 = ssub.s32 %s9, 2
    %s22 = sadd.s32 1, %s17
    %p23 = scmp.ge.s32.totalorder %s22, 1
    %s24 = scalar_select %p23, 0, %s22
    %s25 = sadd.s32 1, %s16
    %s26 = scalar_select %p23, %s25, %s16
    %p27 = scmp.ge.s32.totalorder %s26, 2
    %s28 = scalar_select %p27, 0, %s26
    %s29 = ssub.s32 %s16, %s28
    %p30 = scmp.eq.s32.totalorder %s29, 0
    %s32 = sadd.s32 %s31, 1
    %s33 = scalar_select %p30, %s31, %s32
    %p36 = pneg %p30
    %p37 = scmp.eq.s32.totalorder %s9, 1
    %p38 = por %p36, %p37
    %p39 = scmp.ne.s32.totalorder %s31, %s34
    %p40 = scmp.eq.s32.totalorder %s9, 0
    %p41 = por %p39, %p40
    %p42 = scmp.ne.s32.totalorder %s31, %s34
    %p43 = scmp.eq.s32.totalorder %s14, 1
    %p44 = por %p42, %p43
    %p45 = scmp.ne.s32.totalorder %s34, %s35
    %p46 = scmp.eq.s32.totalorder %s14, 0
    %p47 = por %p45, %p46
    %p48 = scmp.ne.s32.totalorder %s34, %s35
    %p49 = scmp.eq.s32.totalorder %s15, 1
    %p50 = por %p48, %p49
    %p52 = scmp.ne.s32.totalorder %s35, %s51
    %p53 = scmp.eq.s32.totalorder %s15, 0
    %p54 = por %p52, %p53
    %s55 = ssub.s32 %s17, %s24
    %p56 = scmp.eq.s32.totalorder %s55, 0
    %s58 = sadd.s32 %s57, 1
    %s59 = scalar_select %p56, %s57, %s58
    %p62 = pneg %p56
    %p63 = scmp.eq.s32.totalorder %s9, 1
    %p64 = por %p62, %p63
    %p65 = scmp.ne.s32.totalorder %s57, %s60
    %p66 = scmp.eq.s32.totalorder %s9, 0
    %p67 = por %p65, %p66
    %p68 = scmp.ne.s32.totalorder %s57, %s60
    %p69 = scmp.eq.s32.totalorder %s14, 1
    %p70 = por %p68, %p69
    %p71 = scmp.ne.s32.totalorder %s60, %s61
    %p72 = scmp.eq.s32.totalorder %s14, 0
    %p73 = por %p71, %p72
    %p74 = scmp.ne.s32.totalorder %s60, %s61
    %p75 = scmp.eq.s32.totalorder %s15, 1
    %p76 = por %p74, %p75
    %p78 = scmp.ne.s32.totalorder %s61, %s77
    %p79 = scmp.eq.s32.totalorder %s15, 0
    %p80 = por %p78, %p79
    %s81 = ssub.s32 %s17, %s24
    %p82 = scmp.eq.s32.totalorder %s81, 0
    %s84 = sadd.s32 %s83, 1
    %s85 = scalar_select %p82, %s83, %s84
    %p88 = pneg %p82
    %p89 = scmp.eq.s32.totalorder %s9, 1
    %p90 = por %p88, %p89
    %p91 = scmp.ne.s32.totalorder %s83, %s86
    %p92 = scmp.eq.s32.totalorder %s9, 0
    %p93 = por %p91, %p92
    %p94 = scmp.ne.s32.totalorder %s83, %s86
    %p95 = scmp.eq.s32.totalorder %s14, 1
    %p96 = por %p94, %p95
    %p97 = scmp.ne.s32.totalorder %s86, %s87
    %p98 = scmp.eq.s32.totalorder %s14, 0
    %p99 = por %p97, %p98
    %p100 = scmp.ne.s32.totalorder %s86, %s87
    %p101 = scmp.eq.s32.totalorder %s15, 1
    %p102 = por %p100, %p101
    %p104 = scmp.ne.s32.totalorder %s87, %s103
    %p105 = scmp.eq.s32.totalorder %s15, 0
    %p106 = por %p104, %p105
    %s107 = ssub.s32 %s16, %s28
    %s108 = ssub.s32 %s17, %s24
    %s109 = sor.u32 %s107, %s108
    %p110 = scmp.eq.s32.totalorder %s109, 0
    %s112 = sadd.s32 %s111, 1
    %s113 = scalar_select %p110, %s111, %s112
    %p116 = pneg %p110
    %p117 = scmp.eq.s32.totalorder %s9, 1
    %p118 = por %p116, %p117
    %p119 = scmp.ne.s32.totalorder %s111, %s114
    %p120 = scmp.eq.s32.totalorder %s9, 0
    %p121 = por %p119, %p120
    %p122 = scmp.ne.s32.totalorder %s111, %s114
    %p123 = scmp.eq.s32.totalorder %s14, 1
    %p124 = por %p122, %p123
    %p125 = scmp.ne.s32.totalorder %s114, %s115
    %p126 = scmp.eq.s32.totalorder %s14, 0
    %p127 = por %p125, %p126
    %p128 = scmp.ne.s32.totalorder %s114, %s115
    %p129 = scmp.eq.s32.totalorder %s15, 1
    %p130 = por %p128, %p129
    %p132 = scmp.ne.s32.totalorder %s115, %s131
    %p133 = scmp.eq.s32.totalorder %s15, 0
    %p134 = por %p132, %p133
    %p135 = scmp.le.s32.totalorder 1, %s9
    %p136 = scmp.lt.s32.totalorder %s9, 3
    %p137 = pnand %p135, %p136
    %p138 = pneg %p137
    // Predicated region
    $region9: #{net_forward.27} parent=5 // pred_check
      _
    $region10: #{net_forward.27} parent=5 // pred_check_branch
      %140 = sbr.rel (%p137) target = $region12
    $region11: #{net_forward.27} parent=5 // pred_region
      %s141 = ssub.s32 %s9, 1
      // Predicated region
      $region13: #{net_forward.27} parent=11 // pred_check
        %p142 = pneg %p73
      $region14: #{net_forward.27} parent=11 // pred_check_branch
        %144 = sbr.rel (%p142) target = $region16
      $region15: #{net_forward.27} parent=11 // pred_region
        %p145 = scmp.lt.s32.totalorder %s19, 0
        %s146 = scalar_select %p145, %s19, 0
        %s147 = smul.addr %s146, 4
        %s148 = scalar_lea.vmem %s1, %s147
      $region16: #{net_forward.27} parent=11 // pred_fallthru
        _
      // Predicated region
      $region17: #{net_forward.27} parent=11 // pred_check
        %p149 = pneg %p99
      $region18: #{net_forward.27} parent=11 // pred_check_branch
        %151 = sbr.rel (%p149) target = $region20
      $region19: #{net_forward.27} parent=11 // pred_region
        %p152 = scmp.lt.s32.totalorder %s19, 0
        %s153 = scalar_select %p152, %s19, 0
        %s154 = scalar_lea.vmem %s2, %s153
      $region20: #{net_forward.27} parent=11 // pred_fallthru
        _
    $region12: #{net_forward.27} parent=5 // pred_fallthru
      _
    %p155 = scmp.lt.s32.totalorder %s9, 2
    // Predicated region
    $region21: #{net_forward.27} parent=5 // pred_check
      %p156 = pneg %p155
    $region22: #{net_forward.27} parent=5 // pred_check_branch
      %158 = sbr.rel (%p156) target = $region24
    $region23: #{net_forward.27} parent=5 // pred_region
      // Predicated region
      $region25: #{net_forward.27} parent=23 // pred_check
        %p159 = pneg %p41
      $region26: #{net_forward.27} parent=23 // pred_check_branch
        %161 = sbr.rel (%p159) target = $region28
      $region27: #{net_forward.27} parent=23 // pred_region
        %p162 = scmp.lt.s32.totalorder %s16, 1
        %s163 = scalar_select %p162, %s16, 1
        %s164 = smul.addr %s163, 3
        %s165 = smul.addr %s164, 2
        %s166 = scalar_lea.vmem %s0, %s165
      $region28: #{net_forward.27} parent=23 // pred_fallthru
        _
    $region24: #{net_forward.27} parent=5 // pred_fallthru
      _
    %p167 = scmp.le.s32.totalorder 1, %s9
    %p168 = scmp.lt.s32.totalorder %s9, 3
    %p169 = pnand %p167, %p168
    %p170 = pneg %p169
    // Predicated region
    $region29: #{net_forward.27} parent=5 // pred_check
      _
    $region30: #{net_forward.27} parent=5 // pred_check_branch
      %172 = sbr.rel (%p169) target = $region32
    $region31: #{net_forward.27} parent=5 // pred_region
      %s173 = ssub.s32 %s9, 1
      %p174 = scmp.lt.s32.totalorder %s18, 1
      %s175 = scalar_select %p174, %s18, 1
      %s176 = smul.addr %s175, 3
      %s177 = smul.addr %s176, 2
      %s178 = scalar_lea.vmem %s0, %s177
      %p179 = pneg %p47
      %p180 = pneg %p44
      %p181 = scmp.lt.s32.totalorder %s19, 0
      %s182 = scalar_select %p181, %s19, 0
      %s183 = smul.addr %s182, 4
      %s184 = scalar_lea.vmem %s1, %s183
      %p185 = pneg %p73
      %p186 = pneg %p70
      %p187 = scmp.lt.s32.totalorder %s19, 0
      %s188 = scalar_select %p187, %s19, 0
      %s189 = scalar_lea.vmem %s2, %s188
      %p190 = pneg %p99
      %p191 = pneg %p96
      %p192 = pneg %p127
      %p193 = pneg %p124
      %p194 = scmp.lt.s32.totalorder %s18, 1
      %s195 = scalar_select %p194, %s18, 1
      %p196 = scmp.lt.s32.totalorder %s19, 0
      %s197 = scalar_select %p196, %s19, 0
      %s198 = smul.addr %s195, 2
      %s199 = sadd.s32 %s197, %s198
      %s200 = scalar_lea.vmem %s3, %s199
      %p201 = scmp.lt.s32.totalorder %s18, 1
      %s202 = scalar_select %p201, %s18, 1
      %s203 = smul.addr %s202, 3
      %s204 = smul.addr %s203, 2
      %s205 = scalar_lea.vmem %s0, %s204
      %p206 = scmp.lt.s32.totalorder %s19, 0
      %s207 = scalar_select %p206, %s19, 0
      %s208 = smul.addr %s207, 4
      %s209 = scalar_lea.vmem %s1, %s208
      %p210 = scmp.lt.s32.totalorder %s19, 0
      %s211 = scalar_select %p210, %s19, 0
      %s212 = scalar_lea.vmem %s2, %s211
      %p213 = scmp.lt.s32.totalorder %s18, 1
      %s214 = scalar_select %p213, %s18, 1
      %p215 = scmp.lt.s32.totalorder %s19, 0
      %s216 = scalar_select %p215, %s19, 0
      %s217 = smul.addr %s214, 2
      %s218 = sadd.s32 %s216, %s217
      %s219 = scalar_lea.vmem %s3, %s218
      loop: start=0, step=1, limit=2
      $region33: #{net_forward.27} parent=31 // loop_pre_header
        _
      $region34: #{net_forward.27} parent=31 // loop_header
        %s222 = sphi 0, %s226
        %p223 = scmp.ge.s32.totalorder %s222, 2
      $region35: #{net_forward.27} parent=31 // loop_header_branch
        %225 = sbr.rel (%p223) target = $region39
      $region36: #{net_forward.27} parent=31 // loop_body
        %s227 = smul.addr %s222, 2
        %s228 = scalar_lea.vmem %s205, %s227
        %v229 = vld [vmem:[%s228] sm:$0x1]
        %v230 = vld [vmem:[%s209] sm:$0xf]
        %v231 = vld [vmem:[%s209 + $0x4] sm:$0xf]
        %v232 = vld [vmem:[%s209 + $0x8] sm:$0xf]
        %v233 = vld [vmem:[%s209 + $0xc] sm:$0xf]
        %v234 = vld [vmem:[%s209 + $0x10] sm:$0xf]
        %v235 = vld [vmem:[%s209 + $0x14] sm:$0xf]
        %v236 = vld [vmem:[%s209 + $0x18] sm:$0xf]
        %v237 = vld [vmem:[%s209 + $0x1c] sm:$0xf]
        %v238 = vld [vmem:[%s209 + $0x20] sm:$0xf]
        %v239 = vld [vmem:[%s209 + $0x24] sm:$0xf]
        %v240 = vld [vmem:[%s209 + $0x28] sm:$0xf]
        %v241 = vld [vmem:[%s209 + $0x2c] sm:$0xf]
        %v242 = vld [vmem:[%s209 + $0x30] sm:$0xf]
        %v243 = vld [vmem:[%s209 + $0x34] sm:$0xf]
        %v244 = vld [vmem:[%s209 + $0x38] sm:$0xf]
        %v245 = vld [vmem:[%s209 + $0x3c] sm:$0xf]
        %v246 = vld [vmem:[%s228] sm:$0x3]
        %s247 = scalar_lea.vmem %s209, 64
        %v248 = vld [vmem:[%s247] sm:$0xf]
        %v249 = vld [vmem:[%s247 + $0x4] sm:$0xf]
        %v250 = vld [vmem:[%s247 + $0x8] sm:$0xf]
        %v251 = vld [vmem:[%s247 + $0xc] sm:$0xf]
        %v252 = vld [vmem:[%s247 + $0x10] sm:$0xf]
        %v253 = vld [vmem:[%s247 + $0x14] sm:$0xf]
        %v254 = vld [vmem:[%s247 + $0x18] sm:$0xf]
        %v255 = vld [vmem:[%s247 + $0x1c] sm:$0xf]
        %v256 = vld [vmem:[%s247 + $0x20] sm:$0xf]
        %v257 = vld [vmem:[%s247 + $0x24] sm:$0xf]
        %v258 = vld [vmem:[%s247 + $0x28] sm:$0xf]
        %v259 = vld [vmem:[%s247 + $0x2c] sm:$0xf]
        %v260 = vld [vmem:[%s247 + $0x30] sm:$0xf]
        %v261 = vld [vmem:[%s247 + $0x34] sm:$0xf]
        %v262 = vld [vmem:[%s247 + $0x38] sm:$0xf]
        %v263 = vld [vmem:[%s247 + $0x3c] sm:$0xf]
        %v266 = vunpack.c.l.s4 1983009808
        %v267 = vunpack.c.0.s8 %v266
        %v268 = vlaneseq
        %v269 = vshrl.u32 %v268, 7
        %v270 = vsub.s32 %v267, %v269
        %v271 = vrot.slane %v246, %v270
        %v273 = vshrl.u32 %v271, 16
        %v275 = vshll.u32 %v271, 16
        %v277 = vrot.slane %v275, 1
        %v278 = vor.u32 %v273, %v277
        %v296 = vunpack.c.l.b16 %v248
        %v297 = vunpack.c.l.b16 %v249
        %v298 = vunpack.c.l.b16 %v250
        %v299 = vunpack.c.l.b16 %v251
        %v300 = vunpack.c.l.b16 %v252
        %v301 = vunpack.c.l.b16 %v253
        %v302 = vunpack.c.l.b16 %v254
        %v303 = vunpack.c.l.b16 %v255
        %v304 = vunpack.c.l.b16 %v256
        %v305 = vunpack.c.l.b16 %v257
        %v306 = vunpack.c.l.b16 %v258
        %v307 = vunpack.c.l.b16 %v259
        %v308 = vunpack.c.l.b16 %v260
        %v309 = vunpack.c.l.b16 %v261
        %v310 = vunpack.c.l.b16 %v262
        %v311 = vunpack.c.l.b16 %v263
        %v312 = vpack.c.b16 %v297, %v296
        %v313 = vpack.c.b16 %v299, %v298
        %v314 = vpack.c.b16 %v301, %v300
        %v315 = vpack.c.b16 %v303, %v302
        %v316 = vpack.c.b16 %v305, %v304
        %v317 = vpack.c.b16 %v307, %v306
        %v318 = vpack.c.b16 %v309, %v308
        %v319 = vpack.c.b16 %v311, %v310
        %328 = vmatprep.subr.bf16.mxu0 0
        %329 = vmatpush1.bf16.msra.mxu0 %v319
        %330 = vmatprep.subr.bf16.mxu0 0
        %331 = vmatpush1.bf16.msra.mxu0 %v318
        %332 = vmatprep.subr.bf16.mxu0 0
        %333 = vmatpush1.bf16.msra.mxu0 %v317
        %334 = vmatprep.subr.bf16.mxu0 0
        %335 = vmatpush1.bf16.msra.mxu0 %v316
        %336 = vmatprep.subr.bf16.mxu0 0
        %337 = vmatpush1.bf16.msra.mxu0 %v315
        %338 = vmatprep.subr.bf16.mxu0 0
        %339 = vmatpush1.bf16.msra.mxu0 %v314
        %340 = vmatprep.subr.bf16.mxu0 0
        %341 = vmatpush1.bf16.msra.mxu0 %v313
        %342 = vmatprep.subr.bf16.mxu0 0
        %343 = vmatpush1.bf16.msra.mxu0 %v312
        %344 = vmatprep.subr.bf16.mxu0 0
        %345 = vmatpush2.bf16.msra.mxu0 0
        %346 = vmatprep.subr.bf16.mxu0 0
        %347 = vmatpush2.bf16.msra.mxu0 0
        %348 = vmatprep.subr.bf16.mxu0 0
        %349 = vmatpush2.bf16.msra.mxu0 0
        %350 = vmatprep.subr.bf16.mxu0 0
        %351 = vmatpush2.bf16.msra.mxu0 0
        %352 = vmatprep.subr.bf16.mxu0 0
        %353 = vmatpush2.bf16.msra.mxu0 0
        %354 = vmatprep.subr.bf16.mxu0 0
        %355 = vmatpush2.bf16.msra.mxu0 0
        %356 = vmatprep.subr.bf16.mxu0 0
        %357 = vmatpush2.bf16.msra.mxu0 0
        %358 = vmatprep.subr.bf16.mxu0 0
        %359 = vmatpush2.bf16.msra.mxu0 0
        %360 = vmatprep.mubr.bf16.mxu0 0
        %361 = vmatmul.mubr.bf16.gmra.mxu0 %v278
        %v362 = vpop.f32.mrf.mxu0
        %v363 = vadd.f32 0.0, %v362
        %v364 = vpop.f32.mrf.mxu0
        %v365 = vpop.f32.mrf.mxu0
        %v366 = vpop.f32.mrf.mxu0
        %367 = vdwg.mxu0
        %v384 = vunpack.c.l.b16 %v230
        %v385 = vunpack.c.l.b16 %v231
        %v386 = vunpack.c.l.b16 %v232
        %v387 = vunpack.c.l.b16 %v233
        %v388 = vunpack.c.l.b16 %v234
        %v389 = vunpack.c.l.b16 %v235
        %v390 = vunpack.c.l.b16 %v236
        %v391 = vunpack.c.l.b16 %v237
        %v392 = vunpack.c.l.b16 %v238
        %v393 = vunpack.c.l.b16 %v239
        %v394 = vunpack.c.l.b16 %v240
        %v395 = vunpack.c.l.b16 %v241
        %v396 = vunpack.c.l.b16 %v242
        %v397 = vunpack.c.l.b16 %v243
        %v398 = vunpack.c.l.b16 %v244
        %v399 = vunpack.c.l.b16 %v245
        %v400 = vpack.c.b16 %v385, %v384
        %v401 = vpack.c.b16 %v387, %v386
        %v402 = vpack.c.b16 %v389, %v388
        %v403 = vpack.c.b16 %v391, %v390
        %v404 = vpack.c.b16 %v393, %v392
        %v405 = vpack.c.b16 %v395, %v394
        %v406 = vpack.c.b16 %v397, %v396
        %v407 = vpack.c.b16 %v399, %v398
        %416 = vmatprep.subr.bf16.mxu0 0
        %417 = vmatpush1.bf16.msra.mxu0 %v407
        %418 = vmatprep.subr.bf16.mxu0 0
        %419 = vmatpush1.bf16.msra.mxu0 %v406
        %420 = vmatprep.subr.bf16.mxu0 0
        %421 = vmatpush1.bf16.msra.mxu0 %v405
        %422 = vmatprep.subr.bf16.mxu0 0
        %423 = vmatpush1.bf16.msra.mxu0 %v404
        %424 = vmatprep.subr.bf16.mxu0 0
        %425 = vmatpush1.bf16.msra.mxu0 %v403
        %426 = vmatprep.subr.bf16.mxu0 0
        %427 = vmatpush1.bf16.msra.mxu0 %v402
        %428 = vmatprep.subr.bf16.mxu0 0
        %429 = vmatpush1.bf16.msra.mxu0 %v401
        %430 = vmatprep.subr.bf16.mxu0 0
        %431 = vmatpush1.bf16.msra.mxu0 %v400
        %432 = vmatprep.subr.bf16.mxu0 0
        %433 = vmatpush2.bf16.msra.mxu0 0
        %434 = vmatprep.subr.bf16.mxu0 0
        %435 = vmatpush2.bf16.msra.mxu0 0
        %436 = vmatprep.subr.bf16.mxu0 0
        %437 = vmatpush2.bf16.msra.mxu0 0
        %438 = vmatprep.subr.bf16.mxu0 0
        %439 = vmatpush2.bf16.msra.mxu0 0
        %440 = vmatprep.subr.bf16.mxu0 0
        %441 = vmatpush2.bf16.msra.mxu0 0
        %442 = vmatprep.subr.bf16.mxu0 0
        %443 = vmatpush2.bf16.msra.mxu0 0
        %444 = vmatprep.subr.bf16.mxu0 0
        %445 = vmatpush2.bf16.msra.mxu0 0
        %446 = vmatprep.subr.bf16.mxu0 0
        %447 = vmatpush2.bf16.msra.mxu0 0
        %448 = vmatprep.mubr.bf16.mxu0 0
        %449 = vmatmul.mubr.bf16.gmra.mxu0 %v229
        %v450 = vpop.f32.mrf.mxu0
        %v451 = vadd.f32 %v363, %v450
        %v452 = vpop.f32.mrf.mxu0
        %v453 = vpop.f32.mrf.mxu0
        %v454 = vpop.f32.mrf.mxu0
        %455 = vdwg.mxu0
        %s456 = sadd.s32 %s222, 1
        %s457 = smul.addr %s456, 2
        %s458 = scalar_lea.vmem %s205, %s457
        %v459 = vld [vmem:[%s458] sm:$0x1]
        %s460 = scalar_lea.vmem %s209, 128
        %v461 = vld [vmem:[%s460] sm:$0xf]
        %v462 = vld [vmem:[%s460 + $0x4] sm:$0xf]
        %v463 = vld [vmem:[%s460 + $0x8] sm:$0xf]
        %v464 = vld [vmem:[%s460 + $0xc] sm:$0xf]
        %v465 = vld [vmem:[%s460 + $0x10] sm:$0xf]
        %v466 = vld [vmem:[%s460 + $0x14] sm:$0xf]
        %v467 = vld [vmem:[%s460 + $0x18] sm:$0xf]
        %v468 = vld [vmem:[%s460 + $0x1c] sm:$0xf]
        %v469 = vld [vmem:[%s460 + $0x20] sm:$0xf]
        %v470 = vld [vmem:[%s460 + $0x24] sm:$0xf]
        %v471 = vld [vmem:[%s460 + $0x28] sm:$0xf]
        %v472 = vld [vmem:[%s460 + $0x2c] sm:$0xf]
        %v473 = vld [vmem:[%s460 + $0x30] sm:$0xf]
        %v474 = vld [vmem:[%s460 + $0x34] sm:$0xf]
        %v475 = vld [vmem:[%s460 + $0x38] sm:$0xf]
        %v476 = vld [vmem:[%s460 + $0x3c] sm:$0xf]
        %v493 = vunpack.c.l.b16 %v461
        %v494 = vunpack.c.l.b16 %v462
        %v495 = vunpack.c.l.b16 %v463
        %v496 = vunpack.c.l.b16 %v464
        %v497 = vunpack.c.l.b16 %v465
        %v498 = vunpack.c.l.b16 %v466
        %v499 = vunpack.c.l.b16 %v467
        %v500 = vunpack.c.l.b16 %v468
        %v501 = vunpack.c.l.b16 %v469
        %v502 = vunpack.c.l.b16 %v470
        %v503 = vunpack.c.l.b16 %v471
        %v504 = vunpack.c.l.b16 %v472
        %v505 = vunpack.c.l.b16 %v473
        %v506 = vunpack.c.l.b16 %v474
        %v507 = vunpack.c.l.b16 %v475
        %v508 = vunpack.c.l.b16 %v476
        %v509 = vpack.c.b16 %v494, %v493
        %v510 = vpack.c.b16 %v496, %v495
        %v511 = vpack.c.b16 %v498, %v497
        %v512 = vpack.c.b16 %v500, %v499
        %v513 = vpack.c.b16 %v502, %v501
        %v514 = vpack.c.b16 %v504, %v503
        %v515 = vpack.c.b16 %v506, %v505
        %v516 = vpack.c.b16 %v508, %v507
        %525 = vmatprep.subr.bf16.mxu0 0
        %526 = vmatpush1.bf16.msra.mxu0 %v516
        %527 = vmatprep.subr.bf16.mxu0 0
        %528 = vmatpush1.bf16.msra.mxu0 %v515
        %529 = vmatprep.subr.bf16.mxu0 0
        %530 = vmatpush1.bf16.msra.mxu0 %v514
        %531 = vmatprep.subr.bf16.mxu0 0
        %532 = vmatpush1.bf16.msra.mxu0 %v513
        %533 = vmatprep.subr.bf16.mxu0 0
        %534 = vmatpush1.bf16.msra.mxu0 %v512
        %535 = vmatprep.subr.bf16.mxu0 0
        %536 = vmatpush1.bf16.msra.mxu0 %v511
        %537 = vmatprep.subr.bf16.mxu0 0
        %538 = vmatpush1.bf16.msra.mxu0 %v510
        %539 = vmatprep.subr.bf16.mxu0 0
        %540 = vmatpush1.bf16.msra.mxu0 %v509
        %541 = vmatprep.subr.bf16.mxu0 0
        %542 = vmatpush2.bf16.msra.mxu0 0
        %543 = vmatprep.subr.bf16.mxu0 0
        %544 = vmatpush2.bf16.msra.mxu0 0
        %545 = vmatprep.subr.bf16.mxu0 0
        %546 = vmatpush2.bf16.msra.mxu0 0
        %547 = vmatprep.subr.bf16.mxu0 0
        %548 = vmatpush2.bf16.msra.mxu0 0
        %549 = vmatprep.subr.bf16.mxu0 0
        %550 = vmatpush2.bf16.msra.mxu0 0
        %551 = vmatprep.subr.bf16.mxu0 0
        %552 = vmatpush2.bf16.msra.mxu0 0
        %553 = vmatprep.subr.bf16.mxu0 0
        %554 = vmatpush2.bf16.msra.mxu0 0
        %555 = vmatprep.subr.bf16.mxu0 0
        %556 = vmatpush2.bf16.msra.mxu0 0
        %557 = vmatprep.mubr.bf16.mxu0 0
        %558 = vmatmul.mubr.bf16.gmra.mxu0 %v459
        %v559 = vpop.f32.mrf.mxu0
        %v560 = vadd.f32 0.0, %v559
        %v561 = vpop.f32.mrf.mxu0
        %v562 = vpop.f32.mrf.mxu0
        %v563 = vpop.f32.mrf.mxu0
        %564 = vdwg.mxu0
        %v565 = vadd.f32 %v451, %v560
        %v566 = vld [vmem:[%s458] sm:$0x3]
        %s567 = scalar_lea.vmem %s209, 192
        %v568 = vld [vmem:[%s567] sm:$0xf]
        %v569 = vld [vmem:[%s567 + $0x4] sm:$0xf]
        %v570 = vld [vmem:[%s567 + $0x8] sm:$0xf]
        %v571 = vld [vmem:[%s567 + $0xc] sm:$0xf]
        %v572 = vld [vmem:[%s567 + $0x10] sm:$0xf]
        %v573 = vld [vmem:[%s567 + $0x14] sm:$0xf]
        %v574 = vld [vmem:[%s567 + $0x18] sm:$0xf]
        %v575 = vld [vmem:[%s567 + $0x1c] sm:$0xf]
        %v576 = vld [vmem:[%s567 + $0x20] sm:$0xf]
        %v577 = vld [vmem:[%s567 + $0x24] sm:$0xf]
        %v578 = vld [vmem:[%s567 + $0x28] sm:$0xf]
        %v579 = vld [vmem:[%s567 + $0x2c] sm:$0xf]
        %v580 = vld [vmem:[%s567 + $0x30] sm:$0xf]
        %v581 = vld [vmem:[%s567 + $0x34] sm:$0xf]
        %v582 = vld [vmem:[%s567 + $0x38] sm:$0xf]
        %v583 = vld [vmem:[%s567 + $0x3c] sm:$0xf]
        %v586 = vunpack.c.l.s4 1983009808
        %v587 = vunpack.c.0.s8 %v586
        %v588 = vlaneseq
        %v589 = vshrl.u32 %v588, 7
        %v590 = vsub.s32 %v587, %v589
        %v591 = vrot.slane %v566, %v590
        %v593 = vshrl.u32 %v591, 16
        %v595 = vshll.u32 %v591, 16
        %v597 = vrot.slane %v595, 1
        %v598 = vor.u32 %v593, %v597
        %v616 = vunpack.c.l.b16 %v568
        %v617 = vunpack.c.l.b16 %v569
        %v618 = vunpack.c.l.b16 %v570
        %v619 = vunpack.c.l.b16 %v571
        %v620 = vunpack.c.l.b16 %v572
        %v621 = vunpack.c.l.b16 %v573
        %v622 = vunpack.c.l.b16 %v574
        %v623 = vunpack.c.l.b16 %v575
        %v624 = vunpack.c.l.b16 %v576
        %v625 = vunpack.c.l.b16 %v577
        %v626 = vunpack.c.l.b16 %v578
        %v627 = vunpack.c.l.b16 %v579
        %v628 = vunpack.c.l.b16 %v580
        %v629 = vunpack.c.l.b16 %v581
        %v630 = vunpack.c.l.b16 %v582
        %v631 = vunpack.c.l.b16 %v583
        %v632 = vpack.c.b16 %v617, %v616
        %v633 = vpack.c.b16 %v619, %v618
        %v634 = vpack.c.b16 %v621, %v620
        %v635 = vpack.c.b16 %v623, %v622
        %v636 = vpack.c.b16 %v625, %v624
        %v637 = vpack.c.b16 %v627, %v626
        %v638 = vpack.c.b16 %v629, %v628
        %v639 = vpack.c.b16 %v631, %v630
        %648 = vmatprep.subr.bf16.mxu0 0
        %649 = vmatpush1.bf16.msra.mxu0 %v639
        %650 = vmatprep.subr.bf16.mxu0 0
        %651 = vmatpush1.bf16.msra.mxu0 %v638
        %652 = vmatprep.subr.bf16.mxu0 0
        %653 = vmatpush1.bf16.msra.mxu0 %v637
        %654 = vmatprep.subr.bf16.mxu0 0
        %655 = vmatpush1.bf16.msra.mxu0 %v636
        %656 = vmatprep.subr.bf16.mxu0 0
        %657 = vmatpush1.bf16.msra.mxu0 %v635
        %658 = vmatprep.subr.bf16.mxu0 0
        %659 = vmatpush1.bf16.msra.mxu0 %v634
        %660 = vmatprep.subr.bf16.mxu0 0
        %661 = vmatpush1.bf16.msra.mxu0 %v633
        %662 = vmatprep.subr.bf16.mxu0 0
        %663 = vmatpush1.bf16.msra.mxu0 %v632
        %664 = vmatprep.subr.bf16.mxu0 0
        %665 = vmatpush2.bf16.msra.mxu0 0
        %666 = vmatprep.subr.bf16.mxu0 0
        %667 = vmatpush2.bf16.msra.mxu0 0
        %668 = vmatprep.subr.bf16.mxu0 0
        %669 = vmatpush2.bf16.msra.mxu0 0
        %670 = vmatprep.subr.bf16.mxu0 0
        %671 = vmatpush2.bf16.msra.mxu0 0
        %672 = vmatprep.subr.bf16.mxu0 0
        %673 = vmatpush2.bf16.msra.mxu0 0
        %674 = vmatprep.subr.bf16.mxu0 0
        %675 = vmatpush2.bf16.msra.mxu0 0
        %676 = vmatprep.subr.bf16.mxu0 0
        %677 = vmatpush2.bf16.msra.mxu0 0
        %678 = vmatprep.subr.bf16.mxu0 0
        %679 = vmatpush2.bf16.msra.mxu0 0
        %680 = vmatprep.mubr.bf16.mxu0 0
        %681 = vmatmul.mubr.bf16.gmra.mxu0 %v598
        %v682 = vpop.f32.mrf.mxu0
        %v683 = vadd.f32 0.0, %v682
        %v684 = vpop.f32.mrf.mxu0
        %v685 = vpop.f32.mrf.mxu0
        %v686 = vpop.f32.mrf.mxu0
        %687 = vdwg.mxu0
        %v688 = vadd.f32 %v565, %v683
        %v689 = vld [vmem:[%s212] sm:$0x1]
        %v691 = vlaneseq
        %v692 = vshrl.u32 %v691, 7
        %v693 = vsub.s32 0, %v692
        %v694 = vrot.slane %v689, %v693
        %v696 = vadd.f32 %v688, %v694
        %v697 = vmax.f32 %v696, 0.0
        %v698 = vpack.c.bf16 %v697, %v697
        %s699 = scalar_lea.vmem %s219, %s222
        %700 = vst [vmem:[%s699] sm:$0x1] %v698
      $region37: #{net_forward.27} parent=31 // loop_footer
        %s226 = sadd.s32 1, %s222
      $region38: #{net_forward.27} parent=31 // loop_footer_branch
        %221 = sbr.rel target = $region34
      $region39: #{net_forward.27} parent=31 // loop_exit
        _
      %p701 = scmp.lt.s32.totalorder %s18, 1
      %s702 = scalar_select %p701, %s18, 1
      %p703 = scmp.lt.s32.totalorder %s19, 0
      %s704 = scalar_select %p703, %s19, 0
      %s705 = smul.addr %s702, 2
      %s706 = sadd.s32 %s704, %s705
      %s707 = scalar_lea.vmem %s3, %s706
      // Predicated region
      $region40: #{net_forward.27} parent=31 // pred_check
        %p708 = pneg %p124
      $region41: #{net_forward.27} parent=31 // pred_check_branch
        %710 = sbr.rel (%p708) target = $region43
      $region42: #{net_forward.27} parent=31 // pred_region
        _
      $region43: #{net_forward.27} parent=31 // pred_fallthru
        _
    $region32: #{net_forward.27} parent=5 // pred_fallthru
      _
    %p711 = scmp.le.s32.totalorder 2, %s9
    // Predicated region
    $region44: #{net_forward.27} parent=5 // pred_check
      %p712 = pneg %p711
    $region45: #{net_forward.27} parent=5 // pred_check_branch
      %714 = sbr.rel (%p712) target = $region47
    $region46: #{net_forward.27} parent=5 // pred_region
      %s715 = ssub.s32 %s9, 2
      // Predicated region
      $region48: #{net_forward.27} parent=46 // pred_check
        %p716 = pneg %p130
      $region49: #{net_forward.27} parent=46 // pred_check_branch
        %718 = sbr.rel (%p716) target = $region51
      $region50: #{net_forward.27} parent=46 // pred_region
        %p719 = scmp.lt.s32.totalorder %s20, 1
        %s720 = scalar_select %p719, %s20, 1
        %p721 = scmp.lt.s32.totalorder %s21, 0
        %s722 = scalar_select %p721, %s21, 0
        %s723 = smul.addr %s720, 2
        %s724 = sadd.s32 %s722, %s723
        %s725 = scalar_lea.vmem %s3, %s724
      $region51: #{net_forward.27} parent=46 // pred_fallthru
        _
    $region47: #{net_forward.27} parent=5 // pred_fallthru
      _
  $region6: #{net_forward.27} parent=0 // loop_footer
    %s13 = sadd.s32 1, %s9
  $region7: #{net_forward.27} parent=0 // loop_footer_branch
    %8 = sbr.rel target = $region3
  $region8: #{net_forward.27} parent=0 // loop_exit
    _

// kernel: net_forward.30
$region0: #{net_forward.30}
  #allocation0 [shape = 'u32[]', space=smem, size = 0x4, offset = 0x4, fixed_abs, tag = 'smem constant byte address 0x4 - core index']
  #allocation1 [shape = 'u32[144,128]{1,0:T(1,128)}', space=vmem, size = 0x12000, scoped, tag = 'internal scratch']
  #allocation2 [shape = 'f32[8,128]{1,0:T(8,128)}', space=vmem, size = 0x1000, scoped, tag = 'scratch operand']
  %s0 = inlined_call_operand.vmem [shape: bf16[8,128], index: 0, kind: input, shape index: {}]
  %s1 = inlined_call_operand.vmem [shape: bf16[128,128], index: 1, kind: input, shape index: {}]
  %s2 = inlined_call_operand.vmem [shape: f32[1,128], index: 2, kind: input, shape index: {}]
  %s3 = inlined_call_operand.vmem [shape: bf16[8,128], index: 3, kind: output, shape index: {}]
  %s4 = sld [smem:[#allocation0]]
  $region30: #{net_forward.30} parent=0
    _
  %s6 = ssub.s32 1, %s4
  %s7 = scalar_select 0, %s6, %s4
  // Predicated region
  $region2: #{net_forward.30} parent=0 // pred_check
    _
  $region3: #{net_forward.30} parent=0 // pred_check_branch
    %9 = sbr.rel (0) target = $region5
  $region4: #{net_forward.30} parent=0 // pred_region
    _
  $region5: #{net_forward.30} parent=0 // pred_fallthru
    _
  // Predicated region
  $region6: #{net_forward.30} parent=0 // pred_check
    _
  $region7: #{net_forward.30} parent=0 // pred_check_branch
    %11 = sbr.rel (0) target = $region9
  $region8: #{net_forward.30} parent=0 // pred_region
    _
  $region9: #{net_forward.30} parent=0 // pred_fallthru
    _
  // Predicated region
  $region10: #{net_forward.30} parent=0 // pred_check
    _
  $region11: #{net_forward.30} parent=0 // pred_check_branch
    %13 = sbr.rel (0) target = $region13
  $region12: #{net_forward.30} parent=0 // pred_region
    _
  $region13: #{net_forward.30} parent=0 // pred_fallthru
    _
  %p15 = scmp.eq.s32.totalorder 0, 0
  // Predicated region
  $region14: #{net_forward.30} parent=0 // pred_check
    %p16 = pneg %p15
  $region15: #{net_forward.30} parent=0 // pred_check_branch
    %18 = sbr.rel (%p16) target = $region17
  $region16: #{net_forward.30} parent=0 // pred_region
    %19 = vst [vmem:[#allocation2] sm:$0xff] 0.0
  $region17: #{net_forward.30} parent=0 // pred_fallthru
    _
  %v20 = vld [vmem:[#allocation2] sm:$0xff]
  %v21 = vld [vmem:[%s0] sm:$0xf]
  %v22 = vld [vmem:[%s1] sm:$0xf]
  %v23 = vld [vmem:[%s1 + $0x4] sm:$0xf]
  %v24 = vld [vmem:[%s1 + $0x8] sm:$0xf]
  %v25 = vld [vmem:[%s1 + $0xc] sm:$0xf]
  %v26 = vld [vmem:[%s1 + $0x10] sm:$0xf]
  %v27 = vld [vmem:[%s1 + $0x14] sm:$0xf]
  %v28 = vld [vmem:[%s1 + $0x18] sm:$0xf]
  %v29 = vld [vmem:[%s1 + $0x1c] sm:$0xf]
  %v30 = vld [vmem:[%s1 + $0x20] sm:$0xf]
  %v31 = vld [vmem:[%s1 + $0x24] sm:$0xf]
  %v32 = vld [vmem:[%s1 + $0x28] sm:$0xf]
  %v33 = vld [vmem:[%s1 + $0x2c] sm:$0xf]
  %v34 = vld [vmem:[%s1 + $0x30] sm:$0xf]
  %v35 = vld [vmem:[%s1 + $0x34] sm:$0xf]
  %v36 = vld [vmem:[%s1 + $0x38] sm:$0xf]
  %v37 = vld [vmem:[%s1 + $0x3c] sm:$0xf]
  %v54 = vunpack.c.l.b16 %v22
  %v55 = vunpack.c.l.b16 %v23
  %v56 = vunpack.c.l.b16 %v24
  %v57 = vunpack.c.l.b16 %v25
  %v58 = vunpack.c.l.b16 %v26
  %v59 = vunpack.c.l.b16 %v27
  %v60 = vunpack.c.l.b16 %v28
  %v61 = vunpack.c.l.b16 %v29
  %v62 = vunpack.c.l.b16 %v30
  %v63 = vunpack.c.l.b16 %v31
  %v64 = vunpack.c.l.b16 %v32
  %v65 = vunpack.c.l.b16 %v33
  %v66 = vunpack.c.l.b16 %v34
  %v67 = vunpack.c.l.b16 %v35
  %v68 = vunpack.c.l.b16 %v36
  %v69 = vunpack.c.l.b16 %v37
  %v70 = vpack.c.b16 %v55, %v54
  %v71 = vpack.c.b16 %v57, %v56
  %v72 = vpack.c.b16 %v59, %v58
  %v73 = vpack.c.b16 %v61, %v60
  %v74 = vpack.c.b16 %v63, %v62
  %v75 = vpack.c.b16 %v65, %v64
  %v76 = vpack.c.b16 %v67, %v66
  %v77 = vpack.c.b16 %v69, %v68
  %86 = vmatprep.subr.bf16.mxu0 0
  %87 = vmatpush1.bf16.msra.mxu0 %v77
  %88 = vmatprep.subr.bf16.mxu0 0
  %89 = vmatpush1.bf16.msra.mxu0 %v76
  %90 = vmatprep.subr.bf16.mxu0 0
  %91 = vmatpush1.bf16.msra.mxu0 %v75
  %92 = vmatprep.subr.bf16.mxu0 0
  %93 = vmatpush1.bf16.msra.mxu0 %v74
  %94 = vmatprep.subr.bf16.mxu0 0
  %95 = vmatpush1.bf16.msra.mxu0 %v73
  %96 = vmatprep.subr.bf16.mxu0 0
  %97 = vmatpush1.bf16.msra.mxu0 %v72
  %98 = vmatprep.subr.bf16.mxu0 0
  %99 = vmatpush1.bf16.msra.mxu0 %v71
  %100 = vmatprep.subr.bf16.mxu0 0
  %101 = vmatpush1.bf16.msra.mxu0 %v70
  %102 = vmatprep.subr.bf16.mxu0 0
  %103 = vmatpush2.bf16.msra.mxu0 0
  %104 = vmatprep.subr.bf16.mxu0 0
  %105 = vmatpush2.bf16.msra.mxu0 0
  %106 = vmatprep.subr.bf16.mxu0 0
  %107 = vmatpush2.bf16.msra.mxu0 0
  %108 = vmatprep.subr.bf16.mxu0 0
  %109 = vmatpush2.bf16.msra.mxu0 0
  %110 = vmatprep.subr.bf16.mxu0 0
  %111 = vmatpush2.bf16.msra.mxu0 0
  %112 = vmatprep.subr.bf16.mxu0 0
  %113 = vmatpush2.bf16.msra.mxu0 0
  %114 = vmatprep.subr.bf16.mxu0 0
  %115 = vmatpush2.bf16.msra.mxu0 0
  %116 = vmatprep.subr.bf16.mxu0 0
  %117 = vmatpush2.bf16.msra.mxu0 0
  %118 = vmatprep.mubr.bf16.mxu0 0
  %119 = vmatmul.mubr.bf16.gmra.mxu0 %v21
  %v120 = vpop.f32.mrf.mxu0
  %v121 = vadd.f32 0.0, %v120
  %v122 = vpop.f32.mrf.mxu0
  %v123 = vpop.f32.mrf.mxu0
  %v124 = vpop.f32.mrf.mxu0
  %125 = vdwg.mxu0
  %v126 = vadd.f32 %v20, %v121
  %127 = vst [vmem:[#allocation2] sm:$0xff] %v126
  // Predicated region
  $region18: #{net_forward.30} parent=0 // pred_check
    %p128 = pneg %p15
  $region19: #{net_forward.30} parent=0 // pred_check_branch
    %130 = sbr.rel (%p128) target = $region21
  $region20: #{net_forward.30} parent=0 // pred_region
    %v131 = vld [vmem:[#allocation2] sm:$0xff]
    %v132 = vld [vmem:[%s2] sm:$0x1]
    %v134 = vlaneseq
    %v135 = vshrl.u32 %v134, 7
    %v136 = vsub.s32 0, %v135
    %v137 = vrot.slane %v132, %v136
    %v139 = vadd.f32 %v131, %v137
    %v140 = vmax.f32 %v139, 0.0
    %v141 = vpack.c.bf16 %v140, %v140
    %142 = vst [vmem:[%s3] sm:$0xf] %v141
  $region21: #{net_forward.30} parent=0 // pred_fallthru
    _
  // Predicated region
  $region22: #{net_forward.30} parent=0 // pred_check
    _
  $region23: #{net_forward.30} parent=0 // pred_check_branch
    %144 = sbr.rel (0) target = $region25
  $region24: #{net_forward.30} parent=0 // pred_region
    _
  $region25: #{net_forward.30} parent=0 // pred_fallthru
    _
  // Predicated region
  $region26: #{net_forward.30} parent=0 // pred_check
    _
  $region27: #{net_forward.30} parent=0 // pred_check_branch
    %146 = sbr.rel (0) target = $region29
  $region28: #{net_forward.30} parent=0 // pred_region
    _
  $region29: #{net_forward.30} parent=0 // pred_fallthru
    _

// kernel: net_forward.32
$region0: #{net_forward.32}
  #allocation0 [shape = 'u32[]', space=smem, size = 0x4, offset = 0x4, fixed_abs, tag = 'smem constant byte address 0x4 - core index']
  #allocation1 [shape = 'u32[144,128]{1,0:T(1,128)}', space=vmem, size = 0x12000, scoped, tag = 'internal scratch']
  #allocation2 [shape = 'f32[8,256]{1,0:T(8,128)}', space=vmem, size = 0x2000, scoped, tag = 'scratch operand']
  %s0 = inlined_call_operand.vmem [shape: bf16[8,128], index: 0, kind: input, shape index: {}]
  %s1 = inlined_call_operand.vmem [shape: bf16[128,256], index: 1, kind: input, shape index: {}]
  %s2 = inlined_call_operand.vmem [shape: f32[1,256], index: 2, kind: input, shape index: {}]
  %s3 = inlined_call_operand.vmem [shape: bf16[8,256], index: 3, kind: output, shape index: {}]
  %s4 = sld [smem:[#allocation0]]
  $region30: #{net_forward.32} parent=0
    _
  %s6 = ssub.s32 1, %s4
  %s7 = scalar_select 0, %s6, %s4
  // Predicated region
  $region2: #{net_forward.32} parent=0 // pred_check
    _
  $region3: #{net_forward.32} parent=0 // pred_check_branch
    %9 = sbr.rel (0) target = $region5
  $region4: #{net_forward.32} parent=0 // pred_region
    _
  $region5: #{net_forward.32} parent=0 // pred_fallthru
    _
  // Predicated region
  $region6: #{net_forward.32} parent=0 // pred_check
    _
  $region7: #{net_forward.32} parent=0 // pred_check_branch
    %11 = sbr.rel (0) target = $region9
  $region8: #{net_forward.32} parent=0 // pred_region
    _
  $region9: #{net_forward.32} parent=0 // pred_fallthru
    _
  // Predicated region
  $region10: #{net_forward.32} parent=0 // pred_check
    _
  $region11: #{net_forward.32} parent=0 // pred_check_branch
    %13 = sbr.rel (0) target = $region13
  $region12: #{net_forward.32} parent=0 // pred_region
    _
  $region13: #{net_forward.32} parent=0 // pred_fallthru
    _
  %p15 = scmp.eq.s32.totalorder 0, 0
  // Predicated region
  $region14: #{net_forward.32} parent=0 // pred_check
    %p16 = pneg %p15
  $region15: #{net_forward.32} parent=0 // pred_check_branch
    %18 = sbr.rel (%p16) target = $region17
  $region16: #{net_forward.32} parent=0 // pred_region
    %19 = vst [vmem:[#allocation2] sm:$0xff] 0.0
    %20 = vst [vmem:[#allocation2 + $0x8] sm:$0xff] 0.0
  $region17: #{net_forward.32} parent=0 // pred_fallthru
    _
  %v21 = vld [vmem:[#allocation2] sm:$0xff]
  %v22 = vld [vmem:[#allocation2 + $0x8] sm:$0xff]
  %v23 = vld [vmem:[%s0] sm:$0xf]
  %v24 = vld [vmem:[%s1] sm:$0xff]
  %v25 = vld [vmem:[%s1 + $0x8] sm:$0xff]
  %v26 = vld [vmem:[%s1 + $0x10] sm:$0xff]
  %v27 = vld [vmem:[%s1 + $0x18] sm:$0xff]
  %v28 = vld [vmem:[%s1 + $0x20] sm:$0xff]
  %v29 = vld [vmem:[%s1 + $0x28] sm:$0xff]
  %v30 = vld [vmem:[%s1 + $0x30] sm:$0xff]
  %v31 = vld [vmem:[%s1 + $0x38] sm:$0xff]
  %v32 = vld [vmem:[%s1 + $0x40] sm:$0xff]
  %v33 = vld [vmem:[%s1 + $0x48] sm:$0xff]
  %v34 = vld [vmem:[%s1 + $0x50] sm:$0xff]
  %v35 = vld [vmem:[%s1 + $0x58] sm:$0xff]
  %v36 = vld [vmem:[%s1 + $0x60] sm:$0xff]
  %v37 = vld [vmem:[%s1 + $0x68] sm:$0xff]
  %v38 = vld [vmem:[%s1 + $0x70] sm:$0xff]
  %v39 = vld [vmem:[%s1 + $0x78] sm:$0xff]
  %v56 = vunpack.c.l.b16 %v24
  %v57 = vunpack.c.h.b16 %v24
  %v58 = vunpack.c.l.b16 %v25
  %v59 = vunpack.c.h.b16 %v25
  %v60 = vunpack.c.l.b16 %v26
  %v61 = vunpack.c.h.b16 %v26
  %v62 = vunpack.c.l.b16 %v27
  %v63 = vunpack.c.h.b16 %v27
  %v64 = vunpack.c.l.b16 %v28
  %v65 = vunpack.c.h.b16 %v28
  %v66 = vunpack.c.l.b16 %v29
  %v67 = vunpack.c.h.b16 %v29
  %v68 = vunpack.c.l.b16 %v30
  %v69 = vunpack.c.h.b16 %v30
  %v70 = vunpack.c.l.b16 %v31
  %v71 = vunpack.c.h.b16 %v31
  %v72 = vunpack.c.l.b16 %v32
  %v73 = vunpack.c.h.b16 %v32
  %v74 = vunpack.c.l.b16 %v33
  %v75 = vunpack.c.h.b16 %v33
  %v76 = vunpack.c.l.b16 %v34
  %v77 = vunpack.c.h.b16 %v34
  %v78 = vunpack.c.l.b16 %v35
  %v79 = vunpack.c.h.b16 %v35
  %v80 = vunpack.c.l.b16 %v36
  %v81 = vunpack.c.h.b16 %v36
  %v82 = vunpack.c.l.b16 %v37
  %v83 = vunpack.c.h.b16 %v37
  %v84 = vunpack.c.l.b16 %v38
  %v85 = vunpack.c.h.b16 %v38
  %v86 = vunpack.c.l.b16 %v39
  %v87 = vunpack.c.h.b16 %v39
  %v88 = vpack.c.b16 %v58, %v56
  %v89 = vpack.c.b16 %v59, %v57
  %v90 = vpack.c.b16 %v62, %v60
  %v91 = vpack.c.b16 %v63, %v61
  %v92 = vpack.c.b16 %v66, %v64
  %v93 = vpack.c.b16 %v67, %v65
  %v94 = vpack.c.b16 %v70, %v68
  %v95 = vpack.c.b16 %v71, %v69
  %v96 = vpack.c.b16 %v74, %v72
  %v97 = vpack.c.b16 %v75, %v73
  %v98 = vpack.c.b16 %v78, %v76
  %v99 = vpack.c.b16 %v79, %v77
  %v100 = vpack.c.b16 %v82, %v80
  %v101 = vpack.c.b16 %v83, %v81
  %v102 = vpack.c.b16 %v86, %v84
  %v103 = vpack.c.b16 %v87, %v85
  %120 = vmatprep.subr.bf16.mxu0 %v103
  %121 = vmatpush1.bf16.msra.mxu0 %v102
  %122 = vmatprep.subr.bf16.mxu0 %v101
  %123 = vmatpush1.bf16.msra.mxu0 %v100
  %124 = vmatprep.subr.bf16.mxu0 %v99
  %125 = vmatpush1.bf16.msra.mxu0 %v98
  %126 = vmatprep.subr.bf16.mxu0 %v97
  %127 = vmatpush1.bf16.msra.mxu0 %v96
  %128 = vmatprep.subr.bf16.mxu0 %v95
  %129 = vmatpush1.bf16.msra.mxu0 %v94
  %130 = vmatprep.subr.bf16.mxu0 %v93
  %131 = vmatpush1.bf16.msra.mxu0 %v92
  %132 = vmatprep.subr.bf16.mxu0 %v91
  %133 = vmatpush1.bf16.msra.mxu0 %v90
  %134 = vmatprep.subr.bf16.mxu0 %v89
  %135 = vmatpush1.bf16.msra.mxu0 %v88
  %136 = vmatprep.subr.bf16.mxu0 0
  %137 = vmatpush2.bf16.msra.mxu0 0
  %138 = vmatprep.subr.bf16.mxu0 0
  %139 = vmatpush2.bf16.msra.mxu0 0
  %140 = vmatprep.subr.bf16.mxu0 0
  %141 = vmatpush2.bf16.msra.mxu0 0
  %142 = vmatprep.subr.bf16.mxu0 0
  %143 = vmatpush2.bf16.msra.mxu0 0
  %144 = vmatprep.subr.bf16.mxu0 0
  %145 = vmatpush2.bf16.msra.mxu0 0
  %146 = vmatprep.subr.bf16.mxu0 0
  %147 = vmatpush2.bf16.msra.mxu0 0
  %148 = vmatprep.subr.bf16.mxu0 0
  %149 = vmatpush2.bf16.msra.mxu0 0
  %150 = vmatprep.subr.bf16.mxu0 0
  %151 = vmatpush2.bf16.msra.mxu0 0
  %152 = vmatprep.mubr.bf16.mxu0 0
  %153 = vmatmul.mubr.bf16.gmra.mxu0 %v23
  %v154 = vpop.f32.mrf.mxu0
  %v155 = vadd.f32 0.0, %v154
  %v156 = vpop.f32.mrf.mxu0
  %v157 = vadd.f32 0.0, %v156
  %v158 = vpop.f32.mrf.mxu0
  %v159 = vpop.f32.mrf.mxu0
  %160 = vdwg.mxu0
  %v161 = vadd.f32 %v21, %v155
  %v162 = vadd.f32 %v22, %v157
  %163 = vst [vmem:[#allocation2] sm:$0xff] %v161
  %164 = vst [vmem:[#allocation2 + $0x8] sm:$0xff] %v162
  // Predicated region
  $region18: #{net_forward.32} parent=0 // pred_check
    %p165 = pneg %p15
  $region19: #{net_forward.32} parent=0 // pred_check_branch
    %167 = sbr.rel (%p165) target = $region21
  $region20: #{net_forward.32} parent=0 // pred_region
    %v168 = vld [vmem:[#allocation2] sm:$0xff]
    %v169 = vld [vmem:[#allocation2 + $0x8] sm:$0xff]
    %v170 = vld [vmem:[%s2] sm:$0x3]
    %v172 = vlaneseq
    %v173 = vshrl.u32 %v172, 7
    %v174 = vsub.s32 0, %v173
    %v175 = vrot.slane %v170, %v174
    %v176 = vlaneseq
    %v177 = vshrl.u32 %v176, 7
    %v178 = vsub.s32 1, %v177
    %v179 = vrot.slane %v170, %v178
    %v182 = vadd.f32 %v168, %v175
    %v183 = vadd.f32 %v169, %v179
    %v184 = vpack.c.bf16 %v182, %v182
    %v185 = vpack.c.bf16 %v183, %v183
    %v188 = vunpack.c.l.b16 %v184
    %v189 = vunpack.c.l.b16 %v185
    %v190 = vpack.c.b16 %v189, %v188
    %192 = vst [vmem:[%s3] sm:$0xff] %v190
  $region21: #{net_forward.32} parent=0 // pred_fallthru
    _
  // Predicated region
  $region22: #{net_forward.32} parent=0 // pred_check
    _
  $region23: #{net_forward.32} parent=0 // pred_check_branch
    %194 = sbr.rel (0) target = $region25
  $region24: #{net_forward.32} parent=0 // pred_region
    _
  $region25: #{net_forward.32} parent=0 // pred_fallthru
    _
  // Predicated region
  $region26: #{net_forward.32} parent=0 // pred_check
    _
  $region27: #{net_forward.32} parent=0 // pred_check_branch
    %196 = sbr.rel (0) target = $region29
  $region28: #{net_forward.32} parent=0 // pred_region
    _
  $region29: #{net_forward.32} parent=0 // pred_fallthru
    _

// kernel: net_forward.31
$region0: #{net_forward.31}
  #allocation0 [shape = 'u32[]', space=smem, size = 0x4, offset = 0x4, fixed_abs, tag = 'smem constant byte address 0x4 - core index']
  #allocation1 [shape = 'u32[144,128]{1,0:T(1,128)}', space=vmem, size = 0x12000, scoped, tag = 'internal scratch']
  %s0 = inlined_call_operand.vmem [shape: bf16[2,2,2,256], index: 0, kind: input, shape index: {}]
  %s1 = inlined_call_operand.vmem [shape: bf16[4,256,128], index: 1, kind: input, shape index: {}]
  %s2 = inlined_call_operand.vmem [shape: f32[1,128], index: 2, kind: input, shape index: {}]
  %s3 = inlined_call_operand.vmem [shape: bf16[2,1,1,128], index: 3, kind: output, shape index: {}]
  %s4 = sld [smem:[#allocation0]]
  $region45: #{net_forward.31} parent=0
    _
  %s6 = ssub.s32 1, %s4
  %s7 = scalar_select 0, %s6, %s4
  loop: start=0, step=1, limit=4
  $region2: #{net_forward.31} parent=0 // loop_pre_header
    _
  $region3: #{net_forward.31} parent=0 // loop_header
    %s9 = sphi 0, %s13
    %p10 = scmp.ge.s32.totalorder %s9, 4
    %s16 = sphi 0, %s28
    %s17 = sphi 0, %s24
    %s18 = sphi 0, %s16
    %s19 = sphi 0, %s17
    %s20 = sphi 0, %s18
    %s21 = sphi 0, %s19
    %s31 = sphi 0, %s33
    %s34 = sphi 0, %s31
    %s35 = sphi 0, %s34
    %s51 = sphi 0, %s35
    %s57 = sphi 0, %s59
    %s60 = sphi 0, %s57
    %s61 = sphi 0, %s60
    %s77 = sphi 0, %s61
    %s83 = sphi 0, %s85
    %s86 = sphi 0, %s83
    %s87 = sphi 0, %s86
    %s103 = sphi 0, %s87
    %s111 = sphi 0, %s113
    %s114 = sphi 0, %s111
    %s115 = sphi 0, %s114
    %s131 = sphi 0, %s115
  $region4: #{net_forward.31} parent=0 // loop_header_branch
    %12 = sbr.rel (%p10) target = $region8
  $region5: #{net_forward.31} parent=0 // loop_body
    %s14 = ssub.s32 %s9, 1
    %s15 = ssub.s32 %s9, 2
    %s22 = sadd.s32 1, %s17
    %p23 = scmp.ge.s32.totalorder %s22, 1
    %s24 = scalar_select %p23, 0, %s22
    %s25 = sadd.s32 1, %s16
    %s26 = scalar_select %p23, %s25, %s16
    %p27 = scmp.ge.s32.totalorder %s26, 2
    %s28 = scalar_select %p27, 0, %s26
    %s29 = ssub.s32 %s16, %s28
    %p30 = scmp.eq.s32.totalorder %s29, 0
    %s32 = sadd.s32 %s31, 1
    %s33 = scalar_select %p30, %s31, %s32
    %p36 = pneg %p30
    %p37 = scmp.eq.s32.totalorder %s9, 1
    %p38 = por %p36, %p37
    %p39 = scmp.ne.s32.totalorder %s31, %s34
    %p40 = scmp.eq.s32.totalorder %s9, 0
    %p41 = por %p39, %p40
    %p42 = scmp.ne.s32.totalorder %s31, %s34
    %p43 = scmp.eq.s32.totalorder %s14, 1
    %p44 = por %p42, %p43
    %p45 = scmp.ne.s32.totalorder %s34, %s35
    %p46 = scmp.eq.s32.totalorder %s14, 0
    %p47 = por %p45, %p46
    %p48 = scmp.ne.s32.totalorder %s34, %s35
    %p49 = scmp.eq.s32.totalorder %s15, 1
    %p50 = por %p48, %p49
    %p52 = scmp.ne.s32.totalorder %s35, %s51
    %p53 = scmp.eq.s32.totalorder %s15, 0
    %p54 = por %p52, %p53
    %s55 = ssub.s32 %s17, %s24
    %p56 = scmp.eq.s32.totalorder %s55, 0
    %s58 = sadd.s32 %s57, 1
    %s59 = scalar_select %p56, %s57, %s58
    %p62 = pneg %p56
    %p63 = scmp.eq.s32.totalorder %s9, 1
    %p64 = por %p62, %p63
    %p65 = scmp.ne.s32.totalorder %s57, %s60
    %p66 = scmp.eq.s32.totalorder %s9, 0
    %p67 = por %p65, %p66
    %p68 = scmp.ne.s32.totalorder %s57, %s60
    %p69 = scmp.eq.s32.totalorder %s14, 1
    %p70 = por %p68, %p69
    %p71 = scmp.ne.s32.totalorder %s60, %s61
    %p72 = scmp.eq.s32.totalorder %s14, 0
    %p73 = por %p71, %p72
    %p74 = scmp.ne.s32.totalorder %s60, %s61
    %p75 = scmp.eq.s32.totalorder %s15, 1
    %p76 = por %p74, %p75
    %p78 = scmp.ne.s32.totalorder %s61, %s77
    %p79 = scmp.eq.s32.totalorder %s15, 0
    %p80 = por %p78, %p79
    %s81 = ssub.s32 %s17, %s24
    %p82 = scmp.eq.s32.totalorder %s81, 0
    %s84 = sadd.s32 %s83, 1
    %s85 = scalar_select %p82, %s83, %s84
    %p88 = pneg %p82
    %p89 = scmp.eq.s32.totalorder %s9, 1
    %p90 = por %p88, %p89
    %p91 = scmp.ne.s32.totalorder %s83, %s86
    %p92 = scmp.eq.s32.totalorder %s9, 0
    %p93 = por %p91, %p92
    %p94 = scmp.ne.s32.totalorder %s83, %s86
    %p95 = scmp.eq.s32.totalorder %s14, 1
    %p96 = por %p94, %p95
    %p97 = scmp.ne.s32.totalorder %s86, %s87
    %p98 = scmp.eq.s32.totalorder %s14, 0
    %p99 = por %p97, %p98
    %p100 = scmp.ne.s32.totalorder %s86, %s87
    %p101 = scmp.eq.s32.totalorder %s15, 1
    %p102 = por %p100, %p101
    %p104 = scmp.ne.s32.totalorder %s87, %s103
    %p105 = scmp.eq.s32.totalorder %s15, 0
    %p106 = por %p104, %p105
    %s107 = ssub.s32 %s16, %s28
    %s108 = ssub.s32 %s17, %s24
    %s109 = sor.u32 %s107, %s108
    %p110 = scmp.eq.s32.totalorder %s109, 0
    %s112 = sadd.s32 %s111, 1
    %s113 = scalar_select %p110, %s111, %s112
    %p116 = pneg %p110
    %p117 = scmp.eq.s32.totalorder %s9, 1
    %p118 = por %p116, %p117
    %p119 = scmp.ne.s32.totalorder %s111, %s114
    %p120 = scmp.eq.s32.totalorder %s9, 0
    %p121 = por %p119, %p120
    %p122 = scmp.ne.s32.totalorder %s111, %s114
    %p123 = scmp.eq.s32.totalorder %s14, 1
    %p124 = por %p122, %p123
    %p125 = scmp.ne.s32.totalorder %s114, %s115
    %p126 = scmp.eq.s32.totalorder %s14, 0
    %p127 = por %p125, %p126
    %p128 = scmp.ne.s32.totalorder %s114, %s115
    %p129 = scmp.eq.s32.totalorder %s15, 1
    %p130 = por %p128, %p129
    %p132 = scmp.ne.s32.totalorder %s115, %s131
    %p133 = scmp.eq.s32.totalorder %s15, 0
    %p134 = por %p132, %p133
    %p135 = scmp.le.s32.totalorder 1, %s9
    %p136 = scmp.lt.s32.totalorder %s9, 3
    %p137 = pnand %p135, %p136
    %p138 = pneg %p137
    // Predicated region
    $region9: #{net_forward.31} parent=5 // pred_check
      _
    $region10: #{net_forward.31} parent=5 // pred_check_branch
      %140 = sbr.rel (%p137) target = $region12
    $region11: #{net_forward.31} parent=5 // pred_region
      %s141 = ssub.s32 %s9, 1
      // Predicated region
      $region13: #{net_forward.31} parent=11 // pred_check
        %p142 = pneg %p73
      $region14: #{net_forward.31} parent=11 // pred_check_branch
        %144 = sbr.rel (%p142) target = $region16
      $region15: #{net_forward.31} parent=11 // pred_region
        %p145 = scmp.lt.s32.totalorder %s19, 0
        %s146 = scalar_select %p145, %s19, 0
        %s147 = smul.addr %s146, 4
        %s148 = scalar_lea.vmem %s1, %s147
      $region16: #{net_forward.31} parent=11 // pred_fallthru
        _
      // Predicated region
      $region17: #{net_forward.31} parent=11 // pred_check
        %p149 = pneg %p99
      $region18: #{net_forward.31} parent=11 // pred_check_branch
        %151 = sbr.rel (%p149) target = $region20
      $region19: #{net_forward.31} parent=11 // pred_region
        %p152 = scmp.lt.s32.totalorder %s19, 0
        %s153 = scalar_select %p152, %s19, 0
        %s154 = scalar_lea.vmem %s2, %s153
      $region20: #{net_forward.31} parent=11 // pred_fallthru
        _
    $region12: #{net_forward.31} parent=5 // pred_fallthru
      _
    %p155 = scmp.lt.s32.totalorder %s9, 2
    // Predicated region
    $region21: #{net_forward.31} parent=5 // pred_check
      %p156 = pneg %p155
    $region22: #{net_forward.31} parent=5 // pred_check_branch
      %158 = sbr.rel (%p156) target = $region24
    $region23: #{net_forward.31} parent=5 // pred_region
      // Predicated region
      $region25: #{net_forward.31} parent=23 // pred_check
        %p159 = pneg %p41
      $region26: #{net_forward.31} parent=23 // pred_check_branch
        %161 = sbr.rel (%p159) target = $region28
      $region27: #{net_forward.31} parent=23 // pred_region
        %p162 = scmp.lt.s32.totalorder %s16, 1
        %s163 = scalar_select %p162, %s16, 1
        %s164 = smul.addr %s163, 4
        %s165 = scalar_lea.vmem %s0, %s164
      $region28: #{net_forward.31} parent=23 // pred_fallthru
        _
    $region24: #{net_forward.31} parent=5 // pred_fallthru
      _
    %p166 = scmp.le.s32.totalorder 1, %s9
    %p167 = scmp.lt.s32.totalorder %s9, 3
    %p168 = pnand %p166, %p167
    %p169 = pneg %p168
    // Predicated region
    $region29: #{net_forward.31} parent=5 // pred_check
      _
    $region30: #{net_forward.31} parent=5 // pred_check_branch
      %171 = sbr.rel (%p168) target = $region32
    $region31: #{net_forward.31} parent=5 // pred_region
      %s172 = ssub.s32 %s9, 1
      %p173 = scmp.lt.s32.totalorder %s18, 1
      %s174 = scalar_select %p173, %s18, 1
      %s175 = smul.addr %s174, 4
      %s176 = scalar_lea.vmem %s0, %s175
      %p177 = pneg %p47
      %p178 = pneg %p44
      %p179 = scmp.lt.s32.totalorder %s19, 0
      %s180 = scalar_select %p179, %s19, 0
      %s181 = smul.addr %s180, 4
      %s182 = scalar_lea.vmem %s1, %s181
      %p183 = pneg %p73
      %p184 = pneg %p70
      %p185 = scmp.lt.s32.totalorder %s19, 0
      %s186 = scalar_select %p185, %s19, 0
      %s187 = scalar_lea.vmem %s2, %s186
      %p188 = pneg %p99
      %p189 = pneg %p96
      %p190 = pneg %p127
      %p191 = pneg %p124
      %p192 = scmp.lt.s32.totalorder %s18, 1
      %s193 = scalar_select %p192, %s18, 1
      %p194 = scmp.lt.s32.totalorder %s19, 0
      %s195 = scalar_select %p194, %s19, 0
      %s196 = sadd.s32 %s195, %s193
      %s197 = scalar_lea.vmem %s3, %s196
      %p198 = scmp.lt.s32.totalorder %s18, 1
      %s199 = scalar_select %p198, %s18, 1
      %s200 = smul.addr %s199, 4
      %s201 = scalar_lea.vmem %s0, %s200
      %p202 = scmp.lt.s32.totalorder %s19, 0
      %s203 = scalar_select %p202, %s19, 0
      %s204 = smul.addr %s203, 4
      %s205 = scalar_lea.vmem %s1, %s204
      %p206 = scmp.lt.s32.totalorder %s19, 0
      %s207 = scalar_select %p206, %s19, 0
      %s208 = scalar_lea.vmem %s2, %s207
      %p209 = scmp.lt.s32.totalorder %s18, 1
      %s210 = scalar_select %p209, %s18, 1
      %p211 = scmp.lt.s32.totalorder %s19, 0
      %s212 = scalar_select %p211, %s19, 0
      %s213 = sadd.s32 %s212, %s210
      %s214 = scalar_lea.vmem %s3, %s213
      %v216 = vld [vmem:[%s201] sm:$0x3]
      %v217 = vld [vmem:[%s205] sm:$0xf]
      %v218 = vld [vmem:[%s205 + $0x4] sm:$0xf]
      %v219 = vld [vmem:[%s205 + $0x8] sm:$0xf]
      %v220 = vld [vmem:[%s205 + $0xc] sm:$0xf]
      %v221 = vld [vmem:[%s205 + $0x10] sm:$0xf]
      %v222 = vld [vmem:[%s205 + $0x14] sm:$0xf]
      %v223 = vld [vmem:[%s205 + $0x18] sm:$0xf]
      %v224 = vld [vmem:[%s205 + $0x1c] sm:$0xf]
      %v225 = vld [vmem:[%s205 + $0x20] sm:$0xf]
      %v226 = vld [vmem:[%s205 + $0x24] sm:$0xf]
      %v227 = vld [vmem:[%s205 + $0x28] sm:$0xf]
      %v228 = vld [vmem:[%s205 + $0x2c] sm:$0xf]
      %v229 = vld [vmem:[%s205 + $0x30] sm:$0xf]
      %v230 = vld [vmem:[%s205 + $0x34] sm:$0xf]
      %v231 = vld [vmem:[%s205 + $0x38] sm:$0xf]
      %v232 = vld [vmem:[%s205 + $0x3c] sm:$0xf]
      %v233 = vld [vmem:[%s205 + $0x40] sm:$0xf]
      %v234 = vld [vmem:[%s205 + $0x44] sm:$0xf]
      %v235 = vld [vmem:[%s205 + $0x48] sm:$0xf]
      %v236 = vld [vmem:[%s205 + $0x4c] sm:$0xf]
      %v237 = vld [vmem:[%s205 + $0x50] sm:$0xf]
      %v238 = vld [vmem:[%s205 + $0x54] sm:$0xf]
      %v239 = vld [vmem:[%s205 + $0x58] sm:$0xf]
      %v240 = vld [vmem:[%s205 + $0x5c] sm:$0xf]
      %v241 = vld [vmem:[%s205 + $0x60] sm:$0xf]
      %v242 = vld [vmem:[%s205 + $0x64] sm:$0xf]
      %v243 = vld [vmem:[%s205 + $0x68] sm:$0xf]
      %v244 = vld [vmem:[%s205 + $0x6c] sm:$0xf]
      %v245 = vld [vmem:[%s205 + $0x70] sm:$0xf]
      %v246 = vld [vmem:[%s205 + $0x74] sm:$0xf]
      %v247 = vld [vmem:[%s205 + $0x78] sm:$0xf]
      %v248 = vld [vmem:[%s205 + $0x7c] sm:$0xf]
      %s249 = scalar_lea.vmem %s205, 128
      %v250 = vld [vmem:[%s249] sm:$0xf]
      %v251 = vld [vmem:[%s249 + $0x4] sm:$0xf]
      %v252 = vld [vmem:[%s249 + $0x8] sm:$0xf]
      %v253 = vld [vmem:[%s249 + $0xc] sm:$0xf]
      %v254 = vld [vmem:[%s249 + $0x10] sm:$0xf]
      %v255 = vld [vmem:[%s249 + $0x14] sm:$0xf]
      %v256 = vld [vmem:[%s249 + $0x18] sm:$0xf]
      %v257 = vld [vmem:[%s249 + $0x1c] sm:$0xf]
      %v258 = vld [vmem:[%s249 + $0x20] sm:$0xf]
      %v259 = vld [vmem:[%s249 + $0x24] sm:$0xf]
      %v260 = vld [vmem:[%s249 + $0x28] sm:$0xf]
      %v261 = vld [vmem:[%s249 + $0x2c] sm:$0xf]
      %v262 = vld [vmem:[%s249 + $0x30] sm:$0xf]
      %v263 = vld [vmem:[%s249 + $0x34] sm:$0xf]
      %v264 = vld [vmem:[%s249 + $0x38] sm:$0xf]
      %v265 = vld [vmem:[%s249 + $0x3c] sm:$0xf]
      %v266 = vld [vmem:[%s249 + $0x40] sm:$0xf]
      %v267 = vld [vmem:[%s249 + $0x44] sm:$0xf]
      %v268 = vld [vmem:[%s249 + $0x48] sm:$0xf]
      %v269 = vld [vmem:[%s249 + $0x4c] sm:$0xf]
      %v270 = vld [vmem:[%s249 + $0x50] sm:$0xf]
      %v271 = vld [vmem:[%s249 + $0x54] sm:$0xf]
      %v272 = vld [vmem:[%s249 + $0x58] sm:$0xf]
      %v273 = vld [vmem:[%s249 + $0x5c] sm:$0xf]
      %v274 = vld [vmem:[%s249 + $0x60] sm:$0xf]
      %v275 = vld [vmem:[%s249 + $0x64] sm:$0xf]
      %v276 = vld [vmem:[%s249 + $0x68] sm:$0xf]
      %v277 = vld [vmem:[%s249 + $0x6c] sm:$0xf]
      %v278 = vld [vmem:[%s249 + $0x70] sm:$0xf]
      %v279 = vld [vmem:[%s249 + $0x74] sm:$0xf]
      %v280 = vld [vmem:[%s249 + $0x78] sm:$0xf]
      %v281 = vld [vmem:[%s249 + $0x7c] sm:$0xf]
      %v284 = vunpack.c.l.s4 1966171168
      %v285 = vunpack.c.0.s8 %v284
      %v286 = vlaneseq
      %v287 = vshrl.u32 %v286, 7
      %v288 = vsub.s32 %v285, %v287
      %v289 = vrot.slane %v216, %v288
      %v290 = vcombine.high %v289, %v289
      %v292 = vunpack.c.l.s4 1966171168
      %v293 = vunpack.c.0.s8 %v292
      %v294 = vlaneseq
      %v295 = vshrl.u32 %v294, 7
      %v296 = vsub.s32 %v293, %v295
      %v297 = vrot.slane %v289, %v296
      %v299 = vunpack.c.l.s4 1966171168
      %v300 = vunpack.c.0.s8 %v299
      %v301 = vlaneseq
      %v302 = vshrl.u32 %v301, 7
      %v303 = vsub.s32 %v300, %v302
      %v304 = vrot.slane %v290, %v303
      %v306 = vshrl.u32 %v297, 16
      %v309 = vshrl.u32 %v304, 16
      %v345 = vunpack.c.l.b16 %v250
      %v346 = vunpack.c.l.b16 %v251
      %v347 = vunpack.c.l.b16 %v252
      %v348 = vunpack.c.l.b16 %v253
      %v349 = vunpack.c.l.b16 %v254
      %v350 = vunpack.c.l.b16 %v255
      %v351 = vunpack.c.l.b16 %v256
      %v352 = vunpack.c.l.b16 %v257
      %v353 = vunpack.c.l.b16 %v258
      %v354 = vunpack.c.l.b16 %v259
      %v355 = vunpack.c.l.b16 %v260
      %v356 = vunpack.c.l.b16 %v261
      %v357 = vunpack.c.l.b16 %v262
      %v358 = vunpack.c.l.b16 %v263
      %v359 = vunpack.c.l.b16 %v264
      %v360 = vunpack.c.l.b16 %v265
      %v361 = vunpack.c.l.b16 %v266
      %v362 = vunpack.c.l.b16 %v267
      %v363 = vunpack.c.l.b16 %v268
      %v364 = vunpack.c.l.b16 %v269
      %v365 = vunpack.c.l.b16 %v270
      %v366 = vunpack.c.l.b16 %v271
      %v367 = vunpack.c.l.b16 %v272
      %v368 = vunpack.c.l.b16 %v273
      %v369 = vunpack.c.l.b16 %v274
      %v370 = vunpack.c.l.b16 %v275
      %v371 = vunpack.c.l.b16 %v276
      %v372 = vunpack.c.l.b16 %v277
      %v373 = vunpack.c.l.b16 %v278
      %v374 = vunpack.c.l.b16 %v279
      %v375 = vunpack.c.l.b16 %v280
      %v376 = vunpack.c.l.b16 %v281
      %v377 = vpack.c.b16 %v346, %v345
      %v378 = vpack.c.b16 %v348, %v347
      %v379 = vpack.c.b16 %v350, %v349
      %v380 = vpack.c.b16 %v352, %v351
      %v381 = vpack.c.b16 %v354, %v353
      %v382 = vpack.c.b16 %v356, %v355
      %v383 = vpack.c.b16 %v358, %v357
      %v384 = vpack.c.b16 %v360, %v359
      %v385 = vpack.c.b16 %v362, %v361
      %v386 = vpack.c.b16 %v364, %v363
      %v387 = vpack.c.b16 %v366, %v365
      %v388 = vpack.c.b16 %v368, %v367
      %v389 = vpack.c.b16 %v370, %v369
      %v390 = vpack.c.b16 %v372, %v371
      %v391 = vpack.c.b16 %v374, %v373
      %v392 = vpack.c.b16 %v376, %v375
      %409 = vmatprep.subr.bf16.mxu0 0
      %410 = vmatpush1.bf16.msra.mxu0 %v384
      %411 = vmatprep.subr.bf16.mxu0 0
      %412 = vmatpush1.bf16.msra.mxu0 %v383
      %413 = vmatprep.subr.bf16.mxu0 0
      %414 = vmatpush1.bf16.msra.mxu0 %v382
      %415 = vmatprep.subr.bf16.mxu0 0
      %416 = vmatpush1.bf16.msra.mxu0 %v381
      %417 = vmatprep.subr.bf16.mxu0 0
      %418 = vmatpush1.bf16.msra.mxu0 %v380
      %419 = vmatprep.subr.bf16.mxu0 0
      %420 = vmatpush1.bf16.msra.mxu0 %v379
      %421 = vmatprep.subr.bf16.mxu0 0
      %422 = vmatpush1.bf16.msra.mxu0 %v378
      %423 = vmatprep.subr.bf16.mxu0 0
      %424 = vmatpush1.bf16.msra.mxu0 %v377
      %425 = vmatprep.subr.bf16.mxu0 0
      %426 = vmatpush2.bf16.msra.mxu0 %v392
      %427 = vmatprep.subr.bf16.mxu0 0
      %428 = vmatpush2.bf16.msra.mxu0 %v391
      %429 = vmatprep.subr.bf16.mxu0 0
      %430 = vmatpush2.bf16.msra.mxu0 %v390
      %431 = vmatprep.subr.bf16.mxu0 0
      %432 = vmatpush2.bf16.msra.mxu0 %v389
      %433 = vmatprep.subr.bf16.mxu0 0
      %434 = vmatpush2.bf16.msra.mxu0 %v388
      %435 = vmatprep.subr.bf16.mxu0 0
      %436 = vmatpush2.bf16.msra.mxu0 %v387
      %437 = vmatprep.subr.bf16.mxu0 0
      %438 = vmatpush2.bf16.msra.mxu0 %v386
      %439 = vmatprep.subr.bf16.mxu0 0
      %440 = vmatpush2.bf16.msra.mxu0 %v385
      %441 = vmatprep.mubr.bf16.mxu0 %v309
      %442 = vmatmul.mubr.bf16.gmra.mxu0 %v306
      %v443 = vpop.f32.mrf.mxu0
      %v444 = vadd.f32 0.0, %v443
      %v445 = vpop.f32.mrf.mxu0
      %v446 = vpop.f32.mrf.mxu0
      %v447 = vpop.f32.mrf.mxu0
      %448 = vdwg.mxu0
      %v483 = vunpack.c.l.b16 %v217
      %v484 = vunpack.c.l.b16 %v218
      %v485 = vunpack.c.l.b16 %v219
      %v486 = vunpack.c.l.b16 %v220
      %v487 = vunpack.c.l.b16 %v221
      %v488 = vunpack.c.l.b16 %v222
      %v489 = vunpack.c.l.b16 %v223
      %v490 = vunpack.c.l.b16 %v224
      %v491 = vunpack.c.l.b16 %v225
      %v492 = vunpack.c.l.b16 %v226
      %v493 = vunpack.c.l.b16 %v227
      %v494 = vunpack.c.l.b16 %v228
      %v495 = vunpack.c.l.b16 %v229
      %v496 = vunpack.c.l.b16 %v230
      %v497 = vunpack.c.l.b16 %v231
      %v498 = vunpack.c.l.b16 %v232
      %v499 = vunpack.c.l.b16 %v233
      %v500 = vunpack.c.l.b16 %v234
      %v501 = vunpack.c.l.b16 %v235
      %v502 = vunpack.c.l.b16 %v236
      %v503 = vunpack.c.l.b16 %v237
      %v504 = vunpack.c.l.b16 %v238
      %v505 = vunpack.c.l.b16 %v239
      %v506 = vunpack.c.l.b16 %v240
      %v507 = vunpack.c.l.b16 %v241
      %v508 = vunpack.c.l.b16 %v242
      %v509 = vunpack.c.l.b16 %v243
      %v510 = vunpack.c.l.b16 %v244
      %v511 = vunpack.c.l.b16 %v245
      %v512 = vunpack.c.l.b16 %v246
      %v513 = vunpack.c.l.b16 %v247
      %v514 = vunpack.c.l.b16 %v248
      %v515 = vpack.c.b16 %v484, %v483
      %v516 = vpack.c.b16 %v486, %v485
      %v517 = vpack.c.b16 %v488, %v487
      %v518 = vpack.c.b16 %v490, %v489
      %v519 = vpack.c.b16 %v492, %v491
      %v520 = vpack.c.b16 %v494, %v493
      %v521 = vpack.c.b16 %v496, %v495
      %v522 = vpack.c.b16 %v498, %v497
      %v523 = vpack.c.b16 %v500, %v499
      %v524 = vpack.c.b16 %v502, %v501
      %v525 = vpack.c.b16 %v504, %v503
      %v526 = vpack.c.b16 %v506, %v505
      %v527 = vpack.c.b16 %v508, %v507
      %v528 = vpack.c.b16 %v510, %v509
      %v529 = vpack.c.b16 %v512, %v511
      %v530 = vpack.c.b16 %v514, %v513
      %547 = vmatprep.subr.bf16.mxu0 0
      %548 = vmatpush1.bf16.msra.mxu0 %v522
      %549 = vmatprep.subr.bf16.mxu0 0
      %550 = vmatpush1.bf16.msra.mxu0 %v521
      %551 = vmatprep.subr.bf16.mxu0 0
      %552 = vmatpush1.bf16.msra.mxu0 %v520
      %553 = vmatprep.subr.bf16.mxu0 0
      %554 = vmatpush1.bf16.msra.mxu0 %v519
      %555 = vmatprep.subr.bf16.mxu0 0
      %556 = vmatpush1.bf16.msra.mxu0 %v518
      %557 = vmatprep.subr.bf16.mxu0 0
      %558 = vmatpush1.bf16.msra.mxu0 %v517
      %559 = vmatprep.subr.bf16.mxu0 0
      %560 = vmatpush1.bf16.msra.mxu0 %v516
      %561 = vmatprep.subr.bf16.mxu0 0
      %562 = vmatpush1.bf16.msra.mxu0 %v515
      %563 = vmatprep.subr.bf16.mxu0 0
      %564 = vmatpush2.bf16.msra.mxu0 %v530
      %565 = vmatprep.subr.bf16.mxu0 0
      %566 = vmatpush2.bf16.msra.mxu0 %v529
      %567 = vmatprep.subr.bf16.mxu0 0
      %568 = vmatpush2.bf16.msra.mxu0 %v528
      %569 = vmatprep.subr.bf16.mxu0 0
      %570 = vmatpush2.bf16.msra.mxu0 %v527
      %571 = vmatprep.subr.bf16.mxu0 0
      %572 = vmatpush2.bf16.msra.mxu0 %v526
      %573 = vmatprep.subr.bf16.mxu0 0
      %574 = vmatpush2.bf16.msra.mxu0 %v525
      %575 = vmatprep.subr.bf16.mxu0 0
      %576 = vmatpush2.bf16.msra.mxu0 %v524
      %577 = vmatprep.subr.bf16.mxu0 0
      %578 = vmatpush2.bf16.msra.mxu0 %v523
      %579 = vmatprep.mubr.bf16.mxu0 %v304
      %580 = vmatmul.mubr.bf16.gmra.mxu0 %v297
      %v581 = vpop.f32.mrf.mxu0
      %v582 = vadd.f32 %v444, %v581
      %v583 = vpop.f32.mrf.mxu0
      %v584 = vpop.f32.mrf.mxu0
      %v585 = vpop.f32.mrf.mxu0
      %586 = vdwg.mxu0
      %s587 = scalar_lea.vmem %s201, 2
      %v588 = vld [vmem:[%s587] sm:$0x3]
      %s589 = scalar_lea.vmem %s205, 256
      %v590 = vld [vmem:[%s589] sm:$0xf]
      %v591 = vld [vmem:[%s589 + $0x4] sm:$0xf]
      %v592 = vld [vmem:[%s589 + $0x8] sm:$0xf]
      %v593 = vld [vmem:[%s589 + $0xc] sm:$0xf]
      %v594 = vld [vmem:[%s589 + $0x10] sm:$0xf]
      %v595 = vld [vmem:[%s589 + $0x14] sm:$0xf]
      %v596 = vld [vmem:[%s589 + $0x18] sm:$0xf]
      %v597 = vld [vmem:[%s589 + $0x1c] sm:$0xf]
      %v598 = vld [vmem:[%s589 + $0x20] sm:$0xf]
      %v599 = vld [vmem:[%s589 + $0x24] sm:$0xf]
      %v600 = vld [vmem:[%s589 + $0x28] sm:$0xf]
      %v601 = vld [vmem:[%s589 + $0x2c] sm:$0xf]
      %v602 = vld [vmem:[%s589 + $0x30] sm:$0xf]
      %v603 = vld [vmem:[%s589 + $0x34] sm:$0xf]
      %v604 = vld [vmem:[%s589 + $0x38] sm:$0xf]
      %v605 = vld [vmem:[%s589 + $0x3c] sm:$0xf]
      %v606 = vld [vmem:[%s589 + $0x40] sm:$0xf]
      %v607 = vld [vmem:[%s589 + $0x44] sm:$0xf]
      %v608 = vld [vmem:[%s589 + $0x48] sm:$0xf]
      %v609 = vld [vmem:[%s589 + $0x4c] sm:$0xf]
      %v610 = vld [vmem:[%s589 + $0x50] sm:$0xf]
      %v611 = vld [vmem:[%s589 + $0x54] sm:$0xf]
      %v612 = vld [vmem:[%s589 + $0x58] sm:$0xf]
      %v613 = vld [vmem:[%s589 + $0x5c] sm:$0xf]
      %v614 = vld [vmem:[%s589 + $0x60] sm:$0xf]
      %v615 = vld [vmem:[%s589 + $0x64] sm:$0xf]
      %v616 = vld [vmem:[%s589 + $0x68] sm:$0xf]
      %v617 = vld [vmem:[%s589 + $0x6c] sm:$0xf]
      %v618 = vld [vmem:[%s589 + $0x70] sm:$0xf]
      %v619 = vld [vmem:[%s589 + $0x74] sm:$0xf]
      %v620 = vld [vmem:[%s589 + $0x78] sm:$0xf]
      %v621 = vld [vmem:[%s589 + $0x7c] sm:$0xf]
      %v624 = vunpack.c.l.s4 1966171168
      %v625 = vunpack.c.0.s8 %v624
      %v626 = vlaneseq
      %v627 = vshrl.u32 %v626, 7
      %v628 = vsub.s32 %v625, %v627
      %v629 = vrot.slane %v588, %v628
      %v630 = vcombine.high %v629, %v629
      %v632 = vunpack.c.l.s4 1966171168
      %v633 = vunpack.c.0.s8 %v632
      %v634 = vlaneseq
      %v635 = vshrl.u32 %v634, 7
      %v636 = vsub.s32 %v633, %v635
      %v637 = vrot.slane %v629, %v636
      %v639 = vunpack.c.l.s4 1966171168
      %v640 = vunpack.c.0.s8 %v639
      %v641 = vlaneseq
      %v642 = vshrl.u32 %v641, 7
      %v643 = vsub.s32 %v640, %v642
      %v644 = vrot.slane %v630, %v643
      %v679 = vunpack.c.l.b16 %v590
      %v680 = vunpack.c.l.b16 %v591
      %v681 = vunpack.c.l.b16 %v592
      %v682 = vunpack.c.l.b16 %v593
      %v683 = vunpack.c.l.b16 %v594
      %v684 = vunpack.c.l.b16 %v595
      %v685 = vunpack.c.l.b16 %v596
      %v686 = vunpack.c.l.b16 %v597
      %v687 = vunpack.c.l.b16 %v598
      %v688 = vunpack.c.l.b16 %v599
      %v689 = vunpack.c.l.b16 %v600
      %v690 = vunpack.c.l.b16 %v601
      %v691 = vunpack.c.l.b16 %v602
      %v692 = vunpack.c.l.b16 %v603
      %v693 = vunpack.c.l.b16 %v604
      %v694 = vunpack.c.l.b16 %v605
      %v695 = vunpack.c.l.b16 %v606
      %v696 = vunpack.c.l.b16 %v607
      %v697 = vunpack.c.l.b16 %v608
      %v698 = vunpack.c.l.b16 %v609
      %v699 = vunpack.c.l.b16 %v610
      %v700 = vunpack.c.l.b16 %v611
      %v701 = vunpack.c.l.b16 %v612
      %v702 = vunpack.c.l.b16 %v613
      %v703 = vunpack.c.l.b16 %v614
      %v704 = vunpack.c.l.b16 %v615
      %v705 = vunpack.c.l.b16 %v616
      %v706 = vunpack.c.l.b16 %v617
      %v707 = vunpack.c.l.b16 %v618
      %v708 = vunpack.c.l.b16 %v619
      %v709 = vunpack.c.l.b16 %v620
      %v710 = vunpack.c.l.b16 %v621
      %v711 = vpack.c.b16 %v680, %v679
      %v712 = vpack.c.b16 %v682, %v681
      %v713 = vpack.c.b16 %v684, %v683
      %v714 = vpack.c.b16 %v686, %v685
      %v715 = vpack.c.b16 %v688, %v687
      %v716 = vpack.c.b16 %v690, %v689
      %v717 = vpack.c.b16 %v692, %v691
      %v718 = vpack.c.b16 %v694, %v693
      %v719 = vpack.c.b16 %v696, %v695
      %v720 = vpack.c.b16 %v698, %v697
      %v721 = vpack.c.b16 %v700, %v699
      %v722 = vpack.c.b16 %v702, %v701
      %v723 = vpack.c.b16 %v704, %v703
      %v724 = vpack.c.b16 %v706, %v705
      %v725 = vpack.c.b16 %v708, %v707
      %v726 = vpack.c.b16 %v710, %v709
      %743 = vmatprep.subr.bf16.mxu0 0
      %744 = vmatpush1.bf16.msra.mxu0 %v718
      %745 = vmatprep.subr.bf16.mxu0 0
      %746 = vmatpush1.bf16.msra.mxu0 %v717
      %747 = vmatprep.subr.bf16.mxu0 0
      %748 = vmatpush1.bf16.msra.mxu0 %v716
      %749 = vmatprep.subr.bf16.mxu0 0
      %750 = vmatpush1.bf16.msra.mxu0 %v715
      %751 = vmatprep.subr.bf16.mxu0 0
      %752 = vmatpush1.bf16.msra.mxu0 %v714
      %753 = vmatprep.subr.bf16.mxu0 0
      %754 = vmatpush1.bf16.msra.mxu0 %v713
      %755 = vmatprep.subr.bf16.mxu0 0
      %756 = vmatpush1.bf16.msra.mxu0 %v712
      %757 = vmatprep.subr.bf16.mxu0 0
      %758 = vmatpush1.bf16.msra.mxu0 %v711
      %759 = vmatprep.subr.bf16.mxu0 0
      %760 = vmatpush2.bf16.msra.mxu0 %v726
      %761 = vmatprep.subr.bf16.mxu0 0
      %762 = vmatpush2.bf16.msra.mxu0 %v725
      %763 = vmatprep.subr.bf16.mxu0 0
      %764 = vmatpush2.bf16.msra.mxu0 %v724
      %765 = vmatprep.subr.bf16.mxu0 0
      %766 = vmatpush2.bf16.msra.mxu0 %v723
      %767 = vmatprep.subr.bf16.mxu0 0
      %768 = vmatpush2.bf16.msra.mxu0 %v722
      %769 = vmatprep.subr.bf16.mxu0 0
      %770 = vmatpush2.bf16.msra.mxu0 %v721
      %771 = vmatprep.subr.bf16.mxu0 0
      %772 = vmatpush2.bf16.msra.mxu0 %v720
      %773 = vmatprep.subr.bf16.mxu0 0
      %774 = vmatpush2.bf16.msra.mxu0 %v719
      %775 = vmatprep.mubr.bf16.mxu0 %v644
      %776 = vmatmul.mubr.bf16.gmra.mxu0 %v637
      %v777 = vpop.f32.mrf.mxu0
      %v778 = vadd.f32 0.0, %v777
      %v779 = vpop.f32.mrf.mxu0
      %v780 = vpop.f32.mrf.mxu0
      %v781 = vpop.f32.mrf.mxu0
      %782 = vdwg.mxu0
      %v783 = vadd.f32 %v582, %v778
      %v784 = vld [vmem:[%s587] sm:$0x3]
      %s785 = scalar_lea.vmem %s205, 384
      %v786 = vld [vmem:[%s785] sm:$0xf]
      %v787 = vld [vmem:[%s785 + $0x4] sm:$0xf]
      %v788 = vld [vmem:[%s785 + $0x8] sm:$0xf]
      %v789 = vld [vmem:[%s785 + $0xc] sm:$0xf]
      %v790 = vld [vmem:[%s785 + $0x10] sm:$0xf]
      %v791 = vld [vmem:[%s785 + $0x14] sm:$0xf]
      %v792 = vld [vmem:[%s785 + $0x18] sm:$0xf]
      %v793 = vld [vmem:[%s785 + $0x1c] sm:$0xf]
      %v794 = vld [vmem:[%s785 + $0x20] sm:$0xf]
      %v795 = vld [vmem:[%s785 + $0x24] sm:$0xf]
      %v796 = vld [vmem:[%s785 + $0x28] sm:$0xf]
      %v797 = vld [vmem:[%s785 + $0x2c] sm:$0xf]
      %v798 = vld [vmem:[%s785 + $0x30] sm:$0xf]
      %v799 = vld [vmem:[%s785 + $0x34] sm:$0xf]
      %v800 = vld [vmem:[%s785 + $0x38] sm:$0xf]
      %v801 = vld [vmem:[%s785 + $0x3c] sm:$0xf]
      %v802 = vld [vmem:[%s785 + $0x40] sm:$0xf]
      %v803 = vld [vmem:[%s785 + $0x44] sm:$0xf]
      %v804 = vld [vmem:[%s785 + $0x48] sm:$0xf]
      %v805 = vld [vmem:[%s785 + $0x4c] sm:$0xf]
      %v806 = vld [vmem:[%s785 + $0x50] sm:$0xf]
      %v807 = vld [vmem:[%s785 + $0x54] sm:$0xf]
      %v808 = vld [vmem:[%s785 + $0x58] sm:$0xf]
      %v809 = vld [vmem:[%s785 + $0x5c] sm:$0xf]
      %v810 = vld [vmem:[%s785 + $0x60] sm:$0xf]
      %v811 = vld [vmem:[%s785 + $0x64] sm:$0xf]
      %v812 = vld [vmem:[%s785 + $0x68] sm:$0xf]
      %v813 = vld [vmem:[%s785 + $0x6c] sm:$0xf]
      %v814 = vld [vmem:[%s785 + $0x70] sm:$0xf]
      %v815 = vld [vmem:[%s785 + $0x74] sm:$0xf]
      %v816 = vld [vmem:[%s785 + $0x78] sm:$0xf]
      %v817 = vld [vmem:[%s785 + $0x7c] sm:$0xf]
      %v820 = vunpack.c.l.s4 1966171168
      %v821 = vunpack.c.0.s8 %v820
      %v822 = vlaneseq
      %v823 = vshrl.u32 %v822, 7
      %v824 = vsub.s32 %v821, %v823
      %v825 = vrot.slane %v784, %v824
      %v826 = vcombine.high %v825, %v825
      %v828 = vunpack.c.l.s4 1966171168
      %v829 = vunpack.c.0.s8 %v828
      %v830 = vlaneseq
      %v831 = vshrl.u32 %v830, 7
      %v832 = vsub.s32 %v829, %v831
      %v833 = vrot.slane %v825, %v832
      %v835 = vunpack.c.l.s4 1966171168
      %v836 = vunpack.c.0.s8 %v835
      %v837 = vlaneseq
      %v838 = vshrl.u32 %v837, 7
      %v839 = vsub.s32 %v836, %v838
      %v840 = vrot.slane %v826, %v839
      %v842 = vshrl.u32 %v833, 16
      %v845 = vshrl.u32 %v840, 16
      %v881 = vunpack.c.l.b16 %v786
      %v882 = vunpack.c.l.b16 %v787
      %v883 = vunpack.c.l.b16 %v788
      %v884 = vunpack.c.l.b16 %v789
      %v885 = vunpack.c.l.b16 %v790
      %v886 = vunpack.c.l.b16 %v791
      %v887 = vunpack.c.l.b16 %v792
      %v888 = vunpack.c.l.b16 %v793
      %v889 = vunpack.c.l.b16 %v794
      %v890 = vunpack.c.l.b16 %v795
      %v891 = vunpack.c.l.b16 %v796
      %v892 = vunpack.c.l.b16 %v797
      %v893 = vunpack.c.l.b16 %v798
      %v894 = vunpack.c.l.b16 %v799
      %v895 = vunpack.c.l.b16 %v800
      %v896 = vunpack.c.l.b16 %v801
      %v897 = vunpack.c.l.b16 %v802
      %v898 = vunpack.c.l.b16 %v803
      %v899 = vunpack.c.l.b16 %v804
      %v900 = vunpack.c.l.b16 %v805
      %v901 = vunpack.c.l.b16 %v806
      %v902 = vunpack.c.l.b16 %v807
      %v903 = vunpack.c.l.b16 %v808
      %v904 = vunpack.c.l.b16 %v809
      %v905 = vunpack.c.l.b16 %v810
      %v906 = vunpack.c.l.b16 %v811
      %v907 = vunpack.c.l.b16 %v812
      %v908 = vunpack.c.l.b16 %v813
      %v909 = vunpack.c.l.b16 %v814
      %v910 = vunpack.c.l.b16 %v815
      %v911 = vunpack.c.l.b16 %v816
      %v912 = vunpack.c.l.b16 %v817
      %v913 = vpack.c.b16 %v882, %v881
      %v914 = vpack.c.b16 %v884, %v883
      %v915 = vpack.c.b16 %v886, %v885
      %v916 = vpack.c.b16 %v888, %v887
      %v917 = vpack.c.b16 %v890, %v889
      %v918 = vpack.c.b16 %v892, %v891
      %v919 = vpack.c.b16 %v894, %v893
      %v920 = vpack.c.b16 %v896, %v895
      %v921 = vpack.c.b16 %v898, %v897
      %v922 = vpack.c.b16 %v900, %v899
      %v923 = vpack.c.b16 %v902, %v901
      %v924 = vpack.c.b16 %v904, %v903
      %v925 = vpack.c.b16 %v906, %v905
      %v926 = vpack.c.b16 %v908, %v907
      %v927 = vpack.c.b16 %v910, %v909
      %v928 = vpack.c.b16 %v912, %v911
      %945 = vmatprep.subr.bf16.mxu0 0
      %946 = vmatpush1.bf16.msra.mxu0 %v920
      %947 = vmatprep.subr.bf16.mxu0 0
      %948 = vmatpush1.bf16.msra.mxu0 %v919
      %949 = vmatprep.subr.bf16.mxu0 0
      %950 = vmatpush1.bf16.msra.mxu0 %v918
      %951 = vmatprep.subr.bf16.mxu0 0
      %952 = vmatpush1.bf16.msra.mxu0 %v917
      %953 = vmatprep.subr.bf16.mxu0 0
      %954 = vmatpush1.bf16.msra.mxu0 %v916
      %955 = vmatprep.subr.bf16.mxu0 0
      %956 = vmatpush1.bf16.msra.mxu0 %v915
      %957 = vmatprep.subr.bf16.mxu0 0
      %958 = vmatpush1.bf16.msra.mxu0 %v914
      %959 = vmatprep.subr.bf16.mxu0 0
      %960 = vmatpush1.bf16.msra.mxu0 %v913
      %961 = vmatprep.subr.bf16.mxu0 0
      %962 = vmatpush2.bf16.msra.mxu0 %v928
      %963 = vmatprep.subr.bf16.mxu0 0
      %964 = vmatpush2.bf16.msra.mxu0 %v927
      %965 = vmatprep.subr.bf16.mxu0 0
      %966 = vmatpush2.bf16.msra.mxu0 %v926
      %967 = vmatprep.subr.bf16.mxu0 0
      %968 = vmatpush2.bf16.msra.mxu0 %v925
      %969 = vmatprep.subr.bf16.mxu0 0
      %970 = vmatpush2.bf16.msra.mxu0 %v924
      %971 = vmatprep.subr.bf16.mxu0 0
      %972 = vmatpush2.bf16.msra.mxu0 %v923
      %973 = vmatprep.subr.bf16.mxu0 0
      %974 = vmatpush2.bf16.msra.mxu0 %v922
      %975 = vmatprep.subr.bf16.mxu0 0
      %976 = vmatpush2.bf16.msra.mxu0 %v921
      %977 = vmatprep.mubr.bf16.mxu0 %v845
      %978 = vmatmul.mubr.bf16.gmra.mxu0 %v842
      %v979 = vpop.f32.mrf.mxu0
      %v980 = vadd.f32 0.0, %v979
      %v981 = vpop.f32.mrf.mxu0
      %v982 = vpop.f32.mrf.mxu0
      %v983 = vpop.f32.mrf.mxu0
      %984 = vdwg.mxu0
      %v985 = vadd.f32 %v783, %v980
      %v986 = vld [vmem:[%s208] sm:$0x1]
      %v987 = vadd.f32 %v985, %v986
      %v988 = vmax.f32 %v987, 0.0
      %v989 = vpack.c.bf16 %v988, %v988
      %vm990 = vcmask 1040384
      %vm991 = vsmask.f32 256
      %vm992 = vmand %vm990, %vm991
      %v993 = vld [vmem:[%s214] sm:$0x1]
      %v994 = vsel %vm992, %v989, %v993
      %995 = vst [vmem:[%s214] sm:$0x1] %v994
      %p996 = scmp.lt.s32.totalorder %s18, 1
      %s997 = scalar_select %p996, %s18, 1
      %p998 = scmp.lt.s32.totalorder %s19, 0
      %s999 = scalar_select %p998, %s19, 0
      %s1000 = sadd.s32 %s999, %s997
      %s1001 = scalar_lea.vmem %s3, %s1000
      // Predicated region
      $region33: #{net_forward.31} parent=31 // pred_check
        %p1002 = pneg %p124
      $region34: #{net_forward.31} parent=31 // pred_check_branch
        %1004 = sbr.rel (%p1002) target = $region36
      $region35: #{net_forward.31} parent=31 // pred_region
        _
      $region36: #{net_forward.31} parent=31 // pred_fallthru
        _
    $region32: #{net_forward.31} parent=5 // pred_fallthru
      _
    %p1005 = scmp.le.s32.totalorder 2, %s9
    // Predicated region
    $region37: #{net_forward.31} parent=5 // pred_check
      %p1006 = pneg %p1005
    $region38: #{net_forward.31} parent=5 // pred_check_branch
      %1008 = sbr.rel (%p1006) target = $region40
    $region39: #{net_forward.31} parent=5 // pred_region
      %s1009 = ssub.s32 %s9, 2
      // Predicated region
      $region41: #{net_forward.31} parent=39 // pred_check
        %p1010 = pneg %p130
      $region42: #{net_forward.31} parent=39 // pred_check_branch
        %1012 = sbr.rel (%p1010) target = $region44
      $region43: #{net_forward.31} parent=39 // pred_region
        %p1013 = scmp.lt.s32.totalorder %s20, 1
        %s1014 = scalar_select %p1013, %s20, 1
        %p1015 = scmp.lt.s32.totalorder %s21, 0
        %s1016 = scalar_select %p1015, %s21, 0
        %s1017 = sadd.s32 %s1016, %s1014
        %s1018 = scalar_lea.vmem %s3, %s1017
      $region44: #{net_forward.31} parent=39 // pred_fallthru
        _
    $region40: #{net_forward.31} parent=5 // pred_fallthru
      _
  $region6: #{net_forward.31} parent=0 // loop_footer
    %s13 = sadd.s32 1, %s9
  $region7: #{net_forward.31} parent=0 // loop_footer_branch
    %8 = sbr.rel target = $region3
  $region8: #{net_forward.31} parent=0 // loop_exit
    _

// kernel: net_forward.33
$region0: #{net_forward.33}
  #allocation0 [shape = 'u32[]', space=smem, size = 0x4, offset = 0x4, fixed_abs, tag = 'smem constant byte address 0x4 - core index']
  #allocation1 [shape = 'u32[144,128]{1,0:T(1,128)}', space=vmem, size = 0x12000, scoped, tag = 'internal scratch']
  #allocation2 [shape = 'f32[8,256]{1,0:T(8,128)}', space=vmem, size = 0x2000, scoped, tag = 'scratch operand']
  %s0 = inlined_call_operand.vmem [shape: bf16[8,128], index: 0, kind: input, shape index: {}]
  %s1 = inlined_call_operand.vmem [shape: bf16[128,256], index: 1, kind: input, shape index: {}]
  %s2 = inlined_call_operand.vmem [shape: f32[1,256], index: 2, kind: input, shape index: {}]
  %s3 = inlined_call_operand.vmem [shape: bf16[8,256], index: 3, kind: input, shape index: {}]
  %s4 = inlined_call_operand.vmem [shape: bf16[8,256], index: 4, kind: output, shape index: {}]
  %s5 = sld [smem:[#allocation0]]
  $region34: #{net_forward.33} parent=0
    _
  %s7 = ssub.s32 1, %s5
  %s8 = scalar_select 0, %s7, %s5
  // Predicated region
  $region2: #{net_forward.33} parent=0 // pred_check
    _
  $region3: #{net_forward.33} parent=0 // pred_check_branch
    %10 = sbr.rel (0) target = $region5
  $region4: #{net_forward.33} parent=0 // pred_region
    _
  $region5: #{net_forward.33} parent=0 // pred_fallthru
    _
  // Predicated region
  $region6: #{net_forward.33} parent=0 // pred_check
    _
  $region7: #{net_forward.33} parent=0 // pred_check_branch
    %12 = sbr.rel (0) target = $region9
  $region8: #{net_forward.33} parent=0 // pred_region
    _
  $region9: #{net_forward.33} parent=0 // pred_fallthru
    _
  // Predicated region
  $region10: #{net_forward.33} parent=0 // pred_check
    _
  $region11: #{net_forward.33} parent=0 // pred_check_branch
    %14 = sbr.rel (0) target = $region13
  $region12: #{net_forward.33} parent=0 // pred_region
    _
  $region13: #{net_forward.33} parent=0 // pred_fallthru
    _
  // Predicated region
  $region14: #{net_forward.33} parent=0 // pred_check
    _
  $region15: #{net_forward.33} parent=0 // pred_check_branch
    %16 = sbr.rel (0) target = $region17
  $region16: #{net_forward.33} parent=0 // pred_region
    _
  $region17: #{net_forward.33} parent=0 // pred_fallthru
    _
  %p18 = scmp.eq.s32.totalorder 0, 0
  // Predicated region
  $region18: #{net_forward.33} parent=0 // pred_check
    %p19 = pneg %p18
  $region19: #{net_forward.33} parent=0 // pred_check_branch
    %21 = sbr.rel (%p19) target = $region21
  $region20: #{net_forward.33} parent=0 // pred_region
    %22 = vst [vmem:[#allocation2] sm:$0xff] 0.0
    %23 = vst [vmem:[#allocation2 + $0x8] sm:$0xff] 0.0
  $region21: #{net_forward.33} parent=0 // pred_fallthru
    _
  %v24 = vld [vmem:[#allocation2] sm:$0xff]
  %v25 = vld [vmem:[#allocation2 + $0x8] sm:$0xff]
  %v26 = vld [vmem:[%s0] sm:$0xf]
  %v27 = vld [vmem:[%s1] sm:$0xff]
  %v28 = vld [vmem:[%s1 + $0x8] sm:$0xff]
  %v29 = vld [vmem:[%s1 + $0x10] sm:$0xff]
  %v30 = vld [vmem:[%s1 + $0x18] sm:$0xff]
  %v31 = vld [vmem:[%s1 + $0x20] sm:$0xff]
  %v32 = vld [vmem:[%s1 + $0x28] sm:$0xff]
  %v33 = vld [vmem:[%s1 + $0x30] sm:$0xff]
  %v34 = vld [vmem:[%s1 + $0x38] sm:$0xff]
  %v35 = vld [vmem:[%s1 + $0x40] sm:$0xff]
  %v36 = vld [vmem:[%s1 + $0x48] sm:$0xff]
  %v37 = vld [vmem:[%s1 + $0x50] sm:$0xff]
  %v38 = vld [vmem:[%s1 + $0x58] sm:$0xff]
  %v39 = vld [vmem:[%s1 + $0x60] sm:$0xff]
  %v40 = vld [vmem:[%s1 + $0x68] sm:$0xff]
  %v41 = vld [vmem:[%s1 + $0x70] sm:$0xff]
  %v42 = vld [vmem:[%s1 + $0x78] sm:$0xff]
  %v59 = vunpack.c.l.b16 %v27
  %v60 = vunpack.c.h.b16 %v27
  %v61 = vunpack.c.l.b16 %v28
  %v62 = vunpack.c.h.b16 %v28
  %v63 = vunpack.c.l.b16 %v29
  %v64 = vunpack.c.h.b16 %v29
  %v65 = vunpack.c.l.b16 %v30
  %v66 = vunpack.c.h.b16 %v30
  %v67 = vunpack.c.l.b16 %v31
  %v68 = vunpack.c.h.b16 %v31
  %v69 = vunpack.c.l.b16 %v32
  %v70 = vunpack.c.h.b16 %v32
  %v71 = vunpack.c.l.b16 %v33
  %v72 = vunpack.c.h.b16 %v33
  %v73 = vunpack.c.l.b16 %v34
  %v74 = vunpack.c.h.b16 %v34
  %v75 = vunpack.c.l.b16 %v35
  %v76 = vunpack.c.h.b16 %v35
  %v77 = vunpack.c.l.b16 %v36
  %v78 = vunpack.c.h.b16 %v36
  %v79 = vunpack.c.l.b16 %v37
  %v80 = vunpack.c.h.b16 %v37
  %v81 = vunpack.c.l.b16 %v38
  %v82 = vunpack.c.h.b16 %v38
  %v83 = vunpack.c.l.b16 %v39
  %v84 = vunpack.c.h.b16 %v39
  %v85 = vunpack.c.l.b16 %v40
  %v86 = vunpack.c.h.b16 %v40
  %v87 = vunpack.c.l.b16 %v41
  %v88 = vunpack.c.h.b16 %v41
  %v89 = vunpack.c.l.b16 %v42
  %v90 = vunpack.c.h.b16 %v42
  %v91 = vpack.c.b16 %v61, %v59
  %v92 = vpack.c.b16 %v62, %v60
  %v93 = vpack.c.b16 %v65, %v63
  %v94 = vpack.c.b16 %v66, %v64
  %v95 = vpack.c.b16 %v69, %v67
  %v96 = vpack.c.b16 %v70, %v68
  %v97 = vpack.c.b16 %v73, %v71
  %v98 = vpack.c.b16 %v74, %v72
  %v99 = vpack.c.b16 %v77, %v75
  %v100 = vpack.c.b16 %v78, %v76
  %v101 = vpack.c.b16 %v81, %v79
  %v102 = vpack.c.b16 %v82, %v80
  %v103 = vpack.c.b16 %v85, %v83
  %v104 = vpack.c.b16 %v86, %v84
  %v105 = vpack.c.b16 %v89, %v87
  %v106 = vpack.c.b16 %v90, %v88
  %123 = vmatprep.subr.bf16.mxu0 %v106
  %124 = vmatpush1.bf16.msra.mxu0 %v105
  %125 = vmatprep.subr.bf16.mxu0 %v104
  %126 = vmatpush1.bf16.msra.mxu0 %v103
  %127 = vmatprep.subr.bf16.mxu0 %v102
  %128 = vmatpush1.bf16.msra.mxu0 %v101
  %129 = vmatprep.subr.bf16.mxu0 %v100
  %130 = vmatpush1.bf16.msra.mxu0 %v99
  %131 = vmatprep.subr.bf16.mxu0 %v98
  %132 = vmatpush1.bf16.msra.mxu0 %v97
  %133 = vmatprep.subr.bf16.mxu0 %v96
  %134 = vmatpush1.bf16.msra.mxu0 %v95
  %135 = vmatprep.subr.bf16.mxu0 %v94
  %136 = vmatpush1.bf16.msra.mxu0 %v93
  %137 = vmatprep.subr.bf16.mxu0 %v92
  %138 = vmatpush1.bf16.msra.mxu0 %v91
  %139 = vmatprep.subr.bf16.mxu0 0
  %140 = vmatpush2.bf16.msra.mxu0 0
  %141 = vmatprep.subr.bf16.mxu0 0
  %142 = vmatpush2.bf16.msra.mxu0 0
  %143 = vmatprep.subr.bf16.mxu0 0
  %144 = vmatpush2.bf16.msra.mxu0 0
  %145 = vmatprep.subr.bf16.mxu0 0
  %146 = vmatpush2.bf16.msra.mxu0 0
  %147 = vmatprep.subr.bf16.mxu0 0
  %148 = vmatpush2.bf16.msra.mxu0 0
  %149 = vmatprep.subr.bf16.mxu0 0
  %150 = vmatpush2.bf16.msra.mxu0 0
  %151 = vmatprep.subr.bf16.mxu0 0
  %152 = vmatpush2.bf16.msra.mxu0 0
  %153 = vmatprep.subr.bf16.mxu0 0
  %154 = vmatpush2.bf16.msra.mxu0 0
  %155 = vmatprep.mubr.bf16.mxu0 0
  %156 = vmatmul.mubr.bf16.gmra.mxu0 %v26
  %v157 = vpop.f32.mrf.mxu0
  %v158 = vadd.f32 0.0, %v157
  %v159 = vpop.f32.mrf.mxu0
  %v160 = vadd.f32 0.0, %v159
  %v161 = vpop.f32.mrf.mxu0
  %v162 = vpop.f32.mrf.mxu0
  %163 = vdwg.mxu0
  %v164 = vadd.f32 %v24, %v158
  %v165 = vadd.f32 %v25, %v160
  %166 = vst [vmem:[#allocation2] sm:$0xff] %v164
  %167 = vst [vmem:[#allocation2 + $0x8] sm:$0xff] %v165
  // Predicated region
  $region22: #{net_forward.33} parent=0 // pred_check
    %p168 = pneg %p18
  $region23: #{net_forward.33} parent=0 // pred_check_branch
    %170 = sbr.rel (%p168) target = $region25
  $region24: #{net_forward.33} parent=0 // pred_region
    %v171 = vld [vmem:[#allocation2] sm:$0xff]
    %v172 = vld [vmem:[#allocation2 + $0x8] sm:$0xff]
    %v173 = vld [vmem:[%s2] sm:$0x3]
    %v175 = vlaneseq
    %v176 = vshrl.u32 %v175, 7
    %v177 = vsub.s32 0, %v176
    %v178 = vrot.slane %v173, %v177
    %v179 = vlaneseq
    %v180 = vshrl.u32 %v179, 7
    %v181 = vsub.s32 1, %v180
    %v182 = vrot.slane %v173, %v181
    %v185 = vadd.f32 %v171, %v178
    %v186 = vadd.f32 %v172, %v182
    %v187 = vld [vmem:[%s3] sm:$0xff]
    %v188 = vunpack.c.l.bf16 %v187
    %v189 = vunpack.c.h.bf16 %v187
    %v190 = vadd.f32 %v185, %v188
    %v191 = vadd.f32 %v186, %v189
    %v192 = vmax.f32 %v190, 0.0
    %v193 = vmax.f32 %v191, 0.0
    %v194 = vpack.c.bf16 %v192, %v192
    %v195 = vpack.c.bf16 %v193, %v193
    %v198 = vunpack.c.l.b16 %v194
    %v199 = vunpack.c.l.b16 %v195
    %v200 = vpack.c.b16 %v199, %v198
    %202 = vst [vmem:[%s4] sm:$0xff] %v200
  $region25: #{net_forward.33} parent=0 // pred_fallthru
    _
  // Predicated region
  $region26: #{net_forward.33} parent=0 // pred_check
    _
  $region27: #{net_forward.33} parent=0 // pred_check_branch
    %204 = sbr.rel (0) target = $region29
  $region28: #{net_forward.33} parent=0 // pred_region
    _
  $region29: #{net_forward.33} parent=0 // pred_fallthru
    _
  // Predicated region
  $region30: #{net_forward.33} parent=0 // pred_check
    _
  $region31: #{net_forward.33} parent=0 // pred_check_branch
    %206 = sbr.rel (0) target = $region33
  $region32: #{net_forward.33} parent=0 // pred_region
    _
  $region33: #{net_forward.33} parent=0 // pred_fallthru
    _

// kernel: net_forward.34
$region0: #{net_forward.34}
  #allocation0 [shape = 'u32[]', space=smem, size = 0x4, offset = 0x4, fixed_abs, tag = 'smem constant byte address 0x4 - core index']
  #allocation1 [shape = 'u32[144,128]{1,0:T(1,128)}', space=vmem, size = 0x12000, scoped, tag = 'internal scratch']
  #allocation2 [shape = 'f32[8,128]{1,0:T(8,128)}', space=vmem, size = 0x1000, scoped, tag = 'scratch operand']
  %s0 = inlined_call_operand.vmem [shape: bf16[8,256], index: 0, kind: input, shape index: {}]
  %s1 = inlined_call_operand.vmem [shape: bf16[256,128], index: 1, kind: input, shape index: {}]
  %s2 = inlined_call_operand.vmem [shape: f32[1,128], index: 2, kind: input, shape index: {}]
  %s3 = inlined_call_operand.vmem [shape: bf16[8,128], index: 3, kind: output, shape index: {}]
  %s4 = sld [smem:[#allocation0]]
  $region30: #{net_forward.34} parent=0
    _
  %s6 = ssub.s32 1, %s4
  %s7 = scalar_select 0, %s6, %s4
  // Predicated region
  $region2: #{net_forward.34} parent=0 // pred_check
    _
  $region3: #{net_forward.34} parent=0 // pred_check_branch
    %9 = sbr.rel (0) target = $region5
  $region4: #{net_forward.34} parent=0 // pred_region
    _
  $region5: #{net_forward.34} parent=0 // pred_fallthru
    _
  // Predicated region
  $region6: #{net_forward.34} parent=0 // pred_check
    _
  $region7: #{net_forward.34} parent=0 // pred_check_branch
    %11 = sbr.rel (0) target = $region9
  $region8: #{net_forward.34} parent=0 // pred_region
    _
  $region9: #{net_forward.34} parent=0 // pred_fallthru
    _
  // Predicated region
  $region10: #{net_forward.34} parent=0 // pred_check
    _
  $region11: #{net_forward.34} parent=0 // pred_check_branch
    %13 = sbr.rel (0) target = $region13
  $region12: #{net_forward.34} parent=0 // pred_region
    _
  $region13: #{net_forward.34} parent=0 // pred_fallthru
    _
  %p15 = scmp.eq.s32.totalorder 0, 0
  // Predicated region
  $region14: #{net_forward.34} parent=0 // pred_check
    %p16 = pneg %p15
  $region15: #{net_forward.34} parent=0 // pred_check_branch
    %18 = sbr.rel (%p16) target = $region17
  $region16: #{net_forward.34} parent=0 // pred_region
    %19 = vst [vmem:[#allocation2] sm:$0xff] 0.0
  $region17: #{net_forward.34} parent=0 // pred_fallthru
    _
  %v20 = vld [vmem:[#allocation2] sm:$0xff]
  %v21 = vld [vmem:[%s0] sm:$0xff]
  %v22 = vld [vmem:[%s1] sm:$0xf]
  %v23 = vld [vmem:[%s1 + $0x4] sm:$0xf]
  %v24 = vld [vmem:[%s1 + $0x8] sm:$0xf]
  %v25 = vld [vmem:[%s1 + $0xc] sm:$0xf]
  %v26 = vld [vmem:[%s1 + $0x10] sm:$0xf]
  %v27 = vld [vmem:[%s1 + $0x14] sm:$0xf]
  %v28 = vld [vmem:[%s1 + $0x18] sm:$0xf]
  %v29 = vld [vmem:[%s1 + $0x1c] sm:$0xf]
  %v30 = vld [vmem:[%s1 + $0x20] sm:$0xf]
  %v31 = vld [vmem:[%s1 + $0x24] sm:$0xf]
  %v32 = vld [vmem:[%s1 + $0x28] sm:$0xf]
  %v33 = vld [vmem:[%s1 + $0x2c] sm:$0xf]
  %v34 = vld [vmem:[%s1 + $0x30] sm:$0xf]
  %v35 = vld [vmem:[%s1 + $0x34] sm:$0xf]
  %v36 = vld [vmem:[%s1 + $0x38] sm:$0xf]
  %v37 = vld [vmem:[%s1 + $0x3c] sm:$0xf]
  %v38 = vld [vmem:[%s1 + $0x40] sm:$0xf]
  %v39 = vld [vmem:[%s1 + $0x44] sm:$0xf]
  %v40 = vld [vmem:[%s1 + $0x48] sm:$0xf]
  %v41 = vld [vmem:[%s1 + $0x4c] sm:$0xf]
  %v42 = vld [vmem:[%s1 + $0x50] sm:$0xf]
  %v43 = vld [vmem:[%s1 + $0x54] sm:$0xf]
  %v44 = vld [vmem:[%s1 + $0x58] sm:$0xf]
  %v45 = vld [vmem:[%s1 + $0x5c] sm:$0xf]
  %v46 = vld [vmem:[%s1 + $0x60] sm:$0xf]
  %v47 = vld [vmem:[%s1 + $0x64] sm:$0xf]
  %v48 = vld [vmem:[%s1 + $0x68] sm:$0xf]
  %v49 = vld [vmem:[%s1 + $0x6c] sm:$0xf]
  %v50 = vld [vmem:[%s1 + $0x70] sm:$0xf]
  %v51 = vld [vmem:[%s1 + $0x74] sm:$0xf]
  %v52 = vld [vmem:[%s1 + $0x78] sm:$0xf]
  %v53 = vld [vmem:[%s1 + $0x7c] sm:$0xf]
  %v55 = vunpack.c.l.b16 %v21
  %v56 = vunpack.c.h.b16 %v21
  %v57 = vpack.c.b16 %v55, %v55
  %v58 = vpack.c.b16 %v56, %v56
  %v93 = vunpack.c.l.b16 %v22
  %v94 = vunpack.c.l.b16 %v23
  %v95 = vunpack.c.l.b16 %v24
  %v96 = vunpack.c.l.b16 %v25
  %v97 = vunpack.c.l.b16 %v26
  %v98 = vunpack.c.l.b16 %v27
  %v99 = vunpack.c.l.b16 %v28
  %v100 = vunpack.c.l.b16 %v29
  %v101 = vunpack.c.l.b16 %v30
  %v102 = vunpack.c.l.b16 %v31
  %v103 = vunpack.c.l.b16 %v32
  %v104 = vunpack.c.l.b16 %v33
  %v105 = vunpack.c.l.b16 %v34
  %v106 = vunpack.c.l.b16 %v35
  %v107 = vunpack.c.l.b16 %v36
  %v108 = vunpack.c.l.b16 %v37
  %v109 = vunpack.c.l.b16 %v38
  %v110 = vunpack.c.l.b16 %v39
  %v111 = vunpack.c.l.b16 %v40
  %v112 = vunpack.c.l.b16 %v41
  %v113 = vunpack.c.l.b16 %v42
  %v114 = vunpack.c.l.b16 %v43
  %v115 = vunpack.c.l.b16 %v44
  %v116 = vunpack.c.l.b16 %v45
  %v117 = vunpack.c.l.b16 %v46
  %v118 = vunpack.c.l.b16 %v47
  %v119 = vunpack.c.l.b16 %v48
  %v120 = vunpack.c.l.b16 %v49
  %v121 = vunpack.c.l.b16 %v50
  %v122 = vunpack.c.l.b16 %v51
  %v123 = vunpack.c.l.b16 %v52
  %v124 = vunpack.c.l.b16 %v53
  %v125 = vpack.c.b16 %v94, %v93
  %v126 = vpack.c.b16 %v96, %v95
  %v127 = vpack.c.b16 %v98, %v97
  %v128 = vpack.c.b16 %v100, %v99
  %v129 = vpack.c.b16 %v102, %v101
  %v130 = vpack.c.b16 %v104, %v103
  %v131 = vpack.c.b16 %v106, %v105
  %v132 = vpack.c.b16 %v108, %v107
  %v133 = vpack.c.b16 %v110, %v109
  %v134 = vpack.c.b16 %v112, %v111
  %v135 = vpack.c.b16 %v114, %v113
  %v136 = vpack.c.b16 %v116, %v115
  %v137 = vpack.c.b16 %v118, %v117
  %v138 = vpack.c.b16 %v120, %v119
  %v139 = vpack.c.b16 %v122, %v121
  %v140 = vpack.c.b16 %v124, %v123
  %157 = vmatprep.subr.bf16.mxu0 0
  %158 = vmatpush1.bf16.msra.mxu0 %v132
  %159 = vmatprep.subr.bf16.mxu0 0
  %160 = vmatpush1.bf16.msra.mxu0 %v131
  %161 = vmatprep.subr.bf16.mxu0 0
  %162 = vmatpush1.bf16.msra.mxu0 %v130
  %163 = vmatprep.subr.bf16.mxu0 0
  %164 = vmatpush1.bf16.msra.mxu0 %v129
  %165 = vmatprep.subr.bf16.mxu0 0
  %166 = vmatpush1.bf16.msra.mxu0 %v128
  %167 = vmatprep.subr.bf16.mxu0 0
  %168 = vmatpush1.bf16.msra.mxu0 %v127
  %169 = vmatprep.subr.bf16.mxu0 0
  %170 = vmatpush1.bf16.msra.mxu0 %v126
  %171 = vmatprep.subr.bf16.mxu0 0
  %172 = vmatpush1.bf16.msra.mxu0 %v125
  %173 = vmatprep.subr.bf16.mxu0 0
  %174 = vmatpush2.bf16.msra.mxu0 %v140
  %175 = vmatprep.subr.bf16.mxu0 0
  %176 = vmatpush2.bf16.msra.mxu0 %v139
  %177 = vmatprep.subr.bf16.mxu0 0
  %178 = vmatpush2.bf16.msra.mxu0 %v138
  %179 = vmatprep.subr.bf16.mxu0 0
  %180 = vmatpush2.bf16.msra.mxu0 %v137
  %181 = vmatprep.subr.bf16.mxu0 0
  %182 = vmatpush2.bf16.msra.mxu0 %v136
  %183 = vmatprep.subr.bf16.mxu0 0
  %184 = vmatpush2.bf16.msra.mxu0 %v135
  %185 = vmatprep.subr.bf16.mxu0 0
  %186 = vmatpush2.bf16.msra.mxu0 %v134
  %187 = vmatprep.subr.bf16.mxu0 0
  %188 = vmatpush2.bf16.msra.mxu0 %v133
  %189 = vmatprep.mubr.bf16.mxu0 %v58
  %190 = vmatmul.mubr.bf16.gmra.mxu0 %v57
  %v191 = vpop.f32.mrf.mxu0
  %v192 = vadd.f32 0.0, %v191
  %v193 = vpop.f32.mrf.mxu0
  %v194 = vpop.f32.mrf.mxu0
  %v195 = vpop.f32.mrf.mxu0
  %196 = vdwg.mxu0
  %v197 = vadd.f32 %v20, %v192
  %198 = vst [vmem:[#allocation2] sm:$0xff] %v197
  // Predicated region
  $region18: #{net_forward.34} parent=0 // pred_check
    %p199 = pneg %p15
  $region19: #{net_forward.34} parent=0 // pred_check_branch
    %201 = sbr.rel (%p199) target = $region21
  $region20: #{net_forward.34} parent=0 // pred_region
    %v202 = vld [vmem:[#allocation2] sm:$0xff]
    %v203 = vld [vmem:[%s2] sm:$0x1]
    %v205 = vlaneseq
    %v206 = vshrl.u32 %v205, 7
    %v207 = vsub.s32 0, %v206
    %v208 = vrot.slane %v203, %v207
    %v210 = vadd.f32 %v202, %v208
    %v211 = vmax.f32 %v210, 0.0
    %v212 = vpack.c.bf16 %v211, %v211
    %213 = vst [vmem:[%s3] sm:$0xf] %v212
  $region21: #{net_forward.34} parent=0 // pred_fallthru
    _
  // Predicated region
  $region22: #{net_forward.34} parent=0 // pred_check
    _
  $region23: #{net_forward.34} parent=0 // pred_check_branch
    %215 = sbr.rel (0) target = $region25
  $region24: #{net_forward.34} parent=0 // pred_region
    _
  $region25: #{net_forward.34} parent=0 // pred_fallthru
    _
  // Predicated region
  $region26: #{net_forward.34} parent=0 // pred_check
    _
  $region27: #{net_forward.34} parent=0 // pred_check_branch
    %217 = sbr.rel (0) target = $region29
  $region28: #{net_forward.34} parent=0 // pred_region
    _
  $region29: #{net_forward.34} parent=0 // pred_fallthru
    _

// kernel: net_forward.36
$region0: #{net_forward.36}
  #allocation0 [shape = 'u32[]', space=smem, size = 0x4, offset = 0x4, fixed_abs, tag = 'smem constant byte address 0x4 - core index']
  #allocation1 [shape = 'u32[144,128]{1,0:T(1,128)}', space=vmem, size = 0x12000, scoped, tag = 'internal scratch']
  #allocation2 [shape = 'f32[8,512]{1,0:T(8,128)}', space=vmem, size = 0x4000, scoped, tag = 'scratch operand']
  %s0 = inlined_call_operand.vmem [shape: bf16[8,256], index: 0, kind: input, shape index: {}]
  %s1 = inlined_call_operand.vmem [shape: bf16[256,512], index: 1, kind: input, shape index: {}]
  %s2 = inlined_call_operand.vmem [shape: f32[1,512], index: 2, kind: input, shape index: {}]
  %s3 = inlined_call_operand.vmem [shape: bf16[8,512], index: 3, kind: output, shape index: {}]
  %s4 = sld [smem:[#allocation0]]
  $region30: #{net_forward.36} parent=0
    _
  %s6 = ssub.s32 1, %s4
  %s7 = scalar_select 0, %s6, %s4
  // Predicated region
  $region2: #{net_forward.36} parent=0 // pred_check
    _
  $region3: #{net_forward.36} parent=0 // pred_check_branch
    %9 = sbr.rel (0) target = $region5
  $region4: #{net_forward.36} parent=0 // pred_region
    _
  $region5: #{net_forward.36} parent=0 // pred_fallthru
    _
  // Predicated region
  $region6: #{net_forward.36} parent=0 // pred_check
    _
  $region7: #{net_forward.36} parent=0 // pred_check_branch
    %11 = sbr.rel (0) target = $region9
  $region8: #{net_forward.36} parent=0 // pred_region
    _
  $region9: #{net_forward.36} parent=0 // pred_fallthru
    _
  // Predicated region
  $region10: #{net_forward.36} parent=0 // pred_check
    _
  $region11: #{net_forward.36} parent=0 // pred_check_branch
    %13 = sbr.rel (0) target = $region13
  $region12: #{net_forward.36} parent=0 // pred_region
    _
  $region13: #{net_forward.36} parent=0 // pred_fallthru
    _
  %p14 = scmp.eq.s32.totalorder 0, 0
  // Predicated region
  $region14: #{net_forward.36} parent=0 // pred_check
    %p15 = pneg %p14
  $region15: #{net_forward.36} parent=0 // pred_check_branch
    %17 = sbr.rel (%p15) target = $region17
  $region16: #{net_forward.36} parent=0 // pred_region
    %18 = vst [vmem:[#allocation2] sm:$0xff] 0.0
    %19 = vst [vmem:[#allocation2 + $0x8] sm:$0xff] 0.0
    %20 = vst [vmem:[#allocation2 + $0x10] sm:$0xff] 0.0
    %21 = vst [vmem:[#allocation2 + $0x18] sm:$0xff] 0.0
  $region17: #{net_forward.36} parent=0 // pred_fallthru
    _
  %v22 = vld [vmem:[#allocation2] sm:$0xff]
  %v23 = vld [vmem:[#allocation2 + $0x8] sm:$0xff]
  %v24 = vld [vmem:[#allocation2 + $0x10] sm:$0xff]
  %v25 = vld [vmem:[#allocation2 + $0x18] sm:$0xff]
  %v26 = vld [vmem:[%s0] sm:$0xff]
  %v27 = vld [vmem:[%s1] sm:$0xff]
  %v28 = vld [vmem:[%s1 + $0x8] sm:$0xff]
  %v29 = vld [vmem:[%s1 + $0x10] sm:$0xff]
  %v30 = vld [vmem:[%s1 + $0x18] sm:$0xff]
  %v31 = vld [vmem:[%s1 + $0x20] sm:$0xff]
  %v32 = vld [vmem:[%s1 + $0x28] sm:$0xff]
  %v33 = vld [vmem:[%s1 + $0x30] sm:$0xff]
  %v34 = vld [vmem:[%s1 + $0x38] sm:$0xff]
  %v35 = vld [vmem:[%s1 + $0x40] sm:$0xff]
  %v36 = vld [vmem:[%s1 + $0x48] sm:$0xff]
  %v37 = vld [vmem:[%s1 + $0x50] sm:$0xff]
  %v38 = vld [vmem:[%s1 + $0x58] sm:$0xff]
  %v39 = vld [vmem:[%s1 + $0x60] sm:$0xff]
  %v40 = vld [vmem:[%s1 + $0x68] sm:$0xff]
  %v41 = vld [vmem:[%s1 + $0x70] sm:$0xff]
  %v42 = vld [vmem:[%s1 + $0x78] sm:$0xff]
  %v43 = vld [vmem:[%s1 + $0x80] sm:$0xff]
  %v44 = vld [vmem:[%s1 + $0x88] sm:$0xff]
  %v45 = vld [vmem:[%s1 + $0x90] sm:$0xff]
  %v46 = vld [vmem:[%s1 + $0x98] sm:$0xff]
  %v47 = vld [vmem:[%s1 + $0xa0] sm:$0xff]
  %v48 = vld [vmem:[%s1 + $0xa8] sm:$0xff]
  %v49 = vld [vmem:[%s1 + $0xb0] sm:$0xff]
  %v50 = vld [vmem:[%s1 + $0xb8] sm:$0xff]
  %v51 = vld [vmem:[%s1 + $0xc0] sm:$0xff]
  %v52 = vld [vmem:[%s1 + $0xc8] sm:$0xff]
  %v53 = vld [vmem:[%s1 + $0xd0] sm:$0xff]
  %v54 = vld [vmem:[%s1 + $0xd8] sm:$0xff]
  %v55 = vld [vmem:[%s1 + $0xe0] sm:$0xff]
  %v56 = vld [vmem:[%s1 + $0xe8] sm:$0xff]
  %v57 = vld [vmem:[%s1 + $0xf0] sm:$0xff]
  %v58 = vld [vmem:[%s1 + $0xf8] sm:$0xff]
  %v59 = vld [vmem:[%s1 + $0x100] sm:$0xff]
  %v60 = vld [vmem:[%s1 + $0x108] sm:$0xff]
  %v61 = vld [vmem:[%s1 + $0x110] sm:$0xff]
  %v62 = vld [vmem:[%s1 + $0x118] sm:$0xff]
  %v63 = vld [vmem:[%s1 + $0x120] sm:$0xff]
  %v64 = vld [vmem:[%s1 + $0x128] sm:$0xff]
  %v65 = vld [vmem:[%s1 + $0x130] sm:$0xff]
  %v66 = vld [vmem:[%s1 + $0x138] sm:$0xff]
  %v67 = vld [vmem:[%s1 + $0x140] sm:$0xff]
  %v68 = vld [vmem:[%s1 + $0x148] sm:$0xff]
  %v69 = vld [vmem:[%s1 + $0x150] sm:$0xff]
  %v70 = vld [vmem:[%s1 + $0x158] sm:$0xff]
  %v71 = vld [vmem:[%s1 + $0x160] sm:$0xff]
  %v72 = vld [vmem:[%s1 + $0x168] sm:$0xff]
  %v73 = vld [vmem:[%s1 + $0x170] sm:$0xff]
  %v74 = vld [vmem:[%s1 + $0x178] sm:$0xff]
  %v75 = vld [vmem:[%s1 + $0x180] sm:$0xff]
  %v76 = vld [vmem:[%s1 + $0x188] sm:$0xff]
  %v77 = vld [vmem:[%s1 + $0x190] sm:$0xff]
  %v78 = vld [vmem:[%s1 + $0x198] sm:$0xff]
  %v79 = vld [vmem:[%s1 + $0x1a0] sm:$0xff]
  %v80 = vld [vmem:[%s1 + $0x1a8] sm:$0xff]
  %v81 = vld [vmem:[%s1 + $0x1b0] sm:$0xff]
  %v82 = vld [vmem:[%s1 + $0x1b8] sm:$0xff]
  %v83 = vld [vmem:[%s1 + $0x1c0] sm:$0xff]
  %v84 = vld [vmem:[%s1 + $0x1c8] sm:$0xff]
  %v85 = vld [vmem:[%s1 + $0x1d0] sm:$0xff]
  %v86 = vld [vmem:[%s1 + $0x1d8] sm:$0xff]
  %v87 = vld [vmem:[%s1 + $0x1e0] sm:$0xff]
  %v88 = vld [vmem:[%s1 + $0x1e8] sm:$0xff]
  %v89 = vld [vmem:[%s1 + $0x1f0] sm:$0xff]
  %v90 = vld [vmem:[%s1 + $0x1f8] sm:$0xff]
  %v92 = vunpack.c.l.b16 %v26
  %v93 = vunpack.c.h.b16 %v26
  %v94 = vpack.c.b16 %v92, %v92
  %v95 = vpack.c.b16 %v93, %v93
  %v162 = vunpack.c.l.b16 %v27
  %v163 = vunpack.c.h.b16 %v27
  %v164 = vunpack.c.l.b16 %v28
  %v165 = vunpack.c.h.b16 %v28
  %v166 = vunpack.c.l.b16 %v29
  %v167 = vunpack.c.h.b16 %v29
  %v168 = vunpack.c.l.b16 %v30
  %v169 = vunpack.c.h.b16 %v30
  %v170 = vunpack.c.l.b16 %v31
  %v171 = vunpack.c.h.b16 %v31
  %v172 = vunpack.c.l.b16 %v32
  %v173 = vunpack.c.h.b16 %v32
  %v174 = vunpack.c.l.b16 %v33
  %v175 = vunpack.c.h.b16 %v33
  %v176 = vunpack.c.l.b16 %v34
  %v177 = vunpack.c.h.b16 %v34
  %v178 = vunpack.c.l.b16 %v35
  %v179 = vunpack.c.h.b16 %v35
  %v180 = vunpack.c.l.b16 %v36
  %v181 = vunpack.c.h.b16 %v36
  %v182 = vunpack.c.l.b16 %v37
  %v183 = vunpack.c.h.b16 %v37
  %v184 = vunpack.c.l.b16 %v38
  %v185 = vunpack.c.h.b16 %v38
  %v186 = vunpack.c.l.b16 %v39
  %v187 = vunpack.c.h.b16 %v39
  %v188 = vunpack.c.l.b16 %v40
  %v189 = vunpack.c.h.b16 %v40
  %v190 = vunpack.c.l.b16 %v41
  %v191 = vunpack.c.h.b16 %v41
  %v192 = vunpack.c.l.b16 %v42
  %v193 = vunpack.c.h.b16 %v42
  %v194 = vunpack.c.l.b16 %v43
  %v195 = vunpack.c.h.b16 %v43
  %v196 = vunpack.c.l.b16 %v44
  %v197 = vunpack.c.h.b16 %v44
  %v198 = vunpack.c.l.b16 %v45
  %v199 = vunpack.c.h.b16 %v45
  %v200 = vunpack.c.l.b16 %v46
  %v201 = vunpack.c.h.b16 %v46
  %v202 = vunpack.c.l.b16 %v47
  %v203 = vunpack.c.h.b16 %v47
  %v204 = vunpack.c.l.b16 %v48
  %v205 = vunpack.c.h.b16 %v48
  %v206 = vunpack.c.l.b16 %v49
  %v207 = vunpack.c.h.b16 %v49
  %v208 = vunpack.c.l.b16 %v50
  %v209 = vunpack.c.h.b16 %v50
  %v210 = vunpack.c.l.b16 %v51
  %v211 = vunpack.c.h.b16 %v51
  %v212 = vunpack.c.l.b16 %v52
  %v213 = vunpack.c.h.b16 %v52
  %v214 = vunpack.c.l.b16 %v53
  %v215 = vunpack.c.h.b16 %v53
  %v216 = vunpack.c.l.b16 %v54
  %v217 = vunpack.c.h.b16 %v54
  %v218 = vunpack.c.l.b16 %v55
  %v219 = vunpack.c.h.b16 %v55
  %v220 = vunpack.c.l.b16 %v56
  %v221 = vunpack.c.h.b16 %v56
  %v222 = vunpack.c.l.b16 %v57
  %v223 = vunpack.c.h.b16 %v57
  %v224 = vunpack.c.l.b16 %v58
  %v225 = vunpack.c.h.b16 %v58
  %v226 = vunpack.c.l.b16 %v59
  %v227 = vunpack.c.h.b16 %v59
  %v228 = vunpack.c.l.b16 %v60
  %v229 = vunpack.c.h.b16 %v60
  %v230 = vunpack.c.l.b16 %v61
  %v231 = vunpack.c.h.b16 %v61
  %v232 = vunpack.c.l.b16 %v62
  %v233 = vunpack.c.h.b16 %v62
  %v234 = vunpack.c.l.b16 %v63
  %v235 = vunpack.c.h.b16 %v63
  %v236 = vunpack.c.l.b16 %v64
  %v237 = vunpack.c.h.b16 %v64
  %v238 = vunpack.c.l.b16 %v65
  %v239 = vunpack.c.h.b16 %v65
  %v240 = vunpack.c.l.b16 %v66
  %v241 = vunpack.c.h.b16 %v66
  %v242 = vunpack.c.l.b16 %v67
  %v243 = vunpack.c.h.b16 %v67
  %v244 = vunpack.c.l.b16 %v68
  %v245 = vunpack.c.h.b16 %v68
  %v246 = vunpack.c.l.b16 %v69
  %v247 = vunpack.c.h.b16 %v69
  %v248 = vunpack.c.l.b16 %v70
  %v249 = vunpack.c.h.b16 %v70
  %v250 = vunpack.c.l.b16 %v71
  %v251 = vunpack.c.h.b16 %v71
  %v252 = vunpack.c.l.b16 %v72
  %v253 = vunpack.c.h.b16 %v72
  %v254 = vunpack.c.l.b16 %v73
  %v255 = vunpack.c.h.b16 %v73
  %v256 = vunpack.c.l.b16 %v74
  %v257 = vunpack.c.h.b16 %v74
  %v258 = vunpack.c.l.b16 %v75
  %v259 = vunpack.c.h.b16 %v75
  %v260 = vunpack.c.l.b16 %v76
  %v261 = vunpack.c.h.b16 %v76
  %v262 = vunpack.c.l.b16 %v77
  %v263 = vunpack.c.h.b16 %v77
  %v264 = vunpack.c.l.b16 %v78
  %v265 = vunpack.c.h.b16 %v78
  %v266 = vunpack.c.l.b16 %v79
  %v267 = vunpack.c.h.b16 %v79
  %v268 = vunpack.c.l.b16 %v80
  %v269 = vunpack.c.h.b16 %v80
  %v270 = vunpack.c.l.b16 %v81
  %v271 = vunpack.c.h.b16 %v81
  %v272 = vunpack.c.l.b16 %v82
  %v273 = vunpack.c.h.b16 %v82
  %v274 = vunpack.c.l.b16 %v83
  %v275 = vunpack.c.h.b16 %v83
  %v276 = vunpack.c.l.b16 %v84
  %v277 = vunpack.c.h.b16 %v84
  %v278 = vunpack.c.l.b16 %v85
  %v279 = vunpack.c.h.b16 %v85
  %v280 = vunpack.c.l.b16 %v86
  %v281 = vunpack.c.h.b16 %v86
  %v282 = vunpack.c.l.b16 %v87
  %v283 = vunpack.c.h.b16 %v87
  %v284 = vunpack.c.l.b16 %v88
  %v285 = vunpack.c.h.b16 %v88
  %v286 = vunpack.c.l.b16 %v89
  %v287 = vunpack.c.h.b16 %v89
  %v288 = vunpack.c.l.b16 %v90
  %v289 = vunpack.c.h.b16 %v90
  %v290 = vpack.c.b16 %v166, %v162
  %v291 = vpack.c.b16 %v167, %v163
  %v292 = vpack.c.b16 %v168, %v164
  %v293 = vpack.c.b16 %v169, %v165
  %v294 = vpack.c.b16 %v174, %v170
  %v295 = vpack.c.b16 %v175, %v171
  %v296 = vpack.c.b16 %v176, %v172
  %v297 = vpack.c.b16 %v177, %v173
  %v298 = vpack.c.b16 %v182, %v178
  %v299 = vpack.c.b16 %v183, %v179
  %v300 = vpack.c.b16 %v184, %v180
  %v301 = vpack.c.b16 %v185, %v181
  %v302 = vpack.c.b16 %v190, %v186
  %v303 = vpack.c.b16 %v191, %v187
  %v304 = vpack.c.b16 %v192, %v188
  %v305 = vpack.c.b16 %v193, %v189
  %v306 = vpack.c.b16 %v198, %v194
  %v307 = vpack.c.b16 %v199, %v195
  %v308 = vpack.c.b16 %v200, %v196
  %v309 = vpack.c.b16 %v201, %v197
  %v310 = vpack.c.b16 %v206, %v202
  %v311 = vpack.c.b16 %v207, %v203
  %v312 = vpack.c.b16 %v208, %v204
  %v313 = vpack.c.b16 %v209, %v205
  %v314 = vpack.c.b16 %v214, %v210
  %v315 = vpack.c.b16 %v215, %v211
  %v316 = vpack.c.b16 %v216, %v212
  %v317 = vpack.c.b16 %v217, %v213
  %v318 = vpack.c.b16 %v222, %v218
  %v319 = vpack.c.b16 %v223, %v219
  %v320 = vpack.c.b16 %v224, %v220
  %v321 = vpack.c.b16 %v225, %v221
  %v322 = vpack.c.b16 %v230, %v226
  %v323 = vpack.c.b16 %v231, %v227
  %v324 = vpack.c.b16 %v232, %v228
  %v325 = vpack.c.b16 %v233, %v229
  %v326 = vpack.c.b16 %v238, %v234
  %v327 = vpack.c.b16 %v239, %v235
  %v328 = vpack.c.b16 %v240, %v236
  %v329 = vpack.c.b16 %v241, %v237
  %v330 = vpack.c.b16 %v246, %v242
  %v331 = vpack.c.b16 %v247, %v243
  %v332 = vpack.c.b16 %v248, %v244
  %v333 = vpack.c.b16 %v249, %v245
  %v334 = vpack.c.b16 %v254, %v250
  %v335 = vpack.c.b16 %v255, %v251
  %v336 = vpack.c.b16 %v256, %v252
  %v337 = vpack.c.b16 %v257, %v253
  %v338 = vpack.c.b16 %v262, %v258
  %v339 = vpack.c.b16 %v263, %v259
  %v340 = vpack.c.b16 %v264, %v260
  %v341 = vpack.c.b16 %v265, %v261
  %v342 = vpack.c.b16 %v270, %v266
  %v343 = vpack.c.b16 %v271, %v267
  %v344 = vpack.c.b16 %v272, %v268
  %v345 = vpack.c.b16 %v273, %v269
  %v346 = vpack.c.b16 %v278, %v274
  %v347 = vpack.c.b16 %v279, %v275
  %v348 = vpack.c.b16 %v280, %v276
  %v349 = vpack.c.b16 %v281, %v277
  %v350 = vpack.c.b16 %v286, %v282
  %v351 = vpack.c.b16 %v287, %v283
  %v352 = vpack.c.b16 %v288, %v284
  %v353 = vpack.c.b16 %v289, %v285
  %418 = vmatprep.subr.bf16.mxu0 %v319
  %419 = vmatpush1.bf16.msra.mxu0 %v318
  %420 = vmatprep.subr.bf16.mxu0 %v315
  %421 = vmatpush1.bf16.msra.mxu0 %v314
  %422 = vmatprep.subr.bf16.mxu0 %v311
  %423 = vmatpush1.bf16.msra.mxu0 %v310
  %424 = vmatprep.subr.bf16.mxu0 %v307
  %425 = vmatpush1.bf16.msra.mxu0 %v306
  %426 = vmatprep.subr.bf16.mxu0 %v303
  %427 = vmatpush1.bf16.msra.mxu0 %v302
  %428 = vmatprep.subr.bf16.mxu0 %v299
  %429 = vmatpush1.bf16.msra.mxu0 %v298
  %430 = vmatprep.subr.bf16.mxu0 %v295
  %431 = vmatpush1.bf16.msra.mxu0 %v294
  %432 = vmatprep.subr.bf16.mxu0 %v291
  %433 = vmatpush1.bf16.msra.mxu0 %v290
  %434 = vmatprep.subr.bf16.mxu0 %v351
  %435 = vmatpush2.bf16.msra.mxu0 %v350
  %436 = vmatprep.subr.bf16.mxu0 %v347
  %437 = vmatpush2.bf16.msra.mxu0 %v346
  %438 = vmatprep.subr.bf16.mxu0 %v343
  %439 = vmatpush2.bf16.msra.mxu0 %v342
  %440 = vmatprep.subr.bf16.mxu0 %v339
  %441 = vmatpush2.bf16.msra.mxu0 %v338
  %442 = vmatprep.subr.bf16.mxu0 %v335
  %443 = vmatpush2.bf16.msra.mxu0 %v334
  %444 = vmatprep.subr.bf16.mxu0 %v331
  %445 = vmatpush2.bf16.msra.mxu0 %v330
  %446 = vmatprep.subr.bf16.mxu0 %v327
  %447 = vmatpush2.bf16.msra.mxu0 %v326
  %448 = vmatprep.subr.bf16.mxu0 %v323
  %449 = vmatpush2.bf16.msra.mxu0 %v322
  %450 = vmatprep.mubr.bf16.mxu0 %v95
  %451 = vmatmul.mubr.bf16.gmra.mxu0 %v94
  %v452 = vpop.f32.mrf.mxu0
  %v453 = vadd.f32 0.0, %v452
  %v454 = vpop.f32.mrf.mxu0
  %v455 = vadd.f32 0.0, %v454
  %v456 = vpop.f32.mrf.mxu0
  %v457 = vpop.f32.mrf.mxu0
  %458 = vdwg.mxu0
  %459 = vmatprep.subr.bf16.mxu0 %v321
  %460 = vmatpush1.bf16.msra.mxu0 %v320
  %461 = vmatprep.subr.bf16.mxu0 %v317
  %462 = vmatpush1.bf16.msra.mxu0 %v316
  %463 = vmatprep.subr.bf16.mxu0 %v313
  %464 = vmatpush1.bf16.msra.mxu0 %v312
  %465 = vmatprep.subr.bf16.mxu0 %v309
  %466 = vmatpush1.bf16.msra.mxu0 %v308
  %467 = vmatprep.subr.bf16.mxu0 %v305
  %468 = vmatpush1.bf16.msra.mxu0 %v304
  %469 = vmatprep.subr.bf16.mxu0 %v301
  %470 = vmatpush1.bf16.msra.mxu0 %v300
  %471 = vmatprep.subr.bf16.mxu0 %v297
  %472 = vmatpush1.bf16.msra.mxu0 %v296
  %473 = vmatprep.subr.bf16.mxu0 %v293
  %474 = vmatpush1.bf16.msra.mxu0 %v292
  %475 = vmatprep.subr.bf16.mxu0 %v353
  %476 = vmatpush2.bf16.msra.mxu0 %v352
  %477 = vmatprep.subr.bf16.mxu0 %v349
  %478 = vmatpush2.bf16.msra.mxu0 %v348
  %479 = vmatprep.subr.bf16.mxu0 %v345
  %480 = vmatpush2.bf16.msra.mxu0 %v344
  %481 = vmatprep.subr.bf16.mxu0 %v341
  %482 = vmatpush2.bf16.msra.mxu0 %v340
  %483 = vmatprep.subr.bf16.mxu0 %v337
  %484 = vmatpush2.bf16.msra.mxu0 %v336
  %485 = vmatprep.subr.bf16.mxu0 %v333
  %486 = vmatpush2.bf16.msra.mxu0 %v332
  %487 = vmatprep.subr.bf16.mxu0 %v329
  %488 = vmatpush2.bf16.msra.mxu0 %v328
  %489 = vmatprep.subr.bf16.mxu0 %v325
  %490 = vmatpush2.bf16.msra.mxu0 %v324
  %491 = vmatprep.mubr.bf16.mxu0 %v95
  %492 = vmatmul.mubr.bf16.gmra.mxu0 %v94
  %v493 = vpop.f32.mrf.mxu0
  %v494 = vadd.f32 0.0, %v493
  %v495 = vpop.f32.mrf.mxu0
  %v496 = vadd.f32 0.0, %v495
  %v497 = vpop.f32.mrf.mxu0
  %v498 = vpop.f32.mrf.mxu0
  %499 = vdwg.mxu0
  %v500 = vadd.f32 %v22, %v453
  %v501 = vadd.f32 %v23, %v455
  %v502 = vadd.f32 %v24, %v494
  %v503 = vadd.f32 %v25, %v496
  %504 = vst [vmem:[#allocation2] sm:$0xff] %v500
  %505 = vst [vmem:[#allocation2 + $0x8] sm:$0xff] %v501
  %506 = vst [vmem:[#allocation2 + $0x10] sm:$0xff] %v502
  %507 = vst [vmem:[#allocation2 + $0x18] sm:$0xff] %v503
  // Predicated region
  $region18: #{net_forward.36} parent=0 // pred_check
    %p508 = pneg %p14
  $region19: #{net_forward.36} parent=0 // pred_check_branch
    %510 = sbr.rel (%p508) target = $region21
  $region20: #{net_forward.36} parent=0 // pred_region
    %v511 = vld [vmem:[#allocation2] sm:$0xff]
    %v512 = vld [vmem:[#allocation2 + $0x8] sm:$0xff]
    %v513 = vld [vmem:[#allocation2 + $0x10] sm:$0xff]
    %v514 = vld [vmem:[#allocation2 + $0x18] sm:$0xff]
    %v515 = vld [vmem:[%s2] sm:$0xf]
    %v517 = vlaneseq
    %v518 = vshrl.u32 %v517, 7
    %v519 = vsub.s32 0, %v518
    %v520 = vrot.slane %v515, %v519
    %v521 = vlaneseq
    %v522 = vshrl.u32 %v521, 7
    %v523 = vsub.s32 1, %v522
    %v524 = vrot.slane %v515, %v523
    %v525 = vlaneseq
    %v526 = vshrl.u32 %v525, 7
    %v527 = vsub.s32 2, %v526
    %v528 = vrot.slane %v515, %v527
    %v529 = vlaneseq
    %v530 = vshrl.u32 %v529, 7
    %v531 = vsub.s32 3, %v530
    %v532 = vrot.slane %v515, %v531
    %v537 = vadd.f32 %v511, %v520
    %v538 = vadd.f32 %v512, %v524
    %v539 = vadd.f32 %v513, %v528
    %v540 = vadd.f32 %v514, %v532
    %v541 = vpack.c.bf16 %v537, %v537
    %v542 = vpack.c.bf16 %v538, %v538
    %v543 = vpack.c.bf16 %v539, %v539
    %v544 = vpack.c.bf16 %v540, %v540
    %v549 = vunpack.c.l.b16 %v541
    %v550 = vunpack.c.l.b16 %v542
    %v551 = vunpack.c.l.b16 %v543
    %v552 = vunpack.c.l.b16 %v544
    %v553 = vpack.c.b16 %v550, %v549
    %v554 = vpack.c.b16 %v552, %v551
    %557 = vst [vmem:[%s3] sm:$0xff] %v553
    %558 = vst [vmem:[%s3 + $0x8] sm:$0xff] %v554
  $region21: #{net_forward.36} parent=0 // pred_fallthru
    _
  // Predicated region
  $region22: #{net_forward.36} parent=0 // pred_check
    _
  $region23: #{net_forward.36} parent=0 // pred_check_branch
    %560 = sbr.rel (0) target = $region25
  $region24: #{net_forward.36} parent=0 // pred_region
    _
  $region25: #{net_forward.36} parent=0 // pred_fallthru
    _
  // Predicated region
  $region26: #{net_forward.36} parent=0 // pred_check
    _
  $region27: #{net_forward.36} parent=0 // pred_check_branch
    %562 = sbr.rel (0) target = $region29
  $region28: #{net_forward.36} parent=0 // pred_region
    _
  $region29: #{net_forward.36} parent=0 // pred_fallthru
    _

// kernel: net_forward.38
$region0: #{net_forward.38}
  #allocation0 [shape = 'u32[]', space=smem, size = 0x4, offset = 0x4, fixed_abs, tag = 'smem constant byte address 0x4 - core index']
  #allocation1 [shape = 'u32[144,128]{1,0:T(1,128)}', space=vmem, size = 0x12000, scoped, tag = 'internal scratch']
  #allocation2 [shape = 'f32[2,128]{1,0:T(2,128)}', space=vmem, size = 0x400, scoped, tag = 'scratch operand']
  %s0 = inlined_call_operand.vmem [shape: bf16[2,8,512], index: 0, kind: input, shape index: {}]
  %s1 = inlined_call_operand.vmem [shape: f32[2,512], index: 1, kind: output, shape index: {}]
  %s2 = sld [smem:[#allocation0]]
  $region86: #{net_forward.38} parent=0
    _
  %s4 = ssub.s32 1, %s2
  %s5 = scalar_select 0, %s4, %s2
  $region1: #{net_forward.38} parent=0
    #allocation3 [shape = 'u8[8192]{0}', space=vmem, size = 0x2000, scoped, tag = 'input window, operand 0']
    loop: start=0, step=1, limit=6
    $region2: #{net_forward.38} parent=1 // loop_pre_header
      _
    $region3: #{net_forward.38} parent=1 // loop_header
      %s7 = sphi 0, %s11
      %p8 = scmp.ge.s32.totalorder %s7, 6
      %s14 = sphi 0, %s26
      %s15 = sphi 0, %s22
      %s16 = sphi 0, %s14
      %s17 = sphi 0, %s15
      %s18 = sphi 0, %s16
      %s19 = sphi 0, %s17
      %s31 = sphi 0, %s33
      %s34 = sphi 0, %s31
      %s35 = sphi 0, %s34
      %s51 = sphi 0, %s35
      %s57 = sphi 0, %s59
      %s60 = sphi 0, %s57
      %s61 = sphi 0, %s60
      %s77 = sphi 0, %s61
    $region4: #{net_forward.38} parent=1 // loop_header_branch
      %10 = sbr.rel (%p8) target = $region8
    $region5: #{net_forward.38} parent=1 // loop_body
      %s12 = ssub.s32 %s7, 1
      %s13 = ssub.s32 %s7, 2
      %s20 = sadd.s32 1, %s15
      %p21 = scmp.ge.s32.totalorder %s20, 1
      %s22 = scalar_select %p21, 0, %s20
      %s23 = sadd.s32 1, %s14
      %s24 = scalar_select %p21, %s23, %s14
      %p25 = scmp.ge.s32.totalorder %s24, 4
      %s26 = scalar_select %p25, 0, %s24
      %s27 = ssub.s32 %s15, %s22
      %s28 = ssub.s32 %s14, %s26
      %s29 = sor.u32 %s27, %s28
      %p30 = scmp.eq.s32.totalorder %s29, 0
      %s32 = sadd.s32 %s31, 1
      %s33 = scalar_select %p30, %s31, %s32
      %p36 = pneg %p30
      %p37 = scmp.eq.s32.totalorder %s7, 3
      %p38 = por %p36, %p37
      %p39 = scmp.ne.s32.totalorder %s31, %s34
      %p40 = scmp.eq.s32.totalorder %s7, 0
      %p41 = por %p39, %p40
      %p42 = scmp.ne.s32.totalorder %s31, %s34
      %p43 = scmp.eq.s32.totalorder %s12, 3
      %p44 = por %p42, %p43
      %p45 = scmp.ne.s32.totalorder %s34, %s35
      %p46 = scmp.eq.s32.totalorder %s12, 0
      %p47 = por %p45, %p46
      %p48 = scmp.ne.s32.totalorder %s34, %s35
      %p49 = scmp.eq.s32.totalorder %s13, 3
      %p50 = por %p48, %p49
      %p52 = scmp.ne.s32.totalorder %s35, %s51
      %p53 = scmp.eq.s32.totalorder %s13, 0
      %p54 = por %p52, %p53
      %s55 = ssub.s32 %s14, %s26
      %p56 = scmp.eq.s32.totalorder %s55, 0
      %s58 = sadd.s32 %s57, 1
      %s59 = scalar_select %p56, %s57, %s58
      %p62 = pneg %p56
      %p63 = scmp.eq.s32.totalorder %s7, 3
      %p64 = por %p62, %p63
      %p65 = scmp.ne.s32.totalorder %s57, %s60
      %p66 = scmp.eq.s32.totalorder %s7, 0
      %p67 = por %p65, %p66
      %p68 = scmp.ne.s32.totalorder %s57, %s60
      %p69 = scmp.eq.s32.totalorder %s12, 3
      %p70 = por %p68, %p69
      %p71 = scmp.ne.s32.totalorder %s60, %s61
      %p72 = scmp.eq.s32.totalorder %s12, 0
      %p73 = por %p71, %p72
      %p74 = scmp.ne.s32.totalorder %s60, %s61
      %p75 = scmp.eq.s32.totalorder %s13, 3
      %p76 = por %p74, %p75
      %p78 = scmp.ne.s32.totalorder %s61, %s77
      %p79 = scmp.eq.s32.totalorder %s13, 0
      %p80 = por %p78, %p79
      %p81 = scmp.le.s32.totalorder 1, %s7
      %p82 = scmp.lt.s32.totalorder %s7, 5
      %p83 = pnand %p81, %p82
      %p84 = pneg %p83
      // Predicated region
      $region9: #{net_forward.38} parent=5 // pred_check
        _
      $region10: #{net_forward.38} parent=5 // pred_check_branch
        %86 = sbr.rel (%p83) target = $region12
      $region11: #{net_forward.38} parent=5 // pred_region
        %s87 = ssub.s32 %s7, 1
      $region12: #{net_forward.38} parent=5 // pred_fallthru
        _
      %p88 = scmp.lt.s32.totalorder %s7, 4
      // Predicated region
      $region13: #{net_forward.38} parent=5 // pred_check
        %p89 = pneg %p88
      $region14: #{net_forward.38} parent=5 // pred_check_branch
        %91 = sbr.rel (%p89) target = $region16
      $region15: #{net_forward.38} parent=5 // pred_region
        // Predicated region
        $region17: #{net_forward.38} parent=15 // pred_check
          %p92 = pneg %p41
        $region18: #{net_forward.38} parent=15 // pred_check_branch
          %94 = sbr.rel (%p92) target = $region20
        $region19: #{net_forward.38} parent=15 // pred_region
          %s95 = sand.u32 %s31, 1
          %s96 = sand.u32 %s31, 1
          %s97 = smul.addr %s96, 8
          %s98 = scalar_lea.vmem [#allocation3], %s97
          %s99 = smul.addr %s15, 4
          %s100 = sadd.s32 %s14, %s99
          %s101 = smul.addr %s100, 4
          %s102 = scalar_lea.vmem %s0, %s101
          // Predicated region
          $region21: #{net_forward.38} parent=19 // pred_check
            _
          $region22: #{net_forward.38} parent=19 // pred_check_branch
            %104 = sbr.rel (0) target = $region24
          $region23: #{net_forward.38} parent=19 // pred_region
            // Predicated region
            $region25: #{net_forward.38} parent=23 // pred_check
              _
            $region26: #{net_forward.38} parent=23 // pred_check_branch
              %106 = sbr.rel target = $region28
            $region27: #{net_forward.38} parent=23 // pred_region
              // Predicated region
              $region40: #{net_forward.38} parent=27 // pred_check
                _
              $region41: #{net_forward.38} parent=27 // pred_check_branch
                %124 = sbr.rel (0) target = $region43
              $region42: #{net_forward.38} parent=27 // pred_region
                loop: start=0, step=1, limit=1
                $region44: #{net_forward.38} parent=42 // loop_pre_header
                  _
                $region45: #{net_forward.38} parent=42 // loop_header
                  %s126 = sphi 0, %s130
                  %p127 = scmp.ge.s32.totalorder %s126, 1
                  %s131 = sphi %s102, %s102
                  %s132 = sphi %s98, %s98
                $region46: #{net_forward.38} parent=42 // loop_header_branch
                  %129 = sbr.rel (%p127) target = $region50
                $region47: #{net_forward.38} parent=42 // loop_body
                  _
                $region48: #{net_forward.38} parent=42 // loop_footer
                  %s130 = sadd.s32 1, %s126
                $region49: #{net_forward.38} parent=42 // loop_footer_branch
                  %125 = sbr.rel target = $region45
                $region50: #{net_forward.38} parent=42 // loop_exit
                  _
                %s134 = ssub.s32 16, 1
                loop: start=0, step=1, limit=1
                $region51: #{net_forward.38} parent=42 // loop_pre_header
                  _
                $region52: #{net_forward.38} parent=42 // loop_header
                  %s136 = sphi 0, %s140
                  %p137 = scmp.ge.s32.totalorder %s136, 1
                  %s141 = sphi %s102, %s102
                  %s142 = sphi %s98, %s98
                $region53: #{net_forward.38} parent=42 // loop_header_branch
                  %139 = sbr.rel (%p137) target = $region57
                $region54: #{net_forward.38} parent=42 // loop_body
                  %v143 = vld [vmem:[%s141] sm:%s134]
                  %144 = vst [vmem:[%s142] sm:%s134] %v143
                  %v145 = vld [vmem:[%s141 + $0x10] sm:%s134]
                  %146 = vst [vmem:[%s142 + $0x4] sm:%s134] %v145
                $region55: #{net_forward.38} parent=42 // loop_footer
                  %s140 = sadd.s32 1, %s136
                $region56: #{net_forward.38} parent=42 // loop_footer_branch
                  %135 = sbr.rel target = $region52
                $region57: #{net_forward.38} parent=42 // loop_exit
                  _
              $region43: #{net_forward.38} parent=27 // pred_fallthru
                _
            $region28: #{net_forward.38} parent=23 // pred_fallthru
              _
            // Predicated region
            $region29: #{net_forward.38} parent=23 // pred_check
              _
            $region30: #{net_forward.38} parent=23 // pred_check_branch
              %108 = sbr.rel (0) target = $region32
            $region31: #{net_forward.38} parent=23 // pred_region
              %s110 = ssub.s32 16, 1
              loop: start=0, step=1, limit=1
              $region33: #{net_forward.38} parent=31 // loop_pre_header
                _
              $region34: #{net_forward.38} parent=31 // loop_header
                %s112 = sphi 0, %s116
                %p113 = scmp.ge.s32.totalorder %s112, 1
                %s117 = sphi %s102, %s102
                %s118 = sphi %s98, %s98
              $region35: #{net_forward.38} parent=31 // loop_header_branch
                %115 = sbr.rel (%p113) target = $region39
              $region36: #{net_forward.38} parent=31 // loop_body
                %v119 = vld [vmem:[%s117] sm:%s110]
                %120 = vst [vmem:[%s118] sm:%s110] %v119
                %v121 = vld [vmem:[%s117 + $0x10] sm:%s110]
                %122 = vst [vmem:[%s118 + $0x4] sm:%s110] %v121
              $region37: #{net_forward.38} parent=31 // loop_footer
                %s116 = sadd.s32 1, %s112
              $region38: #{net_forward.38} parent=31 // loop_footer_branch
                %111 = sbr.rel target = $region34
              $region39: #{net_forward.38} parent=31 // loop_exit
                _
            $region32: #{net_forward.38} parent=23 // pred_fallthru
              _
          $region24: #{net_forward.38} parent=19 // pred_fallthru
            _
          %147 = vnop
        $region20: #{net_forward.38} parent=15 // pred_fallthru
          _
      $region16: #{net_forward.38} parent=5 // pred_fallthru
        _
      %p148 = scmp.le.s32.totalorder 1, %s7
      %p149 = scmp.lt.s32.totalorder %s7, 5
      %p150 = pnand %p148, %p149
      %p151 = pneg %p150
      // Predicated region
      $region58: #{net_forward.38} parent=5 // pred_check
        _
      $region59: #{net_forward.38} parent=5 // pred_check_branch
        %153 = sbr.rel (%p150) target = $region61
      $region60: #{net_forward.38} parent=5 // pred_region
        %s154 = ssub.s32 %s7, 1
        %s155 = sand.u32 %s34, 1
        %s156 = sand.u32 %s34, 1
        %s157 = smul.addr %s156, 8
        %s158 = scalar_lea.vmem [#allocation3], %s157
        // Predicated region
        $region62: #{net_forward.38} parent=60 // pred_check
          %p159 = pneg %p47
        $region63: #{net_forward.38} parent=60 // pred_check_branch
          %161 = sbr.rel (%p159) target = $region65
        $region64: #{net_forward.38} parent=60 // pred_region
          _
        $region65: #{net_forward.38} parent=60 // pred_fallthru
          _
        %s162 = sand.u32 %s34, 1
        %s163 = sand.u32 %s34, 1
        %s164 = smul.addr %s163, 8
        %s165 = scalar_lea.vmem [#allocation3], %s164
        %p166 = pneg %p47
        %p167 = pneg %p44
        %p168 = pneg %p73
        %p169 = pneg %p70
        %p170 = scmp.lt.s32.totalorder %s16, 3
        %s171 = scalar_select %p170, %s16, 3
        %s172 = smul.addr %s171, 2
        %s173 = scalar_lea.vmem %s1, %s172
        %p174 = scmp.lt.s32.totalorder %s16, 3
        %s175 = scalar_select %p174, %s16, 3
        %s176 = smul.addr %s175, 2
        %s177 = scalar_lea.vmem %s1, %s176
        %p178 = scmp.eq.s32.totalorder %s17, 0
        // Predicated region
        $region66: #{net_forward.38} parent=60 // pred_check
          %p179 = pneg %p178
        $region67: #{net_forward.38} parent=60 // pred_check_branch
          %181 = sbr.rel (%p179) target = $region69
        $region68: #{net_forward.38} parent=60 // pred_region
          %182 = vst [vmem:[#allocation2] sm:$0x3] 0.0
        $region69: #{net_forward.38} parent=60 // pred_fallthru
          _
        %v183 = vld [vmem:[#allocation2] sm:$0x3]
        %v184 = vld [vmem:[%s158] sm:$0xf]
        %v185 = vld [vmem:[%s158 + $0x4] sm:$0xf]
        %v186 = vunpack.c.l.bf16 %v184
        %v187 = vunpack.c.l.bf16 %v185
        %v188 = vrot.slane %v186, 4
        %v189 = vadd.f32 %v186, %v188
        %v190 = vrot.slane %v189, 2
        %v191 = vadd.f32 %v189, %v190
        %v192 = vrot.slane %v191, 1
        %v193 = vadd.f32 %v191, %v192
        %v194 = vrot.slane %v187, 4
        %v195 = vadd.f32 %v187, %v194
        %v196 = vrot.slane %v195, 2
        %v197 = vadd.f32 %v195, %v196
        %v198 = vrot.slane %v197, 1
        %v199 = vadd.f32 %v197, %v198
        %vm202 = vcmask 1041409
        %v203 = vsel %vm202, %v199, %v193
        %v205 = vadd.f32 %v183, %v203
        %206 = vst [vmem:[#allocation2] sm:$0x3] %v205
        // Predicated region
        $region70: #{net_forward.38} parent=60 // pred_check
          %p207 = pneg %p178
        $region71: #{net_forward.38} parent=60 // pred_check_branch
          %209 = sbr.rel (%p207) target = $region73
        $region72: #{net_forward.38} parent=60 // pred_region
          %v210 = vld [vmem:[#allocation2] sm:$0x3]
          %211 = vst [vmem:[%s177] sm:$0x3] %v210
        $region73: #{net_forward.38} parent=60 // pred_fallthru
          _
        %p212 = scmp.lt.s32.totalorder %s16, 3
        %s213 = scalar_select %p212, %s16, 3
        %s214 = smul.addr %s213, 2
        %s215 = scalar_lea.vmem %s1, %s214
        // Predicated region
        $region74: #{net_forward.38} parent=60 // pred_check
          %p216 = pneg %p70
        $region75: #{net_forward.38} parent=60 // pred_check_branch
          %218 = sbr.rel (%p216) target = $region77
        $region76: #{net_forward.38} parent=60 // pred_region
          _
        $region77: #{net_forward.38} parent=60 // pred_fallthru
          _
      $region61: #{net_forward.38} parent=5 // pred_fallthru
        _
      %p219 = scmp.le.s32.totalorder 2, %s7
      // Predicated region
      $region78: #{net_forward.38} parent=5 // pred_check
        %p220 = pneg %p219
      $region79: #{net_forward.38} parent=5 // pred_check_branch
        %222 = sbr.rel (%p220) target = $region81
      $region80: #{net_forward.38} parent=5 // pred_region
        %s223 = ssub.s32 %s7, 2
        // Predicated region
        $region82: #{net_forward.38} parent=80 // pred_check
          %p224 = pneg %p76
        $region83: #{net_forward.38} parent=80 // pred_check_branch
          %226 = sbr.rel (%p224) target = $region85
        $region84: #{net_forward.38} parent=80 // pred_region
          %p227 = scmp.lt.s32.totalorder %s18, 3
          %s228 = scalar_select %p227, %s18, 3
          %s229 = smul.addr %s228, 2
          %s230 = scalar_lea.vmem %s1, %s229
        $region85: #{net_forward.38} parent=80 // pred_fallthru
          _
      $region81: #{net_forward.38} parent=5 // pred_fallthru
        _
    $region6: #{net_forward.38} parent=1 // loop_footer
      %s11 = sadd.s32 1, %s7
    $region7: #{net_forward.38} parent=1 // loop_footer_branch
      %6 = sbr.rel target = $region3
    $region8: #{net_forward.38} parent=1 // loop_exit
      _

// kernel: net_forward.37
$region0: #{net_forward.37}
  #allocation0 [shape = 'u32[]', space=smem, size = 0x4, offset = 0x4, fixed_abs, tag = 'smem constant byte address 0x4 - core index']
  #allocation1 [shape = 'u32[144,128]{1,0:T(1,128)}', space=vmem, size = 0x12000, scoped, tag = 'internal scratch']
  #allocation2 [shape = 'f32[8,512]{1,0:T(8,128)}', space=vmem, size = 0x4000, scoped, tag = 'scratch operand']
  %s0 = inlined_call_operand.vmem [shape: bf16[8,128], index: 0, kind: input, shape index: {}]
  %s1 = inlined_call_operand.vmem [shape: bf16[128,512], index: 1, kind: input, shape index: {}]
  %s2 = inlined_call_operand.vmem [shape: f32[1,512], index: 2, kind: input, shape index: {}]
  %s3 = inlined_call_operand.vmem [shape: bf16[8,512], index: 3, kind: input, shape index: {}]
  %s4 = inlined_call_operand.vmem [shape: bf16[8,512], index: 4, kind: output, shape index: {}]
  %s5 = sld [smem:[#allocation0]]
  $region34: #{net_forward.37} parent=0
    _
  %s7 = ssub.s32 1, %s5
  %s8 = scalar_select 0, %s7, %s5
  // Predicated region
  $region2: #{net_forward.37} parent=0 // pred_check
    _
  $region3: #{net_forward.37} parent=0 // pred_check_branch
    %10 = sbr.rel (0) target = $region5
  $region4: #{net_forward.37} parent=0 // pred_region
    _
  $region5: #{net_forward.37} parent=0 // pred_fallthru
    _
  // Predicated region
  $region6: #{net_forward.37} parent=0 // pred_check
    _
  $region7: #{net_forward.37} parent=0 // pred_check_branch
    %12 = sbr.rel (0) target = $region9
  $region8: #{net_forward.37} parent=0 // pred_region
    _
  $region9: #{net_forward.37} parent=0 // pred_fallthru
    _
  // Predicated region
  $region10: #{net_forward.37} parent=0 // pred_check
    _
  $region11: #{net_forward.37} parent=0 // pred_check_branch
    %14 = sbr.rel (0) target = $region13
  $region12: #{net_forward.37} parent=0 // pred_region
    _
  $region13: #{net_forward.37} parent=0 // pred_fallthru
    _
  // Predicated region
  $region14: #{net_forward.37} parent=0 // pred_check
    _
  $region15: #{net_forward.37} parent=0 // pred_check_branch
    %16 = sbr.rel (0) target = $region17
  $region16: #{net_forward.37} parent=0 // pred_region
    _
  $region17: #{net_forward.37} parent=0 // pred_fallthru
    _
  %p18 = scmp.eq.s32.totalorder 0, 0
  // Predicated region
  $region18: #{net_forward.37} parent=0 // pred_check
    %p19 = pneg %p18
  $region19: #{net_forward.37} parent=0 // pred_check_branch
    %21 = sbr.rel (%p19) target = $region21
  $region20: #{net_forward.37} parent=0 // pred_region
    %22 = vst [vmem:[#allocation2] sm:$0xff] 0.0
    %23 = vst [vmem:[#allocation2 + $0x8] sm:$0xff] 0.0
    %24 = vst [vmem:[#allocation2 + $0x10] sm:$0xff] 0.0
    %25 = vst [vmem:[#allocation2 + $0x18] sm:$0xff] 0.0
  $region21: #{net_forward.37} parent=0 // pred_fallthru
    _
  %v26 = vld [vmem:[#allocation2] sm:$0xff]
  %v27 = vld [vmem:[#allocation2 + $0x8] sm:$0xff]
  %v28 = vld [vmem:[#allocation2 + $0x10] sm:$0xff]
  %v29 = vld [vmem:[#allocation2 + $0x18] sm:$0xff]
  %v30 = vld [vmem:[%s0] sm:$0xf]
  %v31 = vld [vmem:[%s1] sm:$0xff]
  %v32 = vld [vmem:[%s1 + $0x8] sm:$0xff]
  %v33 = vld [vmem:[%s1 + $0x10] sm:$0xff]
  %v34 = vld [vmem:[%s1 + $0x18] sm:$0xff]
  %v35 = vld [vmem:[%s1 + $0x20] sm:$0xff]
  %v36 = vld [vmem:[%s1 + $0x28] sm:$0xff]
  %v37 = vld [vmem:[%s1 + $0x30] sm:$0xff]
  %v38 = vld [vmem:[%s1 + $0x38] sm:$0xff]
  %v39 = vld [vmem:[%s1 + $0x40] sm:$0xff]
  %v40 = vld [vmem:[%s1 + $0x48] sm:$0xff]
  %v41 = vld [vmem:[%s1 + $0x50] sm:$0xff]
  %v42 = vld [vmem:[%s1 + $0x58] sm:$0xff]
  %v43 = vld [vmem:[%s1 + $0x60] sm:$0xff]
  %v44 = vld [vmem:[%s1 + $0x68] sm:$0xff]
  %v45 = vld [vmem:[%s1 + $0x70] sm:$0xff]
  %v46 = vld [vmem:[%s1 + $0x78] sm:$0xff]
  %v47 = vld [vmem:[%s1 + $0x80] sm:$0xff]
  %v48 = vld [vmem:[%s1 + $0x88] sm:$0xff]
  %v49 = vld [vmem:[%s1 + $0x90] sm:$0xff]
  %v50 = vld [vmem:[%s1 + $0x98] sm:$0xff]
  %v51 = vld [vmem:[%s1 + $0xa0] sm:$0xff]
  %v52 = vld [vmem:[%s1 + $0xa8] sm:$0xff]
  %v53 = vld [vmem:[%s1 + $0xb0] sm:$0xff]
  %v54 = vld [vmem:[%s1 + $0xb8] sm:$0xff]
  %v55 = vld [vmem:[%s1 + $0xc0] sm:$0xff]
  %v56 = vld [vmem:[%s1 + $0xc8] sm:$0xff]
  %v57 = vld [vmem:[%s1 + $0xd0] sm:$0xff]
  %v58 = vld [vmem:[%s1 + $0xd8] sm:$0xff]
  %v59 = vld [vmem:[%s1 + $0xe0] sm:$0xff]
  %v60 = vld [vmem:[%s1 + $0xe8] sm:$0xff]
  %v61 = vld [vmem:[%s1 + $0xf0] sm:$0xff]
  %v62 = vld [vmem:[%s1 + $0xf8] sm:$0xff]
  %v95 = vunpack.c.l.b16 %v31
  %v96 = vunpack.c.h.b16 %v31
  %v97 = vunpack.c.l.b16 %v32
  %v98 = vunpack.c.h.b16 %v32
  %v99 = vunpack.c.l.b16 %v33
  %v100 = vunpack.c.h.b16 %v33
  %v101 = vunpack.c.l.b16 %v34
  %v102 = vunpack.c.h.b16 %v34
  %v103 = vunpack.c.l.b16 %v35
  %v104 = vunpack.c.h.b16 %v35
  %v105 = vunpack.c.l.b16 %v36
  %v106 = vunpack.c.h.b16 %v36
  %v107 = vunpack.c.l.b16 %v37
  %v108 = vunpack.c.h.b16 %v37
  %v109 = vunpack.c.l.b16 %v38
  %v110 = vunpack.c.h.b16 %v38
  %v111 = vunpack.c.l.b16 %v39
  %v112 = vunpack.c.h.b16 %v39
  %v113 = vunpack.c.l.b16 %v40
  %v114 = vunpack.c.h.b16 %v40
  %v115 = vunpack.c.l.b16 %v41
  %v116 = vunpack.c.h.b16 %v41
  %v117 = vunpack.c.l.b16 %v42
  %v118 = vunpack.c.h.b16 %v42
  %v119 = vunpack.c.l.b16 %v43
  %v120 = vunpack.c.h.b16 %v43
  %v121 = vunpack.c.l.b16 %v44
  %v122 = vunpack.c.h.b16 %v44
  %v123 = vunpack.c.l.b16 %v45
  %v124 = vunpack.c.h.b16 %v45
  %v125 = vunpack.c.l.b16 %v46
  %v126 = vunpack.c.h.b16 %v46
  %v127 = vunpack.c.l.b16 %v47
  %v128 = vunpack.c.h.b16 %v47
  %v129 = vunpack.c.l.b16 %v48
  %v130 = vunpack.c.h.b16 %v48
  %v131 = vunpack.c.l.b16 %v49
  %v132 = vunpack.c.h.b16 %v49
  %v133 = vunpack.c.l.b16 %v50
  %v134 = vunpack.c.h.b16 %v50
  %v135 = vunpack.c.l.b16 %v51
  %v136 = vunpack.c.h.b16 %v51
  %v137 = vunpack.c.l.b16 %v52
  %v138 = vunpack.c.h.b16 %v52
  %v139 = vunpack.c.l.b16 %v53
  %v140 = vunpack.c.h.b16 %v53
  %v141 = vunpack.c.l.b16 %v54
  %v142 = vunpack.c.h.b16 %v54
  %v143 = vunpack.c.l.b16 %v55
  %v144 = vunpack.c.h.b16 %v55
  %v145 = vunpack.c.l.b16 %v56
  %v146 = vunpack.c.h.b16 %v56
  %v147 = vunpack.c.l.b16 %v57
  %v148 = vunpack.c.h.b16 %v57
  %v149 = vunpack.c.l.b16 %v58
  %v150 = vunpack.c.h.b16 %v58
  %v151 = vunpack.c.l.b16 %v59
  %v152 = vunpack.c.h.b16 %v59
  %v153 = vunpack.c.l.b16 %v60
  %v154 = vunpack.c.h.b16 %v60
  %v155 = vunpack.c.l.b16 %v61
  %v156 = vunpack.c.h.b16 %v61
  %v157 = vunpack.c.l.b16 %v62
  %v158 = vunpack.c.h.b16 %v62
  %v159 = vpack.c.b16 %v99, %v95
  %v160 = vpack.c.b16 %v100, %v96
  %v161 = vpack.c.b16 %v101, %v97
  %v162 = vpack.c.b16 %v102, %v98
  %v163 = vpack.c.b16 %v107, %v103
  %v164 = vpack.c.b16 %v108, %v104
  %v165 = vpack.c.b16 %v109, %v105
  %v166 = vpack.c.b16 %v110, %v106
  %v167 = vpack.c.b16 %v115, %v111
  %v168 = vpack.c.b16 %v116, %v112
  %v169 = vpack.c.b16 %v117, %v113
  %v170 = vpack.c.b16 %v118, %v114
  %v171 = vpack.c.b16 %v123, %v119
  %v172 = vpack.c.b16 %v124, %v120
  %v173 = vpack.c.b16 %v125, %v121
  %v174 = vpack.c.b16 %v126, %v122
  %v175 = vpack.c.b16 %v131, %v127
  %v176 = vpack.c.b16 %v132, %v128
  %v177 = vpack.c.b16 %v133, %v129
  %v178 = vpack.c.b16 %v134, %v130
  %v179 = vpack.c.b16 %v139, %v135
  %v180 = vpack.c.b16 %v140, %v136
  %v181 = vpack.c.b16 %v141, %v137
  %v182 = vpack.c.b16 %v142, %v138
  %v183 = vpack.c.b16 %v147, %v143
  %v184 = vpack.c.b16 %v148, %v144
  %v185 = vpack.c.b16 %v149, %v145
  %v186 = vpack.c.b16 %v150, %v146
  %v187 = vpack.c.b16 %v155, %v151
  %v188 = vpack.c.b16 %v156, %v152
  %v189 = vpack.c.b16 %v157, %v153
  %v190 = vpack.c.b16 %v158, %v154
  %223 = vmatprep.subr.bf16.mxu0 %v188
  %224 = vmatpush1.bf16.msra.mxu0 %v187
  %225 = vmatprep.subr.bf16.mxu0 %v184
  %226 = vmatpush1.bf16.msra.mxu0 %v183
  %227 = vmatprep.subr.bf16.mxu0 %v180
  %228 = vmatpush1.bf16.msra.mxu0 %v179
  %229 = vmatprep.subr.bf16.mxu0 %v176
  %230 = vmatpush1.bf16.msra.mxu0 %v175
  %231 = vmatprep.subr.bf16.mxu0 %v172
  %232 = vmatpush1.bf16.msra.mxu0 %v171
  %233 = vmatprep.subr.bf16.mxu0 %v168
  %234 = vmatpush1.bf16.msra.mxu0 %v167
  %235 = vmatprep.subr.bf16.mxu0 %v164
  %236 = vmatpush1.bf16.msra.mxu0 %v163
  %237 = vmatprep.subr.bf16.mxu0 %v160
  %238 = vmatpush1.bf16.msra.mxu0 %v159
  %239 = vmatprep.subr.bf16.mxu0 0
  %240 = vmatpush2.bf16.msra.mxu0 0
  %241 = vmatprep.subr.bf16.mxu0 0
  %242 = vmatpush2.bf16.msra.mxu0 0
  %243 = vmatprep.subr.bf16.mxu0 0
  %244 = vmatpush2.bf16.msra.mxu0 0
  %245 = vmatprep.subr.bf16.mxu0 0
  %246 = vmatpush2.bf16.msra.mxu0 0
  %247 = vmatprep.subr.bf16.mxu0 0
  %248 = vmatpush2.bf16.msra.mxu0 0
  %249 = vmatprep.subr.bf16.mxu0 0
  %250 = vmatpush2.bf16.msra.mxu0 0
  %251 = vmatprep.subr.bf16.mxu0 0
  %252 = vmatpush2.bf16.msra.mxu0 0
  %253 = vmatprep.subr.bf16.mxu0 0
  %254 = vmatpush2.bf16.msra.mxu0 0
  %255 = vmatprep.mubr.bf16.mxu0 0
  %256 = vmatmul.mubr.bf16.gmra.mxu0 %v30
  %v257 = vpop.f32.mrf.mxu0
  %v258 = vadd.f32 0.0, %v257
  %v259 = vpop.f32.mrf.mxu0
  %v260 = vadd.f32 0.0, %v259
  %v261 = vpop.f32.mrf.mxu0
  %v262 = vpop.f32.mrf.mxu0
  %263 = vdwg.mxu0
  %264 = vmatprep.subr.bf16.mxu0 %v190
  %265 = vmatpush1.bf16.msra.mxu0 %v189
  %266 = vmatprep.subr.bf16.mxu0 %v186
  %267 = vmatpush1.bf16.msra.mxu0 %v185
  %268 = vmatprep.subr.bf16.mxu0 %v182
  %269 = vmatpush1.bf16.msra.mxu0 %v181
  %270 = vmatprep.subr.bf16.mxu0 %v178
  %271 = vmatpush1.bf16.msra.mxu0 %v177
  %272 = vmatprep.subr.bf16.mxu0 %v174
  %273 = vmatpush1.bf16.msra.mxu0 %v173
  %274 = vmatprep.subr.bf16.mxu0 %v170
  %275 = vmatpush1.bf16.msra.mxu0 %v169
  %276 = vmatprep.subr.bf16.mxu0 %v166
  %277 = vmatpush1.bf16.msra.mxu0 %v165
  %278 = vmatprep.subr.bf16.mxu0 %v162
  %279 = vmatpush1.bf16.msra.mxu0 %v161
  %280 = vmatprep.subr.bf16.mxu0 0
  %281 = vmatpush2.bf16.msra.mxu0 0
  %282 = vmatprep.subr.bf16.mxu0 0
  %283 = vmatpush2.bf16.msra.mxu0 0
  %284 = vmatprep.subr.bf16.mxu0 0
  %285 = vmatpush2.bf16.msra.mxu0 0
  %286 = vmatprep.subr.bf16.mxu0 0
  %287 = vmatpush2.bf16.msra.mxu0 0
  %288 = vmatprep.subr.bf16.mxu0 0
  %289 = vmatpush2.bf16.msra.mxu0 0
  %290 = vmatprep.subr.bf16.mxu0 0
  %291 = vmatpush2.bf16.msra.mxu0 0
  %292 = vmatprep.subr.bf16.mxu0 0
  %293 = vmatpush2.bf16.msra.mxu0 0
  %294 = vmatprep.subr.bf16.mxu0 0
  %295 = vmatpush2.bf16.msra.mxu0 0
  %296 = vmatprep.mubr.bf16.mxu0 0
  %297 = vmatmul.mubr.bf16.gmra.mxu0 %v30
  %v298 = vpop.f32.mrf.mxu0
  %v299 = vadd.f32 0.0, %v298
  %v300 = vpop.f32.mrf.mxu0
  %v301 = vadd.f32 0.0, %v300
  %v302 = vpop.f32.mrf.mxu0
  %v303 = vpop.f32.mrf.mxu0
  %304 = vdwg.mxu0
  %v305 = vadd.f32 %v26, %v258
  %v306 = vadd.f32 %v27, %v260
  %v307 = vadd.f32 %v28, %v299
  %v308 = vadd.f32 %v29, %v301
  %309 = vst [vmem:[#allocation2] sm:$0xff] %v305
  %310 = vst [vmem:[#allocation2 + $0x8] sm:$0xff] %v306
  %311 = vst [vmem:[#allocation2 + $0x10] sm:$0xff] %v307
  %312 = vst [vmem:[#allocation2 + $0x18] sm:$0xff] %v308
  // Predicated region
  $region22: #{net_forward.37} parent=0 // pred_check
    %p313 = pneg %p18
  $region23: #{net_forward.37} parent=0 // pred_check_branch
    %315 = sbr.rel (%p313) target = $region25
  $region24: #{net_forward.37} parent=0 // pred_region
    %v316 = vld [vmem:[#allocation2] sm:$0xff]
    %v317 = vld [vmem:[#allocation2 + $0x8] sm:$0xff]
    %v318 = vld [vmem:[#allocation2 + $0x10] sm:$0xff]
    %v319 = vld [vmem:[#allocation2 + $0x18] sm:$0xff]
    %v320 = vld [vmem:[%s2] sm:$0xf]
    %v322 = vlaneseq
    %v323 = vshrl.u32 %v322, 7
    %v324 = vsub.s32 0, %v323
    %v325 = vrot.slane %v320, %v324
    %v326 = vlaneseq
    %v327 = vshrl.u32 %v326, 7
    %v328 = vsub.s32 1, %v327
    %v329 = vrot.slane %v320, %v328
    %v330 = vlaneseq
    %v331 = vshrl.u32 %v330, 7
    %v332 = vsub.s32 2, %v331
    %v333 = vrot.slane %v320, %v332
    %v334 = vlaneseq
    %v335 = vshrl.u32 %v334, 7
    %v336 = vsub.s32 3, %v335
    %v337 = vrot.slane %v320, %v336
    %v342 = vadd.f32 %v316, %v325
    %v343 = vadd.f32 %v317, %v329
    %v344 = vadd.f32 %v318, %v333
    %v345 = vadd.f32 %v319, %v337
    %v346 = vld [vmem:[%s3] sm:$0xff]
    %v347 = vld [vmem:[%s3 + $0x8] sm:$0xff]
    %v348 = vunpack.c.l.bf16 %v346
    %v349 = vunpack.c.h.bf16 %v346
    %v350 = vunpack.c.l.bf16 %v347
    %v351 = vunpack.c.h.bf16 %v347
    %v352 = vadd.f32 %v342, %v348
    %v353 = vadd.f32 %v343, %v349
    %v354 = vadd.f32 %v344, %v350
    %v355 = vadd.f32 %v345, %v351
    %v356 = vmax.f32 %v352, 0.0
    %v357 = vmax.f32 %v353, 0.0
    %v358 = vmax.f32 %v354, 0.0
    %v359 = vmax.f32 %v355, 0.0
    %v360 = vpack.c.bf16 %v356, %v356
    %v361 = vpack.c.bf16 %v357, %v357
    %v362 = vpack.c.bf16 %v358, %v358
    %v363 = vpack.c.bf16 %v359, %v359
    %v368 = vunpack.c.l.b16 %v360
    %v369 = vunpack.c.l.b16 %v361
    %v370 = vunpack.c.l.b16 %v362
    %v371 = vunpack.c.l.b16 %v363
    %v372 = vpack.c.b16 %v369, %v368
    %v373 = vpack.c.b16 %v371, %v370
    %376 = vst [vmem:[%s4] sm:$0xff] %v372
    %377 = vst [vmem:[%s4 + $0x8] sm:$0xff] %v373
  $region25: #{net_forward.37} parent=0 // pred_fallthru
    _
  // Predicated region
  $region26: #{net_forward.37} parent=0 // pred_check
    _
  $region27: #{net_forward.37} parent=0 // pred_check_branch
    %379 = sbr.rel (0) target = $region29
  $region28: #{net_forward.37} parent=0 // pred_region
    _
  $region29: #{net_forward.37} parent=0 // pred_fallthru
    _
  // Predicated region
  $region30: #{net_forward.37} parent=0 // pred_check
    _
  $region31: #{net_forward.37} parent=0 // pred_check_branch
    %381 = sbr.rel (0) target = $region33
  $region32: #{net_forward.37} parent=0 // pred_region
    _
  $region33: #{net_forward.37} parent=0 // pred_fallthru
    _

// kernel: net_forward.35
$region0: #{net_forward.35}
  #allocation0 [shape = 'u32[]', space=smem, size = 0x4, offset = 0x4, fixed_abs, tag = 'smem constant byte address 0x4 - core index']
  #allocation1 [shape = 'u32[144,128]{1,0:T(1,128)}', space=vmem, size = 0x12000, scoped, tag = 'internal scratch']
  %s0 = inlined_call_operand.vmem [shape: bf16[2,2,2,512], index: 0, kind: input, shape index: {}]
  %s1 = inlined_call_operand.vmem [shape: bf16[4,512,128], index: 1, kind: input, shape index: {}]
  %s2 = inlined_call_operand.vmem [shape: f32[1,128], index: 2, kind: input, shape index: {}]
  %s3 = inlined_call_operand.vmem [shape: bf16[2,1,1,128], index: 3, kind: output, shape index: {}]
  %s4 = sld [smem:[#allocation0]]
  $region45: #{net_forward.35} parent=0
    _
  %s6 = ssub.s32 1, %s4
  %s7 = scalar_select 0, %s6, %s4
  loop: start=0, step=1, limit=4
  $region2: #{net_forward.35} parent=0 // loop_pre_header
    _
  $region3: #{net_forward.35} parent=0 // loop_header
    %s9 = sphi 0, %s13
    %p10 = scmp.ge.s32.totalorder %s9, 4
    %s16 = sphi 0, %s28
    %s17 = sphi 0, %s24
    %s18 = sphi 0, %s16
    %s19 = sphi 0, %s17
    %s20 = sphi 0, %s18
    %s21 = sphi 0, %s19
    %s31 = sphi 0, %s33
    %s34 = sphi 0, %s31
    %s35 = sphi 0, %s34
    %s51 = sphi 0, %s35
    %s57 = sphi 0, %s59
    %s60 = sphi 0, %s57
    %s61 = sphi 0, %s60
    %s77 = sphi 0, %s61
    %s83 = sphi 0, %s85
    %s86 = sphi 0, %s83
    %s87 = sphi 0, %s86
    %s103 = sphi 0, %s87
    %s111 = sphi 0, %s113
    %s114 = sphi 0, %s111
    %s115 = sphi 0, %s114
    %s131 = sphi 0, %s115
  $region4: #{net_forward.35} parent=0 // loop_header_branch
    %12 = sbr.rel (%p10) target = $region8
  $region5: #{net_forward.35} parent=0 // loop_body
    %s14 = ssub.s32 %s9, 1
    %s15 = ssub.s32 %s9, 2
    %s22 = sadd.s32 1, %s17
    %p23 = scmp.ge.s32.totalorder %s22, 1
    %s24 = scalar_select %p23, 0, %s22
    %s25 = sadd.s32 1, %s16
    %s26 = scalar_select %p23, %s25, %s16
    %p27 = scmp.ge.s32.totalorder %s26, 2
    %s28 = scalar_select %p27, 0, %s26
    %s29 = ssub.s32 %s16, %s28
    %p30 = scmp.eq.s32.totalorder %s29, 0
    %s32 = sadd.s32 %s31, 1
    %s33 = scalar_select %p30, %s31, %s32
    %p36 = pneg %p30
    %p37 = scmp.eq.s32.totalorder %s9, 1
    %p38 = por %p36, %p37
    %p39 = scmp.ne.s32.totalorder %s31, %s34
    %p40 = scmp.eq.s32.totalorder %s9, 0
    %p41 = por %p39, %p40
    %p42 = scmp.ne.s32.totalorder %s31, %s34
    %p43 = scmp.eq.s32.totalorder %s14, 1
    %p44 = por %p42, %p43
    %p45 = scmp.ne.s32.totalorder %s34, %s35
    %p46 = scmp.eq.s32.totalorder %s14, 0
    %p47 = por %p45, %p46
    %p48 = scmp.ne.s32.totalorder %s34, %s35
    %p49 = scmp.eq.s32.totalorder %s15, 1
    %p50 = por %p48, %p49
    %p52 = scmp.ne.s32.totalorder %s35, %s51
    %p53 = scmp.eq.s32.totalorder %s15, 0
    %p54 = por %p52, %p53
    %s55 = ssub.s32 %s17, %s24
    %p56 = scmp.eq.s32.totalorder %s55, 0
    %s58 = sadd.s32 %s57, 1
    %s59 = scalar_select %p56, %s57, %s58
    %p62 = pneg %p56
    %p63 = scmp.eq.s32.totalorder %s9, 1
    %p64 = por %p62, %p63
    %p65 = scmp.ne.s32.totalorder %s57, %s60
    %p66 = scmp.eq.s32.totalorder %s9, 0
    %p67 = por %p65, %p66
    %p68 = scmp.ne.s32.totalorder %s57, %s60
    %p69 = scmp.eq.s32.totalorder %s14, 1
    %p70 = por %p68, %p69
    %p71 = scmp.ne.s32.totalorder %s60, %s61
    %p72 = scmp.eq.s32.totalorder %s14, 0
    %p73 = por %p71, %p72
    %p74 = scmp.ne.s32.totalorder %s60, %s61
    %p75 = scmp.eq.s32.totalorder %s15, 1
    %p76 = por %p74, %p75
    %p78 = scmp.ne.s32.totalorder %s61, %s77
    %p79 = scmp.eq.s32.totalorder %s15, 0
    %p80 = por %p78, %p79
    %s81 = ssub.s32 %s17, %s24
    %p82 = scmp.eq.s32.totalorder %s81, 0
    %s84 = sadd.s32 %s83, 1
    %s85 = scalar_select %p82, %s83, %s84
    %p88 = pneg %p82
    %p89 = scmp.eq.s32.totalorder %s9, 1
    %p90 = por %p88, %p89
    %p91 = scmp.ne.s32.totalorder %s83, %s86
    %p92 = scmp.eq.s32.totalorder %s9, 0
    %p93 = por %p91, %p92
    %p94 = scmp.ne.s32.totalorder %s83, %s86
    %p95 = scmp.eq.s32.totalorder %s14, 1
    %p96 = por %p94, %p95
    %p97 = scmp.ne.s32.totalorder %s86, %s87
    %p98 = scmp.eq.s32.totalorder %s14, 0
    %p99 = por %p97, %p98
    %p100 = scmp.ne.s32.totalorder %s86, %s87
    %p101 = scmp.eq.s32.totalorder %s15, 1
    %p102 = por %p100, %p101
    %p104 = scmp.ne.s32.totalorder %s87, %s103
    %p105 = scmp.eq.s32.totalorder %s15, 0
    %p106 = por %p104, %p105
    %s107 = ssub.s32 %s16, %s28
    %s108 = ssub.s32 %s17, %s24
    %s109 = sor.u32 %s107, %s108
    %p110 = scmp.eq.s32.totalorder %s109, 0
    %s112 = sadd.s32 %s111, 1
    %s113 = scalar_select %p110, %s111, %s112
    %p116 = pneg %p110
    %p117 = scmp.eq.s32.totalorder %s9, 1
    %p118 = por %p116, %p117
    %p119 = scmp.ne.s32.totalorder %s111, %s114
    %p120 = scmp.eq.s32.totalorder %s9, 0
    %p121 = por %p119, %p120
    %p122 = scmp.ne.s32.totalorder %s111, %s114
    %p123 = scmp.eq.s32.totalorder %s14, 1
    %p124 = por %p122, %p123
    %p125 = scmp.ne.s32.totalorder %s114, %s115
    %p126 = scmp.eq.s32.totalorder %s14, 0
    %p127 = por %p125, %p126
    %p128 = scmp.ne.s32.totalorder %s114, %s115
    %p129 = scmp.eq.s32.totalorder %s15, 1
    %p130 = por %p128, %p129
    %p132 = scmp.ne.s32.totalorder %s115, %s131
    %p133 = scmp.eq.s32.totalorder %s15, 0
    %p134 = por %p132, %p133
    %p135 = scmp.le.s32.totalorder 1, %s9
    %p136 = scmp.lt.s32.totalorder %s9, 3
    %p137 = pnand %p135, %p136
    %p138 = pneg %p137
    // Predicated region
    $region9: #{net_forward.35} parent=5 // pred_check
      _
    $region10: #{net_forward.35} parent=5 // pred_check_branch
      %140 = sbr.rel (%p137) target = $region12
    $region11: #{net_forward.35} parent=5 // pred_region
      %s141 = ssub.s32 %s9, 1
      // Predicated region
      $region13: #{net_forward.35} parent=11 // pred_check
        %p142 = pneg %p73
      $region14: #{net_forward.35} parent=11 // pred_check_branch
        %144 = sbr.rel (%p142) target = $region16
      $region15: #{net_forward.35} parent=11 // pred_region
        %p145 = scmp.lt.s32.totalorder %s19, 0
        %s146 = scalar_select %p145, %s19, 0
        %s147 = smul.addr %s146, 4
        %s148 = scalar_lea.vmem %s1, %s147
      $region16: #{net_forward.35} parent=11 // pred_fallthru
        _
      // Predicated region
      $region17: #{net_forward.35} parent=11 // pred_check
        %p149 = pneg %p99
      $region18: #{net_forward.35} parent=11 // pred_check_branch
        %151 = sbr.rel (%p149) target = $region20
      $region19: #{net_forward.35} parent=11 // pred_region
        %p152 = scmp.lt.s32.totalorder %s19, 0
        %s153 = scalar_select %p152, %s19, 0
        %s154 = scalar_lea.vmem %s2, %s153
      $region20: #{net_forward.35} parent=11 // pred_fallthru
        _
    $region12: #{net_forward.35} parent=5 // pred_fallthru
      _
    %p155 = scmp.lt.s32.totalorder %s9, 2
    // Predicated region
    $region21: #{net_forward.35} parent=5 // pred_check
      %p156 = pneg %p155
    $region22: #{net_forward.35} parent=5 // pred_check_branch
      %158 = sbr.rel (%p156) target = $region24
    $region23: #{net_forward.35} parent=5 // pred_region
      // Predicated region
      $region25: #{net_forward.35} parent=23 // pred_check
        %p159 = pneg %p41
      $region26: #{net_forward.35} parent=23 // pred_check_branch
        %161 = sbr.rel (%p159) target = $region28
      $region27: #{net_forward.35} parent=23 // pred_region
        %p162 = scmp.lt.s32.totalorder %s16, 1
        %s163 = scalar_select %p162, %s16, 1
        %s164 = smul.addr %s163, 8
        %s165 = scalar_lea.vmem %s0, %s164
      $region28: #{net_forward.35} parent=23 // pred_fallthru
        _
    $region24: #{net_forward.35} parent=5 // pred_fallthru
      _
    %p166 = scmp.le.s32.totalorder 1, %s9
    %p167 = scmp.lt.s32.totalorder %s9, 3
    %p168 = pnand %p166, %p167
    %p169 = pneg %p168
    // Predicated region
    $region29: #{net_forward.35} parent=5 // pred_check
      _
    $region30: #{net_forward.35} parent=5 // pred_check_branch
      %171 = sbr.rel (%p168) target = $region32
    $region31: #{net_forward.35} parent=5 // pred_region
      %s172 = ssub.s32 %s9, 1
      %p173 = scmp.lt.s32.totalorder %s18, 1
      %s174 = scalar_select %p173, %s18, 1
      %s175 = smul.addr %s174, 8
      %s176 = scalar_lea.vmem %s0, %s175
      %p177 = pneg %p47
      %p178 = pneg %p44
      %p179 = scmp.lt.s32.totalorder %s19, 0
      %s180 = scalar_select %p179, %s19, 0
      %s181 = smul.addr %s180, 4
      %s182 = scalar_lea.vmem %s1, %s181
      %p183 = pneg %p73
      %p184 = pneg %p70
      %p185 = scmp.lt.s32.totalorder %s19, 0
      %s186 = scalar_select %p185, %s19, 0
      %s187 = scalar_lea.vmem %s2, %s186
      %p188 = pneg %p99
      %p189 = pneg %p96
      %p190 = pneg %p127
      %p191 = pneg %p124
      %p192 = scmp.lt.s32.totalorder %s18, 1
      %s193 = scalar_select %p192, %s18, 1
      %p194 = scmp.lt.s32.totalorder %s19, 0
      %s195 = scalar_select %p194, %s19, 0
      %s196 = sadd.s32 %s195, %s193
      %s197 = scalar_lea.vmem %s3, %s196
      %p198 = scmp.lt.s32.totalorder %s18, 1
      %s199 = scalar_select %p198, %s18, 1
      %s200 = smul.addr %s199, 8
      %s201 = scalar_lea.vmem %s0, %s200
      %p202 = scmp.lt.s32.totalorder %s19, 0
      %s203 = scalar_select %p202, %s19, 0
      %s204 = smul.addr %s203, 4
      %s205 = scalar_lea.vmem %s1, %s204
      %p206 = scmp.lt.s32.totalorder %s19, 0
      %s207 = scalar_select %p206, %s19, 0
      %s208 = scalar_lea.vmem %s2, %s207
      %p209 = scmp.lt.s32.totalorder %s18, 1
      %s210 = scalar_select %p209, %s18, 1
      %p211 = scmp.lt.s32.totalorder %s19, 0
      %s212 = scalar_select %p211, %s19, 0
      %s213 = sadd.s32 %s212, %s210
      %s214 = scalar_lea.vmem %s3, %s213
      %v216 = vld [vmem:[%s201] sm:$0xf]
      %v217 = vld [vmem:[%s205] sm:$0xf]
      %v218 = vld [vmem:[%s205 + $0x4] sm:$0xf]
      %v219 = vld [vmem:[%s205 + $0x8] sm:$0xf]
      %v220 = vld [vmem:[%s205 + $0xc] sm:$0xf]
      %v221 = vld [vmem:[%s205 + $0x10] sm:$0xf]
      %v222 = vld [vmem:[%s205 + $0x14] sm:$0xf]
      %v223 = vld [vmem:[%s205 + $0x18] sm:$0xf]
      %v224 = vld [vmem:[%s205 + $0x1c] sm:$0xf]
      %v225 = vld [vmem:[%s205 + $0x20] sm:$0xf]
      %v226 = vld [vmem:[%s205 + $0x24] sm:$0xf]
      %v227 = vld [vmem:[%s205 + $0x28] sm:$0xf]
      %v228 = vld [vmem:[%s205 + $0x2c] sm:$0xf]
      %v229 = vld [vmem:[%s205 + $0x30] sm:$0xf]
      %v230 = vld [vmem:[%s205 + $0x34] sm:$0xf]
      %v231 = vld [vmem:[%s205 + $0x38] sm:$0xf]
      %v232 = vld [vmem:[%s205 + $0x3c] sm:$0xf]
      %v233 = vld [vmem:[%s205 + $0x40] sm:$0xf]
      %v234 = vld [vmem:[%s205 + $0x44] sm:$0xf]
      %v235 = vld [vmem:[%s205 + $0x48] sm:$0xf]
      %v236 = vld [vmem:[%s205 + $0x4c] sm:$0xf]
      %v237 = vld [vmem:[%s205 + $0x50] sm:$0xf]
      %v238 = vld [vmem:[%s205 + $0x54] sm:$0xf]
      %v239 = vld [vmem:[%s205 + $0x58] sm:$0xf]
      %v240 = vld [vmem:[%s205 + $0x5c] sm:$0xf]
      %v241 = vld [vmem:[%s205 + $0x60] sm:$0xf]
      %v242 = vld [vmem:[%s205 + $0x64] sm:$0xf]
      %v243 = vld [vmem:[%s205 + $0x68] sm:$0xf]
      %v244 = vld [vmem:[%s205 + $0x6c] sm:$0xf]
      %v245 = vld [vmem:[%s205 + $0x70] sm:$0xf]
      %v246 = vld [vmem:[%s205 + $0x74] sm:$0xf]
      %v247 = vld [vmem:[%s205 + $0x78] sm:$0xf]
      %v248 = vld [vmem:[%s205 + $0x7c] sm:$0xf]
      %v249 = vld [vmem:[%s205 + $0x80] sm:$0xf]
      %v250 = vld [vmem:[%s205 + $0x84] sm:$0xf]
      %v251 = vld [vmem:[%s205 + $0x88] sm:$0xf]
      %v252 = vld [vmem:[%s205 + $0x8c] sm:$0xf]
      %v253 = vld [vmem:[%s205 + $0x90] sm:$0xf]
      %v254 = vld [vmem:[%s205 + $0x94] sm:$0xf]
      %v255 = vld [vmem:[%s205 + $0x98] sm:$0xf]
      %v256 = vld [vmem:[%s205 + $0x9c] sm:$0xf]
      %v257 = vld [vmem:[%s205 + $0xa0] sm:$0xf]
      %v258 = vld [vmem:[%s205 + $0xa4] sm:$0xf]
      %v259 = vld [vmem:[%s205 + $0xa8] sm:$0xf]
      %v260 = vld [vmem:[%s205 + $0xac] sm:$0xf]
      %v261 = vld [vmem:[%s205 + $0xb0] sm:$0xf]
      %v262 = vld [vmem:[%s205 + $0xb4] sm:$0xf]
      %v263 = vld [vmem:[%s205 + $0xb8] sm:$0xf]
      %v264 = vld [vmem:[%s205 + $0xbc] sm:$0xf]
      %v265 = vld [vmem:[%s205 + $0xc0] sm:$0xf]
      %v266 = vld [vmem:[%s205 + $0xc4] sm:$0xf]
      %v267 = vld [vmem:[%s205 + $0xc8] sm:$0xf]
      %v268 = vld [vmem:[%s205 + $0xcc] sm:$0xf]
      %v269 = vld [vmem:[%s205 + $0xd0] sm:$0xf]
      %v270 = vld [vmem:[%s205 + $0xd4] sm:$0xf]
      %v271 = vld [vmem:[%s205 + $0xd8] sm:$0xf]
      %v272 = vld [vmem:[%s205 + $0xdc] sm:$0xf]
      %v273 = vld [vmem:[%s205 + $0xe0] sm:$0xf]
      %v274 = vld [vmem:[%s205 + $0xe4] sm:$0xf]
      %v275 = vld [vmem:[%s205 + $0xe8] sm:$0xf]
      %v276 = vld [vmem:[%s205 + $0xec] sm:$0xf]
      %v277 = vld [vmem:[%s205 + $0xf0] sm:$0xf]
      %v278 = vld [vmem:[%s205 + $0xf4] sm:$0xf]
      %v279 = vld [vmem:[%s205 + $0xf8] sm:$0xf]
      %v280 = vld [vmem:[%s205 + $0xfc] sm:$0xf]
      %s281 = scalar_lea.vmem %s205, 256
      %v282 = vld [vmem:[%s281] sm:$0xf]
      %v283 = vld [vmem:[%s281 + $0x4] sm:$0xf]
      %v284 = vld [vmem:[%s281 + $0x8] sm:$0xf]
      %v285 = vld [vmem:[%s281 + $0xc] sm:$0xf]
      %v286 = vld [vmem:[%s281 + $0x10] sm:$0xf]
      %v287 = vld [vmem:[%s281 + $0x14] sm:$0xf]
      %v288 = vld [vmem:[%s281 + $0x18] sm:$0xf]
      %v289 = vld [vmem:[%s281 + $0x1c] sm:$0xf]
      %v290 = vld [vmem:[%s281 + $0x20] sm:$0xf]
      %v291 = vld [vmem:[%s281 + $0x24] sm:$0xf]
      %v292 = vld [vmem:[%s281 + $0x28] sm:$0xf]
      %v293 = vld [vmem:[%s281 + $0x2c] sm:$0xf]
      %v294 = vld [vmem:[%s281 + $0x30] sm:$0xf]
      %v295 = vld [vmem:[%s281 + $0x34] sm:$0xf]
      %v296 = vld [vmem:[%s281 + $0x38] sm:$0xf]
      %v297 = vld [vmem:[%s281 + $0x3c] sm:$0xf]
      %v298 = vld [vmem:[%s281 + $0x40] sm:$0xf]
      %v299 = vld [vmem:[%s281 + $0x44] sm:$0xf]
      %v300 = vld [vmem:[%s281 + $0x48] sm:$0xf]
      %v301 = vld [vmem:[%s281 + $0x4c] sm:$0xf]
      %v302 = vld [vmem:[%s281 + $0x50] sm:$0xf]
      %v303 = vld [vmem:[%s281 + $0x54] sm:$0xf]
      %v304 = vld [vmem:[%s281 + $0x58] sm:$0xf]
      %v305 = vld [vmem:[%s281 + $0x5c] sm:$0xf]
      %v306 = vld [vmem:[%s281 + $0x60] sm:$0xf]
      %v307 = vld [vmem:[%s281 + $0x64] sm:$0xf]
      %v308 = vld [vmem:[%s281 + $0x68] sm:$0xf]
      %v309 = vld [vmem:[%s281 + $0x6c] sm:$0xf]
      %v310 = vld [vmem:[%s281 + $0x70] sm:$0xf]
      %v311 = vld [vmem:[%s281 + $0x74] sm:$0xf]
      %v312 = vld [vmem:[%s281 + $0x78] sm:$0xf]
      %v313 = vld [vmem:[%s281 + $0x7c] sm:$0xf]
      %v314 = vld [vmem:[%s281 + $0x80] sm:$0xf]
      %v315 = vld [vmem:[%s281 + $0x84] sm:$0xf]
      %v316 = vld [vmem:[%s281 + $0x88] sm:$0xf]
      %v317 = vld [vmem:[%s281 + $0x8c] sm:$0xf]
      %v318 = vld [vmem:[%s281 + $0x90] sm:$0xf]
      %v319 = vld [vmem:[%s281 + $0x94] sm:$0xf]
      %v320 = vld [vmem:[%s281 + $0x98] sm:$0xf]
      %v321 = vld [vmem:[%s281 + $0x9c] sm:$0xf]
      %v322 = vld [vmem:[%s281 + $0xa0] sm:$0xf]
      %v323 = vld [vmem:[%s281 + $0xa4] sm:$0xf]
      %v324 = vld [vmem:[%s281 + $0xa8] sm:$0xf]
      %v325 = vld [vmem:[%s281 + $0xac] sm:$0xf]
      %v326 = vld [vmem:[%s281 + $0xb0] sm:$0xf]
      %v327 = vld [vmem:[%s281 + $0xb4] sm:$0xf]
      %v328 = vld [vmem:[%s281 + $0xb8] sm:$0xf]
      %v329 = vld [vmem:[%s281 + $0xbc] sm:$0xf]
      %v330 = vld [vmem:[%s281 + $0xc0] sm:$0xf]
      %v331 = vld [vmem:[%s281 + $0xc4] sm:$0xf]
      %v332 = vld [vmem:[%s281 + $0xc8] sm:$0xf]
      %v333 = vld [vmem:[%s281 + $0xcc] sm:$0xf]
      %v334 = vld [vmem:[%s281 + $0xd0] sm:$0xf]
      %v335 = vld [vmem:[%s281 + $0xd4] sm:$0xf]
      %v336 = vld [vmem:[%s281 + $0xd8] sm:$0xf]
      %v337 = vld [vmem:[%s281 + $0xdc] sm:$0xf]
      %v338 = vld [vmem:[%s281 + $0xe0] sm:$0xf]
      %v339 = vld [vmem:[%s281 + $0xe4] sm:$0xf]
      %v340 = vld [vmem:[%s281 + $0xe8] sm:$0xf]
      %v341 = vld [vmem:[%s281 + $0xec] sm:$0xf]
      %v342 = vld [vmem:[%s281 + $0xf0] sm:$0xf]
      %v343 = vld [vmem:[%s281 + $0xf4] sm:$0xf]
      %v344 = vld [vmem:[%s281 + $0xf8] sm:$0xf]
      %v345 = vld [vmem:[%s281 + $0xfc] sm:$0xf]
      %v348 = vunpack.c.l.s4 1966171168
      %v349 = vunpack.c.0.s8 %v348
      %v350 = vlaneseq
      %v351 = vshrl.u32 %v350, 7
      %v352 = vsub.s32 %v349, %v351
      %v353 = vrot.slane %v216, %v352
      %v354 = vcombine.high %v353, %v353
      %v356 = vunpack.c.l.s4 1966171168
      %v357 = vunpack.c.0.s8 %v356
      %v358 = vlaneseq
      %v359 = vshrl.u32 %v358, 7
      %v360 = vsub.s32 %v357, %v359
      %v361 = vrot.slane %v353, %v360
      %v363 = vunpack.c.l.s4 1966171168
      %v364 = vunpack.c.0.s8 %v363
      %v365 = vlaneseq
      %v366 = vshrl.u32 %v365, 7
      %v367 = vsub.s32 %v364, %v366
      %v368 = vrot.slane %v354, %v367
      %v369 = vcombine.high %v361, %v361
      %v370 = vcombine.high %v368, %v368
      %v372 = vshrl.u32 %v361, 16
      %v375 = vshrl.u32 %v368, 16
      %v378 = vshrl.u32 %v369, 16
      %v381 = vshrl.u32 %v370, 16
      %v451 = vunpack.c.l.b16 %v282
      %v452 = vunpack.c.l.b16 %v283
      %v453 = vunpack.c.l.b16 %v284
      %v454 = vunpack.c.l.b16 %v285
      %v455 = vunpack.c.l.b16 %v286
      %v456 = vunpack.c.l.b16 %v287
      %v457 = vunpack.c.l.b16 %v288
      %v458 = vunpack.c.l.b16 %v289
      %v459 = vunpack.c.l.b16 %v290
      %v460 = vunpack.c.l.b16 %v291
      %v461 = vunpack.c.l.b16 %v292
      %v462 = vunpack.c.l.b16 %v293
      %v463 = vunpack.c.l.b16 %v294
      %v464 = vunpack.c.l.b16 %v295
      %v465 = vunpack.c.l.b16 %v296
      %v466 = vunpack.c.l.b16 %v297
      %v467 = vunpack.c.l.b16 %v298
      %v468 = vunpack.c.l.b16 %v299
      %v469 = vunpack.c.l.b16 %v300
      %v470 = vunpack.c.l.b16 %v301
      %v471 = vunpack.c.l.b16 %v302
      %v472 = vunpack.c.l.b16 %v303
      %v473 = vunpack.c.l.b16 %v304
      %v474 = vunpack.c.l.b16 %v305
      %v475 = vunpack.c.l.b16 %v306
      %v476 = vunpack.c.l.b16 %v307
      %v477 = vunpack.c.l.b16 %v308
      %v478 = vunpack.c.l.b16 %v309
      %v479 = vunpack.c.l.b16 %v310
      %v480 = vunpack.c.l.b16 %v311
      %v481 = vunpack.c.l.b16 %v312
      %v482 = vunpack.c.l.b16 %v313
      %v483 = vunpack.c.l.b16 %v314
      %v484 = vunpack.c.l.b16 %v315
      %v485 = vunpack.c.l.b16 %v316
      %v486 = vunpack.c.l.b16 %v317
      %v487 = vunpack.c.l.b16 %v318
      %v488 = vunpack.c.l.b16 %v319
      %v489 = vunpack.c.l.b16 %v320
      %v490 = vunpack.c.l.b16 %v321
      %v491 = vunpack.c.l.b16 %v322
      %v492 = vunpack.c.l.b16 %v323
      %v493 = vunpack.c.l.b16 %v324
      %v494 = vunpack.c.l.b16 %v325
      %v495 = vunpack.c.l.b16 %v326
      %v496 = vunpack.c.l.b16 %v327
      %v497 = vunpack.c.l.b16 %v328
      %v498 = vunpack.c.l.b16 %v329
      %v499 = vunpack.c.l.b16 %v330
      %v500 = vunpack.c.l.b16 %v331
      %v501 = vunpack.c.l.b16 %v332
      %v502 = vunpack.c.l.b16 %v333
      %v503 = vunpack.c.l.b16 %v334
      %v504 = vunpack.c.l.b16 %v335
      %v505 = vunpack.c.l.b16 %v336
      %v506 = vunpack.c.l.b16 %v337
      %v507 = vunpack.c.l.b16 %v338
      %v508 = vunpack.c.l.b16 %v339
      %v509 = vunpack.c.l.b16 %v340
      %v510 = vunpack.c.l.b16 %v341
      %v511 = vunpack.c.l.b16 %v342
      %v512 = vunpack.c.l.b16 %v343
      %v513 = vunpack.c.l.b16 %v344
      %v514 = vunpack.c.l.b16 %v345
      %v515 = vpack.c.b16 %v452, %v451
      %v516 = vpack.c.b16 %v454, %v453
      %v517 = vpack.c.b16 %v456, %v455
      %v518 = vpack.c.b16 %v458, %v457
      %v519 = vpack.c.b16 %v460, %v459
      %v520 = vpack.c.b16 %v462, %v461
      %v521 = vpack.c.b16 %v464, %v463
      %v522 = vpack.c.b16 %v466, %v465
      %v523 = vpack.c.b16 %v468, %v467
      %v524 = vpack.c.b16 %v470, %v469
      %v525 = vpack.c.b16 %v472, %v471
      %v526 = vpack.c.b16 %v474, %v473
      %v527 = vpack.c.b16 %v476, %v475
      %v528 = vpack.c.b16 %v478, %v477
      %v529 = vpack.c.b16 %v480, %v479
      %v530 = vpack.c.b16 %v482, %v481
      %v531 = vpack.c.b16 %v484, %v483
      %v532 = vpack.c.b16 %v486, %v485
      %v533 = vpack.c.b16 %v488, %v487
      %v534 = vpack.c.b16 %v490, %v489
      %v535 = vpack.c.b16 %v492, %v491
      %v536 = vpack.c.b16 %v494, %v493
      %v537 = vpack.c.b16 %v496, %v495
      %v538 = vpack.c.b16 %v498, %v497
      %v539 = vpack.c.b16 %v500, %v499
      %v540 = vpack.c.b16 %v502, %v501
      %v541 = vpack.c.b16 %v504, %v503
      %v542 = vpack.c.b16 %v506, %v505
      %v543 = vpack.c.b16 %v508, %v507
      %v544 = vpack.c.b16 %v510, %v509
      %v545 = vpack.c.b16 %v512, %v511
      %v546 = vpack.c.b16 %v514, %v513
      %579 = vmatprep.subr.bf16.mxu0 0
      %580 = vmatpush1.bf16.msra.mxu0 %v522
      %581 = vmatprep.subr.bf16.mxu0 0
      %582 = vmatpush1.bf16.msra.mxu0 %v521
      %583 = vmatprep.subr.bf16.mxu0 0
      %584 = vmatpush1.bf16.msra.mxu0 %v520
      %585 = vmatprep.subr.bf16.mxu0 0
      %586 = vmatpush1.bf16.msra.mxu0 %v519
      %587 = vmatprep.subr.bf16.mxu0 0
      %588 = vmatpush1.bf16.msra.mxu0 %v518
      %589 = vmatprep.subr.bf16.mxu0 0
      %590 = vmatpush1.bf16.msra.mxu0 %v517
      %591 = vmatprep.subr.bf16.mxu0 0
      %592 = vmatpush1.bf16.msra.mxu0 %v516
      %593 = vmatprep.subr.bf16.mxu0 0
      %594 = vmatpush1.bf16.msra.mxu0 %v515
      %595 = vmatprep.subr.bf16.mxu0 0
      %596 = vmatpush2.bf16.msra.mxu0 %v530
      %597 = vmatprep.subr.bf16.mxu0 0
      %598 = vmatpush2.bf16.msra.mxu0 %v529
      %599 = vmatprep.subr.bf16.mxu0 0
      %600 = vmatpush2.bf16.msra.mxu0 %v528
      %601 = vmatprep.subr.bf16.mxu0 0
      %602 = vmatpush2.bf16.msra.mxu0 %v527
      %603 = vmatprep.subr.bf16.mxu0 0
      %604 = vmatpush2.bf16.msra.mxu0 %v526
      %605 = vmatprep.subr.bf16.mxu0 0
      %606 = vmatpush2.bf16.msra.mxu0 %v525
      %607 = vmatprep.subr.bf16.mxu0 0
      %608 = vmatpush2.bf16.msra.mxu0 %v524
      %609 = vmatprep.subr.bf16.mxu0 0
      %610 = vmatpush2.bf16.msra.mxu0 %v523
      %611 = vmatprep.mubr.bf16.mxu0 %v375
      %612 = vmatmul.mubr.bf16.gmra.mxu0 %v372
      %v613 = vpop.f32.mrf.mxu0
      %v614 = vadd.f32 0.0, %v613
      %v615 = vpop.f32.mrf.mxu0
      %v616 = vpop.f32.mrf.mxu0
      %v617 = vpop.f32.mrf.mxu0
      %618 = vdwg.mxu0
      %619 = vmatprep.subr.bf16.mxu0 0
      %620 = vmatpush1.bf16.msra.mxu0 %v538
      %621 = vmatprep.subr.bf16.mxu0 0
      %622 = vmatpush1.bf16.msra.mxu0 %v537
      %623 = vmatprep.subr.bf16.mxu0 0
      %624 = vmatpush1.bf16.msra.mxu0 %v536
      %625 = vmatprep.subr.bf16.mxu0 0
      %626 = vmatpush1.bf16.msra.mxu0 %v535
      %627 = vmatprep.subr.bf16.mxu0 0
      %628 = vmatpush1.bf16.msra.mxu0 %v534
      %629 = vmatprep.subr.bf16.mxu0 0
      %630 = vmatpush1.bf16.msra.mxu0 %v533
      %631 = vmatprep.subr.bf16.mxu0 0
      %632 = vmatpush1.bf16.msra.mxu0 %v532
      %633 = vmatprep.subr.bf16.mxu0 0
      %634 = vmatpush1.bf16.msra.mxu0 %v531
      %635 = vmatprep.subr.bf16.mxu0 0
      %636 = vmatpush2.bf16.msra.mxu0 %v546
      %637 = vmatprep.subr.bf16.mxu0 0
      %638 = vmatpush2.bf16.msra.mxu0 %v545
      %639 = vmatprep.subr.bf16.mxu0 0
      %640 = vmatpush2.bf16.msra.mxu0 %v544
      %641 = vmatprep.subr.bf16.mxu0 0
      %642 = vmatpush2.bf16.msra.mxu0 %v543
      %643 = vmatprep.subr.bf16.mxu0 0
      %644 = vmatpush2.bf16.msra.mxu0 %v542
      %645 = vmatprep.subr.bf16.mxu0 0
      %646 = vmatpush2.bf16.msra.mxu0 %v541
      %647 = vmatprep.subr.bf16.mxu0 0
      %648 = vmatpush2.bf16.msra.mxu0 %v540
      %649 = vmatprep.subr.bf16.mxu0 0
      %650 = vmatpush2.bf16.msra.mxu0 %v539
      %651 = vmatprep.mubr.bf16.mxu0 %v381
      %652 = vmatmul.mubr.bf16.gmra.mxu0 %v378
      %v653 = vpop.f32.mrf.mxu0
      %v654 = vadd.f32 %v614, %v653
      %v655 = vpop.f32.mrf.mxu0
      %v656 = vpop.f32.mrf.mxu0
      %v657 = vpop.f32.mrf.mxu0
      %658 = vdwg.mxu0
      %v727 = vunpack.c.l.b16 %v217
      %v728 = vunpack.c.l.b16 %v218
      %v729 = vunpack.c.l.b16 %v219
      %v730 = vunpack.c.l.b16 %v220
      %v731 = vunpack.c.l.b16 %v221
      %v732 = vunpack.c.l.b16 %v222
      %v733 = vunpack.c.l.b16 %v223
      %v734 = vunpack.c.l.b16 %v224
      %v735 = vunpack.c.l.b16 %v225
      %v736 = vunpack.c.l.b16 %v226
      %v737 = vunpack.c.l.b16 %v227
      %v738 = vunpack.c.l.b16 %v228
      %v739 = vunpack.c.l.b16 %v229
      %v740 = vunpack.c.l.b16 %v230
      %v741 = vunpack.c.l.b16 %v231
      %v742 = vunpack.c.l.b16 %v232
      %v743 = vunpack.c.l.b16 %v233
      %v744 = vunpack.c.l.b16 %v234
      %v745 = vunpack.c.l.b16 %v235
      %v746 = vunpack.c.l.b16 %v236
      %v747 = vunpack.c.l.b16 %v237
      %v748 = vunpack.c.l.b16 %v238
      %v749 = vunpack.c.l.b16 %v239
      %v750 = vunpack.c.l.b16 %v240
      %v751 = vunpack.c.l.b16 %v241
      %v752 = vunpack.c.l.b16 %v242
      %v753 = vunpack.c.l.b16 %v243
      %v754 = vunpack.c.l.b16 %v244
      %v755 = vunpack.c.l.b16 %v245
      %v756 = vunpack.c.l.b16 %v246
      %v757 = vunpack.c.l.b16 %v247
      %v758 = vunpack.c.l.b16 %v248
      %v759 = vunpack.c.l.b16 %v249
      %v760 = vunpack.c.l.b16 %v250
      %v761 = vunpack.c.l.b16 %v251
      %v762 = vunpack.c.l.b16 %v252
      %v763 = vunpack.c.l.b16 %v253
      %v764 = vunpack.c.l.b16 %v254
      %v765 = vunpack.c.l.b16 %v255
      %v766 = vunpack.c.l.b16 %v256
      %v767 = vunpack.c.l.b16 %v257
      %v768 = vunpack.c.l.b16 %v258
      %v769 = vunpack.c.l.b16 %v259
      %v770 = vunpack.c.l.b16 %v260
      %v771 = vunpack.c.l.b16 %v261
      %v772 = vunpack.c.l.b16 %v262
      %v773 = vunpack.c.l.b16 %v263
      %v774 = vunpack.c.l.b16 %v264
      %v775 = vunpack.c.l.b16 %v265
      %v776 = vunpack.c.l.b16 %v266
      %v777 = vunpack.c.l.b16 %v267
      %v778 = vunpack.c.l.b16 %v268
      %v779 = vunpack.c.l.b16 %v269
      %v780 = vunpack.c.l.b16 %v270
      %v781 = vunpack.c.l.b16 %v271
      %v782 = vunpack.c.l.b16 %v272
      %v783 = vunpack.c.l.b16 %v273
      %v784 = vunpack.c.l.b16 %v274
      %v785 = vunpack.c.l.b16 %v275
      %v786 = vunpack.c.l.b16 %v276
      %v787 = vunpack.c.l.b16 %v277
      %v788 = vunpack.c.l.b16 %v278
      %v789 = vunpack.c.l.b16 %v279
      %v790 = vunpack.c.l.b16 %v280
      %v791 = vpack.c.b16 %v728, %v727
      %v792 = vpack.c.b16 %v730, %v729
      %v793 = vpack.c.b16 %v732, %v731
      %v794 = vpack.c.b16 %v734, %v733
      %v795 = vpack.c.b16 %v736, %v735
      %v796 = vpack.c.b16 %v738, %v737
      %v797 = vpack.c.b16 %v740, %v739
      %v798 = vpack.c.b16 %v742, %v741
      %v799 = vpack.c.b16 %v744, %v743
      %v800 = vpack.c.b16 %v746, %v745
      %v801 = vpack.c.b16 %v748, %v747
      %v802 = vpack.c.b16 %v750, %v749
      %v803 = vpack.c.b16 %v752, %v751
      %v804 = vpack.c.b16 %v754, %v753
      %v805 = vpack.c.b16 %v756, %v755
      %v806 = vpack.c.b16 %v758, %v757
      %v807 = vpack.c.b16 %v760, %v759
      %v808 = vpack.c.b16 %v762, %v761
      %v809 = vpack.c.b16 %v764, %v763
      %v810 = vpack.c.b16 %v766, %v765
      %v811 = vpack.c.b16 %v768, %v767
      %v812 = vpack.c.b16 %v770, %v769
      %v813 = vpack.c.b16 %v772, %v771
      %v814 = vpack.c.b16 %v774, %v773
      %v815 = vpack.c.b16 %v776, %v775
      %v816 = vpack.c.b16 %v778, %v777
      %v817 = vpack.c.b16 %v780, %v779
      %v818 = vpack.c.b16 %v782, %v781
      %v819 = vpack.c.b16 %v784, %v783
      %v820 = vpack.c.b16 %v786, %v785
      %v821 = vpack.c.b16 %v788, %v787
      %v822 = vpack.c.b16 %v790, %v789
      %855 = vmatprep.subr.bf16.mxu0 0
      %856 = vmatpush1.bf16.msra.mxu0 %v798
      %857 = vmatprep.subr.bf16.mxu0 0
      %858 = vmatpush1.bf16.msra.mxu0 %v797
      %859 = vmatprep.subr.bf16.mxu0 0
      %860 = vmatpush1.bf16.msra.mxu0 %v796
      %861 = vmatprep.subr.bf16.mxu0 0
      %862 = vmatpush1.bf16.msra.mxu0 %v795
      %863 = vmatprep.subr.bf16.mxu0 0
      %864 = vmatpush1.bf16.msra.mxu0 %v794
      %865 = vmatprep.subr.bf16.mxu0 0
      %866 = vmatpush1.bf16.msra.mxu0 %v793
      %867 = vmatprep.subr.bf16.mxu0 0
      %868 = vmatpush1.bf16.msra.mxu0 %v792
      %869 = vmatprep.subr.bf16.mxu0 0
      %870 = vmatpush1.bf16.msra.mxu0 %v791
      %871 = vmatprep.subr.bf16.mxu0 0
      %872 = vmatpush2.bf16.msra.mxu0 %v806
      %873 = vmatprep.subr.bf16.mxu0 0
      %874 = vmatpush2.bf16.msra.mxu0 %v805
      %875 = vmatprep.subr.bf16.mxu0 0
      %876 = vmatpush2.bf16.msra.mxu0 %v804
      %877 = vmatprep.subr.bf16.mxu0 0
      %878 = vmatpush2.bf16.msra.mxu0 %v803
      %879 = vmatprep.subr.bf16.mxu0 0
      %880 = vmatpush2.bf16.msra.mxu0 %v802
      %881 = vmatprep.subr.bf16.mxu0 0
      %882 = vmatpush2.bf16.msra.mxu0 %v801
      %883 = vmatprep.subr.bf16.mxu0 0
      %884 = vmatpush2.bf16.msra.mxu0 %v800
      %885 = vmatprep.subr.bf16.mxu0 0
      %886 = vmatpush2.bf16.msra.mxu0 %v799
      %887 = vmatprep.mubr.bf16.mxu0 %v368
      %888 = vmatmul.mubr.bf16.gmra.mxu0 %v361
      %v889 = vpop.f32.mrf.mxu0
      %v890 = vadd.f32 %v654, %v889
      %v891 = vpop.f32.mrf.mxu0
      %v892 = vpop.f32.mrf.mxu0
      %v893 = vpop.f32.mrf.mxu0
      %894 = vdwg.mxu0
      %895 = vmatprep.subr.bf16.mxu0 0
      %896 = vmatpush1.bf16.msra.mxu0 %v814
      %897 = vmatprep.subr.bf16.mxu0 0
      %898 = vmatpush1.bf16.msra.mxu0 %v813
      %899 = vmatprep.subr.bf16.mxu0 0
      %900 = vmatpush1.bf16.msra.mxu0 %v812
      %901 = vmatprep.subr.bf16.mxu0 0
      %902 = vmatpush1.bf16.msra.mxu0 %v811
      %903 = vmatprep.subr.bf16.mxu0 0
      %904 = vmatpush1.bf16.msra.mxu0 %v810
      %905 = vmatprep.subr.bf16.mxu0 0
      %906 = vmatpush1.bf16.msra.mxu0 %v809
      %907 = vmatprep.subr.bf16.mxu0 0
      %908 = vmatpush1.bf16.msra.mxu0 %v808
      %909 = vmatprep.subr.bf16.mxu0 0
      %910 = vmatpush1.bf16.msra.mxu0 %v807
      %911 = vmatprep.subr.bf16.mxu0 0
      %912 = vmatpush2.bf16.msra.mxu0 %v822
      %913 = vmatprep.subr.bf16.mxu0 0
      %914 = vmatpush2.bf16.msra.mxu0 %v821
      %915 = vmatprep.subr.bf16.mxu0 0
      %916 = vmatpush2.bf16.msra.mxu0 %v820
      %917 = vmatprep.subr.bf16.mxu0 0
      %918 = vmatpush2.bf16.msra.mxu0 %v819
      %919 = vmatprep.subr.bf16.mxu0 0
      %920 = vmatpush2.bf16.msra.mxu0 %v818
      %921 = vmatprep.subr.bf16.mxu0 0
      %922 = vmatpush2.bf16.msra.mxu0 %v817
      %923 = vmatprep.subr.bf16.mxu0 0
      %924 = vmatpush2.bf16.msra.mxu0 %v816
      %925 = vmatprep.subr.bf16.mxu0 0
      %926 = vmatpush2.bf16.msra.mxu0 %v815
      %927 = vmatprep.mubr.bf16.mxu0 %v370
      %928 = vmatmul.mubr.bf16.gmra.mxu0 %v369
      %v929 = vpop.f32.mrf.mxu0
      %v930 = vadd.f32 %v890, %v929
      %v931 = vpop.f32.mrf.mxu0
      %v932 = vpop.f32.mrf.mxu0
      %v933 = vpop.f32.mrf.mxu0
      %934 = vdwg.mxu0
      %s935 = scalar_lea.vmem %s201, 4
      %v936 = vld [vmem:[%s935] sm:$0xf]
      %s937 = scalar_lea.vmem %s205, 512
      %v938 = vld [vmem:[%s937] sm:$0xf]
      %v939 = vld [vmem:[%s937 + $0x4] sm:$0xf]
      %v940 = vld [vmem:[%s937 + $0x8] sm:$0xf]
      %v941 = vld [vmem:[%s937 + $0xc] sm:$0xf]
      %v942 = vld [vmem:[%s937 + $0x10] sm:$0xf]
      %v943 = vld [vmem:[%s937 + $0x14] sm:$0xf]
      %v944 = vld [vmem:[%s937 + $0x18] sm:$0xf]
      %v945 = vld [vmem:[%s937 + $0x1c] sm:$0xf]
      %v946 = vld [vmem:[%s937 + $0x20] sm:$0xf]
      %v947 = vld [vmem:[%s937 + $0x24] sm:$0xf]
      %v948 = vld [vmem:[%s937 + $0x28] sm:$0xf]
      %v949 = vld [vmem:[%s937 + $0x2c] sm:$0xf]
      %v950 = vld [vmem:[%s937 + $0x30] sm:$0xf]
      %v951 = vld [vmem:[%s937 + $0x34] sm:$0xf]
      %v952 = vld [vmem:[%s937 + $0x38] sm:$0xf]
      %v953 = vld [vmem:[%s937 + $0x3c] sm:$0xf]
      %v954 = vld [vmem:[%s937 + $0x40] sm:$0xf]
      %v955 = vld [vmem:[%s937 + $0x44] sm:$0xf]
      %v956 = vld [vmem:[%s937 + $0x48] sm:$0xf]
      %v957 = vld [vmem:[%s937 + $0x4c] sm:$0xf]
      %v958 = vld [vmem:[%s937 + $0x50] sm:$0xf]
      %v959 = vld [vmem:[%s937 + $0x54] sm:$0xf]
      %v960 = vld [vmem:[%s937 + $0x58] sm:$0xf]
      %v961 = vld [vmem:[%s937 + $0x5c] sm:$0xf]
      %v962 = vld [vmem:[%s937 + $0x60] sm:$0xf]
      %v963 = vld [vmem:[%s937 + $0x64] sm:$0xf]
      %v964 = vld [vmem:[%s937 + $0x68] sm:$0xf]
      %v965 = vld [vmem:[%s937 + $0x6c] sm:$0xf]
      %v966 = vld [vmem:[%s937 + $0x70] sm:$0xf]
      %v967 = vld [vmem:[%s937 + $0x74] sm:$0xf]
      %v968 = vld [vmem:[%s937 + $0x78] sm:$0xf]
      %v969 = vld [vmem:[%s937 + $0x7c] sm:$0xf]
      %v970 = vld [vmem:[%s937 + $0x80] sm:$0xf]
      %v971 = vld [vmem:[%s937 + $0x84] sm:$0xf]
      %v972 = vld [vmem:[%s937 + $0x88] sm:$0xf]
      %v973 = vld [vmem:[%s937 + $0x8c] sm:$0xf]
      %v974 = vld [vmem:[%s937 + $0x90] sm:$0xf]
      %v975 = vld [vmem:[%s937 + $0x94] sm:$0xf]
      %v976 = vld [vmem:[%s937 + $0x98] sm:$0xf]
      %v977 = vld [vmem:[%s937 + $0x9c] sm:$0xf]
      %v978 = vld [vmem:[%s937 + $0xa0] sm:$0xf]
      %v979 = vld [vmem:[%s937 + $0xa4] sm:$0xf]
      %v980 = vld [vmem:[%s937 + $0xa8] sm:$0xf]
      %v981 = vld [vmem:[%s937 + $0xac] sm:$0xf]
      %v982 = vld [vmem:[%s937 + $0xb0] sm:$0xf]
      %v983 = vld [vmem:[%s937 + $0xb4] sm:$0xf]
      %v984 = vld [vmem:[%s937 + $0xb8] sm:$0xf]
      %v985 = vld [vmem:[%s937 + $0xbc] sm:$0xf]
      %v986 = vld [vmem:[%s937 + $0xc0] sm:$0xf]
      %v987 = vld [vmem:[%s937 + $0xc4] sm:$0xf]
      %v988 = vld [vmem:[%s937 + $0xc8] sm:$0xf]
      %v989 = vld [vmem:[%s937 + $0xcc] sm:$0xf]
      %v990 = vld [vmem:[%s937 + $0xd0] sm:$0xf]
      %v991 = vld [vmem:[%s937 + $0xd4] sm:$0xf]
      %v992 = vld [vmem:[%s937 + $0xd8] sm:$0xf]
      %v993 = vld [vmem:[%s937 + $0xdc] sm:$0xf]
      %v994 = vld [vmem:[%s937 + $0xe0] sm:$0xf]
      %v995 = vld [vmem:[%s937 + $0xe4] sm:$0xf]
      %v996 = vld [vmem:[%s937 + $0xe8] sm:$0xf]
      %v997 = vld [vmem:[%s937 + $0xec] sm:$0xf]
      %v998 = vld [vmem:[%s937 + $0xf0] sm:$0xf]
      %v999 = vld [vmem:[%s937 + $0xf4] sm:$0xf]
      %v1000 = vld [vmem:[%s937 + $0xf8] sm:$0xf]
      %v1001 = vld [vmem:[%s937 + $0xfc] sm:$0xf]
      %v1004 = vunpack.c.l.s4 1966171168
      %v1005 = vunpack.c.0.s8 %v1004
      %v1006 = vlaneseq
      %v1007 = vshrl.u32 %v1006, 7
      %v1008 = vsub.s32 %v1005, %v1007
      %v1009 = vrot.slane %v936, %v1008
      %v1010 = vcombine.high %v1009, %v1009
      %v1012 = vunpack.c.l.s4 1966171168
      %v1013 = vunpack.c.0.s8 %v1012
      %v1014 = vlaneseq
      %v1015 = vshrl.u32 %v1014, 7
      %v1016 = vsub.s32 %v1013, %v1015
      %v1017 = vrot.slane %v1009, %v1016
      %v1019 = vunpack.c.l.s4 1966171168
      %v1020 = vunpack.c.0.s8 %v1019
      %v1021 = vlaneseq
      %v1022 = vshrl.u32 %v1021, 7
      %v1023 = vsub.s32 %v1020, %v1022
      %v1024 = vrot.slane %v1010, %v1023
      %v1025 = vcombine.high %v1017, %v1017
      %v1026 = vcombine.high %v1024, %v1024
      %v1095 = vunpack.c.l.b16 %v938
      %v1096 = vunpack.c.l.b16 %v939
      %v1097 = vunpack.c.l.b16 %v940
      %v1098 = vunpack.c.l.b16 %v941
      %v1099 = vunpack.c.l.b16 %v942
      %v1100 = vunpack.c.l.b16 %v943
      %v1101 = vunpack.c.l.b16 %v944
      %v1102 = vunpack.c.l.b16 %v945
      %v1103 = vunpack.c.l.b16 %v946
      %v1104 = vunpack.c.l.b16 %v947
      %v1105 = vunpack.c.l.b16 %v948
      %v1106 = vunpack.c.l.b16 %v949
      %v1107 = vunpack.c.l.b16 %v950
      %v1108 = vunpack.c.l.b16 %v951
      %v1109 = vunpack.c.l.b16 %v952
      %v1110 = vunpack.c.l.b16 %v953
      %v1111 = vunpack.c.l.b16 %v954
      %v1112 = vunpack.c.l.b16 %v955
      %v1113 = vunpack.c.l.b16 %v956
      %v1114 = vunpack.c.l.b16 %v957
      %v1115 = vunpack.c.l.b16 %v958
      %v1116 = vunpack.c.l.b16 %v959
      %v1117 = vunpack.c.l.b16 %v960
      %v1118 = vunpack.c.l.b16 %v961
      %v1119 = vunpack.c.l.b16 %v962
      %v1120 = vunpack.c.l.b16 %v963
      %v1121 = vunpack.c.l.b16 %v964
      %v1122 = vunpack.c.l.b16 %v965
      %v1123 = vunpack.c.l.b16 %v966
      %v1124 = vunpack.c.l.b16 %v967
      %v1125 = vunpack.c.l.b16 %v968
      %v1126 = vunpack.c.l.b16 %v969
      %v1127 = vunpack.c.l.b16 %v970
      %v1128 = vunpack.c.l.b16 %v971
      %v1129 = vunpack.c.l.b16 %v972
      %v1130 = vunpack.c.l.b16 %v973
      %v1131 = vunpack.c.l.b16 %v974
      %v1132 = vunpack.c.l.b16 %v975
      %v1133 = vunpack.c.l.b16 %v976
      %v1134 = vunpack.c.l.b16 %v977
      %v1135 = vunpack.c.l.b16 %v978
      %v1136 = vunpack.c.l.b16 %v979
      %v1137 = vunpack.c.l.b16 %v980
      %v1138 = vunpack.c.l.b16 %v981
      %v1139 = vunpack.c.l.b16 %v982
      %v1140 = vunpack.c.l.b16 %v983
      %v1141 = vunpack.c.l.b16 %v984
      %v1142 = vunpack.c.l.b16 %v985
      %v1143 = vunpack.c.l.b16 %v986
      %v1144 = vunpack.c.l.b16 %v987
      %v1145 = vunpack.c.l.b16 %v988
      %v1146 = vunpack.c.l.b16 %v989
      %v1147 = vunpack.c.l.b16 %v990
      %v1148 = vunpack.c.l.b16 %v991
      %v1149 = vunpack.c.l.b16 %v992
      %v1150 = vunpack.c.l.b16 %v993
      %v1151 = vunpack.c.l.b16 %v994
      %v1152 = vunpack.c.l.b16 %v995
      %v1153 = vunpack.c.l.b16 %v996
      %v1154 = vunpack.c.l.b16 %v997
      %v1155 = vunpack.c.l.b16 %v998
      %v1156 = vunpack.c.l.b16 %v999
      %v1157 = vunpack.c.l.b16 %v1000
      %v1158 = vunpack.c.l.b16 %v1001
      %v1159 = vpack.c.b16 %v1096, %v1095
      %v1160 = vpack.c.b16 %v1098, %v1097
      %v1161 = vpack.c.b16 %v1100, %v1099
      %v1162 = vpack.c.b16 %v1102, %v1101
      %v1163 = vpack.c.b16 %v1104, %v1103
      %v1164 = vpack.c.b16 %v1106, %v1105
      %v1165 = vpack.c.b16 %v1108, %v1107
      %v1166 = vpack.c.b16 %v1110, %v1109
      %v1167 = vpack.c.b16 %v1112, %v1111
      %v1168 = vpack.c.b16 %v1114, %v1113
      %v1169 = vpack.c.b16 %v1116, %v1115
      %v1170 = vpack.c.b16 %v1118, %v1117
      %v1171 = vpack.c.b16 %v1120, %v1119
      %v1172 = vpack.c.b16 %v1122, %v1121
      %v1173 = vpack.c.b16 %v1124, %v1123
      %v1174 = vpack.c.b16 %v1126, %v1125
      %v1175 = vpack.c.b16 %v1128, %v1127
      %v1176 = vpack.c.b16 %v1130, %v1129
      %v1177 = vpack.c.b16 %v1132, %v1131
      %v1178 = vpack.c.b16 %v1134, %v1133
      %v1179 = vpack.c.b16 %v1136, %v1135
      %v1180 = vpack.c.b16 %v1138, %v1137
      %v1181 = vpack.c.b16 %v1140, %v1139
      %v1182 = vpack.c.b16 %v1142, %v1141
      %v1183 = vpack.c.b16 %v1144, %v1143
      %v1184 = vpack.c.b16 %v1146, %v1145
      %v1185 = vpack.c.b16 %v1148, %v1147
      %v1186 = vpack.c.b16 %v1150, %v1149
      %v1187 = vpack.c.b16 %v1152, %v1151
      %v1188 = vpack.c.b16 %v1154, %v1153
      %v1189 = vpack.c.b16 %v1156, %v1155
      %v1190 = vpack.c.b16 %v1158, %v1157
      %1223 = vmatprep.subr.bf16.mxu0 0
      %1224 = vmatpush1.bf16.msra.mxu0 %v1166
      %1225 = vmatprep.subr.bf16.mxu0 0
      %1226 = vmatpush1.bf16.msra.mxu0 %v1165
      %1227 = vmatprep.subr.bf16.mxu0 0
      %1228 = vmatpush1.bf16.msra.mxu0 %v1164
      %1229 = vmatprep.subr.bf16.mxu0 0
      %1230 = vmatpush1.bf16.msra.mxu0 %v1163
      %1231 = vmatprep.subr.bf16.mxu0 0
      %1232 = vmatpush1.bf16.msra.mxu0 %v1162
      %1233 = vmatprep.subr.bf16.mxu0 0
      %1234 = vmatpush1.bf16.msra.mxu0 %v1161
      %1235 = vmatprep.subr.bf16.mxu0 0
      %1236 = vmatpush1.bf16.msra.mxu0 %v1160
      %1237 = vmatprep.subr.bf16.mxu0 0
      %1238 = vmatpush1.bf16.msra.mxu0 %v1159
      %1239 = vmatprep.subr.bf16.mxu0 0
      %1240 = vmatpush2.bf16.msra.mxu0 %v1174
      %1241 = vmatprep.subr.bf16.mxu0 0
      %1242 = vmatpush2.bf16.msra.mxu0 %v1173
      %1243 = vmatprep.subr.bf16.mxu0 0
      %1244 = vmatpush2.bf16.msra.mxu0 %v1172
      %1245 = vmatprep.subr.bf16.mxu0 0
      %1246 = vmatpush2.bf16.msra.mxu0 %v1171
      %1247 = vmatprep.subr.bf16.mxu0 0
      %1248 = vmatpush2.bf16.msra.mxu0 %v1170
      %1249 = vmatprep.subr.bf16.mxu0 0
      %1250 = vmatpush2.bf16.msra.mxu0 %v1169
      %1251 = vmatprep.subr.bf16.mxu0 0
      %1252 = vmatpush2.bf16.msra.mxu0 %v1168
      %1253 = vmatprep.subr.bf16.mxu0 0
      %1254 = vmatpush2.bf16.msra.mxu0 %v1167
      %1255 = vmatprep.mubr.bf16.mxu0 %v1024
      %1256 = vmatmul.mubr.bf16.gmra.mxu0 %v1017
      %v1257 = vpop.f32.mrf.mxu0
      %v1258 = vadd.f32 0.0, %v1257
      %v1259 = vpop.f32.mrf.mxu0
      %v1260 = vpop.f32.mrf.mxu0
      %v1261 = vpop.f32.mrf.mxu0
      %1262 = vdwg.mxu0
      %1263 = vmatprep.subr.bf16.mxu0 0
      %1264 = vmatpush1.bf16.msra.mxu0 %v1182
      %1265 = vmatprep.subr.bf16.mxu0 0
      %1266 = vmatpush1.bf16.msra.mxu0 %v1181
      %1267 = vmatprep.subr.bf16.mxu0 0
      %1268 = vmatpush1.bf16.msra.mxu0 %v1180
      %1269 = vmatprep.subr.bf16.mxu0 0
      %1270 = vmatpush1.bf16.msra.mxu0 %v1179
      %1271 = vmatprep.subr.bf16.mxu0 0
      %1272 = vmatpush1.bf16.msra.mxu0 %v1178
      %1273 = vmatprep.subr.bf16.mxu0 0
      %1274 = vmatpush1.bf16.msra.mxu0 %v1177
      %1275 = vmatprep.subr.bf16.mxu0 0
      %1276 = vmatpush1.bf16.msra.mxu0 %v1176
      %1277 = vmatprep.subr.bf16.mxu0 0
      %1278 = vmatpush1.bf16.msra.mxu0 %v1175
      %1279 = vmatprep.subr.bf16.mxu0 0
      %1280 = vmatpush2.bf16.msra.mxu0 %v1190
      %1281 = vmatprep.subr.bf16.mxu0 0
      %1282 = vmatpush2.bf16.msra.mxu0 %v1189
      %1283 = vmatprep.subr.bf16.mxu0 0
      %1284 = vmatpush2.bf16.msra.mxu0 %v1188
      %1285 = vmatprep.subr.bf16.mxu0 0
      %1286 = vmatpush2.bf16.msra.mxu0 %v1187
      %1287 = vmatprep.subr.bf16.mxu0 0
      %1288 = vmatpush2.bf16.msra.mxu0 %v1186
      %1289 = vmatprep.subr.bf16.mxu0 0
      %1290 = vmatpush2.bf16.msra.mxu0 %v1185
      %1291 = vmatprep.subr.bf16.mxu0 0
      %1292 = vmatpush2.bf16.msra.mxu0 %v1184
      %1293 = vmatprep.subr.bf16.mxu0 0
      %1294 = vmatpush2.bf16.msra.mxu0 %v1183
      %1295 = vmatprep.mubr.bf16.mxu0 %v1026
      %1296 = vmatmul.mubr.bf16.gmra.mxu0 %v1025
      %v1297 = vpop.f32.mrf.mxu0
      %v1298 = vadd.f32 %v1258, %v1297
      %v1299 = vpop.f32.mrf.mxu0
      %v1300 = vpop.f32.mrf.mxu0
      %v1301 = vpop.f32.mrf.mxu0
      %1302 = vdwg.mxu0
      %v1303 = vadd.f32 %v930, %v1298
      %v1304 = vld [vmem:[%s935] sm:$0xf]
      %s1305 = scalar_lea.vmem %s205, 768
      %v1306 = vld [vmem:[%s1305] sm:$0xf]
      %v1307 = vld [vmem:[%s1305 + $0x4] sm:$0xf]
      %v1308 = vld [vmem:[%s1305 + $0x8] sm:$0xf]
      %v1309 = vld [vmem:[%s1305 + $0xc] sm:$0xf]
      %v1310 = vld [vmem:[%s1305 + $0x10] sm:$0xf]
      %v1311 = vld [vmem:[%s1305 + $0x14] sm:$0xf]
      %v1312 = vld [vmem:[%s1305 + $0x18] sm:$0xf]
      %v1313 = vld [vmem:[%s1305 + $0x1c] sm:$0xf]
      %v1314 = vld [vmem:[%s1305 + $0x20] sm:$0xf]
      %v1315 = vld [vmem:[%s1305 + $0x24] sm:$0xf]
      %v1316 = vld [vmem:[%s1305 + $0x28] sm:$0xf]
      %v1317 = vld [vmem:[%s1305 + $0x2c] sm:$0xf]
      %v1318 = vld [vmem:[%s1305 + $0x30] sm:$0xf]
      %v1319 = vld [vmem:[%s1305 + $0x34] sm:$0xf]
      %v1320 = vld [vmem:[%s1305 + $0x38] sm:$0xf]
      %v1321 = vld [vmem:[%s1305 + $0x3c] sm:$0xf]
      %v1322 = vld [vmem:[%s1305 + $0x40] sm:$0xf]
      %v1323 = vld [vmem:[%s1305 + $0x44] sm:$0xf]
      %v1324 = vld [vmem:[%s1305 + $0x48] sm:$0xf]
      %v1325 = vld [vmem:[%s1305 + $0x4c] sm:$0xf]
      %v1326 = vld [vmem:[%s1305 + $0x50] sm:$0xf]
      %v1327 = vld [vmem:[%s1305 + $0x54] sm:$0xf]
      %v1328 = vld [vmem:[%s1305 + $0x58] sm:$0xf]
      %v1329 = vld [vmem:[%s1305 + $0x5c] sm:$0xf]
      %v1330 = vld [vmem:[%s1305 + $0x60] sm:$0xf]
      %v1331 = vld [vmem:[%s1305 + $0x64] sm:$0xf]
      %v1332 = vld [vmem:[%s1305 + $0x68] sm:$0xf]
      %v1333 = vld [vmem:[%s1305 + $0x6c] sm:$0xf]
      %v1334 = vld [vmem:[%s1305 + $0x70] sm:$0xf]
      %v1335 = vld [vmem:[%s1305 + $0x74] sm:$0xf]
      %v1336 = vld [vmem:[%s1305 + $0x78] sm:$0xf]
      %v1337 = vld [vmem:[%s1305 + $0x7c] sm:$0xf]
      %v1338 = vld [vmem:[%s1305 + $0x80] sm:$0xf]
      %v1339 = vld [vmem:[%s1305 + $0x84] sm:$0xf]
      %v1340 = vld [vmem:[%s1305 + $0x88] sm:$0xf]
      %v1341 = vld [vmem:[%s1305 + $0x8c] sm:$0xf]
      %v1342 = vld [vmem:[%s1305 + $0x90] sm:$0xf]
      %v1343 = vld [vmem:[%s1305 + $0x94] sm:$0xf]
      %v1344 = vld [vmem:[%s1305 + $0x98] sm:$0xf]
      %v1345 = vld [vmem:[%s1305 + $0x9c] sm:$0xf]
      %v1346 = vld [vmem:[%s1305 + $0xa0] sm:$0xf]
      %v1347 = vld [vmem:[%s1305 + $0xa4] sm:$0xf]
      %v1348 = vld [vmem:[%s1305 + $0xa8] sm:$0xf]
      %v1349 = vld [vmem:[%s1305 + $0xac] sm:$0xf]
      %v1350 = vld [vmem:[%s1305 + $0xb0] sm:$0xf]
      %v1351 = vld [vmem:[%s1305 + $0xb4] sm:$0xf]
      %v1352 = vld [vmem:[%s1305 + $0xb8] sm:$0xf]
      %v1353 = vld [vmem:[%s1305 + $0xbc] sm:$0xf]
      %v1354 = vld [vmem:[%s1305 + $0xc0] sm:$0xf]
      %v1355 = vld [vmem:[%s1305 + $0xc4] sm:$0xf]
      %v1356 = vld [vmem:[%s1305 + $0xc8] sm:$0xf]
      %v1357 = vld [vmem:[%s1305 + $0xcc] sm:$0xf]
      %v1358 = vld [vmem:[%s1305 + $0xd0] sm:$0xf]
      %v1359 = vld [vmem:[%s1305 + $0xd4] sm:$0xf]
      %v1360 = vld [vmem:[%s1305 + $0xd8] sm:$0xf]
      %v1361 = vld [vmem:[%s1305 + $0xdc] sm:$0xf]
      %v1362 = vld [vmem:[%s1305 + $0xe0] sm:$0xf]
      %v1363 = vld [vmem:[%s1305 + $0xe4] sm:$0xf]
      %v1364 = vld [vmem:[%s1305 + $0xe8] sm:$0xf]
      %v1365 = vld [vmem:[%s1305 + $0xec] sm:$0xf]
      %v1366 = vld [vmem:[%s1305 + $0xf0] sm:$0xf]
      %v1367 = vld [vmem:[%s1305 + $0xf4] sm:$0xf]
      %v1368 = vld [vmem:[%s1305 + $0xf8] sm:$0xf]
      %v1369 = vld [vmem:[%s1305 + $0xfc] sm:$0xf]
      %v1372 = vunpack.c.l.s4 1966171168
      %v1373 = vunpack.c.0.s8 %v1372
      %v1374 = vlaneseq
      %v1375 = vshrl.u32 %v1374, 7
      %v1376 = vsub.s32 %v1373, %v1375
      %v1377 = vrot.slane %v1304, %v1376
      %v1378 = vcombine.high %v1377, %v1377
      %v1380 = vunpack.c.l.s4 1966171168
      %v1381 = vunpack.c.0.s8 %v1380
      %v1382 = vlaneseq
      %v1383 = vshrl.u32 %v1382, 7
      %v1384 = vsub.s32 %v1381, %v1383
      %v1385 = vrot.slane %v1377, %v1384
      %v1387 = vunpack.c.l.s4 1966171168
      %v1388 = vunpack.c.0.s8 %v1387
      %v1389 = vlaneseq
      %v1390 = vshrl.u32 %v1389, 7
      %v1391 = vsub.s32 %v1388, %v1390
      %v1392 = vrot.slane %v1378, %v1391
      %v1393 = vcombine.high %v1385, %v1385
      %v1394 = vcombine.high %v1392, %v1392
      %v1396 = vshrl.u32 %v1385, 16
      %v1399 = vshrl.u32 %v1392, 16
      %v1402 = vshrl.u32 %v1393, 16
      %v1405 = vshrl.u32 %v1394, 16
      %v1475 = vunpack.c.l.b16 %v1306
      %v1476 = vunpack.c.l.b16 %v1307
      %v1477 = vunpack.c.l.b16 %v1308
      %v1478 = vunpack.c.l.b16 %v1309
      %v1479 = vunpack.c.l.b16 %v1310
      %v1480 = vunpack.c.l.b16 %v1311
      %v1481 = vunpack.c.l.b16 %v1312
      %v1482 = vunpack.c.l.b16 %v1313
      %v1483 = vunpack.c.l.b16 %v1314
      %v1484 = vunpack.c.l.b16 %v1315
      %v1485 = vunpack.c.l.b16 %v1316
      %v1486 = vunpack.c.l.b16 %v1317
      %v1487 = vunpack.c.l.b16 %v1318
      %v1488 = vunpack.c.l.b16 %v1319
      %v1489 = vunpack.c.l.b16 %v1320
      %v1490 = vunpack.c.l.b16 %v1321
      %v1491 = vunpack.c.l.b16 %v1322
      %v1492 = vunpack.c.l.b16 %v1323
      %v1493 = vunpack.c.l.b16 %v1324
      %v1494 = vunpack.c.l.b16 %v1325
      %v1495 = vunpack.c.l.b16 %v1326
      %v1496 = vunpack.c.l.b16 %v1327
      %v1497 = vunpack.c.l.b16 %v1328
      %v1498 = vunpack.c.l.b16 %v1329
      %v1499 = vunpack.c.l.b16 %v1330
      %v1500 = vunpack.c.l.b16 %v1331
      %v1501 = vunpack.c.l.b16 %v1332
      %v1502 = vunpack.c.l.b16 %v1333
      %v1503 = vunpack.c.l.b16 %v1334
      %v1504 = vunpack.c.l.b16 %v1335
      %v1505 = vunpack.c.l.b16 %v1336
      %v1506 = vunpack.c.l.b16 %v1337
      %v1507 = vunpack.c.l.b16 %v1338
      %v1508 = vunpack.c.l.b16 %v1339
      %v1509 = vunpack.c.l.b16 %v1340
      %v1510 = vunpack.c.l.b16 %v1341
      %v1511 = vunpack.c.l.b16 %v1342
      %v1512 = vunpack.c.l.b16 %v1343
      %v1513 = vunpack.c.l.b16 %v1344
      %v1514 = vunpack.c.l.b16 %v1345
      %v1515 = vunpack.c.l.b16 %v1346
      %v1516 = vunpack.c.l.b16 %v1347
      %v1517 = vunpack.c.l.b16 %v1348
      %v1518 = vunpack.c.l.b16 %v1349
      %v1519 = vunpack.c.l.b16 %v1350
      %v1520 = vunpack.c.l.b16 %v1351
      %v1521 = vunpack.c.l.b16 %v1352
      %v1522 = vunpack.c.l.b16 %v1353
      %v1523 = vunpack.c.l.b16 %v1354
      %v1524 = vunpack.c.l.b16 %v1355
      %v1525 = vunpack.c.l.b16 %v1356
      %v1526 = vunpack.c.l.b16 %v1357
      %v1527 = vunpack.c.l.b16 %v1358
      %v1528 = vunpack.c.l.b16 %v1359
      %v1529 = vunpack.c.l.b16 %v1360
      %v1530 = vunpack.c.l.b16 %v1361
      %v1531 = vunpack.c.l.b16 %v1362
      %v1532 = vunpack.c.l.b16 %v1363
      %v1533 = vunpack.c.l.b16 %v1364
      %v1534 = vunpack.c.l.b16 %v1365
      %v1535 = vunpack.c.l.b16 %v1366
      %v1536 = vunpack.c.l.b16 %v1367
      %v1537 = vunpack.c.l.b16 %v1368
      %v1538 = vunpack.c.l.b16 %v1369
      %v1539 = vpack.c.b16 %v1476, %v1475
      %v1540 = vpack.c.b16 %v1478, %v1477
      %v1541 = vpack.c.b16 %v1480, %v1479
      %v1542 = vpack.c.b16 %v1482, %v1481
      %v1543 = vpack.c.b16 %v1484, %v1483
      %v1544 = vpack.c.b16 %v1486, %v1485
      %v1545 = vpack.c.b16 %v1488, %v1487
      %v1546 = vpack.c.b16 %v1490, %v1489
      %v1547 = vpack.c.b16 %v1492, %v1491
      %v1548 = vpack.c.b16 %v1494, %v1493
      %v1549 = vpack.c.b16 %v1496, %v1495
      %v1550 = vpack.c.b16 %v1498, %v1497
      %v1551 = vpack.c.b16 %v1500, %v1499
      %v1552 = vpack.c.b16 %v1502, %v1501
      %v1553 = vpack.c.b16 %v1504, %v1503
      %v1554 = vpack.c.b16 %v1506, %v1505
      %v1555 = vpack.c.b16 %v1508, %v1507
      %v1556 = vpack.c.b16 %v1510, %v1509
      %v1557 = vpack.c.b16 %v1512, %v1511
      %v1558 = vpack.c.b16 %v1514, %v1513
      %v1559 = vpack.c.b16 %v1516, %v1515
      %v1560 = vpack.c.b16 %v1518, %v1517
      %v1561 = vpack.c.b16 %v1520, %v1519
      %v1562 = vpack.c.b16 %v1522, %v1521
      %v1563 = vpack.c.b16 %v1524, %v1523
      %v1564 = vpack.c.b16 %v1526, %v1525
      %v1565 = vpack.c.b16 %v1528, %v1527
      %v1566 = vpack.c.b16 %v1530, %v1529
      %v1567 = vpack.c.b16 %v1532, %v1531
      %v1568 = vpack.c.b16 %v1534, %v1533
      %v1569 = vpack.c.b16 %v1536, %v1535
      %v1570 = vpack.c.b16 %v1538, %v1537
      %1603 = vmatprep.subr.bf16.mxu0 0
      %1604 = vmatpush1.bf16.msra.mxu0 %v1546
      %1605 = vmatprep.subr.bf16.mxu0 0
      %1606 = vmatpush1.bf16.msra.mxu0 %v1545
      %1607 = vmatprep.subr.bf16.mxu0 0
      %1608 = vmatpush1.bf16.msra.mxu0 %v1544
      %1609 = vmatprep.subr.bf16.mxu0 0
      %1610 = vmatpush1.bf16.msra.mxu0 %v1543
      %1611 = vmatprep.subr.bf16.mxu0 0
      %1612 = vmatpush1.bf16.msra.mxu0 %v1542
      %1613 = vmatprep.subr.bf16.mxu0 0
      %1614 = vmatpush1.bf16.msra.mxu0 %v1541
      %1615 = vmatprep.subr.bf16.mxu0 0
      %1616 = vmatpush1.bf16.msra.mxu0 %v1540
      %1617 = vmatprep.subr.bf16.mxu0 0
      %1618 = vmatpush1.bf16.msra.mxu0 %v1539
      %1619 = vmatprep.subr.bf16.mxu0 0
      %1620 = vmatpush2.bf16.msra.mxu0 %v1554
      %1621 = vmatprep.subr.bf16.mxu0 0
      %1622 = vmatpush2.bf16.msra.mxu0 %v1553
      %1623 = vmatprep.subr.bf16.mxu0 0
      %1624 = vmatpush2.bf16.msra.mxu0 %v1552
      %1625 = vmatprep.subr.bf16.mxu0 0
      %1626 = vmatpush2.bf16.msra.mxu0 %v1551
      %1627 = vmatprep.subr.bf16.mxu0 0
      %1628 = vmatpush2.bf16.msra.mxu0 %v1550
      %1629 = vmatprep.subr.bf16.mxu0 0
      %1630 = vmatpush2.bf16.msra.mxu0 %v1549
      %1631 = vmatprep.subr.bf16.mxu0 0
      %1632 = vmatpush2.bf16.msra.mxu0 %v1548
      %1633 = vmatprep.subr.bf16.mxu0 0
      %1634 = vmatpush2.bf16.msra.mxu0 %v1547
      %1635 = vmatprep.mubr.bf16.mxu0 %v1399
      %1636 = vmatmul.mubr.bf16.gmra.mxu0 %v1396
      %v1637 = vpop.f32.mrf.mxu0
      %v1638 = vadd.f32 0.0, %v1637
      %v1639 = vpop.f32.mrf.mxu0
      %v1640 = vpop.f32.mrf.mxu0
      %v1641 = vpop.f32.mrf.mxu0
      %1642 = vdwg.mxu0
      %1643 = vmatprep.subr.bf16.mxu0 0
      %1644 = vmatpush1.bf16.msra.mxu0 %v1562
      %1645 = vmatprep.subr.bf16.mxu0 0
      %1646 = vmatpush1.bf16.msra.mxu0 %v1561
      %1647 = vmatprep.subr.bf16.mxu0 0
      %1648 = vmatpush1.bf16.msra.mxu0 %v1560
      %1649 = vmatprep.subr.bf16.mxu0 0
      %1650 = vmatpush1.bf16.msra.mxu0 %v1559
      %1651 = vmatprep.subr.bf16.mxu0 0
      %1652 = vmatpush1.bf16.msra.mxu0 %v1558
      %1653 = vmatprep.subr.bf16.mxu0 0
      %1654 = vmatpush1.bf16.msra.mxu0 %v1557
      %1655 = vmatprep.subr.bf16.mxu0 0
      %1656 = vmatpush1.bf16.msra.mxu0 %v1556
      %1657 = vmatprep.subr.bf16.mxu0 0
      %1658 = vmatpush1.bf16.msra.mxu0 %v1555
      %1659 = vmatprep.subr.bf16.mxu0 0
      %1660 = vmatpush2.bf16.msra.mxu0 %v1570
      %1661 = vmatprep.subr.bf16.mxu0 0
      %1662 = vmatpush2.bf16.msra.mxu0 %v1569
      %1663 = vmatprep.subr.bf16.mxu0 0
      %1664 = vmatpush2.bf16.msra.mxu0 %v1568
      %1665 = vmatprep.subr.bf16.mxu0 0
      %1666 = vmatpush2.bf16.msra.mxu0 %v1567
      %1667 = vmatprep.subr.bf16.mxu0 0
      %1668 = vmatpush2.bf16.msra.mxu0 %v1566
      %1669 = vmatprep.subr.bf16.mxu0 0
      %1670 = vmatpush2.bf16.msra.mxu0 %v1565
      %1671 = vmatprep.subr.bf16.mxu0 0
      %1672 = vmatpush2.bf16.msra.mxu0 %v1564
      %1673 = vmatprep.subr.bf16.mxu0 0
      %1674 = vmatpush2.bf16.msra.mxu0 %v1563
      %1675 = vmatprep.mubr.bf16.mxu0 %v1405
      %1676 = vmatmul.mubr.bf16.gmra.mxu0 %v1402
      %v1677 = vpop.f32.mrf.mxu0
      %v1678 = vadd.f32 %v1638, %v1677
      %v1679 = vpop.f32.mrf.mxu0
      %v1680 = vpop.f32.mrf.mxu0
      %v1681 = vpop.f32.mrf.mxu0
      %1682 = vdwg.mxu0
      %v1683 = vadd.f32 %v1303, %v1678
      %v1684 = vld [vmem:[%s208] sm:$0x1]
      %v1685 = vadd.f32 %v1683, %v1684
      %v1686 = vmax.f32 %v1685, 0.0
      %v1687 = vpack.c.bf16 %v1686, %v1686
      %vm1688 = vcmask 1040384
      %vm1689 = vsmask.f32 256
      %vm1690 = vmand %vm1688, %vm1689
      %v1691 = vld [vmem:[%s214] sm:$0x1]
      %v1692 = vsel %vm1690, %v1687, %v1691
      %1693 = vst [vmem:[%s214] sm:$0x1] %v1692
      %p1694 = scmp.lt.s32.totalorder %s18, 1
      %s1695 = scalar_select %p1694, %s18, 1
      %p1696 = scmp.lt.s32.totalorder %s19, 0
      %s1697 = scalar_select %p1696, %s19, 0
      %s1698 = sadd.s32 %s1697, %s1695
      %s1699 = scalar_lea.vmem %s3, %s1698
      // Predicated region
      $region33: #{net_forward.35} parent=31 // pred_check
        %p1700 = pneg %p124
      $region34: #{net_forward.35} parent=31 // pred_check_branch
        %1702 = sbr.rel (%p1700) target = $region36
      $region35: #{net_forward.35} parent=31 // pred_region
        _
      $region36: #{net_forward.35} parent=31 // pred_fallthru
        _
    $region32: #{net_forward.35} parent=5 // pred_fallthru
      _
    %p1703 = scmp.le.s32.totalorder 2, %s9
    // Predicated region
    $region37: #{net_forward.35} parent=5 // pred_check
      %p1704 = pneg %p1703
    $region38: #{net_forward.35} parent=5 // pred_check_branch
      %1706 = sbr.rel (%p1704) target = $region40
    $region39: #{net_forward.35} parent=5 // pred_region
      %s1707 = ssub.s32 %s9, 2
      // Predicated region
      $region41: #{net_forward.35} parent=39 // pred_check
        %p1708 = pneg %p130
      $region42: #{net_forward.35} parent=39 // pred_check_branch
        %1710 = sbr.rel (%p1708) target = $region44
      $region43: #{net_forward.35} parent=39 // pred_region
        %p1711 = scmp.lt.s32.totalorder %s20, 1
        %s1712 = scalar_select %p1711, %s20, 1
        %p1713 = scmp.lt.s32.totalorder %s21, 0
        %s1714 = scalar_select %p1713, %s21, 0
        %s1715 = sadd.s32 %s1714, %s1712
        %s1716 = scalar_lea.vmem %s3, %s1715
      $region44: #{net_forward.35} parent=39 // pred_fallthru
        _
    $region40: #{net_forward.35} parent=5 // pred_fallthru
      _
  $region6: #{net_forward.35} parent=0 // loop_footer
    %s13 = sadd.s32 1, %s9
  $region7: #{net_forward.35} parent=0 // loop_footer_branch
    %8 = sbr.rel target = $region3
  $region8: #{net_forward.35} parent=0 // loop_exit
    _

// kernel: net_forward.39
$region0: #{net_forward.39}
  #allocation0 [shape = 'u32[]', space=smem, size = 0x4, offset = 0x4, fixed_abs, tag = 'smem constant byte address 0x4 - core index']
  #allocation1 [shape = 'u32[144,128]{1,0:T(1,128)}', space=vmem, size = 0x12000, scoped, tag = 'internal scratch']
  #allocation2 [shape = 'f32[8,128]{1,0:T(8,128)}', space=vmem, size = 0x1000, scoped, tag = 'scratch operand']
  %s0 = inlined_call_operand.vmem [shape: bf16[8,512], index: 0, kind: input, shape index: {}]
  %s1 = inlined_call_operand.vmem [shape: bf16[512,128], index: 1, kind: input, shape index: {}]
  %s2 = inlined_call_operand.vmem [shape: f32[1,128], index: 2, kind: input, shape index: {}]
  %s3 = inlined_call_operand.vmem [shape: f32[8,128], index: 3, kind: output, shape index: {}]
  %s4 = sld [smem:[#allocation0]]
  $region30: #{net_forward.39} parent=0
    _
  %s6 = ssub.s32 1, %s4
  %s7 = scalar_select 0, %s6, %s4
  // Predicated region
  $region2: #{net_forward.39} parent=0 // pred_check
    _
  $region3: #{net_forward.39} parent=0 // pred_check_branch
    %9 = sbr.rel (0) target = $region5
  $region4: #{net_forward.39} parent=0 // pred_region
    _
  $region5: #{net_forward.39} parent=0 // pred_fallthru
    _
  // Predicated region
  $region6: #{net_forward.39} parent=0 // pred_check
    _
  $region7: #{net_forward.39} parent=0 // pred_check_branch
    %11 = sbr.rel (0) target = $region9
  $region8: #{net_forward.39} parent=0 // pred_region
    _
  $region9: #{net_forward.39} parent=0 // pred_fallthru
    _
  // Predicated region
  $region10: #{net_forward.39} parent=0 // pred_check
    _
  $region11: #{net_forward.39} parent=0 // pred_check_branch
    %13 = sbr.rel (0) target = $region13
  $region12: #{net_forward.39} parent=0 // pred_region
    _
  $region13: #{net_forward.39} parent=0 // pred_fallthru
    _
  %p15 = scmp.eq.s32.totalorder 0, 0
  // Predicated region
  $region14: #{net_forward.39} parent=0 // pred_check
    %p16 = pneg %p15
  $region15: #{net_forward.39} parent=0 // pred_check_branch
    %18 = sbr.rel (%p16) target = $region17
  $region16: #{net_forward.39} parent=0 // pred_region
    %19 = vst [vmem:[#allocation2] sm:$0xff] 0.0
  $region17: #{net_forward.39} parent=0 // pred_fallthru
    _
  %v20 = vld [vmem:[#allocation2] sm:$0xff]
  %v21 = vld [vmem:[%s0] sm:$0xff]
  %v22 = vld [vmem:[%s0 + $0x8] sm:$0xff]
  %v23 = vld [vmem:[%s1] sm:$0xf]
  %v24 = vld [vmem:[%s1 + $0x4] sm:$0xf]
  %v25 = vld [vmem:[%s1 + $0x8] sm:$0xf]
  %v26 = vld [vmem:[%s1 + $0xc] sm:$0xf]
  %v27 = vld [vmem:[%s1 + $0x10] sm:$0xf]
  %v28 = vld [vmem:[%s1 + $0x14] sm:$0xf]
  %v29 = vld [vmem:[%s1 + $0x18] sm:$0xf]
  %v30 = vld [vmem:[%s1 + $0x1c] sm:$0xf]
  %v31 = vld [vmem:[%s1 + $0x20] sm:$0xf]
  %v32 = vld [vmem:[%s1 + $0x24] sm:$0xf]
  %v33 = vld [vmem:[%s1 + $0x28] sm:$0xf]
  %v34 = vld [vmem:[%s1 + $0x2c] sm:$0xf]
  %v35 = vld [vmem:[%s1 + $0x30] sm:$0xf]
  %v36 = vld [vmem:[%s1 + $0x34] sm:$0xf]
  %v37 = vld [vmem:[%s1 + $0x38] sm:$0xf]
  %v38 = vld [vmem:[%s1 + $0x3c] sm:$0xf]
  %v39 = vld [vmem:[%s1 + $0x40] sm:$0xf]
  %v40 = vld [vmem:[%s1 + $0x44] sm:$0xf]
  %v41 = vld [vmem:[%s1 + $0x48] sm:$0xf]
  %v42 = vld [vmem:[%s1 + $0x4c] sm:$0xf]
  %v43 = vld [vmem:[%s1 + $0x50] sm:$0xf]
  %v44 = vld [vmem:[%s1 + $0x54] sm:$0xf]
  %v45 = vld [vmem:[%s1 + $0x58] sm:$0xf]
  %v46 = vld [vmem:[%s1 + $0x5c] sm:$0xf]
  %v47 = vld [vmem:[%s1 + $0x60] sm:$0xf]
  %v48 = vld [vmem:[%s1 + $0x64] sm:$0xf]
  %v49 = vld [vmem:[%s1 + $0x68] sm:$0xf]
  %v50 = vld [vmem:[%s1 + $0x6c] sm:$0xf]
  %v51 = vld [vmem:[%s1 + $0x70] sm:$0xf]
  %v52 = vld [vmem:[%s1 + $0x74] sm:$0xf]
  %v53 = vld [vmem:[%s1 + $0x78] sm:$0xf]
  %v54 = vld [vmem:[%s1 + $0x7c] sm:$0xf]
  %v55 = vld [vmem:[%s1 + $0x80] sm:$0xf]
  %v56 = vld [vmem:[%s1 + $0x84] sm:$0xf]
  %v57 = vld [vmem:[%s1 + $0x88] sm:$0xf]
  %v58 = vld [vmem:[%s1 + $0x8c] sm:$0xf]
  %v59 = vld [vmem:[%s1 + $0x90] sm:$0xf]
  %v60 = vld [vmem:[%s1 + $0x94] sm:$0xf]
  %v61 = vld [vmem:[%s1 + $0x98] sm:$0xf]
  %v62 = vld [vmem:[%s1 + $0x9c] sm:$0xf]
  %v63 = vld [vmem:[%s1 + $0xa0] sm:$0xf]
  %v64 = vld [vmem:[%s1 + $0xa4] sm:$0xf]
  %v65 = vld [vmem:[%s1 + $0xa8] sm:$0xf]
  %v66 = vld [vmem:[%s1 + $0xac] sm:$0xf]
  %v67 = vld [vmem:[%s1 + $0xb0] sm:$0xf]
  %v68 = vld [vmem:[%s1 + $0xb4] sm:$0xf]
  %v69 = vld [vmem:[%s1 + $0xb8] sm:$0xf]
  %v70 = vld [vmem:[%s1 + $0xbc] sm:$0xf]
  %v71 = vld [vmem:[%s1 + $0xc0] sm:$0xf]
  %v72 = vld [vmem:[%s1 + $0xc4] sm:$0xf]
  %v73 = vld [vmem:[%s1 + $0xc8] sm:$0xf]
  %v74 = vld [vmem:[%s1 + $0xcc] sm:$0xf]
  %v75 = vld [vmem:[%s1 + $0xd0] sm:$0xf]
  %v76 = vld [vmem:[%s1 + $0xd4] sm:$0xf]
  %v77 = vld [vmem:[%s1 + $0xd8] sm:$0xf]
  %v78 = vld [vmem:[%s1 + $0xdc] sm:$0xf]
  %v79 = vld [vmem:[%s1 + $0xe0] sm:$0xf]
  %v80 = vld [vmem:[%s1 + $0xe4] sm:$0xf]
  %v81 = vld [vmem:[%s1 + $0xe8] sm:$0xf]
  %v82 = vld [vmem:[%s1 + $0xec] sm:$0xf]
  %v83 = vld [vmem:[%s1 + $0xf0] sm:$0xf]
  %v84 = vld [vmem:[%s1 + $0xf4] sm:$0xf]
  %v85 = vld [vmem:[%s1 + $0xf8] sm:$0xf]
  %v86 = vld [vmem:[%s1 + $0xfc] sm:$0xf]
  %v89 = vunpack.c.l.b16 %v21
  %v90 = vunpack.c.h.b16 %v21
  %v91 = vunpack.c.l.b16 %v22
  %v92 = vunpack.c.h.b16 %v22
  %v93 = vpack.c.b16 %v89, %v89
  %v94 = vpack.c.b16 %v90, %v90
  %v95 = vpack.c.b16 %v91, %v91
  %v96 = vpack.c.b16 %v92, %v92
  %v165 = vunpack.c.l.b16 %v23
  %v166 = vunpack.c.l.b16 %v24
  %v167 = vunpack.c.l.b16 %v25
  %v168 = vunpack.c.l.b16 %v26
  %v169 = vunpack.c.l.b16 %v27
  %v170 = vunpack.c.l.b16 %v28
  %v171 = vunpack.c.l.b16 %v29
  %v172 = vunpack.c.l.b16 %v30
  %v173 = vunpack.c.l.b16 %v31
  %v174 = vunpack.c.l.b16 %v32
  %v175 = vunpack.c.l.b16 %v33
  %v176 = vunpack.c.l.b16 %v34
  %v177 = vunpack.c.l.b16 %v35
  %v178 = vunpack.c.l.b16 %v36
  %v179 = vunpack.c.l.b16 %v37
  %v180 = vunpack.c.l.b16 %v38
  %v181 = vunpack.c.l.b16 %v39
  %v182 = vunpack.c.l.b16 %v40
  %v183 = vunpack.c.l.b16 %v41
  %v184 = vunpack.c.l.b16 %v42
  %v185 = vunpack.c.l.b16 %v43
  %v186 = vunpack.c.l.b16 %v44
  %v187 = vunpack.c.l.b16 %v45
  %v188 = vunpack.c.l.b16 %v46
  %v189 = vunpack.c.l.b16 %v47
  %v190 = vunpack.c.l.b16 %v48
  %v191 = vunpack.c.l.b16 %v49
  %v192 = vunpack.c.l.b16 %v50
  %v193 = vunpack.c.l.b16 %v51
  %v194 = vunpack.c.l.b16 %v52
  %v195 = vunpack.c.l.b16 %v53
  %v196 = vunpack.c.l.b16 %v54
  %v197 = vunpack.c.l.b16 %v55
  %v198 = vunpack.c.l.b16 %v56
  %v199 = vunpack.c.l.b16 %v57
  %v200 = vunpack.c.l.b16 %v58
  %v201 = vunpack.c.l.b16 %v59
  %v202 = vunpack.c.l.b16 %v60
  %v203 = vunpack.c.l.b16 %v61
  %v204 = vunpack.c.l.b16 %v62
  %v205 = vunpack.c.l.b16 %v63
  %v206 = vunpack.c.l.b16 %v64
  %v207 = vunpack.c.l.b16 %v65
  %v208 = vunpack.c.l.b16 %v66
  %v209 = vunpack.c.l.b16 %v67
  %v210 = vunpack.c.l.b16 %v68
  %v211 = vunpack.c.l.b16 %v69
  %v212 = vunpack.c.l.b16 %v70
  %v213 = vunpack.c.l.b16 %v71
  %v214 = vunpack.c.l.b16 %v72
  %v215 = vunpack.c.l.b16 %v73
  %v216 = vunpack.c.l.b16 %v74
  %v217 = vunpack.c.l.b16 %v75
  %v218 = vunpack.c.l.b16 %v76
  %v219 = vunpack.c.l.b16 %v77
  %v220 = vunpack.c.l.b16 %v78
  %v221 = vunpack.c.l.b16 %v79
  %v222 = vunpack.c.l.b16 %v80
  %v223 = vunpack.c.l.b16 %v81
  %v224 = vunpack.c.l.b16 %v82
  %v225 = vunpack.c.l.b16 %v83
  %v226 = vunpack.c.l.b16 %v84
  %v227 = vunpack.c.l.b16 %v85
  %v228 = vunpack.c.l.b16 %v86
  %v229 = vpack.c.b16 %v166, %v165
  %v230 = vpack.c.b16 %v168, %v167
  %v231 = vpack.c.b16 %v170, %v169
  %v232 = vpack.c.b16 %v172, %v171
  %v233 = vpack.c.b16 %v174, %v173
  %v234 = vpack.c.b16 %v176, %v175
  %v235 = vpack.c.b16 %v178, %v177
  %v236 = vpack.c.b16 %v180, %v179
  %v237 = vpack.c.b16 %v182, %v181
  %v238 = vpack.c.b16 %v184, %v183
  %v239 = vpack.c.b16 %v186, %v185
  %v240 = vpack.c.b16 %v188, %v187
  %v241 = vpack.c.b16 %v190, %v189
  %v242 = vpack.c.b16 %v192, %v191
  %v243 = vpack.c.b16 %v194, %v193
  %v244 = vpack.c.b16 %v196, %v195
  %v245 = vpack.c.b16 %v198, %v197
  %v246 = vpack.c.b16 %v200, %v199
  %v247 = vpack.c.b16 %v202, %v201
  %v248 = vpack.c.b16 %v204, %v203
  %v249 = vpack.c.b16 %v206, %v205
  %v250 = vpack.c.b16 %v208, %v207
  %v251 = vpack.c.b16 %v210, %v209
  %v252 = vpack.c.b16 %v212, %v211
  %v253 = vpack.c.b16 %v214, %v213
  %v254 = vpack.c.b16 %v216, %v215
  %v255 = vpack.c.b16 %v218, %v217
  %v256 = vpack.c.b16 %v220, %v219
  %v257 = vpack.c.b16 %v222, %v221
  %v258 = vpack.c.b16 %v224, %v223
  %v259 = vpack.c.b16 %v226, %v225
  %v260 = vpack.c.b16 %v228, %v227
  %293 = vmatprep.subr.bf16.mxu0 0
  %294 = vmatpush1.bf16.msra.mxu0 %v236
  %295 = vmatprep.subr.bf16.mxu0 0
  %296 = vmatpush1.bf16.msra.mxu0 %v235
  %297 = vmatprep.subr.bf16.mxu0 0
  %298 = vmatpush1.bf16.msra.mxu0 %v234
  %299 = vmatprep.subr.bf16.mxu0 0
  %300 = vmatpush1.bf16.msra.mxu0 %v233
  %301 = vmatprep.subr.bf16.mxu0 0
  %302 = vmatpush1.bf16.msra.mxu0 %v232
  %303 = vmatprep.subr.bf16.mxu0 0
  %304 = vmatpush1.bf16.msra.mxu0 %v231
  %305 = vmatprep.subr.bf16.mxu0 0
  %306 = vmatpush1.bf16.msra.mxu0 %v230
  %307 = vmatprep.subr.bf16.mxu0 0
  %308 = vmatpush1.bf16.msra.mxu0 %v229
  %309 = vmatprep.subr.bf16.mxu0 0
  %310 = vmatpush2.bf16.msra.mxu0 %v244
  %311 = vmatprep.subr.bf16.mxu0 0
  %312 = vmatpush2.bf16.msra.mxu0 %v243
  %313 = vmatprep.subr.bf16.mxu0 0
  %314 = vmatpush2.bf16.msra.mxu0 %v242
  %315 = vmatprep.subr.bf16.mxu0 0
  %316 = vmatpush2.bf16.msra.mxu0 %v241
  %317 = vmatprep.subr.bf16.mxu0 0
  %318 = vmatpush2.bf16.msra.mxu0 %v240
  %319 = vmatprep.subr.bf16.mxu0 0
  %320 = vmatpush2.bf16.msra.mxu0 %v239
  %321 = vmatprep.subr.bf16.mxu0 0
  %322 = vmatpush2.bf16.msra.mxu0 %v238
  %323 = vmatprep.subr.bf16.mxu0 0
  %324 = vmatpush2.bf16.msra.mxu0 %v237
  %325 = vmatprep.mubr.bf16.mxu0 %v94
  %326 = vmatmul.mubr.bf16.gmra.mxu0 %v93
  %v327 = vpop.f32.mrf.mxu0
  %v328 = vadd.f32 0.0, %v327
  %v329 = vpop.f32.mrf.mxu0
  %v330 = vpop.f32.mrf.mxu0
  %v331 = vpop.f32.mrf.mxu0
  %332 = vdwg.mxu0
  %333 = vmatprep.subr.bf16.mxu0 0
  %334 = vmatpush1.bf16.msra.mxu0 %v252
  %335 = vmatprep.subr.bf16.mxu0 0
  %336 = vmatpush1.bf16.msra.mxu0 %v251
  %337 = vmatprep.subr.bf16.mxu0 0
  %338 = vmatpush1.bf16.msra.mxu0 %v250
  %339 = vmatprep.subr.bf16.mxu0 0
  %340 = vmatpush1.bf16.msra.mxu0 %v249
  %341 = vmatprep.subr.bf16.mxu0 0
  %342 = vmatpush1.bf16.msra.mxu0 %v248
  %343 = vmatprep.subr.bf16.mxu0 0
  %344 = vmatpush1.bf16.msra.mxu0 %v247
  %345 = vmatprep.subr.bf16.mxu0 0
  %346 = vmatpush1.bf16.msra.mxu0 %v246
  %347 = vmatprep.subr.bf16.mxu0 0
  %348 = vmatpush1.bf16.msra.mxu0 %v245
  %349 = vmatprep.subr.bf16.mxu0 0
  %350 = vmatpush2.bf16.msra.mxu0 %v260
  %351 = vmatprep.subr.bf16.mxu0 0
  %352 = vmatpush2.bf16.msra.mxu0 %v259
  %353 = vmatprep.subr.bf16.mxu0 0
  %354 = vmatpush2.bf16.msra.mxu0 %v258
  %355 = vmatprep.subr.bf16.mxu0 0
  %356 = vmatpush2.bf16.msra.mxu0 %v257
  %357 = vmatprep.subr.bf16.mxu0 0
  %358 = vmatpush2.bf16.msra.mxu0 %v256
  %359 = vmatprep.subr.bf16.mxu0 0
  %360 = vmatpush2.bf16.msra.mxu0 %v255
  %361 = vmatprep.subr.bf16.mxu0 0
  %362 = vmatpush2.bf16.msra.mxu0 %v254
  %363 = vmatprep.subr.bf16.mxu0 0
  %364 = vmatpush2.bf16.msra.mxu0 %v253
  %365 = vmatprep.mubr.bf16.mxu0 %v96
  %366 = vmatmul.mubr.bf16.gmra.mxu0 %v95
  %v367 = vpop.f32.mrf.mxu0
  %v368 = vadd.f32 %v328, %v367
  %v369 = vpop.f32.mrf.mxu0
  %v370 = vpop.f32.mrf.mxu0
  %v371 = vpop.f32.mrf.mxu0
  %372 = vdwg.mxu0
  %v373 = vadd.f32 %v20, %v368
  %374 = vst [vmem:[#allocation2] sm:$0xff] %v373
  // Predicated region
  $region18: #{net_forward.39} parent=0 // pred_check
    %p375 = pneg %p15
  $region19: #{net_forward.39} parent=0 // pred_check_branch
    %377 = sbr.rel (%p375) target = $region21
  $region20: #{net_forward.39} parent=0 // pred_region
    %v378 = vld [vmem:[#allocation2] sm:$0xff]
    %v379 = vld [vmem:[%s2] sm:$0x1]
    %v381 = vlaneseq
    %v382 = vshrl.u32 %v381, 7
    %v383 = vsub.s32 0, %v382
    %v384 = vrot.slane %v379, %v383
    %v386 = vadd.f32 %v378, %v384
    %387 = vst [vmem:[%s3] sm:$0xff] %v386
  $region21: #{net_forward.39} parent=0 // pred_fallthru
    _
  // Predicated region
  $region22: #{net_forward.39} parent=0 // pred_check
    _
  $region23: #{net_forward.39} parent=0 // pred_check_branch
    %389 = sbr.rel (0) target = $region25
  $region24: #{net_forward.39} parent=0 // pred_region
    _
  $region25: #{net_forward.39} parent=0 // pred_fallthru
    _
  // Predicated region
  $region26: #{net_forward.39} parent=0 // pred_check
    _
  $region27: #{net_forward.39} parent=0 // pred_check_branch
    %391 = sbr.rel (0) target = $region29
  $region28: #{net_forward.39} parent=0 // pred_region
    _
  $region29: #{net_forward.39} parent=0 // pred_fallthru
    _

</llo_original>
